<compile_context>
chip_gen: v7x
topology: tpu7x:2x2x1
jax: 0.10.0
libtpu: 0.0.40
codegen_flags: <defaults>
</compile_context>

<pallas_src>
import jax
import jax.numpy as jnp
from jax.experimental import pallas as pl
from jax.experimental.pallas import tpu as pltpu


def _silu(x):
    return x * jax.nn.sigmoid(x)


# ----------------------------------------------------------------------------
# Fully fused ResidualBlock kernel (one grid step per batch element)
# ----------------------------------------------------------------------------
def _make_residual_block_kernel(H, W, Cin, Cout, has_shortcut):
    HW = H * W
    LPAD = ((W + 1 + 7) // 8) * 8          # >= W+1, 8-aligned center offset (f32 sublanes)

    def kernel(x_ref, g1_ref, b1_ref, agg1_ref, w1_ref, bias1_ref,
               g2_ref, b2_ref, agg2_ref, w2_ref, bias2_ref, *rest):
        if has_shortcut:
            ws_ref, o_ref, pad1_ref, pad2_ref = rest
        else:
            o_ref, pad1_ref, pad2_ref = rest

        # Horizontal-halo masks for the padding=1 3x3 conv (shared by both convs).
        col = jax.lax.broadcasted_iota(jnp.int32, (HW, 1), 0) % W
        mask_l = col > 0            # tap dx = -1 invalid at x == 0
        mask_r = col < (W - 1)      # tap dx = +1 invalid at x == W-1

        def gn_silu(v, gamma, beta, agg):
            # GroupNorm(32) statistics in f32 via a (C,C) group-average matrix:
            # agg[i,j] = 1/group_size if i,j share a group else 0.
            ch_mean = jnp.sum(v, axis=0, keepdims=True) * (1.0 / HW)     # (1, C)
            ch_sq = jnp.sum(v * v, axis=0, keepdims=True) * (1.0 / HW)   # (1, C)
            g_mean = jnp.dot(ch_mean, agg, preferred_element_type=jnp.float32)
            g_sq = jnp.dot(ch_sq, agg, preferred_element_type=jnp.float32)
            scale = gamma * jax.lax.rsqrt(g_sq - g_mean * g_mean + 1e-5)
            shift = beta - g_mean * scale
            y = v * scale + shift                                        # folded affine
            return y * jax.nn.sigmoid(y)                                 # SiLU (f32)

        def conv3x3(pad_ref, y, w_ref, acc, C):
            # Stage y into the zero-padded scratch; only the halo rows need zeros.
            pad_ref[pl.ds(0, LPAD), :] = jnp.zeros((LPAD, C), jnp.float32)
            pad_ref[pl.ds(LPAD + HW, LPAD), :] = jnp.zeros((LPAD, C), jnp.float32)
            pad_ref[pl.ds(LPAD, HW), :] = y
            # Flattened-index trick: tap (dy, dx) is a row-shift by dy*W + dx of
            # the flattened (HW, C) activation, with horizontal wrap masked out.
            for ky in range(3):
                for kx in range(3):
                    shift = (ky - 1) * W + (kx - 1)
                    slab = pad_ref[pl.ds(LPAD + shift, HW), :]           # (HW, C) f32
                    if kx == 0:
                        slab = jnp.where(mask_l, slab, 0.0)
                    elif kx == 2:
                        slab = jnp.where(mask_r, slab, 0.0)
                    acc = acc + jnp.dot(slab.astype(jnp.bfloat16),
                                        w_ref[ky * 3 + kx],
                                        preferred_element_type=jnp.float32)
            return acc

        x = x_ref[0].astype(jnp.float32)                                 # (HW, Cin)

        # ---- stage 1: GN + SiLU + conv1(3x3) + (conv1 bias + time embedding) ----
        y1 = gn_silu(x, g1_ref[...], b1_ref[...], agg1_ref[...])
        h = conv3x3(pad1_ref, y1, w1_ref,
                    jnp.zeros((HW, Cout), jnp.float32), Cin) + bias1_ref[0]

        # ---- stage 2: GN + SiLU + (Dropout = identity) + conv2(3x3) + shortcut ----
        y2 = gn_silu(h, g2_ref[...], b2_ref[...], agg2_ref[...])
        if has_shortcut:
            acc0 = jnp.dot(x.astype(jnp.bfloat16), ws_ref[...],
                           preferred_element_type=jnp.float32)           # 1x1 conv
        else:
            acc0 = x                                                     # identity shortcut
        out = conv3x3(pad2_ref, y2, w2_ref, acc0, Cout) + bias2_ref[0]

        o_ref[0] = out.astype(o_ref.dtype)

    return kernel, LPAD


# ----------------------------------------------------------------------------
# Forward pass (JAX glue: layout + tiny time-embedding matmul + bias folding)
# ----------------------------------------------------------------------------
def group_avg_matrix(C, G):
    gs = C // G
    idx = jnp.arange(C)
    same = (idx[:, None] // gs) == (idx[None, :] // gs)
    return same.astype(jnp.float32) / gs


@jax.jit
def residual_block_forward(x_nchw, t, params):
    B, Cin, H, W = x_nchw.shape
    Cout = params["b1"].shape[-1]
    HW = H * W
    has_shortcut = Cin != Cout

    x_flat = jnp.transpose(x_nchw, (0, 2, 3, 1)).reshape(B, HW, Cin)     # NCHW -> (B,HW,C)

    # Time-embedding MLP hoisted out of the kernel and folded into the conv1 bias.
    temb = _silu(t) @ params["wt"] + params["bt"]                        # (B, Cout)
    bias1 = (temb + params["b1"])[:, None, :]                            # (B, 1, Cout)
    if has_shortcut:
        bias2 = (params["b2"] + params["bs"])[:, None, :]                # (1, 1, Cout)
    else:
        bias2 = params["b2"][:, None, :]

    kernel, LPAD = _make_residual_block_kernel(H, W, Cin, Cout, has_shortcut)

    in_specs = [
        pl.BlockSpec((1, HW, Cin), lambda b: (b, 0, 0)),     # x
        pl.BlockSpec((1, Cin), lambda b: (0, 0)),            # gamma1
        pl.BlockSpec((1, Cin), lambda b: (0, 0)),            # beta1
        pl.BlockSpec((Cin, Cin), lambda b: (0, 0)),          # agg1
        pl.BlockSpec((9, Cin, Cout), lambda b: (0, 0, 0)),   # w1 taps (bf16)
        pl.BlockSpec((1, 1, Cout), lambda b: (b, 0, 0)),     # bias1 (+temb, per batch)
        pl.BlockSpec((1, Cout), lambda b: (0, 0)),           # gamma2
        pl.BlockSpec((1, Cout), lambda b: (0, 0)),           # beta2
        pl.BlockSpec((Cout, Cout), lambda b: (0, 0)),        # agg2
        pl.BlockSpec((9, Cout, Cout), lambda b: (0, 0, 0)),  # w2 taps (bf16)
        pl.BlockSpec((1, 1, Cout), lambda b: (0, 0, 0)),     # bias2 (+shortcut bias)
    ]
    args = [x_flat, params["gamma1"], params["beta1"], params["agg1"],
            params["w1_taps"], bias1,
            params["gamma2"], params["beta2"], params["agg2"],
            params["w2_taps"], bias2]
    if has_shortcut:
        in_specs.append(pl.BlockSpec((Cin, Cout), lambda b: (0, 0)))     # ws (bf16)
        args.append(params["ws_bf16"])

    out_flat = pl.pallas_call(
        kernel,
        out_shape=jax.ShapeDtypeStruct((B, HW, Cout), jnp.float32),
        grid=(B,),
        in_specs=in_specs,
        out_specs=pl.BlockSpec((1, HW, Cout), lambda b: (b, 0, 0)),
        scratch_shapes=[pltpu.VMEM((HW + 2 * LPAD, Cin), jnp.float32),
                        pltpu.VMEM((HW + 2 * LPAD, Cout), jnp.float32)],
        compiler_params=pltpu.CompilerParams(dimension_semantics=("parallel",)),
    )(*args)

    return jnp.transpose(out_flat.reshape(B, H, W, Cout), (0, 3, 1, 2))  # back to NCHW


# ----------------------------------------------------------------------------
# Pure-JAX f32 reference (for correctness check)
# ----------------------------------------------------------------------------
def ref_forward(x_nchw, t, params):
    x = jnp.transpose(x_nchw, (0, 2, 3, 1))

    def gn(xx, gamma, beta, G=32):
        B, H, W, C = xx.shape
        xr = xx.reshape(B, H * W, G, C // G)
        mean = xr.mean(axis=(1, 3), keepdims=True)
        var = xr.var(axis=(1, 3), keepdims=True)
        y = (xr - mean) / jnp.sqrt(var + 1e-5)
        return y.reshape(B, H, W, C) * gamma.reshape(1, 1, 1, C) + beta.reshape(1, 1, 1, C)

    def conv3(xx, w, b):
        return jax.lax.conv_general_dilated(
            xx, w, (1, 1), "SAME",
            dimension_numbers=("NHWC", "HWIO", "NHWC")) + b.reshape(1, 1, 1, -1)

    h = conv3(_silu(gn(x, params["gamma1"][0], params["beta1"][0])),
              params["w1"], params["b1"][0])
    temb = _silu(t) @ params["wt"] + params["bt"][0]
    h = h + temb[:, None, None, :]
    h2 = conv3(_silu(gn(h, params["gamma2"][0], params["beta2"][0])),
               params["w2"], params["b2"][0])
    sc = jnp.einsum("bhwc,cd->bhwd", x, params["ws"]) + params["bs"][0]
    return jnp.transpose(h2 + sc, (0, 3, 1, 2))


# ----------------------------------------------------------------------------
# Main
# ----------------------------------------------------------------------------
if __name__ == "__main__":
    B, Cin, Cout, Tch, H, W = 2, 32, 64, 128, 16, 16   # GroupNorm(32, C) => C % 32 == 0

    key = jax.random.PRNGKey(0)
    ks = jax.random.split(key, 16)
    n = lambda k, s, sc=1.0: sc * jax.random.normal(k, s, dtype=jnp.float32)

    x = n(ks[0], (B, Cin, H, W))
    t = n(ks[1], (B, Tch))

    w1 = n(ks[2], (3, 3, Cin, Cout), 0.05)     # HWIO
    w2 = n(ks[3], (3, 3, Cout, Cout), 0.05)
    ws = n(ks[12], (Cin, Cout), 0.1)

    params = {
        "gamma1": 1.0 + n(ks[4], (1, Cin), 0.1), "beta1": n(ks[5], (1, Cin), 0.1),
        "w1": w1, "w1_taps": w1.reshape(9, Cin, Cout).astype(jnp.bfloat16),
        "b1": n(ks[6], (1, Cout), 0.05),
        "wt": n(ks[7], (Tch, Cout), 0.05), "bt": n(ks[8], (1, Cout), 0.05),
        "gamma2": 1.0 + n(ks[9], (1, Cout), 0.1), "beta2": n(ks[10], (1, Cout), 0.1),
        "w2": w2, "w2_taps": w2.reshape(9, Cout, Cout).astype(jnp.bfloat16),
        "b2": n(ks[11], (1, Cout), 0.05),
        "ws": ws, "ws_bf16": ws.astype(jnp.bfloat16), "bs": n(ks[13], (1, Cout), 0.05),
        "agg1": group_avg_matrix(Cin, 32), "agg2": group_avg_matrix(Cout, 32),
    }

    out = jax.block_until_ready(residual_block_forward(x, t, params))
    assert out.shape == (B, Cout, H, W), out.shape

    ref = jax.block_until_ready(ref_forward(x, t, params))
    err = float(jnp.max(jnp.abs(out - ref)))
    # bf16 MXU operands vs. f32 reference: expected max abs error O(1e-2).
    assert err < 5e-2, f"max abs error too large: {err}"

    print("KERNEL_OK")
</pallas_src>

<mosaic_0001>
module attributes {stable_mosaic.version = 11 : i64} {
  func.func @kernel(%arg0: i32, %arg1: memref<1x256x32xf32, #tpu.memory_space<vmem>>, %arg2: memref<1x32xf32, #tpu.memory_space<vmem>>, %arg3: memref<1x32xf32, #tpu.memory_space<vmem>>, %arg4: memref<32x32xf32, #tpu.memory_space<vmem>>, %arg5: memref<9x32x64xbf16, #tpu.memory_space<vmem>>, %arg6: memref<1x1x64xf32, #tpu.memory_space<vmem>>, %arg7: memref<1x64xf32, #tpu.memory_space<vmem>>, %arg8: memref<1x64xf32, #tpu.memory_space<vmem>>, %arg9: memref<64x64xf32, #tpu.memory_space<vmem>>, %arg10: memref<9x64x64xbf16, #tpu.memory_space<vmem>>, %arg11: memref<1x1x64xf32, #tpu.memory_space<vmem>>, %arg12: memref<32x64xbf16, #tpu.memory_space<vmem>>, %arg13: memref<1x256x64xf32, #tpu.memory_space<vmem>>, %arg14: memref<304x32xf32, #tpu.memory_space<vmem>>, %arg15: memref<304x64xf32, #tpu.memory_space<vmem>>) attributes {dimension_semantics = [#tpu.dimension_semantics<parallel>], iteration_bounds = array<i64: 2>, scalar_prefetch = 0 : i64, scratch_operands = 2 : i64, tpu.core_type = #tpu.core_type<tc>, window_params = [{transform_indices = @transform_0, window_bounds = array<i64: 1, 256, 32>}, {pipeline_mode = #tpu.pipeline_mode<synchronous>, transform_indices = @transform_1, window_bounds = array<i64: 1, 32>}, {pipeline_mode = #tpu.pipeline_mode<synchronous>, transform_indices = @transform_2, window_bounds = array<i64: 1, 32>}, {pipeline_mode = #tpu.pipeline_mode<synchronous>, transform_indices = @transform_3, window_bounds = array<i64: 32, 32>}, {pipeline_mode = #tpu.pipeline_mode<synchronous>, transform_indices = @transform_4, window_bounds = array<i64: 9, 32, 64>}, {transform_indices = @transform_5, window_bounds = array<i64: 1, 1, 64>}, {pipeline_mode = #tpu.pipeline_mode<synchronous>, transform_indices = @transform_6, window_bounds = array<i64: 1, 64>}, {pipeline_mode = #tpu.pipeline_mode<synchronous>, transform_indices = @transform_7, window_bounds = array<i64: 1, 64>}, {pipeline_mode = #tpu.pipeline_mode<synchronous>, transform_indices = @transform_8, window_bounds = array<i64: 64, 64>}, {pipeline_mode = #tpu.pipeline_mode<synchronous>, transform_indices = @transform_9, window_bounds = array<i64: 9, 64, 64>}, {pipeline_mode = #tpu.pipeline_mode<synchronous>, transform_indices = @transform_10, window_bounds = array<i64: 1, 1, 64>}, {pipeline_mode = #tpu.pipeline_mode<synchronous>, transform_indices = @transform_11, window_bounds = array<i64: 32, 64>}, {transform_indices = @transform_12, window_bounds = array<i64: 1, 256, 64>}]} {
    %0 = tpu.iota {dimensions = array<i32: 0>} : vector<256x1xi32>
    %c16_i32 = arith.constant 16 : i32
    %c0_i32 = arith.constant 0 : i32
    %1 = arith.cmpi eq, %c16_i32, %c0_i32 : i32
    %c1_i32 = arith.constant 1 : i32
    %2 = arith.select %1, %c1_i32, %c16_i32 : i32
    %3 = vector.broadcast %2 : i32 to vector<256x1xi32>
    %4 = arith.remsi %0, %3 : vector<256x1xi32>
    %c0_i32_0 = arith.constant 0 : i32
    %5 = vector.broadcast %c0_i32_0 : i32 to vector<256x1xi32>
    %6 = arith.cmpi ne, %4, %5 : vector<256x1xi32>
    %c0_i32_1 = arith.constant 0 : i32
    %7 = vector.broadcast %c0_i32_1 : i32 to vector<256x1xi32>
    %8 = arith.cmpi slt, %4, %7 : vector<256x1xi32>
    %c0_i32_2 = arith.constant 0 : i32
    %9 = arith.cmpi slt, %2, %c0_i32_2 : i32
    %10 = vector.broadcast %9 : i1 to vector<256x1xi1>
    %11 = vector.broadcast %10 : vector<256x1xi1> to vector<256x1xi1>
    %12 = arith.xori %8, %11 : vector<256x1xi1>
    %13 = arith.andi %12, %6 : vector<256x1xi1>
    %14 = vector.broadcast %2 : i32 to vector<256x1xi32>
    %15 = arith.addi %4, %14 : vector<256x1xi32>
    %16 = arith.select %13, %15, %4 : vector<256x1xi1>, vector<256x1xi32>
    %c0_i32_3 = arith.constant 0 : i32
    %17 = vector.broadcast %c0_i32_3 : i32 to vector<256x1xi32>
    %18 = arith.cmpi sgt, %16, %17 : vector<256x1xi32>
    %c15_i32 = arith.constant 15 : i32
    %19 = vector.broadcast %c15_i32 : i32 to vector<256x1xi32>
    %20 = arith.cmpi slt, %16, %19 : vector<256x1xi32>
    %c0 = arith.constant 0 : index
    %c0_4 = arith.constant 0 : index
    %c0_5 = arith.constant 0 : index
    %21 = vector.load %arg1[%c0, %c0_4, %c0_5] : memref<1x256x32xf32, #tpu.memory_space<vmem>>, vector<1x256x32xf32>
    %22 = vector.shape_cast %21 : vector<1x256x32xf32> to vector<256x32xf32>
    %c0_6 = arith.constant 0 : index
    %c0_7 = arith.constant 0 : index
    %23 = vector.load %arg2[%c0_6, %c0_7] : memref<1x32xf32, #tpu.memory_space<vmem>>, vector<1x32xf32>
    %c0_8 = arith.constant 0 : index
    %c0_9 = arith.constant 0 : index
    %24 = vector.load %arg3[%c0_8, %c0_9] : memref<1x32xf32, #tpu.memory_space<vmem>>, vector<1x32xf32>
    %c0_10 = arith.constant 0 : index
    %c0_11 = arith.constant 0 : index
    %25 = vector.load %arg4[%c0_10, %c0_11] : memref<32x32xf32, #tpu.memory_space<vmem>>, vector<32x32xf32>
    %cst = arith.constant dense<0.000000e+00> : vector<32xf32>
    %26 = vector.multi_reduction <add>, %22, %cst [0] : vector<256x32xf32> to vector<32xf32>
    %27 = vector.shape_cast %26 : vector<32xf32> to vector<1x32xf32>
    %cst_12 = arith.constant 3.906250e-03 : f32
    %28 = vector.broadcast %cst_12 : f32 to vector<1x32xf32>
    %29 = arith.mulf %27, %28 : vector<1x32xf32>
    %30 = arith.mulf %22, %22 : vector<256x32xf32>
    %cst_13 = arith.constant dense<0.000000e+00> : vector<32xf32>
    %31 = vector.multi_reduction <add>, %30, %cst_13 [0] : vector<256x32xf32> to vector<32xf32>
    %32 = vector.shape_cast %31 : vector<32xf32> to vector<1x32xf32>
    %cst_14 = arith.constant 3.906250e-03 : f32
    %33 = vector.broadcast %cst_14 : f32 to vector<1x32xf32>
    %34 = arith.mulf %32, %33 : vector<1x32xf32>
    %cst_15 = arith.constant dense<0.000000e+00> : vector<1x32xf32>
    %35 = tpu.matmul %29, %25, %cst_15 {dimension_numbers = #tpu.dot_dimension_numbers<[1], [0], [0], [1], [0, 0, 1, 1], [], []>} : vector<1x32xf32>, vector<32x32xf32>, vector<1x32xf32> -> vector<1x32xf32>
    %cst_16 = arith.constant dense<0.000000e+00> : vector<1x32xf32>
    %36 = tpu.matmul %34, %25, %cst_16 {dimension_numbers = #tpu.dot_dimension_numbers<[1], [0], [0], [1], [0, 0, 1, 1], [], []>} : vector<1x32xf32>, vector<32x32xf32>, vector<1x32xf32> -> vector<1x32xf32>
    %37 = arith.mulf %35, %35 : vector<1x32xf32>
    %38 = arith.subf %36, %37 : vector<1x32xf32>
    %cst_17 = arith.constant 9.99999974E-6 : f32
    %39 = vector.broadcast %cst_17 : f32 to vector<1x32xf32>
    %40 = arith.addf %38, %39 : vector<1x32xf32>
    %41 = math.rsqrt %40 : vector<1x32xf32>
    %42 = arith.mulf %23, %41 : vector<1x32xf32>
    %43 = arith.mulf %35, %42 : vector<1x32xf32>
    %44 = arith.subf %24, %43 : vector<1x32xf32>
    %45 = vector.broadcast %42 : vector<1x32xf32> to vector<256x32xf32>
    %46 = arith.mulf %22, %45 : vector<256x32xf32>
    %47 = vector.broadcast %44 : vector<1x32xf32> to vector<256x32xf32>
    %48 = arith.addf %46, %47 : vector<256x32xf32>
    %49 = arith.negf %48 : vector<256x32xf32>
    %50 = math.exp %49 : vector<256x32xf32>
    %cst_18 = arith.constant 1.000000e+00 : f32
    %51 = vector.broadcast %cst_18 : f32 to vector<256x32xf32>
    %52 = arith.addf %51, %50 : vector<256x32xf32>
    %53 = arith.divf %51, %52 : vector<256x32xf32>
    %54 = arith.mulf %48, %53 : vector<256x32xf32>
    %cst_19 = arith.constant 0.000000e+00 : f32
    %55 = vector.broadcast %cst_19 : f32 to vector<256x64xf32>
    %cst_20 = arith.constant 0.000000e+00 : f32
    %56 = vector.broadcast %cst_20 : f32 to vector<24x32xf32>
    %c0_21 = arith.constant 0 : index
    %c0_22 = arith.constant 0 : index
    %57 = vector.load %arg14[%c0_21, %c0_22] : memref<304x32xf32, #tpu.memory_space<vmem>>, vector<24x32xf32>
    tpu.vector_store %arg14[%c0_21, %c0_22], %56 {strides = array<i32>} : memref<304x32xf32, #tpu.memory_space<vmem>>, vector<24x32xf32>,
    %cst_23 = arith.constant 0.000000e+00 : f32
    %58 = vector.broadcast %cst_23 : f32 to vector<24x32xf32>
    %c280 = arith.constant 280 : index
    %c0_24 = arith.constant 0 : index
    %59 = vector.load %arg14[%c280, %c0_24] : memref<304x32xf32, #tpu.memory_space<vmem>>, vector<24x32xf32>
    tpu.vector_store %arg14[%c280, %c0_24], %58 {strides = array<i32>} : memref<304x32xf32, #tpu.memory_space<vmem>>, vector<24x32xf32>,
    %c24 = arith.constant 24 : index
    %c0_25 = arith.constant 0 : index
    %60 = vector.load %arg14[%c24, %c0_25] : memref<304x32xf32, #tpu.memory_space<vmem>>, vector<256x32xf32>
    tpu.vector_store %arg14[%c24, %c0_25], %54 {strides = array<i32>} : memref<304x32xf32, #tpu.memory_space<vmem>>, vector<256x32xf32>,
    %c7 = arith.constant 7 : index
    %c0_26 = arith.constant 0 : index
    %61 = vector.load %arg14[%c7, %c0_26] : memref<304x32xf32, #tpu.memory_space<vmem>>, vector<256x32xf32>
    %cst_27 = arith.constant 0.000000e+00 : f32
    %62 = vector.shape_cast %18 : vector<256x1xi1> to vector<256x1xi1>
    %63 = vector.broadcast %62 : vector<256x1xi1> to vector<256x32xi1>
    %64 = vector.broadcast %cst_27 : f32 to vector<256x32xf32>
    %65 = arith.select %63, %61, %64 : vector<256x32xi1>, vector<256x32xf32>
    %66 = arith.truncf %65 : vector<256x32xf32> to vector<256x32xbf16>
    %c0_28 = arith.constant 0 : index
    %c0_29 = arith.constant 0 : index
    %c0_30 = arith.constant 0 : index
    %67 = vector.load %arg5[%c0_28, %c0_29, %c0_30] : memref<9x32x64xbf16, #tpu.memory_space<vmem>>, vector<1x32x64xbf16>
    %68 = vector.shape_cast %67 : vector<1x32x64xbf16> to vector<32x64xbf16>
    %cst_31 = arith.constant dense<0.000000e+00> : vector<256x64xf32>
    %69 = tpu.matmul %66, %68, %cst_31 {dimension_numbers = #tpu.dot_dimension_numbers<[1], [0], [0], [1], [0, 0, 1, 1], [], []>} : vector<256x32xbf16>, vector<32x64xbf16>, vector<256x64xf32> -> vector<256x64xf32>
    %70 = arith.addf %55, %69 : vector<256x64xf32>
    %c8 = arith.constant 8 : index
    %c0_32 = arith.constant 0 : index
    %71 = vector.load %arg14[%c8, %c0_32] : memref<304x32xf32, #tpu.memory_space<vmem>>, vector<256x32xf32>
    %72 = arith.truncf %71 : vector<256x32xf32> to vector<256x32xbf16>
    %c1 = arith.constant 1 : index
    %c0_33 = arith.constant 0 : index
    %c0_34 = arith.constant 0 : index
    %73 = vector.load %arg5[%c1, %c0_33, %c0_34] : memref<9x32x64xbf16, #tpu.memory_space<vmem>>, vector<1x32x64xbf16>
    %74 = vector.shape_cast %73 : vector<1x32x64xbf16> to vector<32x64xbf16>
    %cst_35 = arith.constant dense<0.000000e+00> : vector<256x64xf32>
    %75 = tpu.matmul %72, %74, %cst_35 {dimension_numbers = #tpu.dot_dimension_numbers<[1], [0], [0], [1], [0, 0, 1, 1], [], []>} : vector<256x32xbf16>, vector<32x64xbf16>, vector<256x64xf32> -> vector<256x64xf32>
    %76 = arith.addf %70, %75 : vector<256x64xf32>
    %c9 = arith.constant 9 : index
    %c0_36 = arith.constant 0 : index
    %77 = vector.load %arg14[%c9, %c0_36] : memref<304x32xf32, #tpu.memory_space<vmem>>, vector<256x32xf32>
    %cst_37 = arith.constant 0.000000e+00 : f32
    %78 = vector.shape_cast %20 : vector<256x1xi1> to vector<256x1xi1>
    %79 = vector.broadcast %78 : vector<256x1xi1> to vector<256x32xi1>
    %80 = vector.broadcast %cst_37 : f32 to vector<256x32xf32>
    %81 = arith.select %79, %77, %80 : vector<256x32xi1>, vector<256x32xf32>
    %82 = arith.truncf %81 : vector<256x32xf32> to vector<256x32xbf16>
    %c2 = arith.constant 2 : index
    %c0_38 = arith.constant 0 : index
    %c0_39 = arith.constant 0 : index
    %83 = vector.load %arg5[%c2, %c0_38, %c0_39] : memref<9x32x64xbf16, #tpu.memory_space<vmem>>, vector<1x32x64xbf16>
    %84 = vector.shape_cast %83 : vector<1x32x64xbf16> to vector<32x64xbf16>
    %cst_40 = arith.constant dense<0.000000e+00> : vector<256x64xf32>
    %85 = tpu.matmul %82, %84, %cst_40 {dimension_numbers = #tpu.dot_dimension_numbers<[1], [0], [0], [1], [0, 0, 1, 1], [], []>} : vector<256x32xbf16>, vector<32x64xbf16>, vector<256x64xf32> -> vector<256x64xf32>
    %86 = arith.addf %76, %85 : vector<256x64xf32>
    %c23 = arith.constant 23 : index
    %c0_41 = arith.constant 0 : index
    %87 = vector.load %arg14[%c23, %c0_41] : memref<304x32xf32, #tpu.memory_space<vmem>>, vector<256x32xf32>
    %cst_42 = arith.constant 0.000000e+00 : f32
    %88 = vector.shape_cast %18 : vector<256x1xi1> to vector<256x1xi1>
    %89 = vector.broadcast %88 : vector<256x1xi1> to vector<256x32xi1>
    %90 = vector.broadcast %cst_42 : f32 to vector<256x32xf32>
    %91 = arith.select %89, %87, %90 : vector<256x32xi1>, vector<256x32xf32>
    %92 = arith.truncf %91 : vector<256x32xf32> to vector<256x32xbf16>
    %c3 = arith.constant 3 : index
    %c0_43 = arith.constant 0 : index
    %c0_44 = arith.constant 0 : index
    %93 = vector.load %arg5[%c3, %c0_43, %c0_44] : memref<9x32x64xbf16, #tpu.memory_space<vmem>>, vector<1x32x64xbf16>
    %94 = vector.shape_cast %93 : vector<1x32x64xbf16> to vector<32x64xbf16>
    %cst_45 = arith.constant dense<0.000000e+00> : vector<256x64xf32>
    %95 = tpu.matmul %92, %94, %cst_45 {dimension_numbers = #tpu.dot_dimension_numbers<[1], [0], [0], [1], [0, 0, 1, 1], [], []>} : vector<256x32xbf16>, vector<32x64xbf16>, vector<256x64xf32> -> vector<256x64xf32>
    %96 = arith.addf %86, %95 : vector<256x64xf32>
    %c24_46 = arith.constant 24 : index
    %c0_47 = arith.constant 0 : index
    %97 = vector.load %arg14[%c24_46, %c0_47] : memref<304x32xf32, #tpu.memory_space<vmem>>, vector<256x32xf32>
    %98 = arith.truncf %97 : vector<256x32xf32> to vector<256x32xbf16>
    %c4 = arith.constant 4 : index
    %c0_48 = arith.constant 0 : index
    %c0_49 = arith.constant 0 : index
    %99 = vector.load %arg5[%c4, %c0_48, %c0_49] : memref<9x32x64xbf16, #tpu.memory_space<vmem>>, vector<1x32x64xbf16>
    %100 = vector.shape_cast %99 : vector<1x32x64xbf16> to vector<32x64xbf16>
    %cst_50 = arith.constant dense<0.000000e+00> : vector<256x64xf32>
    %101 = tpu.matmul %98, %100, %cst_50 {dimension_numbers = #tpu.dot_dimension_numbers<[1], [0], [0], [1], [0, 0, 1, 1], [], []>} : vector<256x32xbf16>, vector<32x64xbf16>, vector<256x64xf32> -> vector<256x64xf32>
    %102 = arith.addf %96, %101 : vector<256x64xf32>
    %c25 = arith.constant 25 : index
    %c0_51 = arith.constant 0 : index
    %103 = vector.load %arg14[%c25, %c0_51] : memref<304x32xf32, #tpu.memory_space<vmem>>, vector<256x32xf32>
    %cst_52 = arith.constant 0.000000e+00 : f32
    %104 = vector.shape_cast %20 : vector<256x1xi1> to vector<256x1xi1>
    %105 = vector.broadcast %104 : vector<256x1xi1> to vector<256x32xi1>
    %106 = vector.broadcast %cst_52 : f32 to vector<256x32xf32>
    %107 = arith.select %105, %103, %106 : vector<256x32xi1>, vector<256x32xf32>
    %108 = arith.truncf %107 : vector<256x32xf32> to vector<256x32xbf16>
    %c5 = arith.constant 5 : index
    %c0_53 = arith.constant 0 : index
    %c0_54 = arith.constant 0 : index
    %109 = vector.load %arg5[%c5, %c0_53, %c0_54] : memref<9x32x64xbf16, #tpu.memory_space<vmem>>, vector<1x32x64xbf16>
    %110 = vector.shape_cast %109 : vector<1x32x64xbf16> to vector<32x64xbf16>
    %cst_55 = arith.constant dense<0.000000e+00> : vector<256x64xf32>
    %111 = tpu.matmul %108, %110, %cst_55 {dimension_numbers = #tpu.dot_dimension_numbers<[1], [0], [0], [1], [0, 0, 1, 1], [], []>} : vector<256x32xbf16>, vector<32x64xbf16>, vector<256x64xf32> -> vector<256x64xf32>
    %112 = arith.addf %102, %111 : vector<256x64xf32>
    %c39 = arith.constant 39 : index
    %c0_56 = arith.constant 0 : index
    %113 = vector.load %arg14[%c39, %c0_56] : memref<304x32xf32, #tpu.memory_space<vmem>>, vector<256x32xf32>
    %cst_57 = arith.constant 0.000000e+00 : f32
    %114 = vector.shape_cast %18 : vector<256x1xi1> to vector<256x1xi1>
    %115 = vector.broadcast %114 : vector<256x1xi1> to vector<256x32xi1>
    %116 = vector.broadcast %cst_57 : f32 to vector<256x32xf32>
    %117 = arith.select %115, %113, %116 : vector<256x32xi1>, vector<256x32xf32>
    %118 = arith.truncf %117 : vector<256x32xf32> to vector<256x32xbf16>
    %c6 = arith.constant 6 : index
    %c0_58 = arith.constant 0 : index
    %c0_59 = arith.constant 0 : index
    %119 = vector.load %arg5[%c6, %c0_58, %c0_59] : memref<9x32x64xbf16, #tpu.memory_space<vmem>>, vector<1x32x64xbf16>
    %120 = vector.shape_cast %119 : vector<1x32x64xbf16> to vector<32x64xbf16>
    %cst_60 = arith.constant dense<0.000000e+00> : vector<256x64xf32>
    %121 = tpu.matmul %118, %120, %cst_60 {dimension_numbers = #tpu.dot_dimension_numbers<[1], [0], [0], [1], [0, 0, 1, 1], [], []>} : vector<256x32xbf16>, vector<32x64xbf16>, vector<256x64xf32> -> vector<256x64xf32>
    %122 = arith.addf %112, %121 : vector<256x64xf32>
    %c40 = arith.constant 40 : index
    %c0_61 = arith.constant 0 : index
    %123 = vector.load %arg14[%c40, %c0_61] : memref<304x32xf32, #tpu.memory_space<vmem>>, vector<256x32xf32>
    %124 = arith.truncf %123 : vector<256x32xf32> to vector<256x32xbf16>
    %c7_62 = arith.constant 7 : index
    %c0_63 = arith.constant 0 : index
    %c0_64 = arith.constant 0 : index
    %125 = vector.load %arg5[%c7_62, %c0_63, %c0_64] : memref<9x32x64xbf16, #tpu.memory_space<vmem>>, vector<1x32x64xbf16>
    %126 = vector.shape_cast %125 : vector<1x32x64xbf16> to vector<32x64xbf16>
    %cst_65 = arith.constant dense<0.000000e+00> : vector<256x64xf32>
    %127 = tpu.matmul %124, %126, %cst_65 {dimension_numbers = #tpu.dot_dimension_numbers<[1], [0], [0], [1], [0, 0, 1, 1], [], []>} : vector<256x32xbf16>, vector<32x64xbf16>, vector<256x64xf32> -> vector<256x64xf32>
    %128 = arith.addf %122, %127 : vector<256x64xf32>
    %c41 = arith.constant 41 : index
    %c0_66 = arith.constant 0 : index
    %129 = vector.load %arg14[%c41, %c0_66] : memref<304x32xf32, #tpu.memory_space<vmem>>, vector<256x32xf32>
    %cst_67 = arith.constant 0.000000e+00 : f32
    %130 = vector.shape_cast %20 : vector<256x1xi1> to vector<256x1xi1>
    %131 = vector.broadcast %130 : vector<256x1xi1> to vector<256x32xi1>
    %132 = vector.broadcast %cst_67 : f32 to vector<256x32xf32>
    %133 = arith.select %131, %129, %132 : vector<256x32xi1>, vector<256x32xf32>
    %134 = arith.truncf %133 : vector<256x32xf32> to vector<256x32xbf16>
    %c8_68 = arith.constant 8 : index
    %c0_69 = arith.constant 0 : index
    %c0_70 = arith.constant 0 : index
    %135 = vector.load %arg5[%c8_68, %c0_69, %c0_70] : memref<9x32x64xbf16, #tpu.memory_space<vmem>>, vector<1x32x64xbf16>
    %136 = vector.shape_cast %135 : vector<1x32x64xbf16> to vector<32x64xbf16>
    %cst_71 = arith.constant dense<0.000000e+00> : vector<256x64xf32>
    %137 = tpu.matmul %134, %136, %cst_71 {dimension_numbers = #tpu.dot_dimension_numbers<[1], [0], [0], [1], [0, 0, 1, 1], [], []>} : vector<256x32xbf16>, vector<32x64xbf16>, vector<256x64xf32> -> vector<256x64xf32>
    %138 = arith.addf %128, %137 : vector<256x64xf32>
    %c0_72 = arith.constant 0 : index
    %c0_73 = arith.constant 0 : index
    %c0_74 = arith.constant 0 : index
    %139 = vector.load %arg6[%c0_72, %c0_73, %c0_74] : memref<1x1x64xf32, #tpu.memory_space<vmem>>, vector<1x1x64xf32>
    %140 = vector.shape_cast %139 : vector<1x1x64xf32> to vector<1x64xf32>
    %141 = vector.broadcast %140 : vector<1x64xf32> to vector<256x64xf32>
    %142 = arith.addf %138, %141 : vector<256x64xf32>
    %c0_75 = arith.constant 0 : index
    %c0_76 = arith.constant 0 : index
    %143 = vector.load %arg7[%c0_75, %c0_76] : memref<1x64xf32, #tpu.memory_space<vmem>>, vector<1x64xf32>
    %c0_77 = arith.constant 0 : index
    %c0_78 = arith.constant 0 : index
    %144 = vector.load %arg8[%c0_77, %c0_78] : memref<1x64xf32, #tpu.memory_space<vmem>>, vector<1x64xf32>
    %c0_79 = arith.constant 0 : index
    %c0_80 = arith.constant 0 : index
    %145 = vector.load %arg9[%c0_79, %c0_80] : memref<64x64xf32, #tpu.memory_space<vmem>>, vector<64x64xf32>
    %cst_81 = arith.constant dense<0.000000e+00> : vector<64xf32>
    %146 = vector.multi_reduction <add>, %142, %cst_81 [0] : vector<256x64xf32> to vector<64xf32>
    %147 = vector.shape_cast %146 : vector<64xf32> to vector<1x64xf32>
    %cst_82 = arith.constant 3.906250e-03 : f32
    %148 = vector.broadcast %cst_82 : f32 to vector<1x64xf32>
    %149 = arith.mulf %147, %148 : vector<1x64xf32>
    %150 = arith.mulf %142, %142 : vector<256x64xf32>
    %cst_83 = arith.constant dense<0.000000e+00> : vector<64xf32>
    %151 = vector.multi_reduction <add>, %150, %cst_83 [0] : vector<256x64xf32> to vector<64xf32>
    %152 = vector.shape_cast %151 : vector<64xf32> to vector<1x64xf32>
    %cst_84 = arith.constant 3.906250e-03 : f32
    %153 = vector.broadcast %cst_84 : f32 to vector<1x64xf32>
    %154 = arith.mulf %152, %153 : vector<1x64xf32>
    %cst_85 = arith.constant dense<0.000000e+00> : vector<1x64xf32>
    %155 = tpu.matmul %149, %145, %cst_85 {dimension_numbers = #tpu.dot_dimension_numbers<[1], [0], [0], [1], [0, 0, 1, 1], [], []>} : vector<1x64xf32>, vector<64x64xf32>, vector<1x64xf32> -> vector<1x64xf32>
    %cst_86 = arith.constant dense<0.000000e+00> : vector<1x64xf32>
    %156 = tpu.matmul %154, %145, %cst_86 {dimension_numbers = #tpu.dot_dimension_numbers<[1], [0], [0], [1], [0, 0, 1, 1], [], []>} : vector<1x64xf32>, vector<64x64xf32>, vector<1x64xf32> -> vector<1x64xf32>
    %157 = arith.mulf %155, %155 : vector<1x64xf32>
    %158 = arith.subf %156, %157 : vector<1x64xf32>
    %cst_87 = arith.constant 9.99999974E-6 : f32
    %159 = vector.broadcast %cst_87 : f32 to vector<1x64xf32>
    %160 = arith.addf %158, %159 : vector<1x64xf32>
    %161 = math.rsqrt %160 : vector<1x64xf32>
    %162 = arith.mulf %143, %161 : vector<1x64xf32>
    %163 = arith.mulf %155, %162 : vector<1x64xf32>
    %164 = arith.subf %144, %163 : vector<1x64xf32>
    %165 = vector.broadcast %162 : vector<1x64xf32> to vector<256x64xf32>
    %166 = arith.mulf %142, %165 : vector<256x64xf32>
    %167 = vector.broadcast %164 : vector<1x64xf32> to vector<256x64xf32>
    %168 = arith.addf %166, %167 : vector<256x64xf32>
    %169 = arith.negf %168 : vector<256x64xf32>
    %170 = math.exp %169 : vector<256x64xf32>
    %cst_88 = arith.constant 1.000000e+00 : f32
    %171 = vector.broadcast %cst_88 : f32 to vector<256x64xf32>
    %172 = arith.addf %171, %170 : vector<256x64xf32>
    %173 = arith.divf %171, %172 : vector<256x64xf32>
    %174 = arith.mulf %168, %173 : vector<256x64xf32>
    %175 = arith.truncf %22 : vector<256x32xf32> to vector<256x32xbf16>
    %c0_89 = arith.constant 0 : index
    %c0_90 = arith.constant 0 : index
    %176 = vector.load %arg12[%c0_89, %c0_90] : memref<32x64xbf16, #tpu.memory_space<vmem>>, vector<32x64xbf16>
    %cst_91 = arith.constant dense<0.000000e+00> : vector<256x64xf32>
    %177 = tpu.matmul %175, %176, %cst_91 {dimension_numbers = #tpu.dot_dimension_numbers<[1], [0], [0], [1], [0, 0, 1, 1], [], []>} : vector<256x32xbf16>, vector<32x64xbf16>, vector<256x64xf32> -> vector<256x64xf32>
    %cst_92 = arith.constant 0.000000e+00 : f32
    %178 = vector.broadcast %cst_92 : f32 to vector<24x64xf32>
    %c0_93 = arith.constant 0 : index
    %c0_94 = arith.constant 0 : index
    %179 = vector.load %arg15[%c0_93, %c0_94] : memref<304x64xf32, #tpu.memory_space<vmem>>, vector<24x64xf32>
    tpu.vector_store %arg15[%c0_93, %c0_94], %178 {strides = array<i32>} : memref<304x64xf32, #tpu.memory_space<vmem>>, vector<24x64xf32>,
    %cst_95 = arith.constant 0.000000e+00 : f32
    %180 = vector.broadcast %cst_95 : f32 to vector<24x64xf32>
    %c280_96 = arith.constant 280 : index
    %c0_97 = arith.constant 0 : index
    %181 = vector.load %arg15[%c280_96, %c0_97] : memref<304x64xf32, #tpu.memory_space<vmem>>, vector<24x64xf32>
    tpu.vector_store %arg15[%c280_96, %c0_97], %180 {strides = array<i32>} : memref<304x64xf32, #tpu.memory_space<vmem>>, vector<24x64xf32>,
    %c24_98 = arith.constant 24 : index
    %c0_99 = arith.constant 0 : index
    %182 = vector.load %arg15[%c24_98, %c0_99] : memref<304x64xf32, #tpu.memory_space<vmem>>, vector<256x64xf32>
    tpu.vector_store %arg15[%c24_98, %c0_99], %174 {strides = array<i32>} : memref<304x64xf32, #tpu.memory_space<vmem>>, vector<256x64xf32>,
    %c7_100 = arith.constant 7 : index
    %c0_101 = arith.constant 0 : index
    %183 = vector.load %arg15[%c7_100, %c0_101] : memref<304x64xf32, #tpu.memory_space<vmem>>, vector<256x64xf32>
    %cst_102 = arith.constant 0.000000e+00 : f32
    %184 = vector.shape_cast %18 : vector<256x1xi1> to vector<256x1xi1>
    %185 = vector.broadcast %184 : vector<256x1xi1> to vector<256x64xi1>
    %186 = vector.broadcast %cst_102 : f32 to vector<256x64xf32>
    %187 = arith.select %185, %183, %186 : vector<256x64xi1>, vector<256x64xf32>
    %188 = arith.truncf %187 : vector<256x64xf32> to vector<256x64xbf16>
    %c0_103 = arith.constant 0 : index
    %c0_104 = arith.constant 0 : index
    %c0_105 = arith.constant 0 : index
    %189 = vector.load %arg10[%c0_103, %c0_104, %c0_105] : memref<9x64x64xbf16, #tpu.memory_space<vmem>>, vector<1x64x64xbf16>
    %190 = vector.shape_cast %189 : vector<1x64x64xbf16> to vector<64x64xbf16>
    %cst_106 = arith.constant dense<0.000000e+00> : vector<256x64xf32>
    %191 = tpu.matmul %188, %190, %cst_106 {dimension_numbers = #tpu.dot_dimension_numbers<[1], [0], [0], [1], [0, 0, 1, 1], [], []>} : vector<256x64xbf16>, vector<64x64xbf16>, vector<256x64xf32> -> vector<256x64xf32>
    %192 = arith.addf %177, %191 : vector<256x64xf32>
    %c8_107 = arith.constant 8 : index
    %c0_108 = arith.constant 0 : index
    %193 = vector.load %arg15[%c8_107, %c0_108] : memref<304x64xf32, #tpu.memory_space<vmem>>, vector<256x64xf32>
    %194 = arith.truncf %193 : vector<256x64xf32> to vector<256x64xbf16>
    %c1_109 = arith.constant 1 : index
    %c0_110 = arith.constant 0 : index
    %c0_111 = arith.constant 0 : index
    %195 = vector.load %arg10[%c1_109, %c0_110, %c0_111] : memref<9x64x64xbf16, #tpu.memory_space<vmem>>, vector<1x64x64xbf16>
    %196 = vector.shape_cast %195 : vector<1x64x64xbf16> to vector<64x64xbf16>
    %cst_112 = arith.constant dense<0.000000e+00> : vector<256x64xf32>
    %197 = tpu.matmul %194, %196, %cst_112 {dimension_numbers = #tpu.dot_dimension_numbers<[1], [0], [0], [1], [0, 0, 1, 1], [], []>} : vector<256x64xbf16>, vector<64x64xbf16>, vector<256x64xf32> -> vector<256x64xf32>
    %198 = arith.addf %192, %197 : vector<256x64xf32>
    %c9_113 = arith.constant 9 : index
    %c0_114 = arith.constant 0 : index
    %199 = vector.load %arg15[%c9_113, %c0_114] : memref<304x64xf32, #tpu.memory_space<vmem>>, vector<256x64xf32>
    %cst_115 = arith.constant 0.000000e+00 : f32
    %200 = vector.shape_cast %20 : vector<256x1xi1> to vector<256x1xi1>
    %201 = vector.broadcast %200 : vector<256x1xi1> to vector<256x64xi1>
    %202 = vector.broadcast %cst_115 : f32 to vector<256x64xf32>
    %203 = arith.select %201, %199, %202 : vector<256x64xi1>, vector<256x64xf32>
    %204 = arith.truncf %203 : vector<256x64xf32> to vector<256x64xbf16>
    %c2_116 = arith.constant 2 : index
    %c0_117 = arith.constant 0 : index
    %c0_118 = arith.constant 0 : index
    %205 = vector.load %arg10[%c2_116, %c0_117, %c0_118] : memref<9x64x64xbf16, #tpu.memory_space<vmem>>, vector<1x64x64xbf16>
    %206 = vector.shape_cast %205 : vector<1x64x64xbf16> to vector<64x64xbf16>
    %cst_119 = arith.constant dense<0.000000e+00> : vector<256x64xf32>
    %207 = tpu.matmul %204, %206, %cst_119 {dimension_numbers = #tpu.dot_dimension_numbers<[1], [0], [0], [1], [0, 0, 1, 1], [], []>} : vector<256x64xbf16>, vector<64x64xbf16>, vector<256x64xf32> -> vector<256x64xf32>
    %208 = arith.addf %198, %207 : vector<256x64xf32>
    %c23_120 = arith.constant 23 : index
    %c0_121 = arith.constant 0 : index
    %209 = vector.load %arg15[%c23_120, %c0_121] : memref<304x64xf32, #tpu.memory_space<vmem>>, vector<256x64xf32>
    %cst_122 = arith.constant 0.000000e+00 : f32
    %210 = vector.shape_cast %18 : vector<256x1xi1> to vector<256x1xi1>
    %211 = vector.broadcast %210 : vector<256x1xi1> to vector<256x64xi1>
    %212 = vector.broadcast %cst_122 : f32 to vector<256x64xf32>
    %213 = arith.select %211, %209, %212 : vector<256x64xi1>, vector<256x64xf32>
    %214 = arith.truncf %213 : vector<256x64xf32> to vector<256x64xbf16>
    %c3_123 = arith.constant 3 : index
    %c0_124 = arith.constant 0 : index
    %c0_125 = arith.constant 0 : index
    %215 = vector.load %arg10[%c3_123, %c0_124, %c0_125] : memref<9x64x64xbf16, #tpu.memory_space<vmem>>, vector<1x64x64xbf16>
    %216 = vector.shape_cast %215 : vector<1x64x64xbf16> to vector<64x64xbf16>
    %cst_126 = arith.constant dense<0.000000e+00> : vector<256x64xf32>
    %217 = tpu.matmul %214, %216, %cst_126 {dimension_numbers = #tpu.dot_dimension_numbers<[1], [0], [0], [1], [0, 0, 1, 1], [], []>} : vector<256x64xbf16>, vector<64x64xbf16>, vector<256x64xf32> -> vector<256x64xf32>
    %218 = arith.addf %208, %217 : vector<256x64xf32>
    %c24_127 = arith.constant 24 : index
    %c0_128 = arith.constant 0 : index
    %219 = vector.load %arg15[%c24_127, %c0_128] : memref<304x64xf32, #tpu.memory_space<vmem>>, vector<256x64xf32>
    %220 = arith.truncf %219 : vector<256x64xf32> to vector<256x64xbf16>
    %c4_129 = arith.constant 4 : index
    %c0_130 = arith.constant 0 : index
    %c0_131 = arith.constant 0 : index
    %221 = vector.load %arg10[%c4_129, %c0_130, %c0_131] : memref<9x64x64xbf16, #tpu.memory_space<vmem>>, vector<1x64x64xbf16>
    %222 = vector.shape_cast %221 : vector<1x64x64xbf16> to vector<64x64xbf16>
    %cst_132 = arith.constant dense<0.000000e+00> : vector<256x64xf32>
    %223 = tpu.matmul %220, %222, %cst_132 {dimension_numbers = #tpu.dot_dimension_numbers<[1], [0], [0], [1], [0, 0, 1, 1], [], []>} : vector<256x64xbf16>, vector<64x64xbf16>, vector<256x64xf32> -> vector<256x64xf32>
    %224 = arith.addf %218, %223 : vector<256x64xf32>
    %c25_133 = arith.constant 25 : index
    %c0_134 = arith.constant 0 : index
    %225 = vector.load %arg15[%c25_133, %c0_134] : memref<304x64xf32, #tpu.memory_space<vmem>>, vector<256x64xf32>
    %cst_135 = arith.constant 0.000000e+00 : f32
    %226 = vector.shape_cast %20 : vector<256x1xi1> to vector<256x1xi1>
    %227 = vector.broadcast %226 : vector<256x1xi1> to vector<256x64xi1>
    %228 = vector.broadcast %cst_135 : f32 to vector<256x64xf32>
    %229 = arith.select %227, %225, %228 : vector<256x64xi1>, vector<256x64xf32>
    %230 = arith.truncf %229 : vector<256x64xf32> to vector<256x64xbf16>
    %c5_136 = arith.constant 5 : index
    %c0_137 = arith.constant 0 : index
    %c0_138 = arith.constant 0 : index
    %231 = vector.load %arg10[%c5_136, %c0_137, %c0_138] : memref<9x64x64xbf16, #tpu.memory_space<vmem>>, vector<1x64x64xbf16>
    %232 = vector.shape_cast %231 : vector<1x64x64xbf16> to vector<64x64xbf16>
    %cst_139 = arith.constant dense<0.000000e+00> : vector<256x64xf32>
    %233 = tpu.matmul %230, %232, %cst_139 {dimension_numbers = #tpu.dot_dimension_numbers<[1], [0], [0], [1], [0, 0, 1, 1], [], []>} : vector<256x64xbf16>, vector<64x64xbf16>, vector<256x64xf32> -> vector<256x64xf32>
    %234 = arith.addf %224, %233 : vector<256x64xf32>
    %c39_140 = arith.constant 39 : index
    %c0_141 = arith.constant 0 : index
    %235 = vector.load %arg15[%c39_140, %c0_141] : memref<304x64xf32, #tpu.memory_space<vmem>>, vector<256x64xf32>
    %cst_142 = arith.constant 0.000000e+00 : f32
    %236 = vector.shape_cast %18 : vector<256x1xi1> to vector<256x1xi1>
    %237 = vector.broadcast %236 : vector<256x1xi1> to vector<256x64xi1>
    %238 = vector.broadcast %cst_142 : f32 to vector<256x64xf32>
    %239 = arith.select %237, %235, %238 : vector<256x64xi1>, vector<256x64xf32>
    %240 = arith.truncf %239 : vector<256x64xf32> to vector<256x64xbf16>
    %c6_143 = arith.constant 6 : index
    %c0_144 = arith.constant 0 : index
    %c0_145 = arith.constant 0 : index
    %241 = vector.load %arg10[%c6_143, %c0_144, %c0_145] : memref<9x64x64xbf16, #tpu.memory_space<vmem>>, vector<1x64x64xbf16>
    %242 = vector.shape_cast %241 : vector<1x64x64xbf16> to vector<64x64xbf16>
    %cst_146 = arith.constant dense<0.000000e+00> : vector<256x64xf32>
    %243 = tpu.matmul %240, %242, %cst_146 {dimension_numbers = #tpu.dot_dimension_numbers<[1], [0], [0], [1], [0, 0, 1, 1], [], []>} : vector<256x64xbf16>, vector<64x64xbf16>, vector<256x64xf32> -> vector<256x64xf32>
    %244 = arith.addf %234, %243 : vector<256x64xf32>
    %c40_147 = arith.constant 40 : index
    %c0_148 = arith.constant 0 : index
    %245 = vector.load %arg15[%c40_147, %c0_148] : memref<304x64xf32, #tpu.memory_space<vmem>>, vector<256x64xf32>
    %246 = arith.truncf %245 : vector<256x64xf32> to vector<256x64xbf16>
    %c7_149 = arith.constant 7 : index
    %c0_150 = arith.constant 0 : index
    %c0_151 = arith.constant 0 : index
    %247 = vector.load %arg10[%c7_149, %c0_150, %c0_151] : memref<9x64x64xbf16, #tpu.memory_space<vmem>>, vector<1x64x64xbf16>
    %248 = vector.shape_cast %247 : vector<1x64x64xbf16> to vector<64x64xbf16>
    %cst_152 = arith.constant dense<0.000000e+00> : vector<256x64xf32>
    %249 = tpu.matmul %246, %248, %cst_152 {dimension_numbers = #tpu.dot_dimension_numbers<[1], [0], [0], [1], [0, 0, 1, 1], [], []>} : vector<256x64xbf16>, vector<64x64xbf16>, vector<256x64xf32> -> vector<256x64xf32>
    %250 = arith.addf %244, %249 : vector<256x64xf32>
    %c41_153 = arith.constant 41 : index
    %c0_154 = arith.constant 0 : index
    %251 = vector.load %arg15[%c41_153, %c0_154] : memref<304x64xf32, #tpu.memory_space<vmem>>, vector<256x64xf32>
    %cst_155 = arith.constant 0.000000e+00 : f32
    %252 = vector.shape_cast %20 : vector<256x1xi1> to vector<256x1xi1>
    %253 = vector.broadcast %252 : vector<256x1xi1> to vector<256x64xi1>
    %254 = vector.broadcast %cst_155 : f32 to vector<256x64xf32>
    %255 = arith.select %253, %251, %254 : vector<256x64xi1>, vector<256x64xf32>
    %256 = arith.truncf %255 : vector<256x64xf32> to vector<256x64xbf16>
    %c8_156 = arith.constant 8 : index
    %c0_157 = arith.constant 0 : index
    %c0_158 = arith.constant 0 : index
    %257 = vector.load %arg10[%c8_156, %c0_157, %c0_158] : memref<9x64x64xbf16, #tpu.memory_space<vmem>>, vector<1x64x64xbf16>
    %258 = vector.shape_cast %257 : vector<1x64x64xbf16> to vector<64x64xbf16>
    %cst_159 = arith.constant dense<0.000000e+00> : vector<256x64xf32>
    %259 = tpu.matmul %256, %258, %cst_159 {dimension_numbers = #tpu.dot_dimension_numbers<[1], [0], [0], [1], [0, 0, 1, 1], [], []>} : vector<256x64xbf16>, vector<64x64xbf16>, vector<256x64xf32> -> vector<256x64xf32>
    %260 = arith.addf %250, %259 : vector<256x64xf32>
    %c0_160 = arith.constant 0 : index
    %c0_161 = arith.constant 0 : index
    %c0_162 = arith.constant 0 : index
    %261 = vector.load %arg11[%c0_160, %c0_161, %c0_162] : memref<1x1x64xf32, #tpu.memory_space<vmem>>, vector<1x1x64xf32>
    %262 = vector.shape_cast %261 : vector<1x1x64xf32> to vector<1x64xf32>
    %263 = vector.broadcast %262 : vector<1x64xf32> to vector<256x64xf32>
    %264 = arith.addf %260, %263 : vector<256x64xf32>
    %c0_163 = arith.constant 0 : index
    %c0_164 = arith.constant 0 : index
    %c0_165 = arith.constant 0 : index
    %265 = vector.load %arg13[%c0_163, %c0_164, %c0_165] : memref<1x256x64xf32, #tpu.memory_space<vmem>>, vector<1x256x64xf32>
    %266 = vector.shape_cast %265 : vector<1x256x64xf32> to vector<256x64xf32>
    %267 = vector.shape_cast %264 : vector<256x64xf32> to vector<1x256x64xf32>
    tpu.vector_store %arg13[%c0_163, %c0_164, %c0_165], %267 {strides = array<i32>} : memref<1x256x64xf32, #tpu.memory_space<vmem>>, vector<1x256x64xf32>,
    return
  }
  func.func @transform_0(%arg0: i32) -> (i32, i32, i32) {
    %c0_i32 = arith.constant 0 : i32
    %c0_i32_0 = arith.constant 0 : i32
    %c0_i32_1 = arith.constant 0 : i32
    return %arg0, %c0_i32, %c0_i32_0 : i32, i32, i32
  }
  func.func @transform_1(%arg0: i32) -> (i32, i32) {
    %c0_i32 = arith.constant 0 : i32
    %c0_i32_0 = arith.constant 0 : i32
    %c0_i32_1 = arith.constant 0 : i32
    return %c0_i32, %c0_i32_0 : i32, i32
  }
  func.func @transform_2(%arg0: i32) -> (i32, i32) {
    %c0_i32 = arith.constant 0 : i32
    %c0_i32_0 = arith.constant 0 : i32
    %c0_i32_1 = arith.constant 0 : i32
    return %c0_i32, %c0_i32_0 : i32, i32
  }
  func.func @transform_3(%arg0: i32) -> (i32, i32) {
    %c0_i32 = arith.constant 0 : i32
    %c0_i32_0 = arith.constant 0 : i32
    %c0_i32_1 = arith.constant 0 : i32
    return %c0_i32, %c0_i32_0 : i32, i32
  }
  func.func @transform_4(%arg0: i32) -> (i32, i32, i32) {
    %c0_i32 = arith.constant 0 : i32
    %c0_i32_0 = arith.constant 0 : i32
    %c0_i32_1 = arith.constant 0 : i32
    %c0_i32_2 = arith.constant 0 : i32
    return %c0_i32, %c0_i32_0, %c0_i32_1 : i32, i32, i32
  }
  func.func @transform_5(%arg0: i32) -> (i32, i32, i32) {
    %c0_i32 = arith.constant 0 : i32
    %c0_i32_0 = arith.constant 0 : i32
    %c0_i32_1 = arith.constant 0 : i32
    return %arg0, %c0_i32, %c0_i32_0 : i32, i32, i32
  }
  func.func @transform_6(%arg0: i32) -> (i32, i32) {
    %c0_i32 = arith.constant 0 : i32
    %c0_i32_0 = arith.constant 0 : i32
    %c0_i32_1 = arith.constant 0 : i32
    return %c0_i32, %c0_i32_0 : i32, i32
  }
  func.func @transform_7(%arg0: i32) -> (i32, i32) {
    %c0_i32 = arith.constant 0 : i32
    %c0_i32_0 = arith.constant 0 : i32
    %c0_i32_1 = arith.constant 0 : i32
    return %c0_i32, %c0_i32_0 : i32, i32
  }
  func.func @transform_8(%arg0: i32) -> (i32, i32) {
    %c0_i32 = arith.constant 0 : i32
    %c0_i32_0 = arith.constant 0 : i32
    %c0_i32_1 = arith.constant 0 : i32
    return %c0_i32, %c0_i32_0 : i32, i32
  }
  func.func @transform_9(%arg0: i32) -> (i32, i32, i32) {
    %c0_i32 = arith.constant 0 : i32
    %c0_i32_0 = arith.constant 0 : i32
    %c0_i32_1 = arith.constant 0 : i32
    %c0_i32_2 = arith.constant 0 : i32
    return %c0_i32, %c0_i32_0, %c0_i32_1 : i32, i32, i32
  }
  func.func @transform_10(%arg0: i32) -> (i32, i32, i32) {
    %c0_i32 = arith.constant 0 : i32
    %c0_i32_0 = arith.constant 0 : i32
    %c0_i32_1 = arith.constant 0 : i32
    %c0_i32_2 = arith.constant 0 : i32
    return %c0_i32, %c0_i32_0, %c0_i32_1 : i32, i32, i32
  }
  func.func @transform_11(%arg0: i32) -> (i32, i32) {
    %c0_i32 = arith.constant 0 : i32
    %c0_i32_0 = arith.constant 0 : i32
    %c0_i32_1 = arith.constant 0 : i32
    return %c0_i32, %c0_i32_0 : i32, i32
  }
  func.func @transform_12(%arg0: i32) -> (i32, i32, i32) {
    %c0_i32 = arith.constant 0 : i32
    %c0_i32_0 = arith.constant 0 : i32
    %c0_i32_1 = arith.constant 0 : i32
    return %arg0, %c0_i32, %c0_i32_0 : i32, i32, i32
  }
}

</mosaic_0001>

<llo_original>
// kernel: residual_block_forward.1
$region0: #{residual_block_forward.1}
  #allocation0 [shape = 'u32[]', space=smem, size = 0x4, offset = 0x4, fixed_abs, tag = 'smem constant byte address 0x4 - core index']
  #allocation1 [shape = 'u32[144,128]{1,0:T(1,128)}', space=vmem, size = 0x12000, scoped, tag = 'internal scratch']
  #allocation2 [shape = 'f32[304,32]{1,0:T(8,128)}', space=vmem, size = 0x26000, scoped, tag = 'scratch operand']
  #allocation3 [shape = 'f32[304,64]{1,0:T(8,128)}', space=vmem, size = 0x26000, scoped, tag = 'scratch operand']
  %s0 = inlined_call_operand.hbm [shape: f32[2,256,32], index: 0, kind: input, shape index: {}]
  %s1 = inlined_call_operand.vmem [shape: f32[1,32], index: 1, kind: input, shape index: {}]
  %s2 = inlined_call_operand.hbm [shape: f32[1,32], index: 2, kind: input, shape index: {}]
  %s3 = inlined_call_operand.vmem [shape: f32[32,32], index: 3, kind: input, shape index: {}]
  %s4 = inlined_call_operand.hbm [shape: bf16[9,32,64], index: 4, kind: input, shape index: {}]
  %s5 = inlined_call_operand.vmem [shape: f32[2,1,64], index: 5, kind: input, shape index: {}]
  %s6 = inlined_call_operand.vmem [shape: f32[1,64], index: 6, kind: input, shape index: {}]
  %s7 = inlined_call_operand.hbm [shape: f32[1,64], index: 7, kind: input, shape index: {}]
  %s8 = inlined_call_operand.vmem [shape: f32[64,64], index: 8, kind: input, shape index: {}]
  %s9 = inlined_call_operand.hbm [shape: bf16[9,64,64], index: 9, kind: input, shape index: {}]
  %s10 = inlined_call_operand.vmem [shape: f32[1,1,64], index: 10, kind: input, shape index: {}]
  %s11 = inlined_call_operand.vmem [shape: bf16[32,64], index: 11, kind: input, shape index: {}]
  %s12 = inlined_call_operand.hbm [shape: f32[2,256,64], index: 12, kind: output, shape index: {}]
  %s13 = sld [smem:[#allocation0]]
  $region101: #{residual_block_forward.1} parent=0
    _
  %s15 = ssub.s32 1, %s13
  %s16 = scalar_select 0, %s15, %s13
  $region1: #{residual_block_forward.1} parent=0
    #allocation4 [shape = 'u8[262144]{0}', space=vmem, size = 0x40000, scoped, tag = 'input window, operand 0']
    #allocation5 [shape = 's32[2]{0}', space=sflag, size = 0x8, scoped, tag = 'scoped memory for residual_block_forward.1']
    #allocation6 [shape = 's32[2]{0}', space=sflag, size = 0x8, scoped, tag = 'scoped memory for residual_block_forward.1']
    #allocation7 [shape = 'u8[512]{0}', space=vmem, size = 0x400, scoped, tag = 'input window, operand 2, single buffered']
    #allocation8 [shape = 's32[1]{0}', space=sflag, size = 0x4, scoped, tag = 'scoped memory for residual_block_forward.1']
    #allocation9 [shape = 'u8[73728]{0}', space=vmem, size = 0x12000, scoped, tag = 'input window, operand 4, single buffered']
    #allocation10 [shape = 'u8[512]{0}', space=vmem, size = 0x400, scoped, tag = 'input window, operand 7, single buffered']
    #allocation11 [shape = 's32[1]{0}', space=sflag, size = 0x4, scoped, tag = 'scoped memory for residual_block_forward.1']
    #allocation12 [shape = 'u8[147456]{0}', space=vmem, size = 0x24000, scoped, tag = 'input window, operand 9, single buffered']
    #allocation13 [shape = 'u8[262144]{0}', space=vmem, size = 0x40000, scoped, tag = 'output window, operand 0']
    %17 = vsyncpa [#allocation5], 0
    %s18 = scalar_lea.sflag [#allocation5], 1
    %19 = vsyncpa %s18, 0
    %20 = vsyncpa [#allocation8], 0
    %21 = vsyncpa [#allocation11], 0
    %22 = vsyncpa [#allocation6], 0
    %s23 = scalar_lea.sflag [#allocation6], 1
    %24 = vsyncpa %s23, 0
    loop: start=0, step=1, limit=4
    $region2: #{residual_block_forward.1} parent=1 // loop_pre_header
      _
    $region3: #{residual_block_forward.1} parent=1 // loop_header
      %s26 = sphi 0, %s30
      %p27 = scmp.ge.s32.totalorder %s26, 4
      %s36 = sphi 0, %s38
      %s39 = sphi 0, %s36
      %s40 = sphi 0, %s39
      %s56 = sphi 0, %s40
      %s60 = sphi 0, %s60
      %s62 = sphi 0, %s60
      %s63 = sphi 0, %s62
      %s77 = sphi 0, %s63
      %s81 = sphi 0, %s81
      %s83 = sphi 0, %s81
      %s84 = sphi 0, %s83
      %s98 = sphi 0, %s84
      %s102 = sphi 0, %s102
      %s104 = sphi 0, %s102
      %s105 = sphi 0, %s104
      %s119 = sphi 0, %s105
      %s123 = sphi 0, %s123
      %s125 = sphi 0, %s123
      %s126 = sphi 0, %s125
      %s140 = sphi 0, %s126
      %s146 = sphi 0, %s148
      %s149 = sphi 0, %s146
      %s150 = sphi 0, %s149
      %s166 = sphi 0, %s150
      %s170 = sphi 0, %s170
      %s172 = sphi 0, %s170
      %s173 = sphi 0, %s172
      %s187 = sphi 0, %s173
      %s191 = sphi 0, %s191
      %s193 = sphi 0, %s191
      %s194 = sphi 0, %s193
      %s208 = sphi 0, %s194
      %s212 = sphi 0, %s212
      %s214 = sphi 0, %s212
      %s215 = sphi 0, %s214
      %s229 = sphi 0, %s215
      %s233 = sphi 0, %s233
      %s235 = sphi 0, %s233
      %s236 = sphi 0, %s235
      %s250 = sphi 0, %s236
      %s254 = sphi 0, %s254
      %s256 = sphi 0, %s254
      %s257 = sphi 0, %s256
      %s271 = sphi 0, %s257
      %s275 = sphi 0, %s275
      %s277 = sphi 0, %s275
      %s278 = sphi 0, %s277
      %s292 = sphi 0, %s278
      %s298 = sphi 0, %s300
      %s301 = sphi 0, %s298
      %s302 = sphi 0, %s301
      %s318 = sphi 0, %s302
    $region4: #{residual_block_forward.1} parent=1 // loop_header_branch
      %29 = sbr.rel (%p27) target = $region8
    $region5: #{residual_block_forward.1} parent=1 // loop_body
      %s31 = ssub.s32 %s26, 1
      %s32 = ssub.s32 %s26, 2
      %s33 = sadd.s32 %s26, 1
      %s34 = ssub.s32 %s26, %s33
      %p35 = scmp.eq.s32.totalorder %s34, 0
      %s37 = sadd.s32 %s36, 1
      %s38 = scalar_select %p35, %s36, %s37
      %p41 = pneg %p35
      %p42 = scmp.eq.s32.totalorder %s26, 1
      %p43 = por %p41, %p42
      %p44 = scmp.ne.s32.totalorder %s36, %s39
      %p45 = scmp.eq.s32.totalorder %s26, 0
      %p46 = por %p44, %p45
      %p47 = scmp.ne.s32.totalorder %s36, %s39
      %p48 = scmp.eq.s32.totalorder %s31, 1
      %p49 = por %p47, %p48
      %p50 = scmp.ne.s32.totalorder %s39, %s40
      %p51 = scmp.eq.s32.totalorder %s31, 0
      %p52 = por %p50, %p51
      %p53 = scmp.ne.s32.totalorder %s39, %s40
      %p54 = scmp.eq.s32.totalorder %s32, 1
      %p55 = por %p53, %p54
      %p57 = scmp.ne.s32.totalorder %s40, %s56
      %p58 = scmp.eq.s32.totalorder %s32, 0
      %p59 = por %p57, %p58
      %s61 = sadd.s32 %s60, 1
      %p64 = scmp.eq.s32.totalorder %s26, 1
      %p65 = scmp.ne.s32.totalorder %s60, %s62
      %p66 = scmp.eq.s32.totalorder %s26, 0
      %p67 = por %p65, %p66
      %p68 = scmp.ne.s32.totalorder %s60, %s62
      %p69 = scmp.eq.s32.totalorder %s31, 1
      %p70 = por %p68, %p69
      %p71 = scmp.ne.s32.totalorder %s62, %s63
      %p72 = scmp.eq.s32.totalorder %s31, 0
      %p73 = por %p71, %p72
      %p74 = scmp.ne.s32.totalorder %s62, %s63
      %p75 = scmp.eq.s32.totalorder %s32, 1
      %p76 = por %p74, %p75
      %p78 = scmp.ne.s32.totalorder %s63, %s77
      %p79 = scmp.eq.s32.totalorder %s32, 0
      %p80 = por %p78, %p79
      %s82 = sadd.s32 %s81, 1
      %p85 = scmp.eq.s32.totalorder %s26, 1
      %p86 = scmp.ne.s32.totalorder %s81, %s83
      %p87 = scmp.eq.s32.totalorder %s26, 0
      %p88 = por %p86, %p87
      %p89 = scmp.ne.s32.totalorder %s81, %s83
      %p90 = scmp.eq.s32.totalorder %s31, 1
      %p91 = por %p89, %p90
      %p92 = scmp.ne.s32.totalorder %s83, %s84
      %p93 = scmp.eq.s32.totalorder %s31, 0
      %p94 = por %p92, %p93
      %p95 = scmp.ne.s32.totalorder %s83, %s84
      %p96 = scmp.eq.s32.totalorder %s32, 1
      %p97 = por %p95, %p96
      %p99 = scmp.ne.s32.totalorder %s84, %s98
      %p100 = scmp.eq.s32.totalorder %s32, 0
      %p101 = por %p99, %p100
      %s103 = sadd.s32 %s102, 1
      %p106 = scmp.eq.s32.totalorder %s26, 1
      %p107 = scmp.ne.s32.totalorder %s102, %s104
      %p108 = scmp.eq.s32.totalorder %s26, 0
      %p109 = por %p107, %p108
      %p110 = scmp.ne.s32.totalorder %s102, %s104
      %p111 = scmp.eq.s32.totalorder %s31, 1
      %p112 = por %p110, %p111
      %p113 = scmp.ne.s32.totalorder %s104, %s105
      %p114 = scmp.eq.s32.totalorder %s31, 0
      %p115 = por %p113, %p114
      %p116 = scmp.ne.s32.totalorder %s104, %s105
      %p117 = scmp.eq.s32.totalorder %s32, 1
      %p118 = por %p116, %p117
      %p120 = scmp.ne.s32.totalorder %s105, %s119
      %p121 = scmp.eq.s32.totalorder %s32, 0
      %p122 = por %p120, %p121
      %s124 = sadd.s32 %s123, 1
      %p127 = scmp.eq.s32.totalorder %s26, 1
      %p128 = scmp.ne.s32.totalorder %s123, %s125
      %p129 = scmp.eq.s32.totalorder %s26, 0
      %p130 = por %p128, %p129
      %p131 = scmp.ne.s32.totalorder %s123, %s125
      %p132 = scmp.eq.s32.totalorder %s31, 1
      %p133 = por %p131, %p132
      %p134 = scmp.ne.s32.totalorder %s125, %s126
      %p135 = scmp.eq.s32.totalorder %s31, 0
      %p136 = por %p134, %p135
      %p137 = scmp.ne.s32.totalorder %s125, %s126
      %p138 = scmp.eq.s32.totalorder %s32, 1
      %p139 = por %p137, %p138
      %p141 = scmp.ne.s32.totalorder %s126, %s140
      %p142 = scmp.eq.s32.totalorder %s32, 0
      %p143 = por %p141, %p142
      %s144 = ssub.s32 %s26, %s33
      %p145 = scmp.eq.s32.totalorder %s144, 0
      %s147 = sadd.s32 %s146, 1
      %s148 = scalar_select %p145, %s146, %s147
      %p151 = pneg %p145
      %p152 = scmp.eq.s32.totalorder %s26, 1
      %p153 = por %p151, %p152
      %p154 = scmp.ne.s32.totalorder %s146, %s149
      %p155 = scmp.eq.s32.totalorder %s26, 0
      %p156 = por %p154, %p155
      %p157 = scmp.ne.s32.totalorder %s146, %s149
      %p158 = scmp.eq.s32.totalorder %s31, 1
      %p159 = por %p157, %p158
      %p160 = scmp.ne.s32.totalorder %s149, %s150
      %p161 = scmp.eq.s32.totalorder %s31, 0
      %p162 = por %p160, %p161
      %p163 = scmp.ne.s32.totalorder %s149, %s150
      %p164 = scmp.eq.s32.totalorder %s32, 1
      %p165 = por %p163, %p164
      %p167 = scmp.ne.s32.totalorder %s150, %s166
      %p168 = scmp.eq.s32.totalorder %s32, 0
      %p169 = por %p167, %p168
      %s171 = sadd.s32 %s170, 1
      %p174 = scmp.eq.s32.totalorder %s26, 1
      %p175 = scmp.ne.s32.totalorder %s170, %s172
      %p176 = scmp.eq.s32.totalorder %s26, 0
      %p177 = por %p175, %p176
      %p178 = scmp.ne.s32.totalorder %s170, %s172
      %p179 = scmp.eq.s32.totalorder %s31, 1
      %p180 = por %p178, %p179
      %p181 = scmp.ne.s32.totalorder %s172, %s173
      %p182 = scmp.eq.s32.totalorder %s31, 0
      %p183 = por %p181, %p182
      %p184 = scmp.ne.s32.totalorder %s172, %s173
      %p185 = scmp.eq.s32.totalorder %s32, 1
      %p186 = por %p184, %p185
      %p188 = scmp.ne.s32.totalorder %s173, %s187
      %p189 = scmp.eq.s32.totalorder %s32, 0
      %p190 = por %p188, %p189
      %s192 = sadd.s32 %s191, 1
      %p195 = scmp.eq.s32.totalorder %s26, 1
      %p196 = scmp.ne.s32.totalorder %s191, %s193
      %p197 = scmp.eq.s32.totalorder %s26, 0
      %p198 = por %p196, %p197
      %p199 = scmp.ne.s32.totalorder %s191, %s193
      %p200 = scmp.eq.s32.totalorder %s31, 1
      %p201 = por %p199, %p200
      %p202 = scmp.ne.s32.totalorder %s193, %s194
      %p203 = scmp.eq.s32.totalorder %s31, 0
      %p204 = por %p202, %p203
      %p205 = scmp.ne.s32.totalorder %s193, %s194
      %p206 = scmp.eq.s32.totalorder %s32, 1
      %p207 = por %p205, %p206
      %p209 = scmp.ne.s32.totalorder %s194, %s208
      %p210 = scmp.eq.s32.totalorder %s32, 0
      %p211 = por %p209, %p210
      %s213 = sadd.s32 %s212, 1
      %p216 = scmp.eq.s32.totalorder %s26, 1
      %p217 = scmp.ne.s32.totalorder %s212, %s214
      %p218 = scmp.eq.s32.totalorder %s26, 0
      %p219 = por %p217, %p218
      %p220 = scmp.ne.s32.totalorder %s212, %s214
      %p221 = scmp.eq.s32.totalorder %s31, 1
      %p222 = por %p220, %p221
      %p223 = scmp.ne.s32.totalorder %s214, %s215
      %p224 = scmp.eq.s32.totalorder %s31, 0
      %p225 = por %p223, %p224
      %p226 = scmp.ne.s32.totalorder %s214, %s215
      %p227 = scmp.eq.s32.totalorder %s32, 1
      %p228 = por %p226, %p227
      %p230 = scmp.ne.s32.totalorder %s215, %s229
      %p231 = scmp.eq.s32.totalorder %s32, 0
      %p232 = por %p230, %p231
      %s234 = sadd.s32 %s233, 1
      %p237 = scmp.eq.s32.totalorder %s26, 1
      %p238 = scmp.ne.s32.totalorder %s233, %s235
      %p239 = scmp.eq.s32.totalorder %s26, 0
      %p240 = por %p238, %p239
      %p241 = scmp.ne.s32.totalorder %s233, %s235
      %p242 = scmp.eq.s32.totalorder %s31, 1
      %p243 = por %p241, %p242
      %p244 = scmp.ne.s32.totalorder %s235, %s236
      %p245 = scmp.eq.s32.totalorder %s31, 0
      %p246 = por %p244, %p245
      %p247 = scmp.ne.s32.totalorder %s235, %s236
      %p248 = scmp.eq.s32.totalorder %s32, 1
      %p249 = por %p247, %p248
      %p251 = scmp.ne.s32.totalorder %s236, %s250
      %p252 = scmp.eq.s32.totalorder %s32, 0
      %p253 = por %p251, %p252
      %s255 = sadd.s32 %s254, 1
      %p258 = scmp.eq.s32.totalorder %s26, 1
      %p259 = scmp.ne.s32.totalorder %s254, %s256
      %p260 = scmp.eq.s32.totalorder %s26, 0
      %p261 = por %p259, %p260
      %p262 = scmp.ne.s32.totalorder %s254, %s256
      %p263 = scmp.eq.s32.totalorder %s31, 1
      %p264 = por %p262, %p263
      %p265 = scmp.ne.s32.totalorder %s256, %s257
      %p266 = scmp.eq.s32.totalorder %s31, 0
      %p267 = por %p265, %p266
      %p268 = scmp.ne.s32.totalorder %s256, %s257
      %p269 = scmp.eq.s32.totalorder %s32, 1
      %p270 = por %p268, %p269
      %p272 = scmp.ne.s32.totalorder %s257, %s271
      %p273 = scmp.eq.s32.totalorder %s32, 0
      %p274 = por %p272, %p273
      %s276 = sadd.s32 %s275, 1
      %p279 = scmp.eq.s32.totalorder %s26, 1
      %p280 = scmp.ne.s32.totalorder %s275, %s277
      %p281 = scmp.eq.s32.totalorder %s26, 0
      %p282 = por %p280, %p281
      %p283 = scmp.ne.s32.totalorder %s275, %s277
      %p284 = scmp.eq.s32.totalorder %s31, 1
      %p285 = por %p283, %p284
      %p286 = scmp.ne.s32.totalorder %s277, %s278
      %p287 = scmp.eq.s32.totalorder %s31, 0
      %p288 = por %p286, %p287
      %p289 = scmp.ne.s32.totalorder %s277, %s278
      %p290 = scmp.eq.s32.totalorder %s32, 1
      %p291 = por %p289, %p290
      %p293 = scmp.ne.s32.totalorder %s278, %s292
      %p294 = scmp.eq.s32.totalorder %s32, 0
      %p295 = por %p293, %p294
      %s296 = ssub.s32 %s26, %s33
      %p297 = scmp.eq.s32.totalorder %s296, 0
      %s299 = sadd.s32 %s298, 1
      %s300 = scalar_select %p297, %s298, %s299
      %p303 = pneg %p297
      %p304 = scmp.eq.s32.totalorder %s26, 1
      %p305 = por %p303, %p304
      %p306 = scmp.ne.s32.totalorder %s298, %s301
      %p307 = scmp.eq.s32.totalorder %s26, 0
      %p308 = por %p306, %p307
      %p309 = scmp.ne.s32.totalorder %s298, %s301
      %p310 = scmp.eq.s32.totalorder %s31, 1
      %p311 = por %p309, %p310
      %p312 = scmp.ne.s32.totalorder %s301, %s302
      %p313 = scmp.eq.s32.totalorder %s31, 0
      %p314 = por %p312, %p313
      %p315 = scmp.ne.s32.totalorder %s301, %s302
      %p316 = scmp.eq.s32.totalorder %s32, 1
      %p317 = por %p315, %p316
      %p319 = scmp.ne.s32.totalorder %s302, %s318
      %p320 = scmp.eq.s32.totalorder %s32, 0
      %p321 = por %p319, %p320
      %p322 = scmp.le.s32.totalorder 1, %s26
      %p323 = scmp.lt.s32.totalorder %s26, 3
      %p324 = pnand %p322, %p323
      %p325 = pneg %p324
      // Predicated region
      $region9: #{residual_block_forward.1} parent=5 // pred_check
        _
      $region10: #{residual_block_forward.1} parent=5 // pred_check_branch
        %327 = sbr.rel (%p324) target = $region12
      $region11: #{residual_block_forward.1} parent=5 // pred_region
        %s328 = ssub.s32 %s26, 1
        // Predicated region
        $region13: #{residual_block_forward.1} parent=11 // pred_check
          %p329 = pneg %p73
        $region14: #{residual_block_forward.1} parent=11 // pred_check_branch
          %331 = sbr.rel (%p329) target = $region16
        $region15: #{residual_block_forward.1} parent=11 // pred_region
          _
        $region16: #{residual_block_forward.1} parent=11 // pred_fallthru
          _
        // Predicated region
        $region17: #{residual_block_forward.1} parent=11 // pred_check
          %p332 = pneg %p94
        $region18: #{residual_block_forward.1} parent=11 // pred_check_branch
          %334 = sbr.rel (%p332) target = $region20
        $region19: #{residual_block_forward.1} parent=11 // pred_region
          %s336 = ssub.s32 16, 16
          %337 = vsyncadd [#allocation8], %s336
          %s339 = sshll.u32 [#allocation7], 4
          %s340 = int_to_ptr.vmem [resolvable:$true] %s339
          %342 = dma.hbm_to_vmem [thread:$0]  %s2, 16, %s340, [#allocation8]
        $region20: #{residual_block_forward.1} parent=11 // pred_fallthru
          _
        // Predicated region
        $region21: #{residual_block_forward.1} parent=11 // pred_check
          %p343 = pneg %p115
        $region22: #{residual_block_forward.1} parent=11 // pred_check_branch
          %345 = sbr.rel (%p343) target = $region24
        $region23: #{residual_block_forward.1} parent=11 // pred_region
          _
        $region24: #{residual_block_forward.1} parent=11 // pred_fallthru
          _
        // Predicated region
        $region25: #{residual_block_forward.1} parent=11 // pred_check
          %p346 = pneg %p136
        $region26: #{residual_block_forward.1} parent=11 // pred_check_branch
          %348 = sbr.rel (%p346) target = $region28
        $region27: #{residual_block_forward.1} parent=11 // pred_region
          %s350 = ssub.s32 2304, 2304
          %351 = vsyncadd [#allocation8], %s350
          %s352 = sshll.u32 [#allocation9], 4
          %s353 = int_to_ptr.vmem [resolvable:$true] %s352
          %358 = dma.hbm_to_vmem [thread:$0]  %s4, 2304, %s353, [#allocation8], 64, 64, 4
        $region28: #{residual_block_forward.1} parent=11 // pred_fallthru
          _
        // Predicated region
        $region29: #{residual_block_forward.1} parent=11 // pred_check
          %p359 = pneg %p183
        $region30: #{residual_block_forward.1} parent=11 // pred_check_branch
          %361 = sbr.rel (%p359) target = $region32
        $region31: #{residual_block_forward.1} parent=11 // pred_region
          _
        $region32: #{residual_block_forward.1} parent=11 // pred_fallthru
          _
        // Predicated region
        $region33: #{residual_block_forward.1} parent=11 // pred_check
          %p362 = pneg %p204
        $region34: #{residual_block_forward.1} parent=11 // pred_check_branch
          %364 = sbr.rel (%p362) target = $region36
        $region35: #{residual_block_forward.1} parent=11 // pred_region
          %s366 = ssub.s32 16, 16
          %367 = vsyncadd [#allocation11], %s366
          %s369 = sshll.u32 [#allocation10], 4
          %s370 = int_to_ptr.vmem [resolvable:$true] %s369
          %372 = dma.hbm_to_vmem [thread:$0]  %s7, 16, %s370, [#allocation11]
        $region36: #{residual_block_forward.1} parent=11 // pred_fallthru
          _
        // Predicated region
        $region37: #{residual_block_forward.1} parent=11 // pred_check
          %p373 = pneg %p225
        $region38: #{residual_block_forward.1} parent=11 // pred_check_branch
          %375 = sbr.rel (%p373) target = $region40
        $region39: #{residual_block_forward.1} parent=11 // pred_region
          _
        $region40: #{residual_block_forward.1} parent=11 // pred_fallthru
          _
        // Predicated region
        $region41: #{residual_block_forward.1} parent=11 // pred_check
          %p376 = pneg %p246
        $region42: #{residual_block_forward.1} parent=11 // pred_check_branch
          %378 = sbr.rel (%p376) target = $region44
        $region43: #{residual_block_forward.1} parent=11 // pred_region
          %s380 = ssub.s32 4608, 4608
          %381 = vsyncadd [#allocation11], %s380
          %s382 = sshll.u32 [#allocation12], 4
          %s383 = int_to_ptr.vmem [resolvable:$true] %s382
          %388 = dma.hbm_to_vmem [thread:$0]  %s9, 4608, %s383, [#allocation11], 64, 64, 4
        $region44: #{residual_block_forward.1} parent=11 // pred_fallthru
          _
        // Predicated region
        $region45: #{residual_block_forward.1} parent=11 // pred_check
          %p389 = pneg %p267
        $region46: #{residual_block_forward.1} parent=11 // pred_check_branch
          %391 = sbr.rel (%p389) target = $region48
        $region47: #{residual_block_forward.1} parent=11 // pred_region
          _
        $region48: #{residual_block_forward.1} parent=11 // pred_fallthru
          _
        // Predicated region
        $region49: #{residual_block_forward.1} parent=11 // pred_check
          %p392 = pneg %p288
        $region50: #{residual_block_forward.1} parent=11 // pred_check_branch
          %394 = sbr.rel (%p392) target = $region52
        $region51: #{residual_block_forward.1} parent=11 // pred_region
          _
        $region52: #{residual_block_forward.1} parent=11 // pred_fallthru
          _
      $region12: #{residual_block_forward.1} parent=5 // pred_fallthru
        _
      %p395 = scmp.lt.s32.totalorder %s26, 2
      // Predicated region
      $region53: #{residual_block_forward.1} parent=5 // pred_check
        %p396 = pneg %p395
      $region54: #{residual_block_forward.1} parent=5 // pred_check_branch
        %398 = sbr.rel (%p396) target = $region56
      $region55: #{residual_block_forward.1} parent=5 // pred_region
        // Predicated region
        $region57: #{residual_block_forward.1} parent=55 // pred_check
          %p399 = pneg %p46
        $region58: #{residual_block_forward.1} parent=55 // pred_check_branch
          %401 = sbr.rel (%p399) target = $region60
        $region59: #{residual_block_forward.1} parent=55 // pred_region
          %s402 = sand.u32 %s36, 1
          %s403 = scalar_lea.sflag [#allocation5], %s402
          %s404 = sand.u32 %s36, 1
          %s405 = smul.addr %s404, 256
          %s406 = scalar_lea.vmem [#allocation4], %s405
          %s408 = ssub.s32 4096, 4096
          %409 = vsyncadd %s403, %s408
          %s410 = smul.addr %s26, 32
          %s411 = smul.addr %s410, 128
          %s412 = scalar_lea.hbm %s0, %s411
          %s413 = sshll.u32 %s406, 4
          %s414 = int_to_ptr.vmem [resolvable:$true] %s413
          %419 = dma.hbm_to_vmem [thread:$0]  %s412, 4096, %s414, %s403, 128, 128, 8
        $region60: #{residual_block_forward.1} parent=55 // pred_fallthru
          _
        // Predicated region
        $region61: #{residual_block_forward.1} parent=55 // pred_check
          %p420 = pneg %p156
        $region62: #{residual_block_forward.1} parent=55 // pred_check_branch
          %422 = sbr.rel (%p420) target = $region64
        $region63: #{residual_block_forward.1} parent=55 // pred_region
          %p423 = scmp.lt.s32.totalorder %s26, 1
          %s424 = scalar_select %p423, %s26, 1
          %s425 = scalar_lea.vmem %s5, %s424
        $region64: #{residual_block_forward.1} parent=55 // pred_fallthru
          _
      $region56: #{residual_block_forward.1} parent=5 // pred_fallthru
        _
      %p426 = scmp.le.s32.totalorder 1, %s26
      %p427 = scmp.lt.s32.totalorder %s26, 3
      %p428 = pnand %p426, %p427
      %p429 = pneg %p428
      // Predicated region
      $region65: #{residual_block_forward.1} parent=5 // pred_check
        _
      $region66: #{residual_block_forward.1} parent=5 // pred_check_branch
        %431 = sbr.rel (%p428) target = $region68
      $region67: #{residual_block_forward.1} parent=5 // pred_region
        %s432 = ssub.s32 %s26, 1
        %s433 = sand.u32 %s39, 1
        %s434 = scalar_lea.sflag [#allocation5], %s433
        %s435 = sand.u32 %s39, 1
        %s436 = smul.addr %s435, 256
        %s437 = scalar_lea.vmem [#allocation4], %s436
        // Predicated region
        $region69: #{residual_block_forward.1} parent=67 // pred_check
          %p438 = pneg %p52
        $region70: #{residual_block_forward.1} parent=67 // pred_check_branch
          %440 = sbr.rel (%p438) target = $region72
        $region71: #{residual_block_forward.1} parent=67 // pred_region
          %441 = dma.done %s434, 4096
        $region72: #{residual_block_forward.1} parent=67 // pred_fallthru
          _
        // Predicated region
        $region73: #{residual_block_forward.1} parent=67 // pred_check
          %p442 = pneg %p94
        $region74: #{residual_block_forward.1} parent=67 // pred_check_branch
          %444 = sbr.rel (%p442) target = $region76
        $region75: #{residual_block_forward.1} parent=67 // pred_region
          %445 = dma.done [#allocation8], 16
        $region76: #{residual_block_forward.1} parent=67 // pred_fallthru
          _
        // Predicated region
        $region77: #{residual_block_forward.1} parent=67 // pred_check
          %p446 = pneg %p136
        $region78: #{residual_block_forward.1} parent=67 // pred_check_branch
          %448 = sbr.rel (%p446) target = $region80
        $region79: #{residual_block_forward.1} parent=67 // pred_region
          %449 = dma.done [#allocation8], 2304
        $region80: #{residual_block_forward.1} parent=67 // pred_fallthru
          _
        // Predicated region
        $region81: #{residual_block_forward.1} parent=67 // pred_check
          %p450 = pneg %p204
        $region82: #{residual_block_forward.1} parent=67 // pred_check_branch
          %452 = sbr.rel (%p450) target = $region84
        $region83: #{residual_block_forward.1} parent=67 // pred_region
          %453 = dma.done [#allocation11], 16
        $region84: #{residual_block_forward.1} parent=67 // pred_fallthru
          _
        // Predicated region
        $region85: #{residual_block_forward.1} parent=67 // pred_check
          %p454 = pneg %p246
        $region86: #{residual_block_forward.1} parent=67 // pred_check_branch
          %456 = sbr.rel (%p454) target = $region88
        $region87: #{residual_block_forward.1} parent=67 // pred_region
          %457 = dma.done [#allocation11], 4608
        $region88: #{residual_block_forward.1} parent=67 // pred_fallthru
          _
        %s458 = sand.u32 %s39, 1
        %s459 = scalar_lea.sflag [#allocation5], %s458
        %s460 = sand.u32 %s39, 1
        %s461 = smul.addr %s460, 256
        %s462 = scalar_lea.vmem [#allocation4], %s461
        %p463 = pneg %p52
        %p464 = pneg %p49
        %p465 = pneg %p73
        %p466 = pneg %p70
        %p467 = pneg %p94
        %p468 = pneg %p91
        %p469 = pneg %p115
        %p470 = pneg %p112
        %p471 = pneg %p136
        %p472 = pneg %p133
        %p473 = scmp.lt.s32.totalorder %s31, 1
        %s474 = scalar_select %p473, %s31, 1
        %s475 = scalar_lea.vmem %s5, %s474
        %p476 = pneg %p162
        %p477 = pneg %p159
        %p478 = pneg %p183
        %p479 = pneg %p180
        %p480 = pneg %p204
        %p481 = pneg %p201
        %p482 = pneg %p225
        %p483 = pneg %p222
        %p484 = pneg %p246
        %p485 = pneg %p243
        %p486 = pneg %p267
        %p487 = pneg %p264
        %p488 = pneg %p288
        %p489 = pneg %p285
        %p490 = pneg %p314
        %p491 = pneg %p311
        %s492 = sand.u32 %s301, 1
        %s493 = scalar_lea.sflag [#allocation6], %s492
        %s494 = sand.u32 %s301, 1
        %s495 = smul.addr %s494, 256
        %s496 = scalar_lea.vmem [#allocation13], %s495
        %p497 = scmp.lt.s32.totalorder %s31, 1
        %s498 = scalar_select %p497, %s31, 1
        %s499 = scalar_lea.vmem %s5, %s498
        %v501 = vlaneseq
        %v502 = vshrl.u32 %v501, 7
        %v503 = vadd.s32 %v502, 8
        %v504 = vadd.s32 %v502, 16
        %v505 = vadd.s32 %v502, 24
        %v506 = vadd.s32 %v502, 32
        %v507 = vadd.s32 %v502, 40
        %v508 = vadd.s32 %v502, 48
        %v509 = vadd.s32 %v502, 56
        %v510 = vadd.s32 %v502, 64
        %v511 = vadd.s32 %v502, 72
        %v512 = vadd.s32 %v502, 80
        %v513 = vadd.s32 %v502, 88
        %v514 = vadd.s32 %v502, 96
        %v515 = vadd.s32 %v502, 104
        %v516 = vadd.s32 %v502, 112
        %v517 = vadd.s32 %v502, 120
        %v518 = vadd.s32 %v502, 128
        %v519 = vadd.s32 %v502, 136
        %v520 = vadd.s32 %v502, 144
        %v521 = vadd.s32 %v502, 152
        %v522 = vadd.s32 %v502, 160
        %v523 = vadd.s32 %v502, 168
        %v524 = vadd.s32 %v502, 176
        %v525 = vadd.s32 %v502, 184
        %v526 = vadd.s32 %v502, 192
        %v527 = vadd.s32 %v502, 200
        %v528 = vadd.s32 %v502, 208
        %v529 = vadd.s32 %v502, 216
        %v530 = vadd.s32 %v502, 224
        %v531 = vadd.s32 %v502, 232
        %v532 = vadd.s32 %v502, 240
        %v533 = vadd.s32 %v502, 248
        %vm534 = vcmp.lt.s32.totalorder %v502, 0
        %v535 = vsub.s32 0, %v502
        %v536 = vsel %vm534, %v535, %v502
        %v537 = vshrl.u32 %v536, 4
        %v538 = vand.u32 %v536, 15
        %v539 = vsub.s32 0, %v538
        %v540 = vsel %vm534, %v539, %v538
        %vm541 = vcmp.lt.s32.totalorder %v503, 0
        %v542 = vsub.s32 0, %v503
        %v543 = vsel %vm541, %v542, %v503
        %v544 = vshrl.u32 %v543, 4
        %v545 = vand.u32 %v543, 15
        %v546 = vsub.s32 0, %v545
        %v547 = vsel %vm541, %v546, %v545
        %vm548 = vcmp.lt.s32.totalorder %v504, 0
        %v549 = vsub.s32 0, %v504
        %v550 = vsel %vm548, %v549, %v504
        %v551 = vshrl.u32 %v550, 4
        %v552 = vand.u32 %v550, 15
        %v553 = vsub.s32 0, %v552
        %v554 = vsel %vm548, %v553, %v552
        %vm555 = vcmp.lt.s32.totalorder %v505, 0
        %v556 = vsub.s32 0, %v505
        %v557 = vsel %vm555, %v556, %v505
        %v558 = vshrl.u32 %v557, 4
        %v559 = vand.u32 %v557, 15
        %v560 = vsub.s32 0, %v559
        %v561 = vsel %vm555, %v560, %v559
        %vm562 = vcmp.lt.s32.totalorder %v506, 0
        %v563 = vsub.s32 0, %v506
        %v564 = vsel %vm562, %v563, %v506
        %v565 = vshrl.u32 %v564, 4
        %v566 = vand.u32 %v564, 15
        %v567 = vsub.s32 0, %v566
        %v568 = vsel %vm562, %v567, %v566
        %vm569 = vcmp.lt.s32.totalorder %v507, 0
        %v570 = vsub.s32 0, %v507
        %v571 = vsel %vm569, %v570, %v507
        %v572 = vshrl.u32 %v571, 4
        %v573 = vand.u32 %v571, 15
        %v574 = vsub.s32 0, %v573
        %v575 = vsel %vm569, %v574, %v573
        %vm576 = vcmp.lt.s32.totalorder %v508, 0
        %v577 = vsub.s32 0, %v508
        %v578 = vsel %vm576, %v577, %v508
        %v579 = vshrl.u32 %v578, 4
        %v580 = vand.u32 %v578, 15
        %v581 = vsub.s32 0, %v580
        %v582 = vsel %vm576, %v581, %v580
        %vm583 = vcmp.lt.s32.totalorder %v509, 0
        %v584 = vsub.s32 0, %v509
        %v585 = vsel %vm583, %v584, %v509
        %v586 = vshrl.u32 %v585, 4
        %v587 = vand.u32 %v585, 15
        %v588 = vsub.s32 0, %v587
        %v589 = vsel %vm583, %v588, %v587
        %vm590 = vcmp.lt.s32.totalorder %v510, 0
        %v591 = vsub.s32 0, %v510
        %v592 = vsel %vm590, %v591, %v510
        %v593 = vshrl.u32 %v592, 4
        %v594 = vand.u32 %v592, 15
        %v595 = vsub.s32 0, %v594
        %v596 = vsel %vm590, %v595, %v594
        %vm597 = vcmp.lt.s32.totalorder %v511, 0
        %v598 = vsub.s32 0, %v511
        %v599 = vsel %vm597, %v598, %v511
        %v600 = vshrl.u32 %v599, 4
        %v601 = vand.u32 %v599, 15
        %v602 = vsub.s32 0, %v601
        %v603 = vsel %vm597, %v602, %v601
        %vm604 = vcmp.lt.s32.totalorder %v512, 0
        %v605 = vsub.s32 0, %v512
        %v606 = vsel %vm604, %v605, %v512
        %v607 = vshrl.u32 %v606, 4
        %v608 = vand.u32 %v606, 15
        %v609 = vsub.s32 0, %v608
        %v610 = vsel %vm604, %v609, %v608
        %vm611 = vcmp.lt.s32.totalorder %v513, 0
        %v612 = vsub.s32 0, %v513
        %v613 = vsel %vm611, %v612, %v513
        %v614 = vshrl.u32 %v613, 4
        %v615 = vand.u32 %v613, 15
        %v616 = vsub.s32 0, %v615
        %v617 = vsel %vm611, %v616, %v615
        %vm618 = vcmp.lt.s32.totalorder %v514, 0
        %v619 = vsub.s32 0, %v514
        %v620 = vsel %vm618, %v619, %v514
        %v621 = vshrl.u32 %v620, 4
        %v622 = vand.u32 %v620, 15
        %v623 = vsub.s32 0, %v622
        %v624 = vsel %vm618, %v623, %v622
        %vm625 = vcmp.lt.s32.totalorder %v515, 0
        %v626 = vsub.s32 0, %v515
        %v627 = vsel %vm625, %v626, %v515
        %v628 = vshrl.u32 %v627, 4
        %v629 = vand.u32 %v627, 15
        %v630 = vsub.s32 0, %v629
        %v631 = vsel %vm625, %v630, %v629
        %vm632 = vcmp.lt.s32.totalorder %v516, 0
        %v633 = vsub.s32 0, %v516
        %v634 = vsel %vm632, %v633, %v516
        %v635 = vshrl.u32 %v634, 4
        %v636 = vand.u32 %v634, 15
        %v637 = vsub.s32 0, %v636
        %v638 = vsel %vm632, %v637, %v636
        %vm639 = vcmp.lt.s32.totalorder %v517, 0
        %v640 = vsub.s32 0, %v517
        %v641 = vsel %vm639, %v640, %v517
        %v642 = vshrl.u32 %v641, 4
        %v643 = vand.u32 %v641, 15
        %v644 = vsub.s32 0, %v643
        %v645 = vsel %vm639, %v644, %v643
        %vm646 = vcmp.lt.s32.totalorder %v518, 0
        %v647 = vsub.s32 0, %v518
        %v648 = vsel %vm646, %v647, %v518
        %v649 = vshrl.u32 %v648, 4
        %v650 = vand.u32 %v648, 15
        %v651 = vsub.s32 0, %v650
        %v652 = vsel %vm646, %v651, %v650
        %vm653 = vcmp.lt.s32.totalorder %v519, 0
        %v654 = vsub.s32 0, %v519
        %v655 = vsel %vm653, %v654, %v519
        %v656 = vshrl.u32 %v655, 4
        %v657 = vand.u32 %v655, 15
        %v658 = vsub.s32 0, %v657
        %v659 = vsel %vm653, %v658, %v657
        %vm660 = vcmp.lt.s32.totalorder %v520, 0
        %v661 = vsub.s32 0, %v520
        %v662 = vsel %vm660, %v661, %v520
        %v663 = vshrl.u32 %v662, 4
        %v664 = vand.u32 %v662, 15
        %v665 = vsub.s32 0, %v664
        %v666 = vsel %vm660, %v665, %v664
        %vm667 = vcmp.lt.s32.totalorder %v521, 0
        %v668 = vsub.s32 0, %v521
        %v669 = vsel %vm667, %v668, %v521
        %v670 = vshrl.u32 %v669, 4
        %v671 = vand.u32 %v669, 15
        %v672 = vsub.s32 0, %v671
        %v673 = vsel %vm667, %v672, %v671
        %vm674 = vcmp.lt.s32.totalorder %v522, 0
        %v675 = vsub.s32 0, %v522
        %v676 = vsel %vm674, %v675, %v522
        %v677 = vshrl.u32 %v676, 4
        %v678 = vand.u32 %v676, 15
        %v679 = vsub.s32 0, %v678
        %v680 = vsel %vm674, %v679, %v678
        %vm681 = vcmp.lt.s32.totalorder %v523, 0
        %v682 = vsub.s32 0, %v523
        %v683 = vsel %vm681, %v682, %v523
        %v684 = vshrl.u32 %v683, 4
        %v685 = vand.u32 %v683, 15
        %v686 = vsub.s32 0, %v685
        %v687 = vsel %vm681, %v686, %v685
        %vm688 = vcmp.lt.s32.totalorder %v524, 0
        %v689 = vsub.s32 0, %v524
        %v690 = vsel %vm688, %v689, %v524
        %v691 = vshrl.u32 %v690, 4
        %v692 = vand.u32 %v690, 15
        %v693 = vsub.s32 0, %v692
        %v694 = vsel %vm688, %v693, %v692
        %vm695 = vcmp.lt.s32.totalorder %v525, 0
        %v696 = vsub.s32 0, %v525
        %v697 = vsel %vm695, %v696, %v525
        %v698 = vshrl.u32 %v697, 4
        %v699 = vand.u32 %v697, 15
        %v700 = vsub.s32 0, %v699
        %v701 = vsel %vm695, %v700, %v699
        %vm702 = vcmp.lt.s32.totalorder %v526, 0
        %v703 = vsub.s32 0, %v526
        %v704 = vsel %vm702, %v703, %v526
        %v705 = vshrl.u32 %v704, 4
        %v706 = vand.u32 %v704, 15
        %v707 = vsub.s32 0, %v706
        %v708 = vsel %vm702, %v707, %v706
        %vm709 = vcmp.lt.s32.totalorder %v527, 0
        %v710 = vsub.s32 0, %v527
        %v711 = vsel %vm709, %v710, %v527
        %v712 = vshrl.u32 %v711, 4
        %v713 = vand.u32 %v711, 15
        %v714 = vsub.s32 0, %v713
        %v715 = vsel %vm709, %v714, %v713
        %vm716 = vcmp.lt.s32.totalorder %v528, 0
        %v717 = vsub.s32 0, %v528
        %v718 = vsel %vm716, %v717, %v528
        %v719 = vshrl.u32 %v718, 4
        %v720 = vand.u32 %v718, 15
        %v721 = vsub.s32 0, %v720
        %v722 = vsel %vm716, %v721, %v720
        %vm723 = vcmp.lt.s32.totalorder %v529, 0
        %v724 = vsub.s32 0, %v529
        %v725 = vsel %vm723, %v724, %v529
        %v726 = vshrl.u32 %v725, 4
        %v727 = vand.u32 %v725, 15
        %v728 = vsub.s32 0, %v727
        %v729 = vsel %vm723, %v728, %v727
        %vm730 = vcmp.lt.s32.totalorder %v530, 0
        %v731 = vsub.s32 0, %v530
        %v732 = vsel %vm730, %v731, %v530
        %v733 = vshrl.u32 %v732, 4
        %v734 = vand.u32 %v732, 15
        %v735 = vsub.s32 0, %v734
        %v736 = vsel %vm730, %v735, %v734
        %vm737 = vcmp.lt.s32.totalorder %v531, 0
        %v738 = vsub.s32 0, %v531
        %v739 = vsel %vm737, %v738, %v531
        %v740 = vshrl.u32 %v739, 4
        %v741 = vand.u32 %v739, 15
        %v742 = vsub.s32 0, %v741
        %v743 = vsel %vm737, %v742, %v741
        %vm744 = vcmp.lt.s32.totalorder %v532, 0
        %v745 = vsub.s32 0, %v532
        %v746 = vsel %vm744, %v745, %v532
        %v747 = vshrl.u32 %v746, 4
        %v748 = vand.u32 %v746, 15
        %v749 = vsub.s32 0, %v748
        %v750 = vsel %vm744, %v749, %v748
        %vm751 = vcmp.lt.s32.totalorder %v533, 0
        %v752 = vsub.s32 0, %v533
        %v753 = vsel %vm751, %v752, %v533
        %v754 = vshrl.u32 %v753, 4
        %v755 = vand.u32 %v753, 15
        %v756 = vsub.s32 0, %v755
        %v757 = vsel %vm751, %v756, %v755
        %vm758 = vcmp.ne.s32.totalorder %v540, 0
        %vm759 = vcmp.ne.s32.totalorder %v547, 0
        %vm760 = vcmp.ne.s32.totalorder %v554, 0
        %vm761 = vcmp.ne.s32.totalorder %v561, 0
        %vm762 = vcmp.ne.s32.totalorder %v568, 0
        %vm763 = vcmp.ne.s32.totalorder %v575, 0
        %vm764 = vcmp.ne.s32.totalorder %v582, 0
        %vm765 = vcmp.ne.s32.totalorder %v589, 0
        %vm766 = vcmp.ne.s32.totalorder %v596, 0
        %vm767 = vcmp.ne.s32.totalorder %v603, 0
        %vm768 = vcmp.ne.s32.totalorder %v610, 0
        %vm769 = vcmp.ne.s32.totalorder %v617, 0
        %vm770 = vcmp.ne.s32.totalorder %v624, 0
        %vm771 = vcmp.ne.s32.totalorder %v631, 0
        %vm772 = vcmp.ne.s32.totalorder %v638, 0
        %vm773 = vcmp.ne.s32.totalorder %v645, 0
        %vm774 = vcmp.ne.s32.totalorder %v652, 0
        %vm775 = vcmp.ne.s32.totalorder %v659, 0
        %vm776 = vcmp.ne.s32.totalorder %v666, 0
        %vm777 = vcmp.ne.s32.totalorder %v673, 0
        %vm778 = vcmp.ne.s32.totalorder %v680, 0
        %vm779 = vcmp.ne.s32.totalorder %v687, 0
        %vm780 = vcmp.ne.s32.totalorder %v694, 0
        %vm781 = vcmp.ne.s32.totalorder %v701, 0
        %vm782 = vcmp.ne.s32.totalorder %v708, 0
        %vm783 = vcmp.ne.s32.totalorder %v715, 0
        %vm784 = vcmp.ne.s32.totalorder %v722, 0
        %vm785 = vcmp.ne.s32.totalorder %v729, 0
        %vm786 = vcmp.ne.s32.totalorder %v736, 0
        %vm787 = vcmp.ne.s32.totalorder %v743, 0
        %vm788 = vcmp.ne.s32.totalorder %v750, 0
        %vm789 = vcmp.ne.s32.totalorder %v757, 0
        %vm790 = vcmp.lt.s32.totalorder %v540, 0
        %vm791 = vcmp.lt.s32.totalorder %v547, 0
        %vm792 = vcmp.lt.s32.totalorder %v554, 0
        %vm793 = vcmp.lt.s32.totalorder %v561, 0
        %vm794 = vcmp.lt.s32.totalorder %v568, 0
        %vm795 = vcmp.lt.s32.totalorder %v575, 0
        %vm796 = vcmp.lt.s32.totalorder %v582, 0
        %vm797 = vcmp.lt.s32.totalorder %v589, 0
        %vm798 = vcmp.lt.s32.totalorder %v596, 0
        %vm799 = vcmp.lt.s32.totalorder %v603, 0
        %vm800 = vcmp.lt.s32.totalorder %v610, 0
        %vm801 = vcmp.lt.s32.totalorder %v617, 0
        %vm802 = vcmp.lt.s32.totalorder %v624, 0
        %vm803 = vcmp.lt.s32.totalorder %v631, 0
        %vm804 = vcmp.lt.s32.totalorder %v638, 0
        %vm805 = vcmp.lt.s32.totalorder %v645, 0
        %vm806 = vcmp.lt.s32.totalorder %v652, 0
        %vm807 = vcmp.lt.s32.totalorder %v659, 0
        %vm808 = vcmp.lt.s32.totalorder %v666, 0
        %vm809 = vcmp.lt.s32.totalorder %v673, 0
        %vm810 = vcmp.lt.s32.totalorder %v680, 0
        %vm811 = vcmp.lt.s32.totalorder %v687, 0
        %vm812 = vcmp.lt.s32.totalorder %v694, 0
        %vm813 = vcmp.lt.s32.totalorder %v701, 0
        %vm814 = vcmp.lt.s32.totalorder %v708, 0
        %vm815 = vcmp.lt.s32.totalorder %v715, 0
        %vm816 = vcmp.lt.s32.totalorder %v722, 0
        %vm817 = vcmp.lt.s32.totalorder %v729, 0
        %vm818 = vcmp.lt.s32.totalorder %v736, 0
        %vm819 = vcmp.lt.s32.totalorder %v743, 0
        %vm820 = vcmp.lt.s32.totalorder %v750, 0
        %vm821 = vcmp.lt.s32.totalorder %v757, 0
        %vm822 = vmand %vm790, %vm758
        %vm823 = vmand %vm791, %vm759
        %vm824 = vmand %vm792, %vm760
        %vm825 = vmand %vm793, %vm761
        %vm826 = vmand %vm794, %vm762
        %vm827 = vmand %vm795, %vm763
        %vm828 = vmand %vm796, %vm764
        %vm829 = vmand %vm797, %vm765
        %vm830 = vmand %vm798, %vm766
        %vm831 = vmand %vm799, %vm767
        %vm832 = vmand %vm800, %vm768
        %vm833 = vmand %vm801, %vm769
        %vm834 = vmand %vm802, %vm770
        %vm835 = vmand %vm803, %vm771
        %vm836 = vmand %vm804, %vm772
        %vm837 = vmand %vm805, %vm773
        %vm838 = vmand %vm806, %vm774
        %vm839 = vmand %vm807, %vm775
        %vm840 = vmand %vm808, %vm776
        %vm841 = vmand %vm809, %vm777
        %vm842 = vmand %vm810, %vm778
        %vm843 = vmand %vm811, %vm779
        %vm844 = vmand %vm812, %vm780
        %vm845 = vmand %vm813, %vm781
        %vm846 = vmand %vm814, %vm782
        %vm847 = vmand %vm815, %vm783
        %vm848 = vmand %vm816, %vm784
        %vm849 = vmand %vm817, %vm785
        %vm850 = vmand %vm818, %vm786
        %vm851 = vmand %vm819, %vm787
        %vm852 = vmand %vm820, %vm788
        %vm853 = vmand %vm821, %vm789
        %v854 = vadd.s32 %v540, 16
        %v855 = vadd.s32 %v547, 16
        %v856 = vadd.s32 %v554, 16
        %v857 = vadd.s32 %v561, 16
        %v858 = vadd.s32 %v568, 16
        %v859 = vadd.s32 %v575, 16
        %v860 = vadd.s32 %v582, 16
        %v861 = vadd.s32 %v589, 16
        %v862 = vadd.s32 %v596, 16
        %v863 = vadd.s32 %v603, 16
        %v864 = vadd.s32 %v610, 16
        %v865 = vadd.s32 %v617, 16
        %v866 = vadd.s32 %v624, 16
        %v867 = vadd.s32 %v631, 16
        %v868 = vadd.s32 %v638, 16
        %v869 = vadd.s32 %v645, 16
        %v870 = vadd.s32 %v652, 16
        %v871 = vadd.s32 %v659, 16
        %v872 = vadd.s32 %v666, 16
        %v873 = vadd.s32 %v673, 16
        %v874 = vadd.s32 %v680, 16
        %v875 = vadd.s32 %v687, 16
        %v876 = vadd.s32 %v694, 16
        %v877 = vadd.s32 %v701, 16
        %v878 = vadd.s32 %v708, 16
        %v879 = vadd.s32 %v715, 16
        %v880 = vadd.s32 %v722, 16
        %v881 = vadd.s32 %v729, 16
        %v882 = vadd.s32 %v736, 16
        %v883 = vadd.s32 %v743, 16
        %v884 = vadd.s32 %v750, 16
        %v885 = vadd.s32 %v757, 16
        %v886 = vsel %vm822, %v854, %v540
        %v887 = vsel %vm823, %v855, %v547
        %v888 = vsel %vm824, %v856, %v554
        %v889 = vsel %vm825, %v857, %v561
        %v890 = vsel %vm826, %v858, %v568
        %v891 = vsel %vm827, %v859, %v575
        %v892 = vsel %vm828, %v860, %v582
        %v893 = vsel %vm829, %v861, %v589
        %v894 = vsel %vm830, %v862, %v596
        %v895 = vsel %vm831, %v863, %v603
        %v896 = vsel %vm832, %v864, %v610
        %v897 = vsel %vm833, %v865, %v617
        %v898 = vsel %vm834, %v866, %v624
        %v899 = vsel %vm835, %v867, %v631
        %v900 = vsel %vm836, %v868, %v638
        %v901 = vsel %vm837, %v869, %v645
        %v902 = vsel %vm838, %v870, %v652
        %v903 = vsel %vm839, %v871, %v659
        %v904 = vsel %vm840, %v872, %v666
        %v905 = vsel %vm841, %v873, %v673
        %v906 = vsel %vm842, %v874, %v680
        %v907 = vsel %vm843, %v875, %v687
        %v908 = vsel %vm844, %v876, %v694
        %v909 = vsel %vm845, %v877, %v701
        %v910 = vsel %vm846, %v878, %v708
        %v911 = vsel %vm847, %v879, %v715
        %v912 = vsel %vm848, %v880, %v722
        %v913 = vsel %vm849, %v881, %v729
        %v914 = vsel %vm850, %v882, %v736
        %v915 = vsel %vm851, %v883, %v743
        %v916 = vsel %vm852, %v884, %v750
        %v917 = vsel %vm853, %v885, %v757
        %vm918 = vcmp.gt.s32.totalorder %v886, 0
        %vm919 = vcmp.gt.s32.totalorder %v887, 0
        %vm920 = vcmp.gt.s32.totalorder %v888, 0
        %vm921 = vcmp.gt.s32.totalorder %v889, 0
        %vm922 = vcmp.gt.s32.totalorder %v890, 0
        %vm923 = vcmp.gt.s32.totalorder %v891, 0
        %vm924 = vcmp.gt.s32.totalorder %v892, 0
        %vm925 = vcmp.gt.s32.totalorder %v893, 0
        %vm926 = vcmp.gt.s32.totalorder %v894, 0
        %vm927 = vcmp.gt.s32.totalorder %v895, 0
        %vm928 = vcmp.gt.s32.totalorder %v896, 0
        %vm929 = vcmp.gt.s32.totalorder %v897, 0
        %vm930 = vcmp.gt.s32.totalorder %v898, 0
        %vm931 = vcmp.gt.s32.totalorder %v899, 0
        %vm932 = vcmp.gt.s32.totalorder %v900, 0
        %vm933 = vcmp.gt.s32.totalorder %v901, 0
        %vm934 = vcmp.gt.s32.totalorder %v902, 0
        %vm935 = vcmp.gt.s32.totalorder %v903, 0
        %vm936 = vcmp.gt.s32.totalorder %v904, 0
        %vm937 = vcmp.gt.s32.totalorder %v905, 0
        %vm938 = vcmp.gt.s32.totalorder %v906, 0
        %vm939 = vcmp.gt.s32.totalorder %v907, 0
        %vm940 = vcmp.gt.s32.totalorder %v908, 0
        %vm941 = vcmp.gt.s32.totalorder %v909, 0
        %vm942 = vcmp.gt.s32.totalorder %v910, 0
        %vm943 = vcmp.gt.s32.totalorder %v911, 0
        %vm944 = vcmp.gt.s32.totalorder %v912, 0
        %vm945 = vcmp.gt.s32.totalorder %v913, 0
        %vm946 = vcmp.gt.s32.totalorder %v914, 0
        %vm947 = vcmp.gt.s32.totalorder %v915, 0
        %vm948 = vcmp.gt.s32.totalorder %v916, 0
        %vm949 = vcmp.gt.s32.totalorder %v917, 0
        %vm950 = vcmp.lt.s32.totalorder %v886, 15
        %vm951 = vcmp.lt.s32.totalorder %v887, 15
        %vm952 = vcmp.lt.s32.totalorder %v888, 15
        %vm953 = vcmp.lt.s32.totalorder %v889, 15
        %vm954 = vcmp.lt.s32.totalorder %v890, 15
        %vm955 = vcmp.lt.s32.totalorder %v891, 15
        %vm956 = vcmp.lt.s32.totalorder %v892, 15
        %vm957 = vcmp.lt.s32.totalorder %v893, 15
        %vm958 = vcmp.lt.s32.totalorder %v894, 15
        %vm959 = vcmp.lt.s32.totalorder %v895, 15
        %vm960 = vcmp.lt.s32.totalorder %v896, 15
        %vm961 = vcmp.lt.s32.totalorder %v897, 15
        %vm962 = vcmp.lt.s32.totalorder %v898, 15
        %vm963 = vcmp.lt.s32.totalorder %v899, 15
        %vm964 = vcmp.lt.s32.totalorder %v900, 15
        %vm965 = vcmp.lt.s32.totalorder %v901, 15
        %vm966 = vcmp.lt.s32.totalorder %v902, 15
        %vm967 = vcmp.lt.s32.totalorder %v903, 15
        %vm968 = vcmp.lt.s32.totalorder %v904, 15
        %vm969 = vcmp.lt.s32.totalorder %v905, 15
        %vm970 = vcmp.lt.s32.totalorder %v906, 15
        %vm971 = vcmp.lt.s32.totalorder %v907, 15
        %vm972 = vcmp.lt.s32.totalorder %v908, 15
        %vm973 = vcmp.lt.s32.totalorder %v909, 15
        %vm974 = vcmp.lt.s32.totalorder %v910, 15
        %vm975 = vcmp.lt.s32.totalorder %v911, 15
        %vm976 = vcmp.lt.s32.totalorder %v912, 15
        %vm977 = vcmp.lt.s32.totalorder %v913, 15
        %vm978 = vcmp.lt.s32.totalorder %v914, 15
        %vm979 = vcmp.lt.s32.totalorder %v915, 15
        %vm980 = vcmp.lt.s32.totalorder %v916, 15
        %vm981 = vcmp.lt.s32.totalorder %v917, 15
        %v982 = vld [vmem:[%s437] sm:$0xff]
        %v983 = vld [vmem:[%s437 + $0x8] sm:$0xff]
        %v984 = vld [vmem:[%s437 + $0x10] sm:$0xff]
        %v985 = vld [vmem:[%s437 + $0x18] sm:$0xff]
        %v986 = vld [vmem:[%s437 + $0x20] sm:$0xff]
        %v987 = vld [vmem:[%s437 + $0x28] sm:$0xff]
        %v988 = vld [vmem:[%s437 + $0x30] sm:$0xff]
        %v989 = vld [vmem:[%s437 + $0x38] sm:$0xff]
        %v990 = vld [vmem:[%s437 + $0x40] sm:$0xff]
        %v991 = vld [vmem:[%s437 + $0x48] sm:$0xff]
        %v992 = vld [vmem:[%s437 + $0x50] sm:$0xff]
        %v993 = vld [vmem:[%s437 + $0x58] sm:$0xff]
        %v994 = vld [vmem:[%s437 + $0x60] sm:$0xff]
        %v995 = vld [vmem:[%s437 + $0x68] sm:$0xff]
        %v996 = vld [vmem:[%s437 + $0x70] sm:$0xff]
        %v997 = vld [vmem:[%s437 + $0x78] sm:$0xff]
        %v998 = vld [vmem:[%s437 + $0x80] sm:$0xff]
        %v999 = vld [vmem:[%s437 + $0x88] sm:$0xff]
        %v1000 = vld [vmem:[%s437 + $0x90] sm:$0xff]
        %v1001 = vld [vmem:[%s437 + $0x98] sm:$0xff]
        %v1002 = vld [vmem:[%s437 + $0xa0] sm:$0xff]
        %v1003 = vld [vmem:[%s437 + $0xa8] sm:$0xff]
        %v1004 = vld [vmem:[%s437 + $0xb0] sm:$0xff]
        %v1005 = vld [vmem:[%s437 + $0xb8] sm:$0xff]
        %v1006 = vld [vmem:[%s437 + $0xc0] sm:$0xff]
        %v1007 = vld [vmem:[%s437 + $0xc8] sm:$0xff]
        %v1008 = vld [vmem:[%s437 + $0xd0] sm:$0xff]
        %v1009 = vld [vmem:[%s437 + $0xd8] sm:$0xff]
        %v1010 = vld [vmem:[%s437 + $0xe0] sm:$0xff]
        %v1011 = vld [vmem:[%s437 + $0xe8] sm:$0xff]
        %v1012 = vld [vmem:[%s437 + $0xf0] sm:$0xff]
        %v1013 = vld [vmem:[%s437 + $0xf8] sm:$0xff]
        %v1014 = vld [vmem:[%s1] sm:$0x1]
        %v1015 = vld [vmem:[#allocation7] sm:$0x1]
        %v1016 = vld [vmem:[%s3] sm:$0xff]
        %v1017 = vld [vmem:[%s3 + $0x8] sm:$0xff]
        %v1018 = vld [vmem:[%s3 + $0x10] sm:$0xff]
        %v1019 = vld [vmem:[%s3 + $0x18] sm:$0xff]
        %vm1020 = vcmask 261120
        %v1021 = vsel %vm1020, %v982, 0.0
        %v1022 = vsel %vm1020, %v983, 0.0
        %v1023 = vadd.f32 %v1021, %v1022
        %v1024 = vsel %vm1020, %v984, 0.0
        %v1025 = vadd.f32 %v1023, %v1024
        %v1026 = vsel %vm1020, %v985, 0.0
        %v1027 = vadd.f32 %v1025, %v1026
        %v1028 = vsel %vm1020, %v986, 0.0
        %v1029 = vadd.f32 %v1027, %v1028
        %v1030 = vsel %vm1020, %v987, 0.0
        %v1031 = vadd.f32 %v1029, %v1030
        %v1032 = vsel %vm1020, %v988, 0.0
        %v1033 = vadd.f32 %v1031, %v1032
        %v1034 = vsel %vm1020, %v989, 0.0
        %v1035 = vadd.f32 %v1033, %v1034
        %v1036 = vsel %vm1020, %v990, 0.0
        %v1037 = vadd.f32 %v1035, %v1036
        %v1038 = vsel %vm1020, %v991, 0.0
        %v1039 = vadd.f32 %v1037, %v1038
        %v1040 = vsel %vm1020, %v992, 0.0
        %v1041 = vadd.f32 %v1039, %v1040
        %v1042 = vsel %vm1020, %v993, 0.0
        %v1043 = vadd.f32 %v1041, %v1042
        %v1044 = vsel %vm1020, %v994, 0.0
        %v1045 = vadd.f32 %v1043, %v1044
        %v1046 = vsel %vm1020, %v995, 0.0
        %v1047 = vadd.f32 %v1045, %v1046
        %v1048 = vsel %vm1020, %v996, 0.0
        %v1049 = vadd.f32 %v1047, %v1048
        %v1050 = vsel %vm1020, %v997, 0.0
        %v1051 = vadd.f32 %v1049, %v1050
        %v1052 = vsel %vm1020, %v998, 0.0
        %v1053 = vadd.f32 %v1051, %v1052
        %v1054 = vsel %vm1020, %v999, 0.0
        %v1055 = vadd.f32 %v1053, %v1054
        %v1056 = vsel %vm1020, %v1000, 0.0
        %v1057 = vadd.f32 %v1055, %v1056
        %v1058 = vsel %vm1020, %v1001, 0.0
        %v1059 = vadd.f32 %v1057, %v1058
        %v1060 = vsel %vm1020, %v1002, 0.0
        %v1061 = vadd.f32 %v1059, %v1060
        %v1062 = vsel %vm1020, %v1003, 0.0
        %v1063 = vadd.f32 %v1061, %v1062
        %v1064 = vsel %vm1020, %v1004, 0.0
        %v1065 = vadd.f32 %v1063, %v1064
        %v1066 = vsel %vm1020, %v1005, 0.0
        %v1067 = vadd.f32 %v1065, %v1066
        %v1068 = vsel %vm1020, %v1006, 0.0
        %v1069 = vadd.f32 %v1067, %v1068
        %v1070 = vsel %vm1020, %v1007, 0.0
        %v1071 = vadd.f32 %v1069, %v1070
        %v1072 = vsel %vm1020, %v1008, 0.0
        %v1073 = vadd.f32 %v1071, %v1072
        %v1074 = vsel %vm1020, %v1009, 0.0
        %v1075 = vadd.f32 %v1073, %v1074
        %v1076 = vsel %vm1020, %v1010, 0.0
        %v1077 = vadd.f32 %v1075, %v1076
        %v1078 = vsel %vm1020, %v1011, 0.0
        %v1079 = vadd.f32 %v1077, %v1078
        %v1080 = vsel %vm1020, %v1012, 0.0
        %v1081 = vadd.f32 %v1079, %v1080
        %v1082 = vsel %vm1020, %v1013, 0.0
        %v1083 = vadd.f32 %v1081, %v1082
        %v1084 = vrot.slane %v1083, 4
        %v1085 = vadd.f32 %v1083, %v1084
        %v1086 = vrot.slane %v1085, 2
        %v1087 = vadd.f32 %v1085, %v1086
        %v1088 = vrot.slane %v1087, 1
        %v1089 = vadd.f32 %v1087, %v1088
        %v1090 = vmul.f32 %v1089, 0.00390625
        %v1091 = vmul.f32 %v982, %v982
        %v1092 = vmul.f32 %v983, %v983
        %v1093 = vmul.f32 %v984, %v984
        %v1094 = vmul.f32 %v985, %v985
        %v1095 = vmul.f32 %v986, %v986
        %v1096 = vmul.f32 %v987, %v987
        %v1097 = vmul.f32 %v988, %v988
        %v1098 = vmul.f32 %v989, %v989
        %v1099 = vmul.f32 %v990, %v990
        %v1100 = vmul.f32 %v991, %v991
        %v1101 = vmul.f32 %v992, %v992
        %v1102 = vmul.f32 %v993, %v993
        %v1103 = vmul.f32 %v994, %v994
        %v1104 = vmul.f32 %v995, %v995
        %v1105 = vmul.f32 %v996, %v996
        %v1106 = vmul.f32 %v997, %v997
        %v1107 = vmul.f32 %v998, %v998
        %v1108 = vmul.f32 %v999, %v999
        %v1109 = vmul.f32 %v1000, %v1000
        %v1110 = vmul.f32 %v1001, %v1001
        %v1111 = vmul.f32 %v1002, %v1002
        %v1112 = vmul.f32 %v1003, %v1003
        %v1113 = vmul.f32 %v1004, %v1004
        %v1114 = vmul.f32 %v1005, %v1005
        %v1115 = vmul.f32 %v1006, %v1006
        %v1116 = vmul.f32 %v1007, %v1007
        %v1117 = vmul.f32 %v1008, %v1008
        %v1118 = vmul.f32 %v1009, %v1009
        %v1119 = vmul.f32 %v1010, %v1010
        %v1120 = vmul.f32 %v1011, %v1011
        %v1121 = vmul.f32 %v1012, %v1012
        %v1122 = vmul.f32 %v1013, %v1013
        %v1123 = vsel %vm1020, %v1091, 0.0
        %v1124 = vsel %vm1020, %v1092, 0.0
        %v1125 = vadd.f32 %v1123, %v1124
        %v1126 = vsel %vm1020, %v1093, 0.0
        %v1127 = vadd.f32 %v1125, %v1126
        %v1128 = vsel %vm1020, %v1094, 0.0
        %v1129 = vadd.f32 %v1127, %v1128
        %v1130 = vsel %vm1020, %v1095, 0.0
        %v1131 = vadd.f32 %v1129, %v1130
        %v1132 = vsel %vm1020, %v1096, 0.0
        %v1133 = vadd.f32 %v1131, %v1132
        %v1134 = vsel %vm1020, %v1097, 0.0
        %v1135 = vadd.f32 %v1133, %v1134
        %v1136 = vsel %vm1020, %v1098, 0.0
        %v1137 = vadd.f32 %v1135, %v1136
        %v1138 = vsel %vm1020, %v1099, 0.0
        %v1139 = vadd.f32 %v1137, %v1138
        %v1140 = vsel %vm1020, %v1100, 0.0
        %v1141 = vadd.f32 %v1139, %v1140
        %v1142 = vsel %vm1020, %v1101, 0.0
        %v1143 = vadd.f32 %v1141, %v1142
        %v1144 = vsel %vm1020, %v1102, 0.0
        %v1145 = vadd.f32 %v1143, %v1144
        %v1146 = vsel %vm1020, %v1103, 0.0
        %v1147 = vadd.f32 %v1145, %v1146
        %v1148 = vsel %vm1020, %v1104, 0.0
        %v1149 = vadd.f32 %v1147, %v1148
        %v1150 = vsel %vm1020, %v1105, 0.0
        %v1151 = vadd.f32 %v1149, %v1150
        %v1152 = vsel %vm1020, %v1106, 0.0
        %v1153 = vadd.f32 %v1151, %v1152
        %v1154 = vsel %vm1020, %v1107, 0.0
        %v1155 = vadd.f32 %v1153, %v1154
        %v1156 = vsel %vm1020, %v1108, 0.0
        %v1157 = vadd.f32 %v1155, %v1156
        %v1158 = vsel %vm1020, %v1109, 0.0
        %v1159 = vadd.f32 %v1157, %v1158
        %v1160 = vsel %vm1020, %v1110, 0.0
        %v1161 = vadd.f32 %v1159, %v1160
        %v1162 = vsel %vm1020, %v1111, 0.0
        %v1163 = vadd.f32 %v1161, %v1162
        %v1164 = vsel %vm1020, %v1112, 0.0
        %v1165 = vadd.f32 %v1163, %v1164
        %v1166 = vsel %vm1020, %v1113, 0.0
        %v1167 = vadd.f32 %v1165, %v1166
        %v1168 = vsel %vm1020, %v1114, 0.0
        %v1169 = vadd.f32 %v1167, %v1168
        %v1170 = vsel %vm1020, %v1115, 0.0
        %v1171 = vadd.f32 %v1169, %v1170
        %v1172 = vsel %vm1020, %v1116, 0.0
        %v1173 = vadd.f32 %v1171, %v1172
        %v1174 = vsel %vm1020, %v1117, 0.0
        %v1175 = vadd.f32 %v1173, %v1174
        %v1176 = vsel %vm1020, %v1118, 0.0
        %v1177 = vadd.f32 %v1175, %v1176
        %v1178 = vsel %vm1020, %v1119, 0.0
        %v1179 = vadd.f32 %v1177, %v1178
        %v1180 = vsel %vm1020, %v1120, 0.0
        %v1181 = vadd.f32 %v1179, %v1180
        %v1182 = vsel %vm1020, %v1121, 0.0
        %v1183 = vadd.f32 %v1181, %v1182
        %v1184 = vsel %vm1020, %v1122, 0.0
        %v1185 = vadd.f32 %v1183, %v1184
        %v1186 = vrot.slane %v1185, 4
        %v1187 = vadd.f32 %v1185, %v1186
        %v1188 = vrot.slane %v1187, 2
        %v1189 = vadd.f32 %v1187, %v1188
        %v1190 = vrot.slane %v1189, 1
        %v1191 = vadd.f32 %v1189, %v1190
        %v1192 = vmul.f32 %v1191, 0.00390625
        %v1194 = vsel %vm1020, %v1090, 0
        %1196 = vmatprep.subr.mxu0 0.0
        %1197 = vmatpush1.msra.mxu0 %v1016
        %1198 = vmatprep.subr.mxu0 0.0
        %1199 = vmatpush1.msra.mxu0 %v1017
        %1200 = vmatprep.subr.mxu0 0.0
        %1201 = vmatpush1.msra.mxu0 %v1018
        %1202 = vmatprep.subr.mxu0 0.0
        %1203 = vmatpush1.msra.mxu0 %v1019
        %1204 = vmatprep.subr.mxu0 0.0
        %1205 = vmatpush1.msra.mxu0 0.0
        %1206 = vmatprep.subr.mxu0 0.0
        %1207 = vmatpush1.msra.mxu0 0.0
        %1208 = vmatprep.subr.mxu0 0.0
        %1209 = vmatpush1.msra.mxu0 0.0
        %1210 = vmatprep.subr.mxu0 0.0
        %1211 = vmatpush1.msra.mxu0 0.0
        %1212 = vmatprep.subr.mxu0 0.0
        %1213 = vmatpush1.msra.mxu0 0.0
        %1214 = vmatprep.subr.mxu0 0.0
        %1215 = vmatpush1.msra.mxu0 0.0
        %1216 = vmatprep.subr.mxu0 0.0
        %1217 = vmatpush1.msra.mxu0 0.0
        %1218 = vmatprep.subr.mxu0 0.0
        %1219 = vmatpush1.msra.mxu0 0.0
        %1220 = vmatprep.subr.mxu0 0.0
        %1221 = vmatpush1.msra.mxu0 0.0
        %1222 = vmatprep.subr.mxu0 0.0
        %1223 = vmatpush1.msra.mxu0 0.0
        %1224 = vmatprep.subr.mxu0 0.0
        %1225 = vmatpush1.msra.mxu0 0.0
        %1226 = vmatprep.subr.mxu0 0.0
        %1227 = vmatpush1.msra.mxu0 0.0
        %1228 = vmatprep.subr.mxu0 0.0
        %1229 = vmatpush1.msra.mxu0 0.0
        %1230 = vmatprep.subr.mxu0 0.0
        %1231 = vmatpush1.msra.mxu0 0.0
        %1232 = vmatprep.subr.mxu0 0.0
        %1233 = vmatpush1.msra.mxu0 0.0
        %1234 = vmatprep.subr.mxu0 0.0
        %1235 = vmatpush1.msra.mxu0 0.0
        %1236 = vmatprep.subr.mxu0 0.0
        %1237 = vmatpush1.msra.mxu0 0.0
        %1238 = vmatprep.subr.mxu0 0.0
        %1239 = vmatpush1.msra.mxu0 0.0
        %1240 = vmatprep.subr.mxu0 0.0
        %1241 = vmatpush1.msra.mxu0 0.0
        %1242 = vmatprep.subr.mxu0 0.0
        %1243 = vmatpush1.msra.mxu0 0.0
        %1244 = vmatprep.subr.mxu0 0.0
        %1245 = vmatpush1.msra.mxu0 0.0
        %1246 = vmatprep.subr.mxu0 0.0
        %1247 = vmatpush1.msra.mxu0 0.0
        %1248 = vmatprep.subr.mxu0 0.0
        %1249 = vmatpush1.msra.mxu0 0.0
        %1250 = vmatprep.subr.mxu0 0.0
        %1251 = vmatpush1.msra.mxu0 0.0
        %1252 = vmatprep.subr.mxu0 0.0
        %1253 = vmatpush1.msra.mxu0 0.0
        %1254 = vmatprep.subr.mxu0 0.0
        %1255 = vmatpush1.msra.mxu0 0.0
        %1256 = vmatprep.subr.mxu0 0.0
        %1257 = vmatpush1.msra.mxu0 0.0
        %1258 = vmatprep.subr.mxu0 0.0
        %1259 = vmatpush1.msra.mxu0 0.0
        %1260 = vmatprep.mubr.f32.mxu0 0.0
        %1261 = vmatmul.mubr.f32.gmra.mrb[0].mxu0 %v1194
        %v1262 = vpop.f32.mrb[0].mxu0
        %v1263 = vadd.f32 0.0, %v1262
        %v1264 = vpop.f32.mrb[0].mxu0
        %1265 = vdwg.mxu0
        %v1267 = vsel %vm1020, %v1192, 0
        %1269 = vmatprep.subr.mxu0 0.0
        %1270 = vmatpush1.msra.mxu0 %v1016
        %1271 = vmatprep.subr.mxu0 0.0
        %1272 = vmatpush1.msra.mxu0 %v1017
        %1273 = vmatprep.subr.mxu0 0.0
        %1274 = vmatpush1.msra.mxu0 %v1018
        %1275 = vmatprep.subr.mxu0 0.0
        %1276 = vmatpush1.msra.mxu0 %v1019
        %1277 = vmatprep.subr.mxu0 0.0
        %1278 = vmatpush1.msra.mxu0 0.0
        %1279 = vmatprep.subr.mxu0 0.0
        %1280 = vmatpush1.msra.mxu0 0.0
        %1281 = vmatprep.subr.mxu0 0.0
        %1282 = vmatpush1.msra.mxu0 0.0
        %1283 = vmatprep.subr.mxu0 0.0
        %1284 = vmatpush1.msra.mxu0 0.0
        %1285 = vmatprep.subr.mxu0 0.0
        %1286 = vmatpush1.msra.mxu0 0.0
        %1287 = vmatprep.subr.mxu0 0.0
        %1288 = vmatpush1.msra.mxu0 0.0
        %1289 = vmatprep.subr.mxu0 0.0
        %1290 = vmatpush1.msra.mxu0 0.0
        %1291 = vmatprep.subr.mxu0 0.0
        %1292 = vmatpush1.msra.mxu0 0.0
        %1293 = vmatprep.subr.mxu0 0.0
        %1294 = vmatpush1.msra.mxu0 0.0
        %1295 = vmatprep.subr.mxu0 0.0
        %1296 = vmatpush1.msra.mxu0 0.0
        %1297 = vmatprep.subr.mxu0 0.0
        %1298 = vmatpush1.msra.mxu0 0.0
        %1299 = vmatprep.subr.mxu0 0.0
        %1300 = vmatpush1.msra.mxu0 0.0
        %1301 = vmatprep.subr.mxu0 0.0
        %1302 = vmatpush1.msra.mxu0 0.0
        %1303 = vmatprep.subr.mxu0 0.0
        %1304 = vmatpush1.msra.mxu0 0.0
        %1305 = vmatprep.subr.mxu0 0.0
        %1306 = vmatpush1.msra.mxu0 0.0
        %1307 = vmatprep.subr.mxu0 0.0
        %1308 = vmatpush1.msra.mxu0 0.0
        %1309 = vmatprep.subr.mxu0 0.0
        %1310 = vmatpush1.msra.mxu0 0.0
        %1311 = vmatprep.subr.mxu0 0.0
        %1312 = vmatpush1.msra.mxu0 0.0
        %1313 = vmatprep.subr.mxu0 0.0
        %1314 = vmatpush1.msra.mxu0 0.0
        %1315 = vmatprep.subr.mxu0 0.0
        %1316 = vmatpush1.msra.mxu0 0.0
        %1317 = vmatprep.subr.mxu0 0.0
        %1318 = vmatpush1.msra.mxu0 0.0
        %1319 = vmatprep.subr.mxu0 0.0
        %1320 = vmatpush1.msra.mxu0 0.0
        %1321 = vmatprep.subr.mxu0 0.0
        %1322 = vmatpush1.msra.mxu0 0.0
        %1323 = vmatprep.subr.mxu0 0.0
        %1324 = vmatpush1.msra.mxu0 0.0
        %1325 = vmatprep.subr.mxu0 0.0
        %1326 = vmatpush1.msra.mxu0 0.0
        %1327 = vmatprep.subr.mxu0 0.0
        %1328 = vmatpush1.msra.mxu0 0.0
        %1329 = vmatprep.subr.mxu0 0.0
        %1330 = vmatpush1.msra.mxu0 0.0
        %1331 = vmatprep.subr.mxu0 0.0
        %1332 = vmatpush1.msra.mxu0 0.0
        %1333 = vmatprep.mubr.f32.mxu0 0.0
        %1334 = vmatmul.mubr.f32.gmra.mrb[0].mxu0 %v1267
        %v1335 = vpop.f32.mrb[0].mxu0
        %v1336 = vadd.f32 0.0, %v1335
        %v1337 = vpop.f32.mrb[0].mxu0
        %1338 = vdwg.mxu0
        %v1339 = vmul.f32 %v1263, %v1263
        %v1340 = vsub.f32 %v1336, %v1339
        %v1341 = vadd.f32 %v1340, 1e-05
        %v1342 = vrsqrt.pop %v1341
        %v1343 = vmul.f32 %v1014, %v1342
        %v1344 = vmul.f32 %v1263, %v1343
        %v1345 = vsub.f32 %v1015, %v1344
        %v1347 = vlaneseq
        %v1348 = vshrl.u32 %v1347, 7
        %v1349 = vsub.s32 0, %v1348
        %v1350 = vrot.slane %v1343, %v1349
        %v1352 = vmul.f32 %v982, %v1350
        %v1353 = vmul.f32 %v983, %v1350
        %v1354 = vmul.f32 %v984, %v1350
        %v1355 = vmul.f32 %v985, %v1350
        %v1356 = vmul.f32 %v986, %v1350
        %v1357 = vmul.f32 %v987, %v1350
        %v1358 = vmul.f32 %v988, %v1350
        %v1359 = vmul.f32 %v989, %v1350
        %v1360 = vmul.f32 %v990, %v1350
        %v1361 = vmul.f32 %v991, %v1350
        %v1362 = vmul.f32 %v992, %v1350
        %v1363 = vmul.f32 %v993, %v1350
        %v1364 = vmul.f32 %v994, %v1350
        %v1365 = vmul.f32 %v995, %v1350
        %v1366 = vmul.f32 %v996, %v1350
        %v1367 = vmul.f32 %v997, %v1350
        %v1368 = vmul.f32 %v998, %v1350
        %v1369 = vmul.f32 %v999, %v1350
        %v1370 = vmul.f32 %v1000, %v1350
        %v1371 = vmul.f32 %v1001, %v1350
        %v1372 = vmul.f32 %v1002, %v1350
        %v1373 = vmul.f32 %v1003, %v1350
        %v1374 = vmul.f32 %v1004, %v1350
        %v1375 = vmul.f32 %v1005, %v1350
        %v1376 = vmul.f32 %v1006, %v1350
        %v1377 = vmul.f32 %v1007, %v1350
        %v1378 = vmul.f32 %v1008, %v1350
        %v1379 = vmul.f32 %v1009, %v1350
        %v1380 = vmul.f32 %v1010, %v1350
        %v1381 = vmul.f32 %v1011, %v1350
        %v1382 = vmul.f32 %v1012, %v1350
        %v1383 = vmul.f32 %v1013, %v1350
        %v1385 = vlaneseq
        %v1386 = vshrl.u32 %v1385, 7
        %v1387 = vsub.s32 0, %v1386
        %v1388 = vrot.slane %v1345, %v1387
        %v1390 = vadd.f32 %v1352, %v1388
        %v1391 = vadd.f32 %v1353, %v1388
        %v1392 = vadd.f32 %v1354, %v1388
        %v1393 = vadd.f32 %v1355, %v1388
        %v1394 = vadd.f32 %v1356, %v1388
        %v1395 = vadd.f32 %v1357, %v1388
        %v1396 = vadd.f32 %v1358, %v1388
        %v1397 = vadd.f32 %v1359, %v1388
        %v1398 = vadd.f32 %v1360, %v1388
        %v1399 = vadd.f32 %v1361, %v1388
        %v1400 = vadd.f32 %v1362, %v1388
        %v1401 = vadd.f32 %v1363, %v1388
        %v1402 = vadd.f32 %v1364, %v1388
        %v1403 = vadd.f32 %v1365, %v1388
        %v1404 = vadd.f32 %v1366, %v1388
        %v1405 = vadd.f32 %v1367, %v1388
        %v1406 = vadd.f32 %v1368, %v1388
        %v1407 = vadd.f32 %v1369, %v1388
        %v1408 = vadd.f32 %v1370, %v1388
        %v1409 = vadd.f32 %v1371, %v1388
        %v1410 = vadd.f32 %v1372, %v1388
        %v1411 = vadd.f32 %v1373, %v1388
        %v1412 = vadd.f32 %v1374, %v1388
        %v1413 = vadd.f32 %v1375, %v1388
        %v1414 = vadd.f32 %v1376, %v1388
        %v1415 = vadd.f32 %v1377, %v1388
        %v1416 = vadd.f32 %v1378, %v1388
        %v1417 = vadd.f32 %v1379, %v1388
        %v1418 = vadd.f32 %v1380, %v1388
        %v1419 = vadd.f32 %v1381, %v1388
        %v1420 = vadd.f32 %v1382, %v1388
        %v1421 = vadd.f32 %v1383, %v1388
        %v1422 = vxor.u32 %v1390, 2147483648
        %v1423 = vxor.u32 %v1391, 2147483648
        %v1424 = vxor.u32 %v1392, 2147483648
        %v1425 = vxor.u32 %v1393, 2147483648
        %v1426 = vxor.u32 %v1394, 2147483648
        %v1427 = vxor.u32 %v1395, 2147483648
        %v1428 = vxor.u32 %v1396, 2147483648
        %v1429 = vxor.u32 %v1397, 2147483648
        %v1430 = vxor.u32 %v1398, 2147483648
        %v1431 = vxor.u32 %v1399, 2147483648
        %v1432 = vxor.u32 %v1400, 2147483648
        %v1433 = vxor.u32 %v1401, 2147483648
        %v1434 = vxor.u32 %v1402, 2147483648
        %v1435 = vxor.u32 %v1403, 2147483648
        %v1436 = vxor.u32 %v1404, 2147483648
        %v1437 = vxor.u32 %v1405, 2147483648
        %v1438 = vxor.u32 %v1406, 2147483648
        %v1439 = vxor.u32 %v1407, 2147483648
        %v1440 = vxor.u32 %v1408, 2147483648
        %v1441 = vxor.u32 %v1409, 2147483648
        %v1442 = vxor.u32 %v1410, 2147483648
        %v1443 = vxor.u32 %v1411, 2147483648
        %v1444 = vxor.u32 %v1412, 2147483648
        %v1445 = vxor.u32 %v1413, 2147483648
        %v1446 = vxor.u32 %v1414, 2147483648
        %v1447 = vxor.u32 %v1415, 2147483648
        %v1448 = vxor.u32 %v1416, 2147483648
        %v1449 = vxor.u32 %v1417, 2147483648
        %v1450 = vxor.u32 %v1418, 2147483648
        %v1451 = vxor.u32 %v1419, 2147483648
        %v1452 = vxor.u32 %v1420, 2147483648
        %v1453 = vxor.u32 %v1421, 2147483648
        %v1454 = vmul.f32 %v1422, 1.442695
        %v1455 = vpow.pop %v1454
        %v1456 = vmul.f32 %v1423, 1.442695
        %v1457 = vpow.pop %v1456
        %v1458 = vmul.f32 %v1424, 1.442695
        %v1459 = vpow.pop %v1458
        %v1460 = vmul.f32 %v1425, 1.442695
        %v1461 = vpow.pop %v1460
        %v1462 = vmul.f32 %v1426, 1.442695
        %v1463 = vpow.pop %v1462
        %v1464 = vmul.f32 %v1427, 1.442695
        %v1465 = vpow.pop %v1464
        %v1466 = vmul.f32 %v1428, 1.442695
        %v1467 = vpow.pop %v1466
        %v1468 = vmul.f32 %v1429, 1.442695
        %v1469 = vpow.pop %v1468
        %v1470 = vmul.f32 %v1430, 1.442695
        %v1471 = vpow.pop %v1470
        %v1472 = vmul.f32 %v1431, 1.442695
        %v1473 = vpow.pop %v1472
        %v1474 = vmul.f32 %v1432, 1.442695
        %v1475 = vpow.pop %v1474
        %v1476 = vmul.f32 %v1433, 1.442695
        %v1477 = vpow.pop %v1476
        %v1478 = vmul.f32 %v1434, 1.442695
        %v1479 = vpow.pop %v1478
        %v1480 = vmul.f32 %v1435, 1.442695
        %v1481 = vpow.pop %v1480
        %v1482 = vmul.f32 %v1436, 1.442695
        %v1483 = vpow.pop %v1482
        %v1484 = vmul.f32 %v1437, 1.442695
        %v1485 = vpow.pop %v1484
        %v1486 = vmul.f32 %v1438, 1.442695
        %v1487 = vpow.pop %v1486
        %v1488 = vmul.f32 %v1439, 1.442695
        %v1489 = vpow.pop %v1488
        %v1490 = vmul.f32 %v1440, 1.442695
        %v1491 = vpow.pop %v1490
        %v1492 = vmul.f32 %v1441, 1.442695
        %v1493 = vpow.pop %v1492
        %v1494 = vmul.f32 %v1442, 1.442695
        %v1495 = vpow.pop %v1494
        %v1496 = vmul.f32 %v1443, 1.442695
        %v1497 = vpow.pop %v1496
        %v1498 = vmul.f32 %v1444, 1.442695
        %v1499 = vpow.pop %v1498
        %v1500 = vmul.f32 %v1445, 1.442695
        %v1501 = vpow.pop %v1500
        %v1502 = vmul.f32 %v1446, 1.442695
        %v1503 = vpow.pop %v1502
        %v1504 = vmul.f32 %v1447, 1.442695
        %v1505 = vpow.pop %v1504
        %v1506 = vmul.f32 %v1448, 1.442695
        %v1507 = vpow.pop %v1506
        %v1508 = vmul.f32 %v1449, 1.442695
        %v1509 = vpow.pop %v1508
        %v1510 = vmul.f32 %v1450, 1.442695
        %v1511 = vpow.pop %v1510
        %v1512 = vmul.f32 %v1451, 1.442695
        %v1513 = vpow.pop %v1512
        %v1514 = vmul.f32 %v1452, 1.442695
        %v1515 = vpow.pop %v1514
        %v1516 = vmul.f32 %v1453, 1.442695
        %v1517 = vpow.pop %v1516
        %v1518 = vadd.f32 %v1455, 1.0
        %v1519 = vadd.f32 %v1457, 1.0
        %v1520 = vadd.f32 %v1459, 1.0
        %v1521 = vadd.f32 %v1461, 1.0
        %v1522 = vadd.f32 %v1463, 1.0
        %v1523 = vadd.f32 %v1465, 1.0
        %v1524 = vadd.f32 %v1467, 1.0
        %v1525 = vadd.f32 %v1469, 1.0
        %v1526 = vadd.f32 %v1471, 1.0
        %v1527 = vadd.f32 %v1473, 1.0
        %v1528 = vadd.f32 %v1475, 1.0
        %v1529 = vadd.f32 %v1477, 1.0
        %v1530 = vadd.f32 %v1479, 1.0
        %v1531 = vadd.f32 %v1481, 1.0
        %v1532 = vadd.f32 %v1483, 1.0
        %v1533 = vadd.f32 %v1485, 1.0
        %v1534 = vadd.f32 %v1487, 1.0
        %v1535 = vadd.f32 %v1489, 1.0
        %v1536 = vadd.f32 %v1491, 1.0
        %v1537 = vadd.f32 %v1493, 1.0
        %v1538 = vadd.f32 %v1495, 1.0
        %v1539 = vadd.f32 %v1497, 1.0
        %v1540 = vadd.f32 %v1499, 1.0
        %v1541 = vadd.f32 %v1501, 1.0
        %v1542 = vadd.f32 %v1503, 1.0
        %v1543 = vadd.f32 %v1505, 1.0
        %v1544 = vadd.f32 %v1507, 1.0
        %v1545 = vadd.f32 %v1509, 1.0
        %v1546 = vadd.f32 %v1511, 1.0
        %v1547 = vadd.f32 %v1513, 1.0
        %v1548 = vadd.f32 %v1515, 1.0
        %v1549 = vadd.f32 %v1517, 1.0
        %v1550 = vrcp.pop %v1518
        %v1551 = vmul.f32 1.0, %v1550
        %v1552 = vrcp.pop %v1519
        %v1553 = vmul.f32 1.0, %v1552
        %v1554 = vrcp.pop %v1520
        %v1555 = vmul.f32 1.0, %v1554
        %v1556 = vrcp.pop %v1521
        %v1557 = vmul.f32 1.0, %v1556
        %v1558 = vrcp.pop %v1522
        %v1559 = vmul.f32 1.0, %v1558
        %v1560 = vrcp.pop %v1523
        %v1561 = vmul.f32 1.0, %v1560
        %v1562 = vrcp.pop %v1524
        %v1563 = vmul.f32 1.0, %v1562
        %v1564 = vrcp.pop %v1525
        %v1565 = vmul.f32 1.0, %v1564
        %v1566 = vrcp.pop %v1526
        %v1567 = vmul.f32 1.0, %v1566
        %v1568 = vrcp.pop %v1527
        %v1569 = vmul.f32 1.0, %v1568
        %v1570 = vrcp.pop %v1528
        %v1571 = vmul.f32 1.0, %v1570
        %v1572 = vrcp.pop %v1529
        %v1573 = vmul.f32 1.0, %v1572
        %v1574 = vrcp.pop %v1530
        %v1575 = vmul.f32 1.0, %v1574
        %v1576 = vrcp.pop %v1531
        %v1577 = vmul.f32 1.0, %v1576
        %v1578 = vrcp.pop %v1532
        %v1579 = vmul.f32 1.0, %v1578
        %v1580 = vrcp.pop %v1533
        %v1581 = vmul.f32 1.0, %v1580
        %v1582 = vrcp.pop %v1534
        %v1583 = vmul.f32 1.0, %v1582
        %v1584 = vrcp.pop %v1535
        %v1585 = vmul.f32 1.0, %v1584
        %v1586 = vrcp.pop %v1536
        %v1587 = vmul.f32 1.0, %v1586
        %v1588 = vrcp.pop %v1537
        %v1589 = vmul.f32 1.0, %v1588
        %v1590 = vrcp.pop %v1538
        %v1591 = vmul.f32 1.0, %v1590
        %v1592 = vrcp.pop %v1539
        %v1593 = vmul.f32 1.0, %v1592
        %v1594 = vrcp.pop %v1540
        %v1595 = vmul.f32 1.0, %v1594
        %v1596 = vrcp.pop %v1541
        %v1597 = vmul.f32 1.0, %v1596
        %v1598 = vrcp.pop %v1542
        %v1599 = vmul.f32 1.0, %v1598
        %v1600 = vrcp.pop %v1543
        %v1601 = vmul.f32 1.0, %v1600
        %v1602 = vrcp.pop %v1544
        %v1603 = vmul.f32 1.0, %v1602
        %v1604 = vrcp.pop %v1545
        %v1605 = vmul.f32 1.0, %v1604
        %v1606 = vrcp.pop %v1546
        %v1607 = vmul.f32 1.0, %v1606
        %v1608 = vrcp.pop %v1547
        %v1609 = vmul.f32 1.0, %v1608
        %v1610 = vrcp.pop %v1548
        %v1611 = vmul.f32 1.0, %v1610
        %v1612 = vrcp.pop %v1549
        %v1613 = vmul.f32 1.0, %v1612
        %v1614 = vmul.f32 %v1390, %v1551
        %v1615 = vmul.f32 %v1391, %v1553
        %v1616 = vmul.f32 %v1392, %v1555
        %v1617 = vmul.f32 %v1393, %v1557
        %v1618 = vmul.f32 %v1394, %v1559
        %v1619 = vmul.f32 %v1395, %v1561
        %v1620 = vmul.f32 %v1396, %v1563
        %v1621 = vmul.f32 %v1397, %v1565
        %v1622 = vmul.f32 %v1398, %v1567
        %v1623 = vmul.f32 %v1399, %v1569
        %v1624 = vmul.f32 %v1400, %v1571
        %v1625 = vmul.f32 %v1401, %v1573
        %v1626 = vmul.f32 %v1402, %v1575
        %v1627 = vmul.f32 %v1403, %v1577
        %v1628 = vmul.f32 %v1404, %v1579
        %v1629 = vmul.f32 %v1405, %v1581
        %v1630 = vmul.f32 %v1406, %v1583
        %v1631 = vmul.f32 %v1407, %v1585
        %v1632 = vmul.f32 %v1408, %v1587
        %v1633 = vmul.f32 %v1409, %v1589
        %v1634 = vmul.f32 %v1410, %v1591
        %v1635 = vmul.f32 %v1411, %v1593
        %v1636 = vmul.f32 %v1412, %v1595
        %v1637 = vmul.f32 %v1413, %v1597
        %v1638 = vmul.f32 %v1414, %v1599
        %v1639 = vmul.f32 %v1415, %v1601
        %v1640 = vmul.f32 %v1416, %v1603
        %v1641 = vmul.f32 %v1417, %v1605
        %v1642 = vmul.f32 %v1418, %v1607
        %v1643 = vmul.f32 %v1419, %v1609
        %v1644 = vmul.f32 %v1420, %v1611
        %v1645 = vmul.f32 %v1421, %v1613
        %1646 = vst.msk [vmem:[#allocation2] sm:$0xff] %vm1020, 0.0
        %1647 = vst.msk [vmem:[#allocation2 + $0x8] sm:$0xff] %vm1020, 0.0
        %1648 = vst.msk [vmem:[#allocation2 + $0x10] sm:$0xff] %vm1020, 0.0
        %1649 = vst.msk [vmem:[#allocation2 + $0x118] sm:$0xff] %vm1020, 0.0
        %1650 = vst.msk [vmem:[#allocation2 + $0x120] sm:$0xff] %vm1020, 0.0
        %1651 = vst.msk [vmem:[#allocation2 + $0x128] sm:$0xff] %vm1020, 0.0
        %1652 = vst.msk [vmem:[#allocation2 + $0x18] sm:$0xff] %vm1020, %v1614
        %1653 = vst.msk [vmem:[#allocation2 + $0x20] sm:$0xff] %vm1020, %v1615
        %1654 = vst.msk [vmem:[#allocation2 + $0x28] sm:$0xff] %vm1020, %v1616
        %1655 = vst.msk [vmem:[#allocation2 + $0x30] sm:$0xff] %vm1020, %v1617
        %1656 = vst.msk [vmem:[#allocation2 + $0x38] sm:$0xff] %vm1020, %v1618
        %1657 = vst.msk [vmem:[#allocation2 + $0x40] sm:$0xff] %vm1020, %v1619
        %1658 = vst.msk [vmem:[#allocation2 + $0x48] sm:$0xff] %vm1020, %v1620
        %1659 = vst.msk [vmem:[#allocation2 + $0x50] sm:$0xff] %vm1020, %v1621
        %1660 = vst.msk [vmem:[#allocation2 + $0x58] sm:$0xff] %vm1020, %v1622
        %1661 = vst.msk [vmem:[#allocation2 + $0x60] sm:$0xff] %vm1020, %v1623
        %1662 = vst.msk [vmem:[#allocation2 + $0x68] sm:$0xff] %vm1020, %v1624
        %1663 = vst.msk [vmem:[#allocation2 + $0x70] sm:$0xff] %vm1020, %v1625
        %1664 = vst.msk [vmem:[#allocation2 + $0x78] sm:$0xff] %vm1020, %v1626
        %1665 = vst.msk [vmem:[#allocation2 + $0x80] sm:$0xff] %vm1020, %v1627
        %1666 = vst.msk [vmem:[#allocation2 + $0x88] sm:$0xff] %vm1020, %v1628
        %1667 = vst.msk [vmem:[#allocation2 + $0x90] sm:$0xff] %vm1020, %v1629
        %1668 = vst.msk [vmem:[#allocation2 + $0x98] sm:$0xff] %vm1020, %v1630
        %1669 = vst.msk [vmem:[#allocation2 + $0xa0] sm:$0xff] %vm1020, %v1631
        %1670 = vst.msk [vmem:[#allocation2 + $0xa8] sm:$0xff] %vm1020, %v1632
        %1671 = vst.msk [vmem:[#allocation2 + $0xb0] sm:$0xff] %vm1020, %v1633
        %1672 = vst.msk [vmem:[#allocation2 + $0xb8] sm:$0xff] %vm1020, %v1634
        %1673 = vst.msk [vmem:[#allocation2 + $0xc0] sm:$0xff] %vm1020, %v1635
        %1674 = vst.msk [vmem:[#allocation2 + $0xc8] sm:$0xff] %vm1020, %v1636
        %1675 = vst.msk [vmem:[#allocation2 + $0xd0] sm:$0xff] %vm1020, %v1637
        %1676 = vst.msk [vmem:[#allocation2 + $0xd8] sm:$0xff] %vm1020, %v1638
        %1677 = vst.msk [vmem:[#allocation2 + $0xe0] sm:$0xff] %vm1020, %v1639
        %1678 = vst.msk [vmem:[#allocation2 + $0xe8] sm:$0xff] %vm1020, %v1640
        %1679 = vst.msk [vmem:[#allocation2 + $0xf0] sm:$0xff] %vm1020, %v1641
        %1680 = vst.msk [vmem:[#allocation2 + $0xf8] sm:$0xff] %vm1020, %v1642
        %1681 = vst.msk [vmem:[#allocation2 + $0x100] sm:$0xff] %vm1020, %v1643
        %1682 = vst.msk [vmem:[#allocation2 + $0x108] sm:$0xff] %vm1020, %v1644
        %1683 = vst.msk [vmem:[#allocation2 + $0x110] sm:$0xff] %vm1020, %v1645
        %v1684 = vld [vmem:[#allocation2 + $0x7] sm:$0xff]
        %v1685 = vld [vmem:[#allocation2 + $0xf] sm:$0xff]
        %v1686 = vld [vmem:[#allocation2 + $0x17] sm:$0xff]
        %v1687 = vld [vmem:[#allocation2 + $0x1f] sm:$0xff]
        %v1688 = vld [vmem:[#allocation2 + $0x27] sm:$0xff]
        %v1689 = vld [vmem:[#allocation2 + $0x2f] sm:$0xff]
        %v1690 = vld [vmem:[#allocation2 + $0x37] sm:$0xff]
        %v1691 = vld [vmem:[#allocation2 + $0x3f] sm:$0xff]
        %v1692 = vld [vmem:[#allocation2 + $0x47] sm:$0xff]
        %v1693 = vld [vmem:[#allocation2 + $0x4f] sm:$0xff]
        %v1694 = vld [vmem:[#allocation2 + $0x57] sm:$0xff]
        %v1695 = vld [vmem:[#allocation2 + $0x5f] sm:$0xff]
        %v1696 = vld [vmem:[#allocation2 + $0x67] sm:$0xff]
        %v1697 = vld [vmem:[#allocation2 + $0x6f] sm:$0xff]
        %v1698 = vld [vmem:[#allocation2 + $0x77] sm:$0xff]
        %v1699 = vld [vmem:[#allocation2 + $0x7f] sm:$0xff]
        %v1700 = vld [vmem:[#allocation2 + $0x87] sm:$0xff]
        %v1701 = vld [vmem:[#allocation2 + $0x8f] sm:$0xff]
        %v1702 = vld [vmem:[#allocation2 + $0x97] sm:$0xff]
        %v1703 = vld [vmem:[#allocation2 + $0x9f] sm:$0xff]
        %v1704 = vld [vmem:[#allocation2 + $0xa7] sm:$0xff]
        %v1705 = vld [vmem:[#allocation2 + $0xaf] sm:$0xff]
        %v1706 = vld [vmem:[#allocation2 + $0xb7] sm:$0xff]
        %v1707 = vld [vmem:[#allocation2 + $0xbf] sm:$0xff]
        %v1708 = vld [vmem:[#allocation2 + $0xc7] sm:$0xff]
        %v1709 = vld [vmem:[#allocation2 + $0xcf] sm:$0xff]
        %v1710 = vld [vmem:[#allocation2 + $0xd7] sm:$0xff]
        %v1711 = vld [vmem:[#allocation2 + $0xdf] sm:$0xff]
        %v1712 = vld [vmem:[#allocation2 + $0xe7] sm:$0xff]
        %v1713 = vld [vmem:[#allocation2 + $0xef] sm:$0xff]
        %v1714 = vld [vmem:[#allocation2 + $0xf7] sm:$0xff]
        %v1715 = vld [vmem:[#allocation2 + $0xff] sm:$0xff]
        %v1716 = vsel %vm918, 1, 0
        %v1717 = vsel %vm919, 1, 0
        %v1718 = vsel %vm920, 1, 0
        %v1719 = vsel %vm921, 1, 0
        %v1720 = vsel %vm922, 1, 0
        %v1721 = vsel %vm923, 1, 0
        %v1722 = vsel %vm924, 1, 0
        %v1723 = vsel %vm925, 1, 0
        %v1724 = vsel %vm926, 1, 0
        %v1725 = vsel %vm927, 1, 0
        %v1726 = vsel %vm928, 1, 0
        %v1727 = vsel %vm929, 1, 0
        %v1728 = vsel %vm930, 1, 0
        %v1729 = vsel %vm931, 1, 0
        %v1730 = vsel %vm932, 1, 0
        %v1731 = vsel %vm933, 1, 0
        %v1732 = vsel %vm934, 1, 0
        %v1733 = vsel %vm935, 1, 0
        %v1734 = vsel %vm936, 1, 0
        %v1735 = vsel %vm937, 1, 0
        %v1736 = vsel %vm938, 1, 0
        %v1737 = vsel %vm939, 1, 0
        %v1738 = vsel %vm940, 1, 0
        %v1739 = vsel %vm941, 1, 0
        %v1740 = vsel %vm942, 1, 0
        %v1741 = vsel %vm943, 1, 0
        %v1742 = vsel %vm944, 1, 0
        %v1743 = vsel %vm945, 1, 0
        %v1744 = vsel %vm946, 1, 0
        %v1745 = vsel %vm947, 1, 0
        %v1746 = vsel %vm948, 1, 0
        %v1747 = vsel %vm949, 1, 0
        %vm1748 = vcmp.eq.s32.totalorder %v1716, 1
        %vm1749 = vcmp.eq.s32.totalorder %v1717, 1
        %vm1750 = vcmp.eq.s32.totalorder %v1718, 1
        %vm1751 = vcmp.eq.s32.totalorder %v1719, 1
        %vm1752 = vcmp.eq.s32.totalorder %v1720, 1
        %vm1753 = vcmp.eq.s32.totalorder %v1721, 1
        %vm1754 = vcmp.eq.s32.totalorder %v1722, 1
        %vm1755 = vcmp.eq.s32.totalorder %v1723, 1
        %vm1756 = vcmp.eq.s32.totalorder %v1724, 1
        %vm1757 = vcmp.eq.s32.totalorder %v1725, 1
        %vm1758 = vcmp.eq.s32.totalorder %v1726, 1
        %vm1759 = vcmp.eq.s32.totalorder %v1727, 1
        %vm1760 = vcmp.eq.s32.totalorder %v1728, 1
        %vm1761 = vcmp.eq.s32.totalorder %v1729, 1
        %vm1762 = vcmp.eq.s32.totalorder %v1730, 1
        %vm1763 = vcmp.eq.s32.totalorder %v1731, 1
        %vm1764 = vcmp.eq.s32.totalorder %v1732, 1
        %vm1765 = vcmp.eq.s32.totalorder %v1733, 1
        %vm1766 = vcmp.eq.s32.totalorder %v1734, 1
        %vm1767 = vcmp.eq.s32.totalorder %v1735, 1
        %vm1768 = vcmp.eq.s32.totalorder %v1736, 1
        %vm1769 = vcmp.eq.s32.totalorder %v1737, 1
        %vm1770 = vcmp.eq.s32.totalorder %v1738, 1
        %vm1771 = vcmp.eq.s32.totalorder %v1739, 1
        %vm1772 = vcmp.eq.s32.totalorder %v1740, 1
        %vm1773 = vcmp.eq.s32.totalorder %v1741, 1
        %vm1774 = vcmp.eq.s32.totalorder %v1742, 1
        %vm1775 = vcmp.eq.s32.totalorder %v1743, 1
        %vm1776 = vcmp.eq.s32.totalorder %v1744, 1
        %vm1777 = vcmp.eq.s32.totalorder %v1745, 1
        %vm1778 = vcmp.eq.s32.totalorder %v1746, 1
        %vm1779 = vcmp.eq.s32.totalorder %v1747, 1
        %v1780 = vsel %vm1748, %v1684, 0.0
        %v1781 = vsel %vm1749, %v1685, 0.0
        %v1782 = vsel %vm1750, %v1686, 0.0
        %v1783 = vsel %vm1751, %v1687, 0.0
        %v1784 = vsel %vm1752, %v1688, 0.0
        %v1785 = vsel %vm1753, %v1689, 0.0
        %v1786 = vsel %vm1754, %v1690, 0.0
        %v1787 = vsel %vm1755, %v1691, 0.0
        %v1788 = vsel %vm1756, %v1692, 0.0
        %v1789 = vsel %vm1757, %v1693, 0.0
        %v1790 = vsel %vm1758, %v1694, 0.0
        %v1791 = vsel %vm1759, %v1695, 0.0
        %v1792 = vsel %vm1760, %v1696, 0.0
        %v1793 = vsel %vm1761, %v1697, 0.0
        %v1794 = vsel %vm1762, %v1698, 0.0
        %v1795 = vsel %vm1763, %v1699, 0.0
        %v1796 = vsel %vm1764, %v1700, 0.0
        %v1797 = vsel %vm1765, %v1701, 0.0
        %v1798 = vsel %vm1766, %v1702, 0.0
        %v1799 = vsel %vm1767, %v1703, 0.0
        %v1800 = vsel %vm1768, %v1704, 0.0
        %v1801 = vsel %vm1769, %v1705, 0.0
        %v1802 = vsel %vm1770, %v1706, 0.0
        %v1803 = vsel %vm1771, %v1707, 0.0
        %v1804 = vsel %vm1772, %v1708, 0.0
        %v1805 = vsel %vm1773, %v1709, 0.0
        %v1806 = vsel %vm1774, %v1710, 0.0
        %v1807 = vsel %vm1775, %v1711, 0.0
        %v1808 = vsel %vm1776, %v1712, 0.0
        %v1809 = vsel %vm1777, %v1713, 0.0
        %v1810 = vsel %vm1778, %v1714, 0.0
        %v1811 = vsel %vm1779, %v1715, 0.0
        %v1812 = vpack.c.bf16 %v1781, %v1780
        %v1813 = vpack.c.bf16 %v1783, %v1782
        %v1814 = vpack.c.bf16 %v1785, %v1784
        %v1815 = vpack.c.bf16 %v1787, %v1786
        %v1816 = vpack.c.bf16 %v1789, %v1788
        %v1817 = vpack.c.bf16 %v1791, %v1790
        %v1818 = vpack.c.bf16 %v1793, %v1792
        %v1819 = vpack.c.bf16 %v1795, %v1794
        %v1820 = vpack.c.bf16 %v1797, %v1796
        %v1821 = vpack.c.bf16 %v1799, %v1798
        %v1822 = vpack.c.bf16 %v1801, %v1800
        %v1823 = vpack.c.bf16 %v1803, %v1802
        %v1824 = vpack.c.bf16 %v1805, %v1804
        %v1825 = vpack.c.bf16 %v1807, %v1806
        %v1826 = vpack.c.bf16 %v1809, %v1808
        %v1827 = vpack.c.bf16 %v1811, %v1810
        %v1828 = vld [vmem:[#allocation9] sm:$0xf]
        %v1829 = vld [vmem:[#allocation9 + $0x4] sm:$0xf]
        %v1830 = vld [vmem:[#allocation9 + $0x8] sm:$0xf]
        %v1831 = vld [vmem:[#allocation9 + $0xc] sm:$0xf]
        %v1832 = vld [vmem:[#allocation2 + $0x8] sm:$0xff]
        %v1833 = vld [vmem:[#allocation2 + $0x10] sm:$0xff]
        %v1834 = vld [vmem:[#allocation2 + $0x18] sm:$0xff]
        %v1835 = vld [vmem:[#allocation2 + $0x20] sm:$0xff]
        %v1836 = vld [vmem:[#allocation2 + $0x28] sm:$0xff]
        %v1837 = vld [vmem:[#allocation2 + $0x30] sm:$0xff]
        %v1838 = vld [vmem:[#allocation2 + $0x38] sm:$0xff]
        %v1839 = vld [vmem:[#allocation2 + $0x40] sm:$0xff]
        %v1840 = vld [vmem:[#allocation2 + $0x48] sm:$0xff]
        %v1841 = vld [vmem:[#allocation2 + $0x50] sm:$0xff]
        %v1842 = vld [vmem:[#allocation2 + $0x58] sm:$0xff]
        %v1843 = vld [vmem:[#allocation2 + $0x60] sm:$0xff]
        %v1844 = vld [vmem:[#allocation2 + $0x68] sm:$0xff]
        %v1845 = vld [vmem:[#allocation2 + $0x70] sm:$0xff]
        %v1846 = vld [vmem:[#allocation2 + $0x78] sm:$0xff]
        %v1847 = vld [vmem:[#allocation2 + $0x80] sm:$0xff]
        %v1848 = vld [vmem:[#allocation2 + $0x88] sm:$0xff]
        %v1849 = vld [vmem:[#allocation2 + $0x90] sm:$0xff]
        %v1850 = vld [vmem:[#allocation2 + $0x98] sm:$0xff]
        %v1851 = vld [vmem:[#allocation2 + $0xa0] sm:$0xff]
        %v1852 = vld [vmem:[#allocation2 + $0xa8] sm:$0xff]
        %v1853 = vld [vmem:[#allocation2 + $0xb0] sm:$0xff]
        %v1854 = vld [vmem:[#allocation2 + $0xb8] sm:$0xff]
        %v1855 = vld [vmem:[#allocation2 + $0xc0] sm:$0xff]
        %v1856 = vld [vmem:[#allocation2 + $0xc8] sm:$0xff]
        %v1857 = vld [vmem:[#allocation2 + $0xd0] sm:$0xff]
        %v1858 = vld [vmem:[#allocation2 + $0xd8] sm:$0xff]
        %v1859 = vld [vmem:[#allocation2 + $0xe0] sm:$0xff]
        %v1860 = vld [vmem:[#allocation2 + $0xe8] sm:$0xff]
        %v1861 = vld [vmem:[#allocation2 + $0xf0] sm:$0xff]
        %v1862 = vld [vmem:[#allocation2 + $0xf8] sm:$0xff]
        %v1863 = vld [vmem:[#allocation2 + $0x100] sm:$0xff]
        %v1864 = vpack.c.bf16 %v1833, %v1832
        %v1865 = vpack.c.bf16 %v1835, %v1834
        %v1866 = vpack.c.bf16 %v1837, %v1836
        %v1867 = vpack.c.bf16 %v1839, %v1838
        %v1868 = vpack.c.bf16 %v1841, %v1840
        %v1869 = vpack.c.bf16 %v1843, %v1842
        %v1870 = vpack.c.bf16 %v1845, %v1844
        %v1871 = vpack.c.bf16 %v1847, %v1846
        %v1872 = vpack.c.bf16 %v1849, %v1848
        %v1873 = vpack.c.bf16 %v1851, %v1850
        %v1874 = vpack.c.bf16 %v1853, %v1852
        %v1875 = vpack.c.bf16 %v1855, %v1854
        %v1876 = vpack.c.bf16 %v1857, %v1856
        %v1877 = vpack.c.bf16 %v1859, %v1858
        %v1878 = vpack.c.bf16 %v1861, %v1860
        %v1879 = vpack.c.bf16 %v1863, %v1862
        %s1880 = scalar_lea.vmem [#allocation9], 16
        %v1881 = vld [vmem:[%s1880] sm:$0xf]
        %v1882 = vld [vmem:[%s1880 + $0x4] sm:$0xf]
        %v1883 = vld [vmem:[%s1880 + $0x8] sm:$0xf]
        %v1884 = vld [vmem:[%s1880 + $0xc] sm:$0xf]
        %v1889 = vunpack.c.l.b16 %v1881
        %v1890 = vunpack.c.l.b16 %v1882
        %v1891 = vunpack.c.l.b16 %v1883
        %v1892 = vunpack.c.l.b16 %v1884
        %v1893 = vpack.c.b16 %v1890, %v1889
        %v1894 = vpack.c.b16 %v1892, %v1891
        %v1898 = vsel %vm1020, %v1864, 0
        %v1901 = vsel %vm1020, %v1865, 0
        %v1904 = vsel %vm1020, %v1866, 0
        %v1907 = vsel %vm1020, %v1867, 0
        %v1910 = vsel %vm1020, %v1868, 0
        %v1913 = vsel %vm1020, %v1869, 0
        %v1916 = vsel %vm1020, %v1870, 0
        %v1919 = vsel %vm1020, %v1871, 0
        %v1922 = vsel %vm1020, %v1872, 0
        %v1925 = vsel %vm1020, %v1873, 0
        %v1928 = vsel %vm1020, %v1874, 0
        %v1931 = vsel %vm1020, %v1875, 0
        %v1934 = vsel %vm1020, %v1876, 0
        %v1937 = vsel %vm1020, %v1877, 0
        %v1940 = vsel %vm1020, %v1878, 0
        %v1943 = vsel %vm1020, %v1879, 0
        %1945 = vmatprep.subr.bf16.mxu0 0
        %1946 = vmatpush1.bf16.msra.mxu0 %v1893
        %1947 = vmatprep.subr.bf16.mxu0 0
        %1948 = vmatpush1.bf16.msra.mxu0 %v1894
        %1949 = vmatprep.subr.bf16.mxu0 0
        %1950 = vmatpush1.bf16.msra.mxu0 0
        %1951 = vmatprep.subr.bf16.mxu0 0
        %1952 = vmatpush1.bf16.msra.mxu0 0
        %1953 = vmatprep.subr.bf16.mxu0 0
        %1954 = vmatpush1.bf16.msra.mxu0 0
        %1955 = vmatprep.subr.bf16.mxu0 0
        %1956 = vmatpush1.bf16.msra.mxu0 0
        %1957 = vmatprep.subr.bf16.mxu0 0
        %1958 = vmatpush1.bf16.msra.mxu0 0
        %1959 = vmatprep.subr.bf16.mxu0 0
        %1960 = vmatpush1.bf16.msra.mxu0 0
        %1961 = vmatprep.subr.bf16.mxu0 0
        %1962 = vmatpush1.bf16.msra.mxu0 0
        %1963 = vmatprep.subr.bf16.mxu0 0
        %1964 = vmatpush1.bf16.msra.mxu0 0
        %1965 = vmatprep.subr.bf16.mxu0 0
        %1966 = vmatpush1.bf16.msra.mxu0 0
        %1967 = vmatprep.subr.bf16.mxu0 0
        %1968 = vmatpush1.bf16.msra.mxu0 0
        %1969 = vmatprep.subr.bf16.mxu0 0
        %1970 = vmatpush1.bf16.msra.mxu0 0
        %1971 = vmatprep.subr.bf16.mxu0 0
        %1972 = vmatpush1.bf16.msra.mxu0 0
        %1973 = vmatprep.subr.bf16.mxu0 0
        %1974 = vmatpush1.bf16.msra.mxu0 0
        %1975 = vmatprep.subr.bf16.mxu0 0
        %1976 = vmatpush1.bf16.msra.mxu0 0
        %1977 = vmatprep.mubr.bf16.mxu0 0
        %1978 = vmatmul.mubr.bf16.gmra.mrb[0].mxu0 %v1898
        %v1979 = vpop.f32.mrb[0].mxu0
        %v1980 = vadd.f32 0.0, %v1979
        %v1981 = vpop.f32.mrb[0].mxu0
        %v1982 = vpop.f32.mrb[0].mxu0
        %v1983 = vadd.f32 0.0, %v1982
        %v1984 = vpop.f32.mrb[0].mxu0
        %1985 = vmatprep.mubr.bf16.mxu0 0
        %1986 = vmatmul.mubr.bf16.gmra.mrb[0].mxu0 %v1901
        %v1987 = vpop.f32.mrb[0].mxu0
        %v1988 = vadd.f32 0.0, %v1987
        %v1989 = vpop.f32.mrb[0].mxu0
        %v1990 = vpop.f32.mrb[0].mxu0
        %v1991 = vadd.f32 0.0, %v1990
        %v1992 = vpop.f32.mrb[0].mxu0
        %1993 = vmatprep.mubr.bf16.mxu0 0
        %1994 = vmatmul.mubr.bf16.gmra.mrb[0].mxu0 %v1904
        %v1995 = vpop.f32.mrb[0].mxu0
        %v1996 = vadd.f32 0.0, %v1995
        %v1997 = vpop.f32.mrb[0].mxu0
        %v1998 = vpop.f32.mrb[0].mxu0
        %v1999 = vadd.f32 0.0, %v1998
        %v2000 = vpop.f32.mrb[0].mxu0
        %2001 = vmatprep.mubr.bf16.mxu0 0
        %2002 = vmatmul.mubr.bf16.gmra.mrb[0].mxu0 %v1907
        %v2003 = vpop.f32.mrb[0].mxu0
        %v2004 = vadd.f32 0.0, %v2003
        %v2005 = vpop.f32.mrb[0].mxu0
        %v2006 = vpop.f32.mrb[0].mxu0
        %v2007 = vadd.f32 0.0, %v2006
        %v2008 = vpop.f32.mrb[0].mxu0
        %2009 = vmatprep.mubr.bf16.mxu0 0
        %2010 = vmatmul.mubr.bf16.gmra.mrb[0].mxu0 %v1910
        %v2011 = vpop.f32.mrb[0].mxu0
        %v2012 = vadd.f32 0.0, %v2011
        %v2013 = vpop.f32.mrb[0].mxu0
        %v2014 = vpop.f32.mrb[0].mxu0
        %v2015 = vadd.f32 0.0, %v2014
        %v2016 = vpop.f32.mrb[0].mxu0
        %2017 = vmatprep.mubr.bf16.mxu0 0
        %2018 = vmatmul.mubr.bf16.gmra.mrb[0].mxu0 %v1913
        %v2019 = vpop.f32.mrb[0].mxu0
        %v2020 = vadd.f32 0.0, %v2019
        %v2021 = vpop.f32.mrb[0].mxu0
        %v2022 = vpop.f32.mrb[0].mxu0
        %v2023 = vadd.f32 0.0, %v2022
        %v2024 = vpop.f32.mrb[0].mxu0
        %2025 = vmatprep.mubr.bf16.mxu0 0
        %2026 = vmatmul.mubr.bf16.gmra.mrb[0].mxu0 %v1916
        %v2027 = vpop.f32.mrb[0].mxu0
        %v2028 = vadd.f32 0.0, %v2027
        %v2029 = vpop.f32.mrb[0].mxu0
        %v2030 = vpop.f32.mrb[0].mxu0
        %v2031 = vadd.f32 0.0, %v2030
        %v2032 = vpop.f32.mrb[0].mxu0
        %2033 = vmatprep.mubr.bf16.mxu0 0
        %2034 = vmatmul.mubr.bf16.gmra.mrb[0].mxu0 %v1919
        %v2035 = vpop.f32.mrb[0].mxu0
        %v2036 = vadd.f32 0.0, %v2035
        %v2037 = vpop.f32.mrb[0].mxu0
        %v2038 = vpop.f32.mrb[0].mxu0
        %v2039 = vadd.f32 0.0, %v2038
        %v2040 = vpop.f32.mrb[0].mxu0
        %2041 = vmatprep.mubr.bf16.mxu0 0
        %2042 = vmatmul.mubr.bf16.gmra.mrb[0].mxu0 %v1922
        %v2043 = vpop.f32.mrb[0].mxu0
        %v2044 = vadd.f32 0.0, %v2043
        %v2045 = vpop.f32.mrb[0].mxu0
        %v2046 = vpop.f32.mrb[0].mxu0
        %v2047 = vadd.f32 0.0, %v2046
        %v2048 = vpop.f32.mrb[0].mxu0
        %2049 = vmatprep.mubr.bf16.mxu0 0
        %2050 = vmatmul.mubr.bf16.gmra.mrb[0].mxu0 %v1925
        %v2051 = vpop.f32.mrb[0].mxu0
        %v2052 = vadd.f32 0.0, %v2051
        %v2053 = vpop.f32.mrb[0].mxu0
        %v2054 = vpop.f32.mrb[0].mxu0
        %v2055 = vadd.f32 0.0, %v2054
        %v2056 = vpop.f32.mrb[0].mxu0
        %2057 = vmatprep.mubr.bf16.mxu0 0
        %2058 = vmatmul.mubr.bf16.gmra.mrb[0].mxu0 %v1928
        %v2059 = vpop.f32.mrb[0].mxu0
        %v2060 = vadd.f32 0.0, %v2059
        %v2061 = vpop.f32.mrb[0].mxu0
        %v2062 = vpop.f32.mrb[0].mxu0
        %v2063 = vadd.f32 0.0, %v2062
        %v2064 = vpop.f32.mrb[0].mxu0
        %2065 = vmatprep.mubr.bf16.mxu0 0
        %2066 = vmatmul.mubr.bf16.gmra.mrb[0].mxu0 %v1931
        %v2067 = vpop.f32.mrb[0].mxu0
        %v2068 = vadd.f32 0.0, %v2067
        %v2069 = vpop.f32.mrb[0].mxu0
        %v2070 = vpop.f32.mrb[0].mxu0
        %v2071 = vadd.f32 0.0, %v2070
        %v2072 = vpop.f32.mrb[0].mxu0
        %2073 = vmatprep.mubr.bf16.mxu0 0
        %2074 = vmatmul.mubr.bf16.gmra.mrb[0].mxu0 %v1934
        %v2075 = vpop.f32.mrb[0].mxu0
        %v2076 = vadd.f32 0.0, %v2075
        %v2077 = vpop.f32.mrb[0].mxu0
        %v2078 = vpop.f32.mrb[0].mxu0
        %v2079 = vadd.f32 0.0, %v2078
        %v2080 = vpop.f32.mrb[0].mxu0
        %2081 = vmatprep.mubr.bf16.mxu0 0
        %2082 = vmatmul.mubr.bf16.gmra.mrb[0].mxu0 %v1937
        %v2083 = vpop.f32.mrb[0].mxu0
        %v2084 = vadd.f32 0.0, %v2083
        %v2085 = vpop.f32.mrb[0].mxu0
        %v2086 = vpop.f32.mrb[0].mxu0
        %v2087 = vadd.f32 0.0, %v2086
        %v2088 = vpop.f32.mrb[0].mxu0
        %2089 = vmatprep.mubr.bf16.mxu0 0
        %2090 = vmatmul.mubr.bf16.gmra.mrb[0].mxu0 %v1940
        %v2091 = vpop.f32.mrb[0].mxu0
        %v2092 = vadd.f32 0.0, %v2091
        %v2093 = vpop.f32.mrb[0].mxu0
        %v2094 = vpop.f32.mrb[0].mxu0
        %v2095 = vadd.f32 0.0, %v2094
        %v2096 = vpop.f32.mrb[0].mxu0
        %2097 = vmatprep.mubr.bf16.mxu0 0
        %2098 = vmatmul.mubr.bf16.gmra.mrb[0].mxu0 %v1943
        %v2099 = vpop.f32.mrb[0].mxu0
        %v2100 = vadd.f32 0.0, %v2099
        %v2101 = vpop.f32.mrb[0].mxu0
        %v2102 = vpop.f32.mrb[0].mxu0
        %v2103 = vadd.f32 0.0, %v2102
        %v2104 = vpop.f32.mrb[0].mxu0
        %2105 = vdwg.mxu0
        %v2110 = vunpack.c.l.b16 %v1828
        %v2111 = vunpack.c.l.b16 %v1829
        %v2112 = vunpack.c.l.b16 %v1830
        %v2113 = vunpack.c.l.b16 %v1831
        %v2114 = vpack.c.b16 %v2111, %v2110
        %v2115 = vpack.c.b16 %v2113, %v2112
        %v2119 = vsel %vm1020, %v1812, 0
        %v2122 = vsel %vm1020, %v1813, 0
        %v2125 = vsel %vm1020, %v1814, 0
        %v2128 = vsel %vm1020, %v1815, 0
        %v2131 = vsel %vm1020, %v1816, 0
        %v2134 = vsel %vm1020, %v1817, 0
        %v2137 = vsel %vm1020, %v1818, 0
        %v2140 = vsel %vm1020, %v1819, 0
        %v2143 = vsel %vm1020, %v1820, 0
        %v2146 = vsel %vm1020, %v1821, 0
        %v2149 = vsel %vm1020, %v1822, 0
        %v2152 = vsel %vm1020, %v1823, 0
        %v2155 = vsel %vm1020, %v1824, 0
        %v2158 = vsel %vm1020, %v1825, 0
        %v2161 = vsel %vm1020, %v1826, 0
        %v2164 = vsel %vm1020, %v1827, 0
        %2166 = vmatprep.subr.bf16.mxu0 0
        %2167 = vmatpush1.bf16.msra.mxu0 %v2114
        %2168 = vmatprep.subr.bf16.mxu0 0
        %2169 = vmatpush1.bf16.msra.mxu0 %v2115
        %2170 = vmatprep.subr.bf16.mxu0 0
        %2171 = vmatpush1.bf16.msra.mxu0 0
        %2172 = vmatprep.subr.bf16.mxu0 0
        %2173 = vmatpush1.bf16.msra.mxu0 0
        %2174 = vmatprep.subr.bf16.mxu0 0
        %2175 = vmatpush1.bf16.msra.mxu0 0
        %2176 = vmatprep.subr.bf16.mxu0 0
        %2177 = vmatpush1.bf16.msra.mxu0 0
        %2178 = vmatprep.subr.bf16.mxu0 0
        %2179 = vmatpush1.bf16.msra.mxu0 0
        %2180 = vmatprep.subr.bf16.mxu0 0
        %2181 = vmatpush1.bf16.msra.mxu0 0
        %2182 = vmatprep.subr.bf16.mxu0 0
        %2183 = vmatpush1.bf16.msra.mxu0 0
        %2184 = vmatprep.subr.bf16.mxu0 0
        %2185 = vmatpush1.bf16.msra.mxu0 0
        %2186 = vmatprep.subr.bf16.mxu0 0
        %2187 = vmatpush1.bf16.msra.mxu0 0
        %2188 = vmatprep.subr.bf16.mxu0 0
        %2189 = vmatpush1.bf16.msra.mxu0 0
        %2190 = vmatprep.subr.bf16.mxu0 0
        %2191 = vmatpush1.bf16.msra.mxu0 0
        %2192 = vmatprep.subr.bf16.mxu0 0
        %2193 = vmatpush1.bf16.msra.mxu0 0
        %2194 = vmatprep.subr.bf16.mxu0 0
        %2195 = vmatpush1.bf16.msra.mxu0 0
        %2196 = vmatprep.subr.bf16.mxu0 0
        %2197 = vmatpush1.bf16.msra.mxu0 0
        %2198 = vmatprep.mubr.bf16.mxu0 0
        %2199 = vmatmul.mubr.bf16.gmra.mrb[0].mxu0 %v2119
        %v2200 = vpop.f32.mrb[0].mxu0
        %v2201 = vadd.f32 %v1980, %v2200
        %v2202 = vpop.f32.mrb[0].mxu0
        %v2203 = vpop.f32.mrb[0].mxu0
        %v2204 = vadd.f32 %v1983, %v2203
        %v2205 = vpop.f32.mrb[0].mxu0
        %2206 = vmatprep.mubr.bf16.mxu0 0
        %2207 = vmatmul.mubr.bf16.gmra.mrb[0].mxu0 %v2122
        %v2208 = vpop.f32.mrb[0].mxu0
        %v2209 = vadd.f32 %v1988, %v2208
        %v2210 = vpop.f32.mrb[0].mxu0
        %v2211 = vpop.f32.mrb[0].mxu0
        %v2212 = vadd.f32 %v1991, %v2211
        %v2213 = vpop.f32.mrb[0].mxu0
        %2214 = vmatprep.mubr.bf16.mxu0 0
        %2215 = vmatmul.mubr.bf16.gmra.mrb[0].mxu0 %v2125
        %v2216 = vpop.f32.mrb[0].mxu0
        %v2217 = vadd.f32 %v1996, %v2216
        %v2218 = vpop.f32.mrb[0].mxu0
        %v2219 = vpop.f32.mrb[0].mxu0
        %v2220 = vadd.f32 %v1999, %v2219
        %v2221 = vpop.f32.mrb[0].mxu0
        %2222 = vmatprep.mubr.bf16.mxu0 0
        %2223 = vmatmul.mubr.bf16.gmra.mrb[0].mxu0 %v2128
        %v2224 = vpop.f32.mrb[0].mxu0
        %v2225 = vadd.f32 %v2004, %v2224
        %v2226 = vpop.f32.mrb[0].mxu0
        %v2227 = vpop.f32.mrb[0].mxu0
        %v2228 = vadd.f32 %v2007, %v2227
        %v2229 = vpop.f32.mrb[0].mxu0
        %2230 = vmatprep.mubr.bf16.mxu0 0
        %2231 = vmatmul.mubr.bf16.gmra.mrb[0].mxu0 %v2131
        %v2232 = vpop.f32.mrb[0].mxu0
        %v2233 = vadd.f32 %v2012, %v2232
        %v2234 = vpop.f32.mrb[0].mxu0
        %v2235 = vpop.f32.mrb[0].mxu0
        %v2236 = vadd.f32 %v2015, %v2235
        %v2237 = vpop.f32.mrb[0].mxu0
        %2238 = vmatprep.mubr.bf16.mxu0 0
        %2239 = vmatmul.mubr.bf16.gmra.mrb[0].mxu0 %v2134
        %v2240 = vpop.f32.mrb[0].mxu0
        %v2241 = vadd.f32 %v2020, %v2240
        %v2242 = vpop.f32.mrb[0].mxu0
        %v2243 = vpop.f32.mrb[0].mxu0
        %v2244 = vadd.f32 %v2023, %v2243
        %v2245 = vpop.f32.mrb[0].mxu0
        %2246 = vmatprep.mubr.bf16.mxu0 0
        %2247 = vmatmul.mubr.bf16.gmra.mrb[0].mxu0 %v2137
        %v2248 = vpop.f32.mrb[0].mxu0
        %v2249 = vadd.f32 %v2028, %v2248
        %v2250 = vpop.f32.mrb[0].mxu0
        %v2251 = vpop.f32.mrb[0].mxu0
        %v2252 = vadd.f32 %v2031, %v2251
        %v2253 = vpop.f32.mrb[0].mxu0
        %2254 = vmatprep.mubr.bf16.mxu0 0
        %2255 = vmatmul.mubr.bf16.gmra.mrb[0].mxu0 %v2140
        %v2256 = vpop.f32.mrb[0].mxu0
        %v2257 = vadd.f32 %v2036, %v2256
        %v2258 = vpop.f32.mrb[0].mxu0
        %v2259 = vpop.f32.mrb[0].mxu0
        %v2260 = vadd.f32 %v2039, %v2259
        %v2261 = vpop.f32.mrb[0].mxu0
        %2262 = vmatprep.mubr.bf16.mxu0 0
        %2263 = vmatmul.mubr.bf16.gmra.mrb[0].mxu0 %v2143
        %v2264 = vpop.f32.mrb[0].mxu0
        %v2265 = vadd.f32 %v2044, %v2264
        %v2266 = vpop.f32.mrb[0].mxu0
        %v2267 = vpop.f32.mrb[0].mxu0
        %v2268 = vadd.f32 %v2047, %v2267
        %v2269 = vpop.f32.mrb[0].mxu0
        %2270 = vmatprep.mubr.bf16.mxu0 0
        %2271 = vmatmul.mubr.bf16.gmra.mrb[0].mxu0 %v2146
        %v2272 = vpop.f32.mrb[0].mxu0
        %v2273 = vadd.f32 %v2052, %v2272
        %v2274 = vpop.f32.mrb[0].mxu0
        %v2275 = vpop.f32.mrb[0].mxu0
        %v2276 = vadd.f32 %v2055, %v2275
        %v2277 = vpop.f32.mrb[0].mxu0
        %2278 = vmatprep.mubr.bf16.mxu0 0
        %2279 = vmatmul.mubr.bf16.gmra.mrb[0].mxu0 %v2149
        %v2280 = vpop.f32.mrb[0].mxu0
        %v2281 = vadd.f32 %v2060, %v2280
        %v2282 = vpop.f32.mrb[0].mxu0
        %v2283 = vpop.f32.mrb[0].mxu0
        %v2284 = vadd.f32 %v2063, %v2283
        %v2285 = vpop.f32.mrb[0].mxu0
        %2286 = vmatprep.mubr.bf16.mxu0 0
        %2287 = vmatmul.mubr.bf16.gmra.mrb[0].mxu0 %v2152
        %v2288 = vpop.f32.mrb[0].mxu0
        %v2289 = vadd.f32 %v2068, %v2288
        %v2290 = vpop.f32.mrb[0].mxu0
        %v2291 = vpop.f32.mrb[0].mxu0
        %v2292 = vadd.f32 %v2071, %v2291
        %v2293 = vpop.f32.mrb[0].mxu0
        %2294 = vmatprep.mubr.bf16.mxu0 0
        %2295 = vmatmul.mubr.bf16.gmra.mrb[0].mxu0 %v2155
        %v2296 = vpop.f32.mrb[0].mxu0
        %v2297 = vadd.f32 %v2076, %v2296
        %v2298 = vpop.f32.mrb[0].mxu0
        %v2299 = vpop.f32.mrb[0].mxu0
        %v2300 = vadd.f32 %v2079, %v2299
        %v2301 = vpop.f32.mrb[0].mxu0
        %2302 = vmatprep.mubr.bf16.mxu0 0
        %2303 = vmatmul.mubr.bf16.gmra.mrb[0].mxu0 %v2158
        %v2304 = vpop.f32.mrb[0].mxu0
        %v2305 = vadd.f32 %v2084, %v2304
        %v2306 = vpop.f32.mrb[0].mxu0
        %v2307 = vpop.f32.mrb[0].mxu0
        %v2308 = vadd.f32 %v2087, %v2307
        %v2309 = vpop.f32.mrb[0].mxu0
        %2310 = vmatprep.mubr.bf16.mxu0 0
        %2311 = vmatmul.mubr.bf16.gmra.mrb[0].mxu0 %v2161
        %v2312 = vpop.f32.mrb[0].mxu0
        %v2313 = vadd.f32 %v2092, %v2312
        %v2314 = vpop.f32.mrb[0].mxu0
        %v2315 = vpop.f32.mrb[0].mxu0
        %v2316 = vadd.f32 %v2095, %v2315
        %v2317 = vpop.f32.mrb[0].mxu0
        %2318 = vmatprep.mubr.bf16.mxu0 0
        %2319 = vmatmul.mubr.bf16.gmra.mrb[0].mxu0 %v2164
        %v2320 = vpop.f32.mrb[0].mxu0
        %v2321 = vadd.f32 %v2100, %v2320
        %v2322 = vpop.f32.mrb[0].mxu0
        %v2323 = vpop.f32.mrb[0].mxu0
        %v2324 = vadd.f32 %v2103, %v2323
        %v2325 = vpop.f32.mrb[0].mxu0
        %2326 = vdwg.mxu0
        %v2327 = vld [vmem:[#allocation2 + $0x9] sm:$0xff]
        %v2328 = vld [vmem:[#allocation2 + $0x11] sm:$0xff]
        %v2329 = vld [vmem:[#allocation2 + $0x19] sm:$0xff]
        %v2330 = vld [vmem:[#allocation2 + $0x21] sm:$0xff]
        %v2331 = vld [vmem:[#allocation2 + $0x29] sm:$0xff]
        %v2332 = vld [vmem:[#allocation2 + $0x31] sm:$0xff]
        %v2333 = vld [vmem:[#allocation2 + $0x39] sm:$0xff]
        %v2334 = vld [vmem:[#allocation2 + $0x41] sm:$0xff]
        %v2335 = vld [vmem:[#allocation2 + $0x49] sm:$0xff]
        %v2336 = vld [vmem:[#allocation2 + $0x51] sm:$0xff]
        %v2337 = vld [vmem:[#allocation2 + $0x59] sm:$0xff]
        %v2338 = vld [vmem:[#allocation2 + $0x61] sm:$0xff]
        %v2339 = vld [vmem:[#allocation2 + $0x69] sm:$0xff]
        %v2340 = vld [vmem:[#allocation2 + $0x71] sm:$0xff]
        %v2341 = vld [vmem:[#allocation2 + $0x79] sm:$0xff]
        %v2342 = vld [vmem:[#allocation2 + $0x81] sm:$0xff]
        %v2343 = vld [vmem:[#allocation2 + $0x89] sm:$0xff]
        %v2344 = vld [vmem:[#allocation2 + $0x91] sm:$0xff]
        %v2345 = vld [vmem:[#allocation2 + $0x99] sm:$0xff]
        %v2346 = vld [vmem:[#allocation2 + $0xa1] sm:$0xff]
        %v2347 = vld [vmem:[#allocation2 + $0xa9] sm:$0xff]
        %v2348 = vld [vmem:[#allocation2 + $0xb1] sm:$0xff]
        %v2349 = vld [vmem:[#allocation2 + $0xb9] sm:$0xff]
        %v2350 = vld [vmem:[#allocation2 + $0xc1] sm:$0xff]
        %v2351 = vld [vmem:[#allocation2 + $0xc9] sm:$0xff]
        %v2352 = vld [vmem:[#allocation2 + $0xd1] sm:$0xff]
        %v2353 = vld [vmem:[#allocation2 + $0xd9] sm:$0xff]
        %v2354 = vld [vmem:[#allocation2 + $0xe1] sm:$0xff]
        %v2355 = vld [vmem:[#allocation2 + $0xe9] sm:$0xff]
        %v2356 = vld [vmem:[#allocation2 + $0xf1] sm:$0xff]
        %v2357 = vld [vmem:[#allocation2 + $0xf9] sm:$0xff]
        %v2358 = vld [vmem:[#allocation2 + $0x101] sm:$0xff]
        %v2359 = vsel %vm950, 1, 0
        %v2360 = vsel %vm951, 1, 0
        %v2361 = vsel %vm952, 1, 0
        %v2362 = vsel %vm953, 1, 0
        %v2363 = vsel %vm954, 1, 0
        %v2364 = vsel %vm955, 1, 0
        %v2365 = vsel %vm956, 1, 0
        %v2366 = vsel %vm957, 1, 0
        %v2367 = vsel %vm958, 1, 0
        %v2368 = vsel %vm959, 1, 0
        %v2369 = vsel %vm960, 1, 0
        %v2370 = vsel %vm961, 1, 0
        %v2371 = vsel %vm962, 1, 0
        %v2372 = vsel %vm963, 1, 0
        %v2373 = vsel %vm964, 1, 0
        %v2374 = vsel %vm965, 1, 0
        %v2375 = vsel %vm966, 1, 0
        %v2376 = vsel %vm967, 1, 0
        %v2377 = vsel %vm968, 1, 0
        %v2378 = vsel %vm969, 1, 0
        %v2379 = vsel %vm970, 1, 0
        %v2380 = vsel %vm971, 1, 0
        %v2381 = vsel %vm972, 1, 0
        %v2382 = vsel %vm973, 1, 0
        %v2383 = vsel %vm974, 1, 0
        %v2384 = vsel %vm975, 1, 0
        %v2385 = vsel %vm976, 1, 0
        %v2386 = vsel %vm977, 1, 0
        %v2387 = vsel %vm978, 1, 0
        %v2388 = vsel %vm979, 1, 0
        %v2389 = vsel %vm980, 1, 0
        %v2390 = vsel %vm981, 1, 0
        %vm2391 = vcmp.eq.s32.totalorder %v2359, 1
        %vm2392 = vcmp.eq.s32.totalorder %v2360, 1
        %vm2393 = vcmp.eq.s32.totalorder %v2361, 1
        %vm2394 = vcmp.eq.s32.totalorder %v2362, 1
        %vm2395 = vcmp.eq.s32.totalorder %v2363, 1
        %vm2396 = vcmp.eq.s32.totalorder %v2364, 1
        %vm2397 = vcmp.eq.s32.totalorder %v2365, 1
        %vm2398 = vcmp.eq.s32.totalorder %v2366, 1
        %vm2399 = vcmp.eq.s32.totalorder %v2367, 1
        %vm2400 = vcmp.eq.s32.totalorder %v2368, 1
        %vm2401 = vcmp.eq.s32.totalorder %v2369, 1
        %vm2402 = vcmp.eq.s32.totalorder %v2370, 1
        %vm2403 = vcmp.eq.s32.totalorder %v2371, 1
        %vm2404 = vcmp.eq.s32.totalorder %v2372, 1
        %vm2405 = vcmp.eq.s32.totalorder %v2373, 1
        %vm2406 = vcmp.eq.s32.totalorder %v2374, 1
        %vm2407 = vcmp.eq.s32.totalorder %v2375, 1
        %vm2408 = vcmp.eq.s32.totalorder %v2376, 1
        %vm2409 = vcmp.eq.s32.totalorder %v2377, 1
        %vm2410 = vcmp.eq.s32.totalorder %v2378, 1
        %vm2411 = vcmp.eq.s32.totalorder %v2379, 1
        %vm2412 = vcmp.eq.s32.totalorder %v2380, 1
        %vm2413 = vcmp.eq.s32.totalorder %v2381, 1
        %vm2414 = vcmp.eq.s32.totalorder %v2382, 1
        %vm2415 = vcmp.eq.s32.totalorder %v2383, 1
        %vm2416 = vcmp.eq.s32.totalorder %v2384, 1
        %vm2417 = vcmp.eq.s32.totalorder %v2385, 1
        %vm2418 = vcmp.eq.s32.totalorder %v2386, 1
        %vm2419 = vcmp.eq.s32.totalorder %v2387, 1
        %vm2420 = vcmp.eq.s32.totalorder %v2388, 1
        %vm2421 = vcmp.eq.s32.totalorder %v2389, 1
        %vm2422 = vcmp.eq.s32.totalorder %v2390, 1
        %v2423 = vsel %vm2391, %v2327, 0.0
        %v2424 = vsel %vm2392, %v2328, 0.0
        %v2425 = vsel %vm2393, %v2329, 0.0
        %v2426 = vsel %vm2394, %v2330, 0.0
        %v2427 = vsel %vm2395, %v2331, 0.0
        %v2428 = vsel %vm2396, %v2332, 0.0
        %v2429 = vsel %vm2397, %v2333, 0.0
        %v2430 = vsel %vm2398, %v2334, 0.0
        %v2431 = vsel %vm2399, %v2335, 0.0
        %v2432 = vsel %vm2400, %v2336, 0.0
        %v2433 = vsel %vm2401, %v2337, 0.0
        %v2434 = vsel %vm2402, %v2338, 0.0
        %v2435 = vsel %vm2403, %v2339, 0.0
        %v2436 = vsel %vm2404, %v2340, 0.0
        %v2437 = vsel %vm2405, %v2341, 0.0
        %v2438 = vsel %vm2406, %v2342, 0.0
        %v2439 = vsel %vm2407, %v2343, 0.0
        %v2440 = vsel %vm2408, %v2344, 0.0
        %v2441 = vsel %vm2409, %v2345, 0.0
        %v2442 = vsel %vm2410, %v2346, 0.0
        %v2443 = vsel %vm2411, %v2347, 0.0
        %v2444 = vsel %vm2412, %v2348, 0.0
        %v2445 = vsel %vm2413, %v2349, 0.0
        %v2446 = vsel %vm2414, %v2350, 0.0
        %v2447 = vsel %vm2415, %v2351, 0.0
        %v2448 = vsel %vm2416, %v2352, 0.0
        %v2449 = vsel %vm2417, %v2353, 0.0
        %v2450 = vsel %vm2418, %v2354, 0.0
        %v2451 = vsel %vm2419, %v2355, 0.0
        %v2452 = vsel %vm2420, %v2356, 0.0
        %v2453 = vsel %vm2421, %v2357, 0.0
        %v2454 = vsel %vm2422, %v2358, 0.0
        %v2455 = vpack.c.bf16 %v2424, %v2423
        %v2456 = vpack.c.bf16 %v2426, %v2425
        %v2457 = vpack.c.bf16 %v2428, %v2427
        %v2458 = vpack.c.bf16 %v2430, %v2429
        %v2459 = vpack.c.bf16 %v2432, %v2431
        %v2460 = vpack.c.bf16 %v2434, %v2433
        %v2461 = vpack.c.bf16 %v2436, %v2435
        %v2462 = vpack.c.bf16 %v2438, %v2437
        %v2463 = vpack.c.bf16 %v2440, %v2439
        %v2464 = vpack.c.bf16 %v2442, %v2441
        %v2465 = vpack.c.bf16 %v2444, %v2443
        %v2466 = vpack.c.bf16 %v2446, %v2445
        %v2467 = vpack.c.bf16 %v2448, %v2447
        %v2468 = vpack.c.bf16 %v2450, %v2449
        %v2469 = vpack.c.bf16 %v2452, %v2451
        %v2470 = vpack.c.bf16 %v2454, %v2453
        %s2471 = scalar_lea.vmem [#allocation9], 32
        %v2472 = vld [vmem:[%s2471] sm:$0xf]
        %v2473 = vld [vmem:[%s2471 + $0x4] sm:$0xf]
        %v2474 = vld [vmem:[%s2471 + $0x8] sm:$0xf]
        %v2475 = vld [vmem:[%s2471 + $0xc] sm:$0xf]
        %v2480 = vunpack.c.l.b16 %v2472
        %v2481 = vunpack.c.l.b16 %v2473
        %v2482 = vunpack.c.l.b16 %v2474
        %v2483 = vunpack.c.l.b16 %v2475
        %v2484 = vpack.c.b16 %v2481, %v2480
        %v2485 = vpack.c.b16 %v2483, %v2482
        %v2489 = vsel %vm1020, %v2455, 0
        %v2492 = vsel %vm1020, %v2456, 0
        %v2495 = vsel %vm1020, %v2457, 0
        %v2498 = vsel %vm1020, %v2458, 0
        %v2501 = vsel %vm1020, %v2459, 0
        %v2504 = vsel %vm1020, %v2460, 0
        %v2507 = vsel %vm1020, %v2461, 0
        %v2510 = vsel %vm1020, %v2462, 0
        %v2513 = vsel %vm1020, %v2463, 0
        %v2516 = vsel %vm1020, %v2464, 0
        %v2519 = vsel %vm1020, %v2465, 0
        %v2522 = vsel %vm1020, %v2466, 0
        %v2525 = vsel %vm1020, %v2467, 0
        %v2528 = vsel %vm1020, %v2468, 0
        %v2531 = vsel %vm1020, %v2469, 0
        %v2534 = vsel %vm1020, %v2470, 0
        %2536 = vmatprep.subr.bf16.mxu0 0
        %2537 = vmatpush1.bf16.msra.mxu0 %v2484
        %2538 = vmatprep.subr.bf16.mxu0 0
        %2539 = vmatpush1.bf16.msra.mxu0 %v2485
        %2540 = vmatprep.subr.bf16.mxu0 0
        %2541 = vmatpush1.bf16.msra.mxu0 0
        %2542 = vmatprep.subr.bf16.mxu0 0
        %2543 = vmatpush1.bf16.msra.mxu0 0
        %2544 = vmatprep.subr.bf16.mxu0 0
        %2545 = vmatpush1.bf16.msra.mxu0 0
        %2546 = vmatprep.subr.bf16.mxu0 0
        %2547 = vmatpush1.bf16.msra.mxu0 0
        %2548 = vmatprep.subr.bf16.mxu0 0
        %2549 = vmatpush1.bf16.msra.mxu0 0
        %2550 = vmatprep.subr.bf16.mxu0 0
        %2551 = vmatpush1.bf16.msra.mxu0 0
        %2552 = vmatprep.subr.bf16.mxu0 0
        %2553 = vmatpush1.bf16.msra.mxu0 0
        %2554 = vmatprep.subr.bf16.mxu0 0
        %2555 = vmatpush1.bf16.msra.mxu0 0
        %2556 = vmatprep.subr.bf16.mxu0 0
        %2557 = vmatpush1.bf16.msra.mxu0 0
        %2558 = vmatprep.subr.bf16.mxu0 0
        %2559 = vmatpush1.bf16.msra.mxu0 0
        %2560 = vmatprep.subr.bf16.mxu0 0
        %2561 = vmatpush1.bf16.msra.mxu0 0
        %2562 = vmatprep.subr.bf16.mxu0 0
        %2563 = vmatpush1.bf16.msra.mxu0 0
        %2564 = vmatprep.subr.bf16.mxu0 0
        %2565 = vmatpush1.bf16.msra.mxu0 0
        %2566 = vmatprep.subr.bf16.mxu0 0
        %2567 = vmatpush1.bf16.msra.mxu0 0
        %2568 = vmatprep.mubr.bf16.mxu0 0
        %2569 = vmatmul.mubr.bf16.gmra.mrb[0].mxu0 %v2489
        %v2570 = vpop.f32.mrb[0].mxu0
        %v2571 = vadd.f32 0.0, %v2570
        %v2572 = vpop.f32.mrb[0].mxu0
        %v2573 = vpop.f32.mrb[0].mxu0
        %v2574 = vadd.f32 0.0, %v2573
        %v2575 = vpop.f32.mrb[0].mxu0
        %2576 = vmatprep.mubr.bf16.mxu0 0
        %2577 = vmatmul.mubr.bf16.gmra.mrb[0].mxu0 %v2492
        %v2578 = vpop.f32.mrb[0].mxu0
        %v2579 = vadd.f32 0.0, %v2578
        %v2580 = vpop.f32.mrb[0].mxu0
        %v2581 = vpop.f32.mrb[0].mxu0
        %v2582 = vadd.f32 0.0, %v2581
        %v2583 = vpop.f32.mrb[0].mxu0
        %2584 = vmatprep.mubr.bf16.mxu0 0
        %2585 = vmatmul.mubr.bf16.gmra.mrb[0].mxu0 %v2495
        %v2586 = vpop.f32.mrb[0].mxu0
        %v2587 = vadd.f32 0.0, %v2586
        %v2588 = vpop.f32.mrb[0].mxu0
        %v2589 = vpop.f32.mrb[0].mxu0
        %v2590 = vadd.f32 0.0, %v2589
        %v2591 = vpop.f32.mrb[0].mxu0
        %2592 = vmatprep.mubr.bf16.mxu0 0
        %2593 = vmatmul.mubr.bf16.gmra.mrb[0].mxu0 %v2498
        %v2594 = vpop.f32.mrb[0].mxu0
        %v2595 = vadd.f32 0.0, %v2594
        %v2596 = vpop.f32.mrb[0].mxu0
        %v2597 = vpop.f32.mrb[0].mxu0
        %v2598 = vadd.f32 0.0, %v2597
        %v2599 = vpop.f32.mrb[0].mxu0
        %2600 = vmatprep.mubr.bf16.mxu0 0
        %2601 = vmatmul.mubr.bf16.gmra.mrb[0].mxu0 %v2501
        %v2602 = vpop.f32.mrb[0].mxu0
        %v2603 = vadd.f32 0.0, %v2602
        %v2604 = vpop.f32.mrb[0].mxu0
        %v2605 = vpop.f32.mrb[0].mxu0
        %v2606 = vadd.f32 0.0, %v2605
        %v2607 = vpop.f32.mrb[0].mxu0
        %2608 = vmatprep.mubr.bf16.mxu0 0
        %2609 = vmatmul.mubr.bf16.gmra.mrb[0].mxu0 %v2504
        %v2610 = vpop.f32.mrb[0].mxu0
        %v2611 = vadd.f32 0.0, %v2610
        %v2612 = vpop.f32.mrb[0].mxu0
        %v2613 = vpop.f32.mrb[0].mxu0
        %v2614 = vadd.f32 0.0, %v2613
        %v2615 = vpop.f32.mrb[0].mxu0
        %2616 = vmatprep.mubr.bf16.mxu0 0
        %2617 = vmatmul.mubr.bf16.gmra.mrb[0].mxu0 %v2507
        %v2618 = vpop.f32.mrb[0].mxu0
        %v2619 = vadd.f32 0.0, %v2618
        %v2620 = vpop.f32.mrb[0].mxu0
        %v2621 = vpop.f32.mrb[0].mxu0
        %v2622 = vadd.f32 0.0, %v2621
        %v2623 = vpop.f32.mrb[0].mxu0
        %2624 = vmatprep.mubr.bf16.mxu0 0
        %2625 = vmatmul.mubr.bf16.gmra.mrb[0].mxu0 %v2510
        %v2626 = vpop.f32.mrb[0].mxu0
        %v2627 = vadd.f32 0.0, %v2626
        %v2628 = vpop.f32.mrb[0].mxu0
        %v2629 = vpop.f32.mrb[0].mxu0
        %v2630 = vadd.f32 0.0, %v2629
        %v2631 = vpop.f32.mrb[0].mxu0
        %2632 = vmatprep.mubr.bf16.mxu0 0
        %2633 = vmatmul.mubr.bf16.gmra.mrb[0].mxu0 %v2513
        %v2634 = vpop.f32.mrb[0].mxu0
        %v2635 = vadd.f32 0.0, %v2634
        %v2636 = vpop.f32.mrb[0].mxu0
        %v2637 = vpop.f32.mrb[0].mxu0
        %v2638 = vadd.f32 0.0, %v2637
        %v2639 = vpop.f32.mrb[0].mxu0
        %2640 = vmatprep.mubr.bf16.mxu0 0
        %2641 = vmatmul.mubr.bf16.gmra.mrb[0].mxu0 %v2516
        %v2642 = vpop.f32.mrb[0].mxu0
        %v2643 = vadd.f32 0.0, %v2642
        %v2644 = vpop.f32.mrb[0].mxu0
        %v2645 = vpop.f32.mrb[0].mxu0
        %v2646 = vadd.f32 0.0, %v2645
        %v2647 = vpop.f32.mrb[0].mxu0
        %2648 = vmatprep.mubr.bf16.mxu0 0
        %2649 = vmatmul.mubr.bf16.gmra.mrb[0].mxu0 %v2519
        %v2650 = vpop.f32.mrb[0].mxu0
        %v2651 = vadd.f32 0.0, %v2650
        %v2652 = vpop.f32.mrb[0].mxu0
        %v2653 = vpop.f32.mrb[0].mxu0
        %v2654 = vadd.f32 0.0, %v2653
        %v2655 = vpop.f32.mrb[0].mxu0
        %2656 = vmatprep.mubr.bf16.mxu0 0
        %2657 = vmatmul.mubr.bf16.gmra.mrb[0].mxu0 %v2522
        %v2658 = vpop.f32.mrb[0].mxu0
        %v2659 = vadd.f32 0.0, %v2658
        %v2660 = vpop.f32.mrb[0].mxu0
        %v2661 = vpop.f32.mrb[0].mxu0
        %v2662 = vadd.f32 0.0, %v2661
        %v2663 = vpop.f32.mrb[0].mxu0
        %2664 = vmatprep.mubr.bf16.mxu0 0
        %2665 = vmatmul.mubr.bf16.gmra.mrb[0].mxu0 %v2525
        %v2666 = vpop.f32.mrb[0].mxu0
        %v2667 = vadd.f32 0.0, %v2666
        %v2668 = vpop.f32.mrb[0].mxu0
        %v2669 = vpop.f32.mrb[0].mxu0
        %v2670 = vadd.f32 0.0, %v2669
        %v2671 = vpop.f32.mrb[0].mxu0
        %2672 = vmatprep.mubr.bf16.mxu0 0
        %2673 = vmatmul.mubr.bf16.gmra.mrb[0].mxu0 %v2528
        %v2674 = vpop.f32.mrb[0].mxu0
        %v2675 = vadd.f32 0.0, %v2674
        %v2676 = vpop.f32.mrb[0].mxu0
        %v2677 = vpop.f32.mrb[0].mxu0
        %v2678 = vadd.f32 0.0, %v2677
        %v2679 = vpop.f32.mrb[0].mxu0
        %2680 = vmatprep.mubr.bf16.mxu0 0
        %2681 = vmatmul.mubr.bf16.gmra.mrb[0].mxu0 %v2531
        %v2682 = vpop.f32.mrb[0].mxu0
        %v2683 = vadd.f32 0.0, %v2682
        %v2684 = vpop.f32.mrb[0].mxu0
        %v2685 = vpop.f32.mrb[0].mxu0
        %v2686 = vadd.f32 0.0, %v2685
        %v2687 = vpop.f32.mrb[0].mxu0
        %2688 = vmatprep.mubr.bf16.mxu0 0
        %2689 = vmatmul.mubr.bf16.gmra.mrb[0].mxu0 %v2534
        %v2690 = vpop.f32.mrb[0].mxu0
        %v2691 = vadd.f32 0.0, %v2690
        %v2692 = vpop.f32.mrb[0].mxu0
        %v2693 = vpop.f32.mrb[0].mxu0
        %v2694 = vadd.f32 0.0, %v2693
        %v2695 = vpop.f32.mrb[0].mxu0
        %2696 = vdwg.mxu0
        %v2697 = vadd.f32 %v2201, %v2571
        %v2698 = vadd.f32 %v2204, %v2574
        %v2699 = vadd.f32 %v2209, %v2579
        %v2700 = vadd.f32 %v2212, %v2582
        %v2701 = vadd.f32 %v2217, %v2587
        %v2702 = vadd.f32 %v2220, %v2590
        %v2703 = vadd.f32 %v2225, %v2595
        %v2704 = vadd.f32 %v2228, %v2598
        %v2705 = vadd.f32 %v2233, %v2603
        %v2706 = vadd.f32 %v2236, %v2606
        %v2707 = vadd.f32 %v2241, %v2611
        %v2708 = vadd.f32 %v2244, %v2614
        %v2709 = vadd.f32 %v2249, %v2619
        %v2710 = vadd.f32 %v2252, %v2622
        %v2711 = vadd.f32 %v2257, %v2627
        %v2712 = vadd.f32 %v2260, %v2630
        %v2713 = vadd.f32 %v2265, %v2635
        %v2714 = vadd.f32 %v2268, %v2638
        %v2715 = vadd.f32 %v2273, %v2643
        %v2716 = vadd.f32 %v2276, %v2646
        %v2717 = vadd.f32 %v2281, %v2651
        %v2718 = vadd.f32 %v2284, %v2654
        %v2719 = vadd.f32 %v2289, %v2659
        %v2720 = vadd.f32 %v2292, %v2662
        %v2721 = vadd.f32 %v2297, %v2667
        %v2722 = vadd.f32 %v2300, %v2670
        %v2723 = vadd.f32 %v2305, %v2675
        %v2724 = vadd.f32 %v2308, %v2678
        %v2725 = vadd.f32 %v2313, %v2683
        %v2726 = vadd.f32 %v2316, %v2686
        %v2727 = vadd.f32 %v2321, %v2691
        %v2728 = vadd.f32 %v2324, %v2694
        %v2729 = vld [vmem:[#allocation2 + $0x17] sm:$0xff]
        %v2730 = vld [vmem:[#allocation2 + $0x1f] sm:$0xff]
        %v2731 = vld [vmem:[#allocation2 + $0x27] sm:$0xff]
        %v2732 = vld [vmem:[#allocation2 + $0x2f] sm:$0xff]
        %v2733 = vld [vmem:[#allocation2 + $0x37] sm:$0xff]
        %v2734 = vld [vmem:[#allocation2 + $0x3f] sm:$0xff]
        %v2735 = vld [vmem:[#allocation2 + $0x47] sm:$0xff]
        %v2736 = vld [vmem:[#allocation2 + $0x4f] sm:$0xff]
        %v2737 = vld [vmem:[#allocation2 + $0x57] sm:$0xff]
        %v2738 = vld [vmem:[#allocation2 + $0x5f] sm:$0xff]
        %v2739 = vld [vmem:[#allocation2 + $0x67] sm:$0xff]
        %v2740 = vld [vmem:[#allocation2 + $0x6f] sm:$0xff]
        %v2741 = vld [vmem:[#allocation2 + $0x77] sm:$0xff]
        %v2742 = vld [vmem:[#allocation2 + $0x7f] sm:$0xff]
        %v2743 = vld [vmem:[#allocation2 + $0x87] sm:$0xff]
        %v2744 = vld [vmem:[#allocation2 + $0x8f] sm:$0xff]
        %v2745 = vld [vmem:[#allocation2 + $0x97] sm:$0xff]
        %v2746 = vld [vmem:[#allocation2 + $0x9f] sm:$0xff]
        %v2747 = vld [vmem:[#allocation2 + $0xa7] sm:$0xff]
        %v2748 = vld [vmem:[#allocation2 + $0xaf] sm:$0xff]
        %v2749 = vld [vmem:[#allocation2 + $0xb7] sm:$0xff]
        %v2750 = vld [vmem:[#allocation2 + $0xbf] sm:$0xff]
        %v2751 = vld [vmem:[#allocation2 + $0xc7] sm:$0xff]
        %v2752 = vld [vmem:[#allocation2 + $0xcf] sm:$0xff]
        %v2753 = vld [vmem:[#allocation2 + $0xd7] sm:$0xff]
        %v2754 = vld [vmem:[#allocation2 + $0xdf] sm:$0xff]
        %v2755 = vld [vmem:[#allocation2 + $0xe7] sm:$0xff]
        %v2756 = vld [vmem:[#allocation2 + $0xef] sm:$0xff]
        %v2757 = vld [vmem:[#allocation2 + $0xf7] sm:$0xff]
        %v2758 = vld [vmem:[#allocation2 + $0xff] sm:$0xff]
        %v2759 = vld [vmem:[#allocation2 + $0x107] sm:$0xff]
        %v2760 = vld [vmem:[#allocation2 + $0x10f] sm:$0xff]
        %v2761 = vsel %vm1748, %v2729, 0.0
        %v2762 = vsel %vm1749, %v2730, 0.0
        %v2763 = vsel %vm1750, %v2731, 0.0
        %v2764 = vsel %vm1751, %v2732, 0.0
        %v2765 = vsel %vm1752, %v2733, 0.0
        %v2766 = vsel %vm1753, %v2734, 0.0
        %v2767 = vsel %vm1754, %v2735, 0.0
        %v2768 = vsel %vm1755, %v2736, 0.0
        %v2769 = vsel %vm1756, %v2737, 0.0
        %v2770 = vsel %vm1757, %v2738, 0.0
        %v2771 = vsel %vm1758, %v2739, 0.0
        %v2772 = vsel %vm1759, %v2740, 0.0
        %v2773 = vsel %vm1760, %v2741, 0.0
        %v2774 = vsel %vm1761, %v2742, 0.0
        %v2775 = vsel %vm1762, %v2743, 0.0
        %v2776 = vsel %vm1763, %v2744, 0.0
        %v2777 = vsel %vm1764, %v2745, 0.0
        %v2778 = vsel %vm1765, %v2746, 0.0
        %v2779 = vsel %vm1766, %v2747, 0.0
        %v2780 = vsel %vm1767, %v2748, 0.0
        %v2781 = vsel %vm1768, %v2749, 0.0
        %v2782 = vsel %vm1769, %v2750, 0.0
        %v2783 = vsel %vm1770, %v2751, 0.0
        %v2784 = vsel %vm1771, %v2752, 0.0
        %v2785 = vsel %vm1772, %v2753, 0.0
        %v2786 = vsel %vm1773, %v2754, 0.0
        %v2787 = vsel %vm1774, %v2755, 0.0
        %v2788 = vsel %vm1775, %v2756, 0.0
        %v2789 = vsel %vm1776, %v2757, 0.0
        %v2790 = vsel %vm1777, %v2758, 0.0
        %v2791 = vsel %vm1778, %v2759, 0.0
        %v2792 = vsel %vm1779, %v2760, 0.0
        %v2793 = vpack.c.bf16 %v2762, %v2761
        %v2794 = vpack.c.bf16 %v2764, %v2763
        %v2795 = vpack.c.bf16 %v2766, %v2765
        %v2796 = vpack.c.bf16 %v2768, %v2767
        %v2797 = vpack.c.bf16 %v2770, %v2769
        %v2798 = vpack.c.bf16 %v2772, %v2771
        %v2799 = vpack.c.bf16 %v2774, %v2773
        %v2800 = vpack.c.bf16 %v2776, %v2775
        %v2801 = vpack.c.bf16 %v2778, %v2777
        %v2802 = vpack.c.bf16 %v2780, %v2779
        %v2803 = vpack.c.bf16 %v2782, %v2781
        %v2804 = vpack.c.bf16 %v2784, %v2783
        %v2805 = vpack.c.bf16 %v2786, %v2785
        %v2806 = vpack.c.bf16 %v2788, %v2787
        %v2807 = vpack.c.bf16 %v2790, %v2789
        %v2808 = vpack.c.bf16 %v2792, %v2791
        %s2809 = scalar_lea.vmem [#allocation9], 48
        %v2810 = vld [vmem:[%s2809] sm:$0xf]
        %v2811 = vld [vmem:[%s2809 + $0x4] sm:$0xf]
        %v2812 = vld [vmem:[%s2809 + $0x8] sm:$0xf]
        %v2813 = vld [vmem:[%s2809 + $0xc] sm:$0xf]
        %v2818 = vunpack.c.l.b16 %v2810
        %v2819 = vunpack.c.l.b16 %v2811
        %v2820 = vunpack.c.l.b16 %v2812
        %v2821 = vunpack.c.l.b16 %v2813
        %v2822 = vpack.c.b16 %v2819, %v2818
        %v2823 = vpack.c.b16 %v2821, %v2820
        %v2827 = vsel %vm1020, %v2793, 0
        %v2830 = vsel %vm1020, %v2794, 0
        %v2833 = vsel %vm1020, %v2795, 0
        %v2836 = vsel %vm1020, %v2796, 0
        %v2839 = vsel %vm1020, %v2797, 0
        %v2842 = vsel %vm1020, %v2798, 0
        %v2845 = vsel %vm1020, %v2799, 0
        %v2848 = vsel %vm1020, %v2800, 0
        %v2851 = vsel %vm1020, %v2801, 0
        %v2854 = vsel %vm1020, %v2802, 0
        %v2857 = vsel %vm1020, %v2803, 0
        %v2860 = vsel %vm1020, %v2804, 0
        %v2863 = vsel %vm1020, %v2805, 0
        %v2866 = vsel %vm1020, %v2806, 0
        %v2869 = vsel %vm1020, %v2807, 0
        %v2872 = vsel %vm1020, %v2808, 0
        %2874 = vmatprep.subr.bf16.mxu0 0
        %2875 = vmatpush1.bf16.msra.mxu0 %v2822
        %2876 = vmatprep.subr.bf16.mxu0 0
        %2877 = vmatpush1.bf16.msra.mxu0 %v2823
        %2878 = vmatprep.subr.bf16.mxu0 0
        %2879 = vmatpush1.bf16.msra.mxu0 0
        %2880 = vmatprep.subr.bf16.mxu0 0
        %2881 = vmatpush1.bf16.msra.mxu0 0
        %2882 = vmatprep.subr.bf16.mxu0 0
        %2883 = vmatpush1.bf16.msra.mxu0 0
        %2884 = vmatprep.subr.bf16.mxu0 0
        %2885 = vmatpush1.bf16.msra.mxu0 0
        %2886 = vmatprep.subr.bf16.mxu0 0
        %2887 = vmatpush1.bf16.msra.mxu0 0
        %2888 = vmatprep.subr.bf16.mxu0 0
        %2889 = vmatpush1.bf16.msra.mxu0 0
        %2890 = vmatprep.subr.bf16.mxu0 0
        %2891 = vmatpush1.bf16.msra.mxu0 0
        %2892 = vmatprep.subr.bf16.mxu0 0
        %2893 = vmatpush1.bf16.msra.mxu0 0
        %2894 = vmatprep.subr.bf16.mxu0 0
        %2895 = vmatpush1.bf16.msra.mxu0 0
        %2896 = vmatprep.subr.bf16.mxu0 0
        %2897 = vmatpush1.bf16.msra.mxu0 0
        %2898 = vmatprep.subr.bf16.mxu0 0
        %2899 = vmatpush1.bf16.msra.mxu0 0
        %2900 = vmatprep.subr.bf16.mxu0 0
        %2901 = vmatpush1.bf16.msra.mxu0 0
        %2902 = vmatprep.subr.bf16.mxu0 0
        %2903 = vmatpush1.bf16.msra.mxu0 0
        %2904 = vmatprep.subr.bf16.mxu0 0
        %2905 = vmatpush1.bf16.msra.mxu0 0
        %2906 = vmatprep.mubr.bf16.mxu0 0
        %2907 = vmatmul.mubr.bf16.gmra.mrb[0].mxu0 %v2827
        %v2908 = vpop.f32.mrb[0].mxu0
        %v2909 = vadd.f32 0.0, %v2908
        %v2910 = vpop.f32.mrb[0].mxu0
        %v2911 = vpop.f32.mrb[0].mxu0
        %v2912 = vadd.f32 0.0, %v2911
        %v2913 = vpop.f32.mrb[0].mxu0
        %2914 = vmatprep.mubr.bf16.mxu0 0
        %2915 = vmatmul.mubr.bf16.gmra.mrb[0].mxu0 %v2830
        %v2916 = vpop.f32.mrb[0].mxu0
        %v2917 = vadd.f32 0.0, %v2916
        %v2918 = vpop.f32.mrb[0].mxu0
        %v2919 = vpop.f32.mrb[0].mxu0
        %v2920 = vadd.f32 0.0, %v2919
        %v2921 = vpop.f32.mrb[0].mxu0
        %2922 = vmatprep.mubr.bf16.mxu0 0
        %2923 = vmatmul.mubr.bf16.gmra.mrb[0].mxu0 %v2833
        %v2924 = vpop.f32.mrb[0].mxu0
        %v2925 = vadd.f32 0.0, %v2924
        %v2926 = vpop.f32.mrb[0].mxu0
        %v2927 = vpop.f32.mrb[0].mxu0
        %v2928 = vadd.f32 0.0, %v2927
        %v2929 = vpop.f32.mrb[0].mxu0
        %2930 = vmatprep.mubr.bf16.mxu0 0
        %2931 = vmatmul.mubr.bf16.gmra.mrb[0].mxu0 %v2836
        %v2932 = vpop.f32.mrb[0].mxu0
        %v2933 = vadd.f32 0.0, %v2932
        %v2934 = vpop.f32.mrb[0].mxu0
        %v2935 = vpop.f32.mrb[0].mxu0
        %v2936 = vadd.f32 0.0, %v2935
        %v2937 = vpop.f32.mrb[0].mxu0
        %2938 = vmatprep.mubr.bf16.mxu0 0
        %2939 = vmatmul.mubr.bf16.gmra.mrb[0].mxu0 %v2839
        %v2940 = vpop.f32.mrb[0].mxu0
        %v2941 = vadd.f32 0.0, %v2940
        %v2942 = vpop.f32.mrb[0].mxu0
        %v2943 = vpop.f32.mrb[0].mxu0
        %v2944 = vadd.f32 0.0, %v2943
        %v2945 = vpop.f32.mrb[0].mxu0
        %2946 = vmatprep.mubr.bf16.mxu0 0
        %2947 = vmatmul.mubr.bf16.gmra.mrb[0].mxu0 %v2842
        %v2948 = vpop.f32.mrb[0].mxu0
        %v2949 = vadd.f32 0.0, %v2948
        %v2950 = vpop.f32.mrb[0].mxu0
        %v2951 = vpop.f32.mrb[0].mxu0
        %v2952 = vadd.f32 0.0, %v2951
        %v2953 = vpop.f32.mrb[0].mxu0
        %2954 = vmatprep.mubr.bf16.mxu0 0
        %2955 = vmatmul.mubr.bf16.gmra.mrb[0].mxu0 %v2845
        %v2956 = vpop.f32.mrb[0].mxu0
        %v2957 = vadd.f32 0.0, %v2956
        %v2958 = vpop.f32.mrb[0].mxu0
        %v2959 = vpop.f32.mrb[0].mxu0
        %v2960 = vadd.f32 0.0, %v2959
        %v2961 = vpop.f32.mrb[0].mxu0
        %2962 = vmatprep.mubr.bf16.mxu0 0
        %2963 = vmatmul.mubr.bf16.gmra.mrb[0].mxu0 %v2848
        %v2964 = vpop.f32.mrb[0].mxu0
        %v2965 = vadd.f32 0.0, %v2964
        %v2966 = vpop.f32.mrb[0].mxu0
        %v2967 = vpop.f32.mrb[0].mxu0
        %v2968 = vadd.f32 0.0, %v2967
        %v2969 = vpop.f32.mrb[0].mxu0
        %2970 = vmatprep.mubr.bf16.mxu0 0
        %2971 = vmatmul.mubr.bf16.gmra.mrb[0].mxu0 %v2851
        %v2972 = vpop.f32.mrb[0].mxu0
        %v2973 = vadd.f32 0.0, %v2972
        %v2974 = vpop.f32.mrb[0].mxu0
        %v2975 = vpop.f32.mrb[0].mxu0
        %v2976 = vadd.f32 0.0, %v2975
        %v2977 = vpop.f32.mrb[0].mxu0
        %2978 = vmatprep.mubr.bf16.mxu0 0
        %2979 = vmatmul.mubr.bf16.gmra.mrb[0].mxu0 %v2854
        %v2980 = vpop.f32.mrb[0].mxu0
        %v2981 = vadd.f32 0.0, %v2980
        %v2982 = vpop.f32.mrb[0].mxu0
        %v2983 = vpop.f32.mrb[0].mxu0
        %v2984 = vadd.f32 0.0, %v2983
        %v2985 = vpop.f32.mrb[0].mxu0
        %2986 = vmatprep.mubr.bf16.mxu0 0
        %2987 = vmatmul.mubr.bf16.gmra.mrb[0].mxu0 %v2857
        %v2988 = vpop.f32.mrb[0].mxu0
        %v2989 = vadd.f32 0.0, %v2988
        %v2990 = vpop.f32.mrb[0].mxu0
        %v2991 = vpop.f32.mrb[0].mxu0
        %v2992 = vadd.f32 0.0, %v2991
        %v2993 = vpop.f32.mrb[0].mxu0
        %2994 = vmatprep.mubr.bf16.mxu0 0
        %2995 = vmatmul.mubr.bf16.gmra.mrb[0].mxu0 %v2860
        %v2996 = vpop.f32.mrb[0].mxu0
        %v2997 = vadd.f32 0.0, %v2996
        %v2998 = vpop.f32.mrb[0].mxu0
        %v2999 = vpop.f32.mrb[0].mxu0
        %v3000 = vadd.f32 0.0, %v2999
        %v3001 = vpop.f32.mrb[0].mxu0
        %3002 = vmatprep.mubr.bf16.mxu0 0
        %3003 = vmatmul.mubr.bf16.gmra.mrb[0].mxu0 %v2863
        %v3004 = vpop.f32.mrb[0].mxu0
        %v3005 = vadd.f32 0.0, %v3004
        %v3006 = vpop.f32.mrb[0].mxu0
        %v3007 = vpop.f32.mrb[0].mxu0
        %v3008 = vadd.f32 0.0, %v3007
        %v3009 = vpop.f32.mrb[0].mxu0
        %3010 = vmatprep.mubr.bf16.mxu0 0
        %3011 = vmatmul.mubr.bf16.gmra.mrb[0].mxu0 %v2866
        %v3012 = vpop.f32.mrb[0].mxu0
        %v3013 = vadd.f32 0.0, %v3012
        %v3014 = vpop.f32.mrb[0].mxu0
        %v3015 = vpop.f32.mrb[0].mxu0
        %v3016 = vadd.f32 0.0, %v3015
        %v3017 = vpop.f32.mrb[0].mxu0
        %3018 = vmatprep.mubr.bf16.mxu0 0
        %3019 = vmatmul.mubr.bf16.gmra.mrb[0].mxu0 %v2869
        %v3020 = vpop.f32.mrb[0].mxu0
        %v3021 = vadd.f32 0.0, %v3020
        %v3022 = vpop.f32.mrb[0].mxu0
        %v3023 = vpop.f32.mrb[0].mxu0
        %v3024 = vadd.f32 0.0, %v3023
        %v3025 = vpop.f32.mrb[0].mxu0
        %3026 = vmatprep.mubr.bf16.mxu0 0
        %3027 = vmatmul.mubr.bf16.gmra.mrb[0].mxu0 %v2872
        %v3028 = vpop.f32.mrb[0].mxu0
        %v3029 = vadd.f32 0.0, %v3028
        %v3030 = vpop.f32.mrb[0].mxu0
        %v3031 = vpop.f32.mrb[0].mxu0
        %v3032 = vadd.f32 0.0, %v3031
        %v3033 = vpop.f32.mrb[0].mxu0
        %3034 = vdwg.mxu0
        %v3035 = vadd.f32 %v2697, %v2909
        %v3036 = vadd.f32 %v2698, %v2912
        %v3037 = vadd.f32 %v2699, %v2917
        %v3038 = vadd.f32 %v2700, %v2920
        %v3039 = vadd.f32 %v2701, %v2925
        %v3040 = vadd.f32 %v2702, %v2928
        %v3041 = vadd.f32 %v2703, %v2933
        %v3042 = vadd.f32 %v2704, %v2936
        %v3043 = vadd.f32 %v2705, %v2941
        %v3044 = vadd.f32 %v2706, %v2944
        %v3045 = vadd.f32 %v2707, %v2949
        %v3046 = vadd.f32 %v2708, %v2952
        %v3047 = vadd.f32 %v2709, %v2957
        %v3048 = vadd.f32 %v2710, %v2960
        %v3049 = vadd.f32 %v2711, %v2965
        %v3050 = vadd.f32 %v2712, %v2968
        %v3051 = vadd.f32 %v2713, %v2973
        %v3052 = vadd.f32 %v2714, %v2976
        %v3053 = vadd.f32 %v2715, %v2981
        %v3054 = vadd.f32 %v2716, %v2984
        %v3055 = vadd.f32 %v2717, %v2989
        %v3056 = vadd.f32 %v2718, %v2992
        %v3057 = vadd.f32 %v2719, %v2997
        %v3058 = vadd.f32 %v2720, %v3000
        %v3059 = vadd.f32 %v2721, %v3005
        %v3060 = vadd.f32 %v2722, %v3008
        %v3061 = vadd.f32 %v2723, %v3013
        %v3062 = vadd.f32 %v2724, %v3016
        %v3063 = vadd.f32 %v2725, %v3021
        %v3064 = vadd.f32 %v2726, %v3024
        %v3065 = vadd.f32 %v2727, %v3029
        %v3066 = vadd.f32 %v2728, %v3032
        %v3067 = vld [vmem:[#allocation2 + $0x18] sm:$0xff]
        %v3068 = vld [vmem:[#allocation2 + $0x20] sm:$0xff]
        %v3069 = vld [vmem:[#allocation2 + $0x28] sm:$0xff]
        %v3070 = vld [vmem:[#allocation2 + $0x30] sm:$0xff]
        %v3071 = vld [vmem:[#allocation2 + $0x38] sm:$0xff]
        %v3072 = vld [vmem:[#allocation2 + $0x40] sm:$0xff]
        %v3073 = vld [vmem:[#allocation2 + $0x48] sm:$0xff]
        %v3074 = vld [vmem:[#allocation2 + $0x50] sm:$0xff]
        %v3075 = vld [vmem:[#allocation2 + $0x58] sm:$0xff]
        %v3076 = vld [vmem:[#allocation2 + $0x60] sm:$0xff]
        %v3077 = vld [vmem:[#allocation2 + $0x68] sm:$0xff]
        %v3078 = vld [vmem:[#allocation2 + $0x70] sm:$0xff]
        %v3079 = vld [vmem:[#allocation2 + $0x78] sm:$0xff]
        %v3080 = vld [vmem:[#allocation2 + $0x80] sm:$0xff]
        %v3081 = vld [vmem:[#allocation2 + $0x88] sm:$0xff]
        %v3082 = vld [vmem:[#allocation2 + $0x90] sm:$0xff]
        %v3083 = vld [vmem:[#allocation2 + $0x98] sm:$0xff]
        %v3084 = vld [vmem:[#allocation2 + $0xa0] sm:$0xff]
        %v3085 = vld [vmem:[#allocation2 + $0xa8] sm:$0xff]
        %v3086 = vld [vmem:[#allocation2 + $0xb0] sm:$0xff]
        %v3087 = vld [vmem:[#allocation2 + $0xb8] sm:$0xff]
        %v3088 = vld [vmem:[#allocation2 + $0xc0] sm:$0xff]
        %v3089 = vld [vmem:[#allocation2 + $0xc8] sm:$0xff]
        %v3090 = vld [vmem:[#allocation2 + $0xd0] sm:$0xff]
        %v3091 = vld [vmem:[#allocation2 + $0xd8] sm:$0xff]
        %v3092 = vld [vmem:[#allocation2 + $0xe0] sm:$0xff]
        %v3093 = vld [vmem:[#allocation2 + $0xe8] sm:$0xff]
        %v3094 = vld [vmem:[#allocation2 + $0xf0] sm:$0xff]
        %v3095 = vld [vmem:[#allocation2 + $0xf8] sm:$0xff]
        %v3096 = vld [vmem:[#allocation2 + $0x100] sm:$0xff]
        %v3097 = vld [vmem:[#allocation2 + $0x108] sm:$0xff]
        %v3098 = vld [vmem:[#allocation2 + $0x110] sm:$0xff]
        %v3099 = vpack.c.bf16 %v3068, %v3067
        %v3100 = vpack.c.bf16 %v3070, %v3069
        %v3101 = vpack.c.bf16 %v3072, %v3071
        %v3102 = vpack.c.bf16 %v3074, %v3073
        %v3103 = vpack.c.bf16 %v3076, %v3075
        %v3104 = vpack.c.bf16 %v3078, %v3077
        %v3105 = vpack.c.bf16 %v3080, %v3079
        %v3106 = vpack.c.bf16 %v3082, %v3081
        %v3107 = vpack.c.bf16 %v3084, %v3083
        %v3108 = vpack.c.bf16 %v3086, %v3085
        %v3109 = vpack.c.bf16 %v3088, %v3087
        %v3110 = vpack.c.bf16 %v3090, %v3089
        %v3111 = vpack.c.bf16 %v3092, %v3091
        %v3112 = vpack.c.bf16 %v3094, %v3093
        %v3113 = vpack.c.bf16 %v3096, %v3095
        %v3114 = vpack.c.bf16 %v3098, %v3097
        %s3115 = scalar_lea.vmem [#allocation9], 64
        %v3116 = vld [vmem:[%s3115] sm:$0xf]
        %v3117 = vld [vmem:[%s3115 + $0x4] sm:$0xf]
        %v3118 = vld [vmem:[%s3115 + $0x8] sm:$0xf]
        %v3119 = vld [vmem:[%s3115 + $0xc] sm:$0xf]
        %v3124 = vunpack.c.l.b16 %v3116
        %v3125 = vunpack.c.l.b16 %v3117
        %v3126 = vunpack.c.l.b16 %v3118
        %v3127 = vunpack.c.l.b16 %v3119
        %v3128 = vpack.c.b16 %v3125, %v3124
        %v3129 = vpack.c.b16 %v3127, %v3126
        %v3133 = vsel %vm1020, %v3099, 0
        %v3136 = vsel %vm1020, %v3100, 0
        %v3139 = vsel %vm1020, %v3101, 0
        %v3142 = vsel %vm1020, %v3102, 0
        %v3145 = vsel %vm1020, %v3103, 0
        %v3148 = vsel %vm1020, %v3104, 0
        %v3151 = vsel %vm1020, %v3105, 0
        %v3154 = vsel %vm1020, %v3106, 0
        %v3157 = vsel %vm1020, %v3107, 0
        %v3160 = vsel %vm1020, %v3108, 0
        %v3163 = vsel %vm1020, %v3109, 0
        %v3166 = vsel %vm1020, %v3110, 0
        %v3169 = vsel %vm1020, %v3111, 0
        %v3172 = vsel %vm1020, %v3112, 0
        %v3175 = vsel %vm1020, %v3113, 0
        %v3178 = vsel %vm1020, %v3114, 0
        %3180 = vmatprep.subr.bf16.mxu0 0
        %3181 = vmatpush1.bf16.msra.mxu0 %v3128
        %3182 = vmatprep.subr.bf16.mxu0 0
        %3183 = vmatpush1.bf16.msra.mxu0 %v3129
        %3184 = vmatprep.subr.bf16.mxu0 0
        %3185 = vmatpush1.bf16.msra.mxu0 0
        %3186 = vmatprep.subr.bf16.mxu0 0
        %3187 = vmatpush1.bf16.msra.mxu0 0
        %3188 = vmatprep.subr.bf16.mxu0 0
        %3189 = vmatpush1.bf16.msra.mxu0 0
        %3190 = vmatprep.subr.bf16.mxu0 0
        %3191 = vmatpush1.bf16.msra.mxu0 0
        %3192 = vmatprep.subr.bf16.mxu0 0
        %3193 = vmatpush1.bf16.msra.mxu0 0
        %3194 = vmatprep.subr.bf16.mxu0 0
        %3195 = vmatpush1.bf16.msra.mxu0 0
        %3196 = vmatprep.subr.bf16.mxu0 0
        %3197 = vmatpush1.bf16.msra.mxu0 0
        %3198 = vmatprep.subr.bf16.mxu0 0
        %3199 = vmatpush1.bf16.msra.mxu0 0
        %3200 = vmatprep.subr.bf16.mxu0 0
        %3201 = vmatpush1.bf16.msra.mxu0 0
        %3202 = vmatprep.subr.bf16.mxu0 0
        %3203 = vmatpush1.bf16.msra.mxu0 0
        %3204 = vmatprep.subr.bf16.mxu0 0
        %3205 = vmatpush1.bf16.msra.mxu0 0
        %3206 = vmatprep.subr.bf16.mxu0 0
        %3207 = vmatpush1.bf16.msra.mxu0 0
        %3208 = vmatprep.subr.bf16.mxu0 0
        %3209 = vmatpush1.bf16.msra.mxu0 0
        %3210 = vmatprep.subr.bf16.mxu0 0
        %3211 = vmatpush1.bf16.msra.mxu0 0
        %3212 = vmatprep.mubr.bf16.mxu0 0
        %3213 = vmatmul.mubr.bf16.gmra.mrb[0].mxu0 %v3133
        %v3214 = vpop.f32.mrb[0].mxu0
        %v3215 = vadd.f32 0.0, %v3214
        %v3216 = vpop.f32.mrb[0].mxu0
        %v3217 = vpop.f32.mrb[0].mxu0
        %v3218 = vadd.f32 0.0, %v3217
        %v3219 = vpop.f32.mrb[0].mxu0
        %3220 = vmatprep.mubr.bf16.mxu0 0
        %3221 = vmatmul.mubr.bf16.gmra.mrb[0].mxu0 %v3136
        %v3222 = vpop.f32.mrb[0].mxu0
        %v3223 = vadd.f32 0.0, %v3222
        %v3224 = vpop.f32.mrb[0].mxu0
        %v3225 = vpop.f32.mrb[0].mxu0
        %v3226 = vadd.f32 0.0, %v3225
        %v3227 = vpop.f32.mrb[0].mxu0
        %3228 = vmatprep.mubr.bf16.mxu0 0
        %3229 = vmatmul.mubr.bf16.gmra.mrb[0].mxu0 %v3139
        %v3230 = vpop.f32.mrb[0].mxu0
        %v3231 = vadd.f32 0.0, %v3230
        %v3232 = vpop.f32.mrb[0].mxu0
        %v3233 = vpop.f32.mrb[0].mxu0
        %v3234 = vadd.f32 0.0, %v3233
        %v3235 = vpop.f32.mrb[0].mxu0
        %3236 = vmatprep.mubr.bf16.mxu0 0
        %3237 = vmatmul.mubr.bf16.gmra.mrb[0].mxu0 %v3142
        %v3238 = vpop.f32.mrb[0].mxu0
        %v3239 = vadd.f32 0.0, %v3238
        %v3240 = vpop.f32.mrb[0].mxu0
        %v3241 = vpop.f32.mrb[0].mxu0
        %v3242 = vadd.f32 0.0, %v3241
        %v3243 = vpop.f32.mrb[0].mxu0
        %3244 = vmatprep.mubr.bf16.mxu0 0
        %3245 = vmatmul.mubr.bf16.gmra.mrb[0].mxu0 %v3145
        %v3246 = vpop.f32.mrb[0].mxu0
        %v3247 = vadd.f32 0.0, %v3246
        %v3248 = vpop.f32.mrb[0].mxu0
        %v3249 = vpop.f32.mrb[0].mxu0
        %v3250 = vadd.f32 0.0, %v3249
        %v3251 = vpop.f32.mrb[0].mxu0
        %3252 = vmatprep.mubr.bf16.mxu0 0
        %3253 = vmatmul.mubr.bf16.gmra.mrb[0].mxu0 %v3148
        %v3254 = vpop.f32.mrb[0].mxu0
        %v3255 = vadd.f32 0.0, %v3254
        %v3256 = vpop.f32.mrb[0].mxu0
        %v3257 = vpop.f32.mrb[0].mxu0
        %v3258 = vadd.f32 0.0, %v3257
        %v3259 = vpop.f32.mrb[0].mxu0
        %3260 = vmatprep.mubr.bf16.mxu0 0
        %3261 = vmatmul.mubr.bf16.gmra.mrb[0].mxu0 %v3151
        %v3262 = vpop.f32.mrb[0].mxu0
        %v3263 = vadd.f32 0.0, %v3262
        %v3264 = vpop.f32.mrb[0].mxu0
        %v3265 = vpop.f32.mrb[0].mxu0
        %v3266 = vadd.f32 0.0, %v3265
        %v3267 = vpop.f32.mrb[0].mxu0
        %3268 = vmatprep.mubr.bf16.mxu0 0
        %3269 = vmatmul.mubr.bf16.gmra.mrb[0].mxu0 %v3154
        %v3270 = vpop.f32.mrb[0].mxu0
        %v3271 = vadd.f32 0.0, %v3270
        %v3272 = vpop.f32.mrb[0].mxu0
        %v3273 = vpop.f32.mrb[0].mxu0
        %v3274 = vadd.f32 0.0, %v3273
        %v3275 = vpop.f32.mrb[0].mxu0
        %3276 = vmatprep.mubr.bf16.mxu0 0
        %3277 = vmatmul.mubr.bf16.gmra.mrb[0].mxu0 %v3157
        %v3278 = vpop.f32.mrb[0].mxu0
        %v3279 = vadd.f32 0.0, %v3278
        %v3280 = vpop.f32.mrb[0].mxu0
        %v3281 = vpop.f32.mrb[0].mxu0
        %v3282 = vadd.f32 0.0, %v3281
        %v3283 = vpop.f32.mrb[0].mxu0
        %3284 = vmatprep.mubr.bf16.mxu0 0
        %3285 = vmatmul.mubr.bf16.gmra.mrb[0].mxu0 %v3160
        %v3286 = vpop.f32.mrb[0].mxu0
        %v3287 = vadd.f32 0.0, %v3286
        %v3288 = vpop.f32.mrb[0].mxu0
        %v3289 = vpop.f32.mrb[0].mxu0
        %v3290 = vadd.f32 0.0, %v3289
        %v3291 = vpop.f32.mrb[0].mxu0
        %3292 = vmatprep.mubr.bf16.mxu0 0
        %3293 = vmatmul.mubr.bf16.gmra.mrb[0].mxu0 %v3163
        %v3294 = vpop.f32.mrb[0].mxu0
        %v3295 = vadd.f32 0.0, %v3294
        %v3296 = vpop.f32.mrb[0].mxu0
        %v3297 = vpop.f32.mrb[0].mxu0
        %v3298 = vadd.f32 0.0, %v3297
        %v3299 = vpop.f32.mrb[0].mxu0
        %3300 = vmatprep.mubr.bf16.mxu0 0
        %3301 = vmatmul.mubr.bf16.gmra.mrb[0].mxu0 %v3166
        %v3302 = vpop.f32.mrb[0].mxu0
        %v3303 = vadd.f32 0.0, %v3302
        %v3304 = vpop.f32.mrb[0].mxu0
        %v3305 = vpop.f32.mrb[0].mxu0
        %v3306 = vadd.f32 0.0, %v3305
        %v3307 = vpop.f32.mrb[0].mxu0
        %3308 = vmatprep.mubr.bf16.mxu0 0
        %3309 = vmatmul.mubr.bf16.gmra.mrb[0].mxu0 %v3169
        %v3310 = vpop.f32.mrb[0].mxu0
        %v3311 = vadd.f32 0.0, %v3310
        %v3312 = vpop.f32.mrb[0].mxu0
        %v3313 = vpop.f32.mrb[0].mxu0
        %v3314 = vadd.f32 0.0, %v3313
        %v3315 = vpop.f32.mrb[0].mxu0
        %3316 = vmatprep.mubr.bf16.mxu0 0
        %3317 = vmatmul.mubr.bf16.gmra.mrb[0].mxu0 %v3172
        %v3318 = vpop.f32.mrb[0].mxu0
        %v3319 = vadd.f32 0.0, %v3318
        %v3320 = vpop.f32.mrb[0].mxu0
        %v3321 = vpop.f32.mrb[0].mxu0
        %v3322 = vadd.f32 0.0, %v3321
        %v3323 = vpop.f32.mrb[0].mxu0
        %3324 = vmatprep.mubr.bf16.mxu0 0
        %3325 = vmatmul.mubr.bf16.gmra.mrb[0].mxu0 %v3175
        %v3326 = vpop.f32.mrb[0].mxu0
        %v3327 = vadd.f32 0.0, %v3326
        %v3328 = vpop.f32.mrb[0].mxu0
        %v3329 = vpop.f32.mrb[0].mxu0
        %v3330 = vadd.f32 0.0, %v3329
        %v3331 = vpop.f32.mrb[0].mxu0
        %3332 = vmatprep.mubr.bf16.mxu0 0
        %3333 = vmatmul.mubr.bf16.gmra.mrb[0].mxu0 %v3178
        %v3334 = vpop.f32.mrb[0].mxu0
        %v3335 = vadd.f32 0.0, %v3334
        %v3336 = vpop.f32.mrb[0].mxu0
        %v3337 = vpop.f32.mrb[0].mxu0
        %v3338 = vadd.f32 0.0, %v3337
        %v3339 = vpop.f32.mrb[0].mxu0
        %3340 = vdwg.mxu0
        %v3341 = vadd.f32 %v3035, %v3215
        %v3342 = vadd.f32 %v3036, %v3218
        %v3343 = vadd.f32 %v3037, %v3223
        %v3344 = vadd.f32 %v3038, %v3226
        %v3345 = vadd.f32 %v3039, %v3231
        %v3346 = vadd.f32 %v3040, %v3234
        %v3347 = vadd.f32 %v3041, %v3239
        %v3348 = vadd.f32 %v3042, %v3242
        %v3349 = vadd.f32 %v3043, %v3247
        %v3350 = vadd.f32 %v3044, %v3250
        %v3351 = vadd.f32 %v3045, %v3255
        %v3352 = vadd.f32 %v3046, %v3258
        %v3353 = vadd.f32 %v3047, %v3263
        %v3354 = vadd.f32 %v3048, %v3266
        %v3355 = vadd.f32 %v3049, %v3271
        %v3356 = vadd.f32 %v3050, %v3274
        %v3357 = vadd.f32 %v3051, %v3279
        %v3358 = vadd.f32 %v3052, %v3282
        %v3359 = vadd.f32 %v3053, %v3287
        %v3360 = vadd.f32 %v3054, %v3290
        %v3361 = vadd.f32 %v3055, %v3295
        %v3362 = vadd.f32 %v3056, %v3298
        %v3363 = vadd.f32 %v3057, %v3303
        %v3364 = vadd.f32 %v3058, %v3306
        %v3365 = vadd.f32 %v3059, %v3311
        %v3366 = vadd.f32 %v3060, %v3314
        %v3367 = vadd.f32 %v3061, %v3319
        %v3368 = vadd.f32 %v3062, %v3322
        %v3369 = vadd.f32 %v3063, %v3327
        %v3370 = vadd.f32 %v3064, %v3330
        %v3371 = vadd.f32 %v3065, %v3335
        %v3372 = vadd.f32 %v3066, %v3338
        %v3373 = vld [vmem:[#allocation2 + $0x19] sm:$0xff]
        %v3374 = vld [vmem:[#allocation2 + $0x21] sm:$0xff]
        %v3375 = vld [vmem:[#allocation2 + $0x29] sm:$0xff]
        %v3376 = vld [vmem:[#allocation2 + $0x31] sm:$0xff]
        %v3377 = vld [vmem:[#allocation2 + $0x39] sm:$0xff]
        %v3378 = vld [vmem:[#allocation2 + $0x41] sm:$0xff]
        %v3379 = vld [vmem:[#allocation2 + $0x49] sm:$0xff]
        %v3380 = vld [vmem:[#allocation2 + $0x51] sm:$0xff]
        %v3381 = vld [vmem:[#allocation2 + $0x59] sm:$0xff]
        %v3382 = vld [vmem:[#allocation2 + $0x61] sm:$0xff]
        %v3383 = vld [vmem:[#allocation2 + $0x69] sm:$0xff]
        %v3384 = vld [vmem:[#allocation2 + $0x71] sm:$0xff]
        %v3385 = vld [vmem:[#allocation2 + $0x79] sm:$0xff]
        %v3386 = vld [vmem:[#allocation2 + $0x81] sm:$0xff]
        %v3387 = vld [vmem:[#allocation2 + $0x89] sm:$0xff]
        %v3388 = vld [vmem:[#allocation2 + $0x91] sm:$0xff]
        %v3389 = vld [vmem:[#allocation2 + $0x99] sm:$0xff]
        %v3390 = vld [vmem:[#allocation2 + $0xa1] sm:$0xff]
        %v3391 = vld [vmem:[#allocation2 + $0xa9] sm:$0xff]
        %v3392 = vld [vmem:[#allocation2 + $0xb1] sm:$0xff]
        %v3393 = vld [vmem:[#allocation2 + $0xb9] sm:$0xff]
        %v3394 = vld [vmem:[#allocation2 + $0xc1] sm:$0xff]
        %v3395 = vld [vmem:[#allocation2 + $0xc9] sm:$0xff]
        %v3396 = vld [vmem:[#allocation2 + $0xd1] sm:$0xff]
        %v3397 = vld [vmem:[#allocation2 + $0xd9] sm:$0xff]
        %v3398 = vld [vmem:[#allocation2 + $0xe1] sm:$0xff]
        %v3399 = vld [vmem:[#allocation2 + $0xe9] sm:$0xff]
        %v3400 = vld [vmem:[#allocation2 + $0xf1] sm:$0xff]
        %v3401 = vld [vmem:[#allocation2 + $0xf9] sm:$0xff]
        %v3402 = vld [vmem:[#allocation2 + $0x101] sm:$0xff]
        %v3403 = vld [vmem:[#allocation2 + $0x109] sm:$0xff]
        %v3404 = vld [vmem:[#allocation2 + $0x111] sm:$0xff]
        %v3405 = vsel %vm2391, %v3373, 0.0
        %v3406 = vsel %vm2392, %v3374, 0.0
        %v3407 = vsel %vm2393, %v3375, 0.0
        %v3408 = vsel %vm2394, %v3376, 0.0
        %v3409 = vsel %vm2395, %v3377, 0.0
        %v3410 = vsel %vm2396, %v3378, 0.0
        %v3411 = vsel %vm2397, %v3379, 0.0
        %v3412 = vsel %vm2398, %v3380, 0.0
        %v3413 = vsel %vm2399, %v3381, 0.0
        %v3414 = vsel %vm2400, %v3382, 0.0
        %v3415 = vsel %vm2401, %v3383, 0.0
        %v3416 = vsel %vm2402, %v3384, 0.0
        %v3417 = vsel %vm2403, %v3385, 0.0
        %v3418 = vsel %vm2404, %v3386, 0.0
        %v3419 = vsel %vm2405, %v3387, 0.0
        %v3420 = vsel %vm2406, %v3388, 0.0
        %v3421 = vsel %vm2407, %v3389, 0.0
        %v3422 = vsel %vm2408, %v3390, 0.0
        %v3423 = vsel %vm2409, %v3391, 0.0
        %v3424 = vsel %vm2410, %v3392, 0.0
        %v3425 = vsel %vm2411, %v3393, 0.0
        %v3426 = vsel %vm2412, %v3394, 0.0
        %v3427 = vsel %vm2413, %v3395, 0.0
        %v3428 = vsel %vm2414, %v3396, 0.0
        %v3429 = vsel %vm2415, %v3397, 0.0
        %v3430 = vsel %vm2416, %v3398, 0.0
        %v3431 = vsel %vm2417, %v3399, 0.0
        %v3432 = vsel %vm2418, %v3400, 0.0
        %v3433 = vsel %vm2419, %v3401, 0.0
        %v3434 = vsel %vm2420, %v3402, 0.0
        %v3435 = vsel %vm2421, %v3403, 0.0
        %v3436 = vsel %vm2422, %v3404, 0.0
        %v3437 = vpack.c.bf16 %v3406, %v3405
        %v3438 = vpack.c.bf16 %v3408, %v3407
        %v3439 = vpack.c.bf16 %v3410, %v3409
        %v3440 = vpack.c.bf16 %v3412, %v3411
        %v3441 = vpack.c.bf16 %v3414, %v3413
        %v3442 = vpack.c.bf16 %v3416, %v3415
        %v3443 = vpack.c.bf16 %v3418, %v3417
        %v3444 = vpack.c.bf16 %v3420, %v3419
        %v3445 = vpack.c.bf16 %v3422, %v3421
        %v3446 = vpack.c.bf16 %v3424, %v3423
        %v3447 = vpack.c.bf16 %v3426, %v3425
        %v3448 = vpack.c.bf16 %v3428, %v3427
        %v3449 = vpack.c.bf16 %v3430, %v3429
        %v3450 = vpack.c.bf16 %v3432, %v3431
        %v3451 = vpack.c.bf16 %v3434, %v3433
        %v3452 = vpack.c.bf16 %v3436, %v3435
        %s3453 = scalar_lea.vmem [#allocation9], 80
        %v3454 = vld [vmem:[%s3453] sm:$0xf]
        %v3455 = vld [vmem:[%s3453 + $0x4] sm:$0xf]
        %v3456 = vld [vmem:[%s3453 + $0x8] sm:$0xf]
        %v3457 = vld [vmem:[%s3453 + $0xc] sm:$0xf]
        %v3462 = vunpack.c.l.b16 %v3454
        %v3463 = vunpack.c.l.b16 %v3455
        %v3464 = vunpack.c.l.b16 %v3456
        %v3465 = vunpack.c.l.b16 %v3457
        %v3466 = vpack.c.b16 %v3463, %v3462
        %v3467 = vpack.c.b16 %v3465, %v3464
        %v3471 = vsel %vm1020, %v3437, 0
        %v3474 = vsel %vm1020, %v3438, 0
        %v3477 = vsel %vm1020, %v3439, 0
        %v3480 = vsel %vm1020, %v3440, 0
        %v3483 = vsel %vm1020, %v3441, 0
        %v3486 = vsel %vm1020, %v3442, 0
        %v3489 = vsel %vm1020, %v3443, 0
        %v3492 = vsel %vm1020, %v3444, 0
        %v3495 = vsel %vm1020, %v3445, 0
        %v3498 = vsel %vm1020, %v3446, 0
        %v3501 = vsel %vm1020, %v3447, 0
        %v3504 = vsel %vm1020, %v3448, 0
        %v3507 = vsel %vm1020, %v3449, 0
        %v3510 = vsel %vm1020, %v3450, 0
        %v3513 = vsel %vm1020, %v3451, 0
        %v3516 = vsel %vm1020, %v3452, 0
        %3518 = vmatprep.subr.bf16.mxu0 0
        %3519 = vmatpush1.bf16.msra.mxu0 %v3466
        %3520 = vmatprep.subr.bf16.mxu0 0
        %3521 = vmatpush1.bf16.msra.mxu0 %v3467
        %3522 = vmatprep.subr.bf16.mxu0 0
        %3523 = vmatpush1.bf16.msra.mxu0 0
        %3524 = vmatprep.subr.bf16.mxu0 0
        %3525 = vmatpush1.bf16.msra.mxu0 0
        %3526 = vmatprep.subr.bf16.mxu0 0
        %3527 = vmatpush1.bf16.msra.mxu0 0
        %3528 = vmatprep.subr.bf16.mxu0 0
        %3529 = vmatpush1.bf16.msra.mxu0 0
        %3530 = vmatprep.subr.bf16.mxu0 0
        %3531 = vmatpush1.bf16.msra.mxu0 0
        %3532 = vmatprep.subr.bf16.mxu0 0
        %3533 = vmatpush1.bf16.msra.mxu0 0
        %3534 = vmatprep.subr.bf16.mxu0 0
        %3535 = vmatpush1.bf16.msra.mxu0 0
        %3536 = vmatprep.subr.bf16.mxu0 0
        %3537 = vmatpush1.bf16.msra.mxu0 0
        %3538 = vmatprep.subr.bf16.mxu0 0
        %3539 = vmatpush1.bf16.msra.mxu0 0
        %3540 = vmatprep.subr.bf16.mxu0 0
        %3541 = vmatpush1.bf16.msra.mxu0 0
        %3542 = vmatprep.subr.bf16.mxu0 0
        %3543 = vmatpush1.bf16.msra.mxu0 0
        %3544 = vmatprep.subr.bf16.mxu0 0
        %3545 = vmatpush1.bf16.msra.mxu0 0
        %3546 = vmatprep.subr.bf16.mxu0 0
        %3547 = vmatpush1.bf16.msra.mxu0 0
        %3548 = vmatprep.subr.bf16.mxu0 0
        %3549 = vmatpush1.bf16.msra.mxu0 0
        %3550 = vmatprep.mubr.bf16.mxu0 0
        %3551 = vmatmul.mubr.bf16.gmra.mrb[0].mxu0 %v3471
        %v3552 = vpop.f32.mrb[0].mxu0
        %v3553 = vadd.f32 0.0, %v3552
        %v3554 = vpop.f32.mrb[0].mxu0
        %v3555 = vpop.f32.mrb[0].mxu0
        %v3556 = vadd.f32 0.0, %v3555
        %v3557 = vpop.f32.mrb[0].mxu0
        %3558 = vmatprep.mubr.bf16.mxu0 0
        %3559 = vmatmul.mubr.bf16.gmra.mrb[0].mxu0 %v3474
        %v3560 = vpop.f32.mrb[0].mxu0
        %v3561 = vadd.f32 0.0, %v3560
        %v3562 = vpop.f32.mrb[0].mxu0
        %v3563 = vpop.f32.mrb[0].mxu0
        %v3564 = vadd.f32 0.0, %v3563
        %v3565 = vpop.f32.mrb[0].mxu0
        %3566 = vmatprep.mubr.bf16.mxu0 0
        %3567 = vmatmul.mubr.bf16.gmra.mrb[0].mxu0 %v3477
        %v3568 = vpop.f32.mrb[0].mxu0
        %v3569 = vadd.f32 0.0, %v3568
        %v3570 = vpop.f32.mrb[0].mxu0
        %v3571 = vpop.f32.mrb[0].mxu0
        %v3572 = vadd.f32 0.0, %v3571
        %v3573 = vpop.f32.mrb[0].mxu0
        %3574 = vmatprep.mubr.bf16.mxu0 0
        %3575 = vmatmul.mubr.bf16.gmra.mrb[0].mxu0 %v3480
        %v3576 = vpop.f32.mrb[0].mxu0
        %v3577 = vadd.f32 0.0, %v3576
        %v3578 = vpop.f32.mrb[0].mxu0
        %v3579 = vpop.f32.mrb[0].mxu0
        %v3580 = vadd.f32 0.0, %v3579
        %v3581 = vpop.f32.mrb[0].mxu0
        %3582 = vmatprep.mubr.bf16.mxu0 0
        %3583 = vmatmul.mubr.bf16.gmra.mrb[0].mxu0 %v3483
        %v3584 = vpop.f32.mrb[0].mxu0
        %v3585 = vadd.f32 0.0, %v3584
        %v3586 = vpop.f32.mrb[0].mxu0
        %v3587 = vpop.f32.mrb[0].mxu0
        %v3588 = vadd.f32 0.0, %v3587
        %v3589 = vpop.f32.mrb[0].mxu0
        %3590 = vmatprep.mubr.bf16.mxu0 0
        %3591 = vmatmul.mubr.bf16.gmra.mrb[0].mxu0 %v3486
        %v3592 = vpop.f32.mrb[0].mxu0
        %v3593 = vadd.f32 0.0, %v3592
        %v3594 = vpop.f32.mrb[0].mxu0
        %v3595 = vpop.f32.mrb[0].mxu0
        %v3596 = vadd.f32 0.0, %v3595
        %v3597 = vpop.f32.mrb[0].mxu0
        %3598 = vmatprep.mubr.bf16.mxu0 0
        %3599 = vmatmul.mubr.bf16.gmra.mrb[0].mxu0 %v3489
        %v3600 = vpop.f32.mrb[0].mxu0
        %v3601 = vadd.f32 0.0, %v3600
        %v3602 = vpop.f32.mrb[0].mxu0
        %v3603 = vpop.f32.mrb[0].mxu0
        %v3604 = vadd.f32 0.0, %v3603
        %v3605 = vpop.f32.mrb[0].mxu0
        %3606 = vmatprep.mubr.bf16.mxu0 0
        %3607 = vmatmul.mubr.bf16.gmra.mrb[0].mxu0 %v3492
        %v3608 = vpop.f32.mrb[0].mxu0
        %v3609 = vadd.f32 0.0, %v3608
        %v3610 = vpop.f32.mrb[0].mxu0
        %v3611 = vpop.f32.mrb[0].mxu0
        %v3612 = vadd.f32 0.0, %v3611
        %v3613 = vpop.f32.mrb[0].mxu0
        %3614 = vmatprep.mubr.bf16.mxu0 0
        %3615 = vmatmul.mubr.bf16.gmra.mrb[0].mxu0 %v3495
        %v3616 = vpop.f32.mrb[0].mxu0
        %v3617 = vadd.f32 0.0, %v3616
        %v3618 = vpop.f32.mrb[0].mxu0
        %v3619 = vpop.f32.mrb[0].mxu0
        %v3620 = vadd.f32 0.0, %v3619
        %v3621 = vpop.f32.mrb[0].mxu0
        %3622 = vmatprep.mubr.bf16.mxu0 0
        %3623 = vmatmul.mubr.bf16.gmra.mrb[0].mxu0 %v3498
        %v3624 = vpop.f32.mrb[0].mxu0
        %v3625 = vadd.f32 0.0, %v3624
        %v3626 = vpop.f32.mrb[0].mxu0
        %v3627 = vpop.f32.mrb[0].mxu0
        %v3628 = vadd.f32 0.0, %v3627
        %v3629 = vpop.f32.mrb[0].mxu0
        %3630 = vmatprep.mubr.bf16.mxu0 0
        %3631 = vmatmul.mubr.bf16.gmra.mrb[0].mxu0 %v3501
        %v3632 = vpop.f32.mrb[0].mxu0
        %v3633 = vadd.f32 0.0, %v3632
        %v3634 = vpop.f32.mrb[0].mxu0
        %v3635 = vpop.f32.mrb[0].mxu0
        %v3636 = vadd.f32 0.0, %v3635
        %v3637 = vpop.f32.mrb[0].mxu0
        %3638 = vmatprep.mubr.bf16.mxu0 0
        %3639 = vmatmul.mubr.bf16.gmra.mrb[0].mxu0 %v3504
        %v3640 = vpop.f32.mrb[0].mxu0
        %v3641 = vadd.f32 0.0, %v3640
        %v3642 = vpop.f32.mrb[0].mxu0
        %v3643 = vpop.f32.mrb[0].mxu0
        %v3644 = vadd.f32 0.0, %v3643
        %v3645 = vpop.f32.mrb[0].mxu0
        %3646 = vmatprep.mubr.bf16.mxu0 0
        %3647 = vmatmul.mubr.bf16.gmra.mrb[0].mxu0 %v3507
        %v3648 = vpop.f32.mrb[0].mxu0
        %v3649 = vadd.f32 0.0, %v3648
        %v3650 = vpop.f32.mrb[0].mxu0
        %v3651 = vpop.f32.mrb[0].mxu0
        %v3652 = vadd.f32 0.0, %v3651
        %v3653 = vpop.f32.mrb[0].mxu0
        %3654 = vmatprep.mubr.bf16.mxu0 0
        %3655 = vmatmul.mubr.bf16.gmra.mrb[0].mxu0 %v3510
        %v3656 = vpop.f32.mrb[0].mxu0
        %v3657 = vadd.f32 0.0, %v3656
        %v3658 = vpop.f32.mrb[0].mxu0
        %v3659 = vpop.f32.mrb[0].mxu0
        %v3660 = vadd.f32 0.0, %v3659
        %v3661 = vpop.f32.mrb[0].mxu0
        %3662 = vmatprep.mubr.bf16.mxu0 0
        %3663 = vmatmul.mubr.bf16.gmra.mrb[0].mxu0 %v3513
        %v3664 = vpop.f32.mrb[0].mxu0
        %v3665 = vadd.f32 0.0, %v3664
        %v3666 = vpop.f32.mrb[0].mxu0
        %v3667 = vpop.f32.mrb[0].mxu0
        %v3668 = vadd.f32 0.0, %v3667
        %v3669 = vpop.f32.mrb[0].mxu0
        %3670 = vmatprep.mubr.bf16.mxu0 0
        %3671 = vmatmul.mubr.bf16.gmra.mrb[0].mxu0 %v3516
        %v3672 = vpop.f32.mrb[0].mxu0
        %v3673 = vadd.f32 0.0, %v3672
        %v3674 = vpop.f32.mrb[0].mxu0
        %v3675 = vpop.f32.mrb[0].mxu0
        %v3676 = vadd.f32 0.0, %v3675
        %v3677 = vpop.f32.mrb[0].mxu0
        %3678 = vdwg.mxu0
        %v3679 = vadd.f32 %v3341, %v3553
        %v3680 = vadd.f32 %v3342, %v3556
        %v3681 = vadd.f32 %v3343, %v3561
        %v3682 = vadd.f32 %v3344, %v3564
        %v3683 = vadd.f32 %v3345, %v3569
        %v3684 = vadd.f32 %v3346, %v3572
        %v3685 = vadd.f32 %v3347, %v3577
        %v3686 = vadd.f32 %v3348, %v3580
        %v3687 = vadd.f32 %v3349, %v3585
        %v3688 = vadd.f32 %v3350, %v3588
        %v3689 = vadd.f32 %v3351, %v3593
        %v3690 = vadd.f32 %v3352, %v3596
        %v3691 = vadd.f32 %v3353, %v3601
        %v3692 = vadd.f32 %v3354, %v3604
        %v3693 = vadd.f32 %v3355, %v3609
        %v3694 = vadd.f32 %v3356, %v3612
        %v3695 = vadd.f32 %v3357, %v3617
        %v3696 = vadd.f32 %v3358, %v3620
        %v3697 = vadd.f32 %v3359, %v3625
        %v3698 = vadd.f32 %v3360, %v3628
        %v3699 = vadd.f32 %v3361, %v3633
        %v3700 = vadd.f32 %v3362, %v3636
        %v3701 = vadd.f32 %v3363, %v3641
        %v3702 = vadd.f32 %v3364, %v3644
        %v3703 = vadd.f32 %v3365, %v3649
        %v3704 = vadd.f32 %v3366, %v3652
        %v3705 = vadd.f32 %v3367, %v3657
        %v3706 = vadd.f32 %v3368, %v3660
        %v3707 = vadd.f32 %v3369, %v3665
        %v3708 = vadd.f32 %v3370, %v3668
        %v3709 = vadd.f32 %v3371, %v3673
        %v3710 = vadd.f32 %v3372, %v3676
        %v3711 = vld [vmem:[#allocation2 + $0x27] sm:$0xff]
        %v3712 = vld [vmem:[#allocation2 + $0x2f] sm:$0xff]
        %v3713 = vld [vmem:[#allocation2 + $0x37] sm:$0xff]
        %v3714 = vld [vmem:[#allocation2 + $0x3f] sm:$0xff]
        %v3715 = vld [vmem:[#allocation2 + $0x47] sm:$0xff]
        %v3716 = vld [vmem:[#allocation2 + $0x4f] sm:$0xff]
        %v3717 = vld [vmem:[#allocation2 + $0x57] sm:$0xff]
        %v3718 = vld [vmem:[#allocation2 + $0x5f] sm:$0xff]
        %v3719 = vld [vmem:[#allocation2 + $0x67] sm:$0xff]
        %v3720 = vld [vmem:[#allocation2 + $0x6f] sm:$0xff]
        %v3721 = vld [vmem:[#allocation2 + $0x77] sm:$0xff]
        %v3722 = vld [vmem:[#allocation2 + $0x7f] sm:$0xff]
        %v3723 = vld [vmem:[#allocation2 + $0x87] sm:$0xff]
        %v3724 = vld [vmem:[#allocation2 + $0x8f] sm:$0xff]
        %v3725 = vld [vmem:[#allocation2 + $0x97] sm:$0xff]
        %v3726 = vld [vmem:[#allocation2 + $0x9f] sm:$0xff]
        %v3727 = vld [vmem:[#allocation2 + $0xa7] sm:$0xff]
        %v3728 = vld [vmem:[#allocation2 + $0xaf] sm:$0xff]
        %v3729 = vld [vmem:[#allocation2 + $0xb7] sm:$0xff]
        %v3730 = vld [vmem:[#allocation2 + $0xbf] sm:$0xff]
        %v3731 = vld [vmem:[#allocation2 + $0xc7] sm:$0xff]
        %v3732 = vld [vmem:[#allocation2 + $0xcf] sm:$0xff]
        %v3733 = vld [vmem:[#allocation2 + $0xd7] sm:$0xff]
        %v3734 = vld [vmem:[#allocation2 + $0xdf] sm:$0xff]
        %v3735 = vld [vmem:[#allocation2 + $0xe7] sm:$0xff]
        %v3736 = vld [vmem:[#allocation2 + $0xef] sm:$0xff]
        %v3737 = vld [vmem:[#allocation2 + $0xf7] sm:$0xff]
        %v3738 = vld [vmem:[#allocation2 + $0xff] sm:$0xff]
        %v3739 = vld [vmem:[#allocation2 + $0x107] sm:$0xff]
        %v3740 = vld [vmem:[#allocation2 + $0x10f] sm:$0xff]
        %v3741 = vld [vmem:[#allocation2 + $0x117] sm:$0xff]
        %v3742 = vld [vmem:[#allocation2 + $0x11f] sm:$0xff]
        %v3743 = vsel %vm1748, %v3711, 0.0
        %v3744 = vsel %vm1749, %v3712, 0.0
        %v3745 = vsel %vm1750, %v3713, 0.0
        %v3746 = vsel %vm1751, %v3714, 0.0
        %v3747 = vsel %vm1752, %v3715, 0.0
        %v3748 = vsel %vm1753, %v3716, 0.0
        %v3749 = vsel %vm1754, %v3717, 0.0
        %v3750 = vsel %vm1755, %v3718, 0.0
        %v3751 = vsel %vm1756, %v3719, 0.0
        %v3752 = vsel %vm1757, %v3720, 0.0
        %v3753 = vsel %vm1758, %v3721, 0.0
        %v3754 = vsel %vm1759, %v3722, 0.0
        %v3755 = vsel %vm1760, %v3723, 0.0
        %v3756 = vsel %vm1761, %v3724, 0.0
        %v3757 = vsel %vm1762, %v3725, 0.0
        %v3758 = vsel %vm1763, %v3726, 0.0
        %v3759 = vsel %vm1764, %v3727, 0.0
        %v3760 = vsel %vm1765, %v3728, 0.0
        %v3761 = vsel %vm1766, %v3729, 0.0
        %v3762 = vsel %vm1767, %v3730, 0.0
        %v3763 = vsel %vm1768, %v3731, 0.0
        %v3764 = vsel %vm1769, %v3732, 0.0
        %v3765 = vsel %vm1770, %v3733, 0.0
        %v3766 = vsel %vm1771, %v3734, 0.0
        %v3767 = vsel %vm1772, %v3735, 0.0
        %v3768 = vsel %vm1773, %v3736, 0.0
        %v3769 = vsel %vm1774, %v3737, 0.0
        %v3770 = vsel %vm1775, %v3738, 0.0
        %v3771 = vsel %vm1776, %v3739, 0.0
        %v3772 = vsel %vm1777, %v3740, 0.0
        %v3773 = vsel %vm1778, %v3741, 0.0
        %v3774 = vsel %vm1779, %v3742, 0.0
        %v3775 = vpack.c.bf16 %v3744, %v3743
        %v3776 = vpack.c.bf16 %v3746, %v3745
        %v3777 = vpack.c.bf16 %v3748, %v3747
        %v3778 = vpack.c.bf16 %v3750, %v3749
        %v3779 = vpack.c.bf16 %v3752, %v3751
        %v3780 = vpack.c.bf16 %v3754, %v3753
        %v3781 = vpack.c.bf16 %v3756, %v3755
        %v3782 = vpack.c.bf16 %v3758, %v3757
        %v3783 = vpack.c.bf16 %v3760, %v3759
        %v3784 = vpack.c.bf16 %v3762, %v3761
        %v3785 = vpack.c.bf16 %v3764, %v3763
        %v3786 = vpack.c.bf16 %v3766, %v3765
        %v3787 = vpack.c.bf16 %v3768, %v3767
        %v3788 = vpack.c.bf16 %v3770, %v3769
        %v3789 = vpack.c.bf16 %v3772, %v3771
        %v3790 = vpack.c.bf16 %v3774, %v3773
        %s3791 = scalar_lea.vmem [#allocation9], 96
        %v3792 = vld [vmem:[%s3791] sm:$0xf]
        %v3793 = vld [vmem:[%s3791 + $0x4] sm:$0xf]
        %v3794 = vld [vmem:[%s3791 + $0x8] sm:$0xf]
        %v3795 = vld [vmem:[%s3791 + $0xc] sm:$0xf]
        %v3800 = vunpack.c.l.b16 %v3792
        %v3801 = vunpack.c.l.b16 %v3793
        %v3802 = vunpack.c.l.b16 %v3794
        %v3803 = vunpack.c.l.b16 %v3795
        %v3804 = vpack.c.b16 %v3801, %v3800
        %v3805 = vpack.c.b16 %v3803, %v3802
        %v3809 = vsel %vm1020, %v3775, 0
        %v3812 = vsel %vm1020, %v3776, 0
        %v3815 = vsel %vm1020, %v3777, 0
        %v3818 = vsel %vm1020, %v3778, 0
        %v3821 = vsel %vm1020, %v3779, 0
        %v3824 = vsel %vm1020, %v3780, 0
        %v3827 = vsel %vm1020, %v3781, 0
        %v3830 = vsel %vm1020, %v3782, 0
        %v3833 = vsel %vm1020, %v3783, 0
        %v3836 = vsel %vm1020, %v3784, 0
        %v3839 = vsel %vm1020, %v3785, 0
        %v3842 = vsel %vm1020, %v3786, 0
        %v3845 = vsel %vm1020, %v3787, 0
        %v3848 = vsel %vm1020, %v3788, 0
        %v3851 = vsel %vm1020, %v3789, 0
        %v3854 = vsel %vm1020, %v3790, 0
        %3856 = vmatprep.subr.bf16.mxu0 0
        %3857 = vmatpush1.bf16.msra.mxu0 %v3804
        %3858 = vmatprep.subr.bf16.mxu0 0
        %3859 = vmatpush1.bf16.msra.mxu0 %v3805
        %3860 = vmatprep.subr.bf16.mxu0 0
        %3861 = vmatpush1.bf16.msra.mxu0 0
        %3862 = vmatprep.subr.bf16.mxu0 0
        %3863 = vmatpush1.bf16.msra.mxu0 0
        %3864 = vmatprep.subr.bf16.mxu0 0
        %3865 = vmatpush1.bf16.msra.mxu0 0
        %3866 = vmatprep.subr.bf16.mxu0 0
        %3867 = vmatpush1.bf16.msra.mxu0 0
        %3868 = vmatprep.subr.bf16.mxu0 0
        %3869 = vmatpush1.bf16.msra.mxu0 0
        %3870 = vmatprep.subr.bf16.mxu0 0
        %3871 = vmatpush1.bf16.msra.mxu0 0
        %3872 = vmatprep.subr.bf16.mxu0 0
        %3873 = vmatpush1.bf16.msra.mxu0 0
        %3874 = vmatprep.subr.bf16.mxu0 0
        %3875 = vmatpush1.bf16.msra.mxu0 0
        %3876 = vmatprep.subr.bf16.mxu0 0
        %3877 = vmatpush1.bf16.msra.mxu0 0
        %3878 = vmatprep.subr.bf16.mxu0 0
        %3879 = vmatpush1.bf16.msra.mxu0 0
        %3880 = vmatprep.subr.bf16.mxu0 0
        %3881 = vmatpush1.bf16.msra.mxu0 0
        %3882 = vmatprep.subr.bf16.mxu0 0
        %3883 = vmatpush1.bf16.msra.mxu0 0
        %3884 = vmatprep.subr.bf16.mxu0 0
        %3885 = vmatpush1.bf16.msra.mxu0 0
        %3886 = vmatprep.subr.bf16.mxu0 0
        %3887 = vmatpush1.bf16.msra.mxu0 0
        %3888 = vmatprep.mubr.bf16.mxu0 0
        %3889 = vmatmul.mubr.bf16.gmra.mrb[0].mxu0 %v3809
        %v3890 = vpop.f32.mrb[0].mxu0
        %v3891 = vadd.f32 0.0, %v3890
        %v3892 = vpop.f32.mrb[0].mxu0
        %v3893 = vpop.f32.mrb[0].mxu0
        %v3894 = vadd.f32 0.0, %v3893
        %v3895 = vpop.f32.mrb[0].mxu0
        %3896 = vmatprep.mubr.bf16.mxu0 0
        %3897 = vmatmul.mubr.bf16.gmra.mrb[0].mxu0 %v3812
        %v3898 = vpop.f32.mrb[0].mxu0
        %v3899 = vadd.f32 0.0, %v3898
        %v3900 = vpop.f32.mrb[0].mxu0
        %v3901 = vpop.f32.mrb[0].mxu0
        %v3902 = vadd.f32 0.0, %v3901
        %v3903 = vpop.f32.mrb[0].mxu0
        %3904 = vmatprep.mubr.bf16.mxu0 0
        %3905 = vmatmul.mubr.bf16.gmra.mrb[0].mxu0 %v3815
        %v3906 = vpop.f32.mrb[0].mxu0
        %v3907 = vadd.f32 0.0, %v3906
        %v3908 = vpop.f32.mrb[0].mxu0
        %v3909 = vpop.f32.mrb[0].mxu0
        %v3910 = vadd.f32 0.0, %v3909
        %v3911 = vpop.f32.mrb[0].mxu0
        %3912 = vmatprep.mubr.bf16.mxu0 0
        %3913 = vmatmul.mubr.bf16.gmra.mrb[0].mxu0 %v3818
        %v3914 = vpop.f32.mrb[0].mxu0
        %v3915 = vadd.f32 0.0, %v3914
        %v3916 = vpop.f32.mrb[0].mxu0
        %v3917 = vpop.f32.mrb[0].mxu0
        %v3918 = vadd.f32 0.0, %v3917
        %v3919 = vpop.f32.mrb[0].mxu0
        %3920 = vmatprep.mubr.bf16.mxu0 0
        %3921 = vmatmul.mubr.bf16.gmra.mrb[0].mxu0 %v3821
        %v3922 = vpop.f32.mrb[0].mxu0
        %v3923 = vadd.f32 0.0, %v3922
        %v3924 = vpop.f32.mrb[0].mxu0
        %v3925 = vpop.f32.mrb[0].mxu0
        %v3926 = vadd.f32 0.0, %v3925
        %v3927 = vpop.f32.mrb[0].mxu0
        %3928 = vmatprep.mubr.bf16.mxu0 0
        %3929 = vmatmul.mubr.bf16.gmra.mrb[0].mxu0 %v3824
        %v3930 = vpop.f32.mrb[0].mxu0
        %v3931 = vadd.f32 0.0, %v3930
        %v3932 = vpop.f32.mrb[0].mxu0
        %v3933 = vpop.f32.mrb[0].mxu0
        %v3934 = vadd.f32 0.0, %v3933
        %v3935 = vpop.f32.mrb[0].mxu0
        %3936 = vmatprep.mubr.bf16.mxu0 0
        %3937 = vmatmul.mubr.bf16.gmra.mrb[0].mxu0 %v3827
        %v3938 = vpop.f32.mrb[0].mxu0
        %v3939 = vadd.f32 0.0, %v3938
        %v3940 = vpop.f32.mrb[0].mxu0
        %v3941 = vpop.f32.mrb[0].mxu0
        %v3942 = vadd.f32 0.0, %v3941
        %v3943 = vpop.f32.mrb[0].mxu0
        %3944 = vmatprep.mubr.bf16.mxu0 0
        %3945 = vmatmul.mubr.bf16.gmra.mrb[0].mxu0 %v3830
        %v3946 = vpop.f32.mrb[0].mxu0
        %v3947 = vadd.f32 0.0, %v3946
        %v3948 = vpop.f32.mrb[0].mxu0
        %v3949 = vpop.f32.mrb[0].mxu0
        %v3950 = vadd.f32 0.0, %v3949
        %v3951 = vpop.f32.mrb[0].mxu0
        %3952 = vmatprep.mubr.bf16.mxu0 0
        %3953 = vmatmul.mubr.bf16.gmra.mrb[0].mxu0 %v3833
        %v3954 = vpop.f32.mrb[0].mxu0
        %v3955 = vadd.f32 0.0, %v3954
        %v3956 = vpop.f32.mrb[0].mxu0
        %v3957 = vpop.f32.mrb[0].mxu0
        %v3958 = vadd.f32 0.0, %v3957
        %v3959 = vpop.f32.mrb[0].mxu0
        %3960 = vmatprep.mubr.bf16.mxu0 0
        %3961 = vmatmul.mubr.bf16.gmra.mrb[0].mxu0 %v3836
        %v3962 = vpop.f32.mrb[0].mxu0
        %v3963 = vadd.f32 0.0, %v3962
        %v3964 = vpop.f32.mrb[0].mxu0
        %v3965 = vpop.f32.mrb[0].mxu0
        %v3966 = vadd.f32 0.0, %v3965
        %v3967 = vpop.f32.mrb[0].mxu0
        %3968 = vmatprep.mubr.bf16.mxu0 0
        %3969 = vmatmul.mubr.bf16.gmra.mrb[0].mxu0 %v3839
        %v3970 = vpop.f32.mrb[0].mxu0
        %v3971 = vadd.f32 0.0, %v3970
        %v3972 = vpop.f32.mrb[0].mxu0
        %v3973 = vpop.f32.mrb[0].mxu0
        %v3974 = vadd.f32 0.0, %v3973
        %v3975 = vpop.f32.mrb[0].mxu0
        %3976 = vmatprep.mubr.bf16.mxu0 0
        %3977 = vmatmul.mubr.bf16.gmra.mrb[0].mxu0 %v3842
        %v3978 = vpop.f32.mrb[0].mxu0
        %v3979 = vadd.f32 0.0, %v3978
        %v3980 = vpop.f32.mrb[0].mxu0
        %v3981 = vpop.f32.mrb[0].mxu0
        %v3982 = vadd.f32 0.0, %v3981
        %v3983 = vpop.f32.mrb[0].mxu0
        %3984 = vmatprep.mubr.bf16.mxu0 0
        %3985 = vmatmul.mubr.bf16.gmra.mrb[0].mxu0 %v3845
        %v3986 = vpop.f32.mrb[0].mxu0
        %v3987 = vadd.f32 0.0, %v3986
        %v3988 = vpop.f32.mrb[0].mxu0
        %v3989 = vpop.f32.mrb[0].mxu0
        %v3990 = vadd.f32 0.0, %v3989
        %v3991 = vpop.f32.mrb[0].mxu0
        %3992 = vmatprep.mubr.bf16.mxu0 0
        %3993 = vmatmul.mubr.bf16.gmra.mrb[0].mxu0 %v3848
        %v3994 = vpop.f32.mrb[0].mxu0
        %v3995 = vadd.f32 0.0, %v3994
        %v3996 = vpop.f32.mrb[0].mxu0
        %v3997 = vpop.f32.mrb[0].mxu0
        %v3998 = vadd.f32 0.0, %v3997
        %v3999 = vpop.f32.mrb[0].mxu0
        %4000 = vmatprep.mubr.bf16.mxu0 0
        %4001 = vmatmul.mubr.bf16.gmra.mrb[0].mxu0 %v3851
        %v4002 = vpop.f32.mrb[0].mxu0
        %v4003 = vadd.f32 0.0, %v4002
        %v4004 = vpop.f32.mrb[0].mxu0
        %v4005 = vpop.f32.mrb[0].mxu0
        %v4006 = vadd.f32 0.0, %v4005
        %v4007 = vpop.f32.mrb[0].mxu0
        %4008 = vmatprep.mubr.bf16.mxu0 0
        %4009 = vmatmul.mubr.bf16.gmra.mrb[0].mxu0 %v3854
        %v4010 = vpop.f32.mrb[0].mxu0
        %v4011 = vadd.f32 0.0, %v4010
        %v4012 = vpop.f32.mrb[0].mxu0
        %v4013 = vpop.f32.mrb[0].mxu0
        %v4014 = vadd.f32 0.0, %v4013
        %v4015 = vpop.f32.mrb[0].mxu0
        %4016 = vdwg.mxu0
        %v4017 = vadd.f32 %v3679, %v3891
        %v4018 = vadd.f32 %v3680, %v3894
        %v4019 = vadd.f32 %v3681, %v3899
        %v4020 = vadd.f32 %v3682, %v3902
        %v4021 = vadd.f32 %v3683, %v3907
        %v4022 = vadd.f32 %v3684, %v3910
        %v4023 = vadd.f32 %v3685, %v3915
        %v4024 = vadd.f32 %v3686, %v3918
        %v4025 = vadd.f32 %v3687, %v3923
        %v4026 = vadd.f32 %v3688, %v3926
        %v4027 = vadd.f32 %v3689, %v3931
        %v4028 = vadd.f32 %v3690, %v3934
        %v4029 = vadd.f32 %v3691, %v3939
        %v4030 = vadd.f32 %v3692, %v3942
        %v4031 = vadd.f32 %v3693, %v3947
        %v4032 = vadd.f32 %v3694, %v3950
        %v4033 = vadd.f32 %v3695, %v3955
        %v4034 = vadd.f32 %v3696, %v3958
        %v4035 = vadd.f32 %v3697, %v3963
        %v4036 = vadd.f32 %v3698, %v3966
        %v4037 = vadd.f32 %v3699, %v3971
        %v4038 = vadd.f32 %v3700, %v3974
        %v4039 = vadd.f32 %v3701, %v3979
        %v4040 = vadd.f32 %v3702, %v3982
        %v4041 = vadd.f32 %v3703, %v3987
        %v4042 = vadd.f32 %v3704, %v3990
        %v4043 = vadd.f32 %v3705, %v3995
        %v4044 = vadd.f32 %v3706, %v3998
        %v4045 = vadd.f32 %v3707, %v4003
        %v4046 = vadd.f32 %v3708, %v4006
        %v4047 = vadd.f32 %v3709, %v4011
        %v4048 = vadd.f32 %v3710, %v4014
        %v4049 = vld [vmem:[#allocation2 + $0x28] sm:$0xff]
        %v4050 = vld [vmem:[#allocation2 + $0x30] sm:$0xff]
        %v4051 = vld [vmem:[#allocation2 + $0x38] sm:$0xff]
        %v4052 = vld [vmem:[#allocation2 + $0x40] sm:$0xff]
        %v4053 = vld [vmem:[#allocation2 + $0x48] sm:$0xff]
        %v4054 = vld [vmem:[#allocation2 + $0x50] sm:$0xff]
        %v4055 = vld [vmem:[#allocation2 + $0x58] sm:$0xff]
        %v4056 = vld [vmem:[#allocation2 + $0x60] sm:$0xff]
        %v4057 = vld [vmem:[#allocation2 + $0x68] sm:$0xff]
        %v4058 = vld [vmem:[#allocation2 + $0x70] sm:$0xff]
        %v4059 = vld [vmem:[#allocation2 + $0x78] sm:$0xff]
        %v4060 = vld [vmem:[#allocation2 + $0x80] sm:$0xff]
        %v4061 = vld [vmem:[#allocation2 + $0x88] sm:$0xff]
        %v4062 = vld [vmem:[#allocation2 + $0x90] sm:$0xff]
        %v4063 = vld [vmem:[#allocation2 + $0x98] sm:$0xff]
        %v4064 = vld [vmem:[#allocation2 + $0xa0] sm:$0xff]
        %v4065 = vld [vmem:[#allocation2 + $0xa8] sm:$0xff]
        %v4066 = vld [vmem:[#allocation2 + $0xb0] sm:$0xff]
        %v4067 = vld [vmem:[#allocation2 + $0xb8] sm:$0xff]
        %v4068 = vld [vmem:[#allocation2 + $0xc0] sm:$0xff]
        %v4069 = vld [vmem:[#allocation2 + $0xc8] sm:$0xff]
        %v4070 = vld [vmem:[#allocation2 + $0xd0] sm:$0xff]
        %v4071 = vld [vmem:[#allocation2 + $0xd8] sm:$0xff]
        %v4072 = vld [vmem:[#allocation2 + $0xe0] sm:$0xff]
        %v4073 = vld [vmem:[#allocation2 + $0xe8] sm:$0xff]
        %v4074 = vld [vmem:[#allocation2 + $0xf0] sm:$0xff]
        %v4075 = vld [vmem:[#allocation2 + $0xf8] sm:$0xff]
        %v4076 = vld [vmem:[#allocation2 + $0x100] sm:$0xff]
        %v4077 = vld [vmem:[#allocation2 + $0x108] sm:$0xff]
        %v4078 = vld [vmem:[#allocation2 + $0x110] sm:$0xff]
        %v4079 = vld [vmem:[#allocation2 + $0x118] sm:$0xff]
        %v4080 = vld [vmem:[#allocation2 + $0x120] sm:$0xff]
        %v4081 = vpack.c.bf16 %v4050, %v4049
        %v4082 = vpack.c.bf16 %v4052, %v4051
        %v4083 = vpack.c.bf16 %v4054, %v4053
        %v4084 = vpack.c.bf16 %v4056, %v4055
        %v4085 = vpack.c.bf16 %v4058, %v4057
        %v4086 = vpack.c.bf16 %v4060, %v4059
        %v4087 = vpack.c.bf16 %v4062, %v4061
        %v4088 = vpack.c.bf16 %v4064, %v4063
        %v4089 = vpack.c.bf16 %v4066, %v4065
        %v4090 = vpack.c.bf16 %v4068, %v4067
        %v4091 = vpack.c.bf16 %v4070, %v4069
        %v4092 = vpack.c.bf16 %v4072, %v4071
        %v4093 = vpack.c.bf16 %v4074, %v4073
        %v4094 = vpack.c.bf16 %v4076, %v4075
        %v4095 = vpack.c.bf16 %v4078, %v4077
        %v4096 = vpack.c.bf16 %v4080, %v4079
        %s4097 = scalar_lea.vmem [#allocation9], 112
        %v4098 = vld [vmem:[%s4097] sm:$0xf]
        %v4099 = vld [vmem:[%s4097 + $0x4] sm:$0xf]
        %v4100 = vld [vmem:[%s4097 + $0x8] sm:$0xf]
        %v4101 = vld [vmem:[%s4097 + $0xc] sm:$0xf]
        %v4106 = vunpack.c.l.b16 %v4098
        %v4107 = vunpack.c.l.b16 %v4099
        %v4108 = vunpack.c.l.b16 %v4100
        %v4109 = vunpack.c.l.b16 %v4101
        %v4110 = vpack.c.b16 %v4107, %v4106
        %v4111 = vpack.c.b16 %v4109, %v4108
        %v4115 = vsel %vm1020, %v4081, 0
        %v4118 = vsel %vm1020, %v4082, 0
        %v4121 = vsel %vm1020, %v4083, 0
        %v4124 = vsel %vm1020, %v4084, 0
        %v4127 = vsel %vm1020, %v4085, 0
        %v4130 = vsel %vm1020, %v4086, 0
        %v4133 = vsel %vm1020, %v4087, 0
        %v4136 = vsel %vm1020, %v4088, 0
        %v4139 = vsel %vm1020, %v4089, 0
        %v4142 = vsel %vm1020, %v4090, 0
        %v4145 = vsel %vm1020, %v4091, 0
        %v4148 = vsel %vm1020, %v4092, 0
        %v4151 = vsel %vm1020, %v4093, 0
        %v4154 = vsel %vm1020, %v4094, 0
        %v4157 = vsel %vm1020, %v4095, 0
        %v4160 = vsel %vm1020, %v4096, 0
        %4162 = vmatprep.subr.bf16.mxu0 0
        %4163 = vmatpush1.bf16.msra.mxu0 %v4110
        %4164 = vmatprep.subr.bf16.mxu0 0
        %4165 = vmatpush1.bf16.msra.mxu0 %v4111
        %4166 = vmatprep.subr.bf16.mxu0 0
        %4167 = vmatpush1.bf16.msra.mxu0 0
        %4168 = vmatprep.subr.bf16.mxu0 0
        %4169 = vmatpush1.bf16.msra.mxu0 0
        %4170 = vmatprep.subr.bf16.mxu0 0
        %4171 = vmatpush1.bf16.msra.mxu0 0
        %4172 = vmatprep.subr.bf16.mxu0 0
        %4173 = vmatpush1.bf16.msra.mxu0 0
        %4174 = vmatprep.subr.bf16.mxu0 0
        %4175 = vmatpush1.bf16.msra.mxu0 0
        %4176 = vmatprep.subr.bf16.mxu0 0
        %4177 = vmatpush1.bf16.msra.mxu0 0
        %4178 = vmatprep.subr.bf16.mxu0 0
        %4179 = vmatpush1.bf16.msra.mxu0 0
        %4180 = vmatprep.subr.bf16.mxu0 0
        %4181 = vmatpush1.bf16.msra.mxu0 0
        %4182 = vmatprep.subr.bf16.mxu0 0
        %4183 = vmatpush1.bf16.msra.mxu0 0
        %4184 = vmatprep.subr.bf16.mxu0 0
        %4185 = vmatpush1.bf16.msra.mxu0 0
        %4186 = vmatprep.subr.bf16.mxu0 0
        %4187 = vmatpush1.bf16.msra.mxu0 0
        %4188 = vmatprep.subr.bf16.mxu0 0
        %4189 = vmatpush1.bf16.msra.mxu0 0
        %4190 = vmatprep.subr.bf16.mxu0 0
        %4191 = vmatpush1.bf16.msra.mxu0 0
        %4192 = vmatprep.subr.bf16.mxu0 0
        %4193 = vmatpush1.bf16.msra.mxu0 0
        %4194 = vmatprep.mubr.bf16.mxu0 0
        %4195 = vmatmul.mubr.bf16.gmra.mrb[0].mxu0 %v4115
        %v4196 = vpop.f32.mrb[0].mxu0
        %v4197 = vadd.f32 0.0, %v4196
        %v4198 = vpop.f32.mrb[0].mxu0
        %v4199 = vpop.f32.mrb[0].mxu0
        %v4200 = vadd.f32 0.0, %v4199
        %v4201 = vpop.f32.mrb[0].mxu0
        %4202 = vmatprep.mubr.bf16.mxu0 0
        %4203 = vmatmul.mubr.bf16.gmra.mrb[0].mxu0 %v4118
        %v4204 = vpop.f32.mrb[0].mxu0
        %v4205 = vadd.f32 0.0, %v4204
        %v4206 = vpop.f32.mrb[0].mxu0
        %v4207 = vpop.f32.mrb[0].mxu0
        %v4208 = vadd.f32 0.0, %v4207
        %v4209 = vpop.f32.mrb[0].mxu0
        %4210 = vmatprep.mubr.bf16.mxu0 0
        %4211 = vmatmul.mubr.bf16.gmra.mrb[0].mxu0 %v4121
        %v4212 = vpop.f32.mrb[0].mxu0
        %v4213 = vadd.f32 0.0, %v4212
        %v4214 = vpop.f32.mrb[0].mxu0
        %v4215 = vpop.f32.mrb[0].mxu0
        %v4216 = vadd.f32 0.0, %v4215
        %v4217 = vpop.f32.mrb[0].mxu0
        %4218 = vmatprep.mubr.bf16.mxu0 0
        %4219 = vmatmul.mubr.bf16.gmra.mrb[0].mxu0 %v4124
        %v4220 = vpop.f32.mrb[0].mxu0
        %v4221 = vadd.f32 0.0, %v4220
        %v4222 = vpop.f32.mrb[0].mxu0
        %v4223 = vpop.f32.mrb[0].mxu0
        %v4224 = vadd.f32 0.0, %v4223
        %v4225 = vpop.f32.mrb[0].mxu0
        %4226 = vmatprep.mubr.bf16.mxu0 0
        %4227 = vmatmul.mubr.bf16.gmra.mrb[0].mxu0 %v4127
        %v4228 = vpop.f32.mrb[0].mxu0
        %v4229 = vadd.f32 0.0, %v4228
        %v4230 = vpop.f32.mrb[0].mxu0
        %v4231 = vpop.f32.mrb[0].mxu0
        %v4232 = vadd.f32 0.0, %v4231
        %v4233 = vpop.f32.mrb[0].mxu0
        %4234 = vmatprep.mubr.bf16.mxu0 0
        %4235 = vmatmul.mubr.bf16.gmra.mrb[0].mxu0 %v4130
        %v4236 = vpop.f32.mrb[0].mxu0
        %v4237 = vadd.f32 0.0, %v4236
        %v4238 = vpop.f32.mrb[0].mxu0
        %v4239 = vpop.f32.mrb[0].mxu0
        %v4240 = vadd.f32 0.0, %v4239
        %v4241 = vpop.f32.mrb[0].mxu0
        %4242 = vmatprep.mubr.bf16.mxu0 0
        %4243 = vmatmul.mubr.bf16.gmra.mrb[0].mxu0 %v4133
        %v4244 = vpop.f32.mrb[0].mxu0
        %v4245 = vadd.f32 0.0, %v4244
        %v4246 = vpop.f32.mrb[0].mxu0
        %v4247 = vpop.f32.mrb[0].mxu0
        %v4248 = vadd.f32 0.0, %v4247
        %v4249 = vpop.f32.mrb[0].mxu0
        %4250 = vmatprep.mubr.bf16.mxu0 0
        %4251 = vmatmul.mubr.bf16.gmra.mrb[0].mxu0 %v4136
        %v4252 = vpop.f32.mrb[0].mxu0
        %v4253 = vadd.f32 0.0, %v4252
        %v4254 = vpop.f32.mrb[0].mxu0
        %v4255 = vpop.f32.mrb[0].mxu0
        %v4256 = vadd.f32 0.0, %v4255
        %v4257 = vpop.f32.mrb[0].mxu0
        %4258 = vmatprep.mubr.bf16.mxu0 0
        %4259 = vmatmul.mubr.bf16.gmra.mrb[0].mxu0 %v4139
        %v4260 = vpop.f32.mrb[0].mxu0
        %v4261 = vadd.f32 0.0, %v4260
        %v4262 = vpop.f32.mrb[0].mxu0
        %v4263 = vpop.f32.mrb[0].mxu0
        %v4264 = vadd.f32 0.0, %v4263
        %v4265 = vpop.f32.mrb[0].mxu0
        %4266 = vmatprep.mubr.bf16.mxu0 0
        %4267 = vmatmul.mubr.bf16.gmra.mrb[0].mxu0 %v4142
        %v4268 = vpop.f32.mrb[0].mxu0
        %v4269 = vadd.f32 0.0, %v4268
        %v4270 = vpop.f32.mrb[0].mxu0
        %v4271 = vpop.f32.mrb[0].mxu0
        %v4272 = vadd.f32 0.0, %v4271
        %v4273 = vpop.f32.mrb[0].mxu0
        %4274 = vmatprep.mubr.bf16.mxu0 0
        %4275 = vmatmul.mubr.bf16.gmra.mrb[0].mxu0 %v4145
        %v4276 = vpop.f32.mrb[0].mxu0
        %v4277 = vadd.f32 0.0, %v4276
        %v4278 = vpop.f32.mrb[0].mxu0
        %v4279 = vpop.f32.mrb[0].mxu0
        %v4280 = vadd.f32 0.0, %v4279
        %v4281 = vpop.f32.mrb[0].mxu0
        %4282 = vmatprep.mubr.bf16.mxu0 0
        %4283 = vmatmul.mubr.bf16.gmra.mrb[0].mxu0 %v4148
        %v4284 = vpop.f32.mrb[0].mxu0
        %v4285 = vadd.f32 0.0, %v4284
        %v4286 = vpop.f32.mrb[0].mxu0
        %v4287 = vpop.f32.mrb[0].mxu0
        %v4288 = vadd.f32 0.0, %v4287
        %v4289 = vpop.f32.mrb[0].mxu0
        %4290 = vmatprep.mubr.bf16.mxu0 0
        %4291 = vmatmul.mubr.bf16.gmra.mrb[0].mxu0 %v4151
        %v4292 = vpop.f32.mrb[0].mxu0
        %v4293 = vadd.f32 0.0, %v4292
        %v4294 = vpop.f32.mrb[0].mxu0
        %v4295 = vpop.f32.mrb[0].mxu0
        %v4296 = vadd.f32 0.0, %v4295
        %v4297 = vpop.f32.mrb[0].mxu0
        %4298 = vmatprep.mubr.bf16.mxu0 0
        %4299 = vmatmul.mubr.bf16.gmra.mrb[0].mxu0 %v4154
        %v4300 = vpop.f32.mrb[0].mxu0
        %v4301 = vadd.f32 0.0, %v4300
        %v4302 = vpop.f32.mrb[0].mxu0
        %v4303 = vpop.f32.mrb[0].mxu0
        %v4304 = vadd.f32 0.0, %v4303
        %v4305 = vpop.f32.mrb[0].mxu0
        %4306 = vmatprep.mubr.bf16.mxu0 0
        %4307 = vmatmul.mubr.bf16.gmra.mrb[0].mxu0 %v4157
        %v4308 = vpop.f32.mrb[0].mxu0
        %v4309 = vadd.f32 0.0, %v4308
        %v4310 = vpop.f32.mrb[0].mxu0
        %v4311 = vpop.f32.mrb[0].mxu0
        %v4312 = vadd.f32 0.0, %v4311
        %v4313 = vpop.f32.mrb[0].mxu0
        %4314 = vmatprep.mubr.bf16.mxu0 0
        %4315 = vmatmul.mubr.bf16.gmra.mrb[0].mxu0 %v4160
        %v4316 = vpop.f32.mrb[0].mxu0
        %v4317 = vadd.f32 0.0, %v4316
        %v4318 = vpop.f32.mrb[0].mxu0
        %v4319 = vpop.f32.mrb[0].mxu0
        %v4320 = vadd.f32 0.0, %v4319
        %v4321 = vpop.f32.mrb[0].mxu0
        %4322 = vdwg.mxu0
        %v4323 = vadd.f32 %v4017, %v4197
        %v4324 = vadd.f32 %v4018, %v4200
        %v4325 = vadd.f32 %v4019, %v4205
        %v4326 = vadd.f32 %v4020, %v4208
        %v4327 = vadd.f32 %v4021, %v4213
        %v4328 = vadd.f32 %v4022, %v4216
        %v4329 = vadd.f32 %v4023, %v4221
        %v4330 = vadd.f32 %v4024, %v4224
        %v4331 = vadd.f32 %v4025, %v4229
        %v4332 = vadd.f32 %v4026, %v4232
        %v4333 = vadd.f32 %v4027, %v4237
        %v4334 = vadd.f32 %v4028, %v4240
        %v4335 = vadd.f32 %v4029, %v4245
        %v4336 = vadd.f32 %v4030, %v4248
        %v4337 = vadd.f32 %v4031, %v4253
        %v4338 = vadd.f32 %v4032, %v4256
        %v4339 = vadd.f32 %v4033, %v4261
        %v4340 = vadd.f32 %v4034, %v4264
        %v4341 = vadd.f32 %v4035, %v4269
        %v4342 = vadd.f32 %v4036, %v4272
        %v4343 = vadd.f32 %v4037, %v4277
        %v4344 = vadd.f32 %v4038, %v4280
        %v4345 = vadd.f32 %v4039, %v4285
        %v4346 = vadd.f32 %v4040, %v4288
        %v4347 = vadd.f32 %v4041, %v4293
        %v4348 = vadd.f32 %v4042, %v4296
        %v4349 = vadd.f32 %v4043, %v4301
        %v4350 = vadd.f32 %v4044, %v4304
        %v4351 = vadd.f32 %v4045, %v4309
        %v4352 = vadd.f32 %v4046, %v4312
        %v4353 = vadd.f32 %v4047, %v4317
        %v4354 = vadd.f32 %v4048, %v4320
        %v4355 = vld [vmem:[#allocation2 + $0x29] sm:$0xff]
        %v4356 = vld [vmem:[#allocation2 + $0x31] sm:$0xff]
        %v4357 = vld [vmem:[#allocation2 + $0x39] sm:$0xff]
        %v4358 = vld [vmem:[#allocation2 + $0x41] sm:$0xff]
        %v4359 = vld [vmem:[#allocation2 + $0x49] sm:$0xff]
        %v4360 = vld [vmem:[#allocation2 + $0x51] sm:$0xff]
        %v4361 = vld [vmem:[#allocation2 + $0x59] sm:$0xff]
        %v4362 = vld [vmem:[#allocation2 + $0x61] sm:$0xff]
        %v4363 = vld [vmem:[#allocation2 + $0x69] sm:$0xff]
        %v4364 = vld [vmem:[#allocation2 + $0x71] sm:$0xff]
        %v4365 = vld [vmem:[#allocation2 + $0x79] sm:$0xff]
        %v4366 = vld [vmem:[#allocation2 + $0x81] sm:$0xff]
        %v4367 = vld [vmem:[#allocation2 + $0x89] sm:$0xff]
        %v4368 = vld [vmem:[#allocation2 + $0x91] sm:$0xff]
        %v4369 = vld [vmem:[#allocation2 + $0x99] sm:$0xff]
        %v4370 = vld [vmem:[#allocation2 + $0xa1] sm:$0xff]
        %v4371 = vld [vmem:[#allocation2 + $0xa9] sm:$0xff]
        %v4372 = vld [vmem:[#allocation2 + $0xb1] sm:$0xff]
        %v4373 = vld [vmem:[#allocation2 + $0xb9] sm:$0xff]
        %v4374 = vld [vmem:[#allocation2 + $0xc1] sm:$0xff]
        %v4375 = vld [vmem:[#allocation2 + $0xc9] sm:$0xff]
        %v4376 = vld [vmem:[#allocation2 + $0xd1] sm:$0xff]
        %v4377 = vld [vmem:[#allocation2 + $0xd9] sm:$0xff]
        %v4378 = vld [vmem:[#allocation2 + $0xe1] sm:$0xff]
        %v4379 = vld [vmem:[#allocation2 + $0xe9] sm:$0xff]
        %v4380 = vld [vmem:[#allocation2 + $0xf1] sm:$0xff]
        %v4381 = vld [vmem:[#allocation2 + $0xf9] sm:$0xff]
        %v4382 = vld [vmem:[#allocation2 + $0x101] sm:$0xff]
        %v4383 = vld [vmem:[#allocation2 + $0x109] sm:$0xff]
        %v4384 = vld [vmem:[#allocation2 + $0x111] sm:$0xff]
        %v4385 = vld [vmem:[#allocation2 + $0x119] sm:$0xff]
        %v4386 = vld [vmem:[#allocation2 + $0x121] sm:$0xff]
        %v4387 = vsel %vm2391, %v4355, 0.0
        %v4388 = vsel %vm2392, %v4356, 0.0
        %v4389 = vsel %vm2393, %v4357, 0.0
        %v4390 = vsel %vm2394, %v4358, 0.0
        %v4391 = vsel %vm2395, %v4359, 0.0
        %v4392 = vsel %vm2396, %v4360, 0.0
        %v4393 = vsel %vm2397, %v4361, 0.0
        %v4394 = vsel %vm2398, %v4362, 0.0
        %v4395 = vsel %vm2399, %v4363, 0.0
        %v4396 = vsel %vm2400, %v4364, 0.0
        %v4397 = vsel %vm2401, %v4365, 0.0
        %v4398 = vsel %vm2402, %v4366, 0.0
        %v4399 = vsel %vm2403, %v4367, 0.0
        %v4400 = vsel %vm2404, %v4368, 0.0
        %v4401 = vsel %vm2405, %v4369, 0.0
        %v4402 = vsel %vm2406, %v4370, 0.0
        %v4403 = vsel %vm2407, %v4371, 0.0
        %v4404 = vsel %vm2408, %v4372, 0.0
        %v4405 = vsel %vm2409, %v4373, 0.0
        %v4406 = vsel %vm2410, %v4374, 0.0
        %v4407 = vsel %vm2411, %v4375, 0.0
        %v4408 = vsel %vm2412, %v4376, 0.0
        %v4409 = vsel %vm2413, %v4377, 0.0
        %v4410 = vsel %vm2414, %v4378, 0.0
        %v4411 = vsel %vm2415, %v4379, 0.0
        %v4412 = vsel %vm2416, %v4380, 0.0
        %v4413 = vsel %vm2417, %v4381, 0.0
        %v4414 = vsel %vm2418, %v4382, 0.0
        %v4415 = vsel %vm2419, %v4383, 0.0
        %v4416 = vsel %vm2420, %v4384, 0.0
        %v4417 = vsel %vm2421, %v4385, 0.0
        %v4418 = vsel %vm2422, %v4386, 0.0
        %v4419 = vpack.c.bf16 %v4388, %v4387
        %v4420 = vpack.c.bf16 %v4390, %v4389
        %v4421 = vpack.c.bf16 %v4392, %v4391
        %v4422 = vpack.c.bf16 %v4394, %v4393
        %v4423 = vpack.c.bf16 %v4396, %v4395
        %v4424 = vpack.c.bf16 %v4398, %v4397
        %v4425 = vpack.c.bf16 %v4400, %v4399
        %v4426 = vpack.c.bf16 %v4402, %v4401
        %v4427 = vpack.c.bf16 %v4404, %v4403
        %v4428 = vpack.c.bf16 %v4406, %v4405
        %v4429 = vpack.c.bf16 %v4408, %v4407
        %v4430 = vpack.c.bf16 %v4410, %v4409
        %v4431 = vpack.c.bf16 %v4412, %v4411
        %v4432 = vpack.c.bf16 %v4414, %v4413
        %v4433 = vpack.c.bf16 %v4416, %v4415
        %v4434 = vpack.c.bf16 %v4418, %v4417
        %s4435 = scalar_lea.vmem [#allocation9], 128
        %v4436 = vld [vmem:[%s4435] sm:$0xf]
        %v4437 = vld [vmem:[%s4435 + $0x4] sm:$0xf]
        %v4438 = vld [vmem:[%s4435 + $0x8] sm:$0xf]
        %v4439 = vld [vmem:[%s4435 + $0xc] sm:$0xf]
        %v4444 = vunpack.c.l.b16 %v4436
        %v4445 = vunpack.c.l.b16 %v4437
        %v4446 = vunpack.c.l.b16 %v4438
        %v4447 = vunpack.c.l.b16 %v4439
        %v4448 = vpack.c.b16 %v4445, %v4444
        %v4449 = vpack.c.b16 %v4447, %v4446
        %v4453 = vsel %vm1020, %v4419, 0
        %v4456 = vsel %vm1020, %v4420, 0
        %v4459 = vsel %vm1020, %v4421, 0
        %v4462 = vsel %vm1020, %v4422, 0
        %v4465 = vsel %vm1020, %v4423, 0
        %v4468 = vsel %vm1020, %v4424, 0
        %v4471 = vsel %vm1020, %v4425, 0
        %v4474 = vsel %vm1020, %v4426, 0
        %v4477 = vsel %vm1020, %v4427, 0
        %v4480 = vsel %vm1020, %v4428, 0
        %v4483 = vsel %vm1020, %v4429, 0
        %v4486 = vsel %vm1020, %v4430, 0
        %v4489 = vsel %vm1020, %v4431, 0
        %v4492 = vsel %vm1020, %v4432, 0
        %v4495 = vsel %vm1020, %v4433, 0
        %v4498 = vsel %vm1020, %v4434, 0
        %4500 = vmatprep.subr.bf16.mxu0 0
        %4501 = vmatpush1.bf16.msra.mxu0 %v4448
        %4502 = vmatprep.subr.bf16.mxu0 0
        %4503 = vmatpush1.bf16.msra.mxu0 %v4449
        %4504 = vmatprep.subr.bf16.mxu0 0
        %4505 = vmatpush1.bf16.msra.mxu0 0
        %4506 = vmatprep.subr.bf16.mxu0 0
        %4507 = vmatpush1.bf16.msra.mxu0 0
        %4508 = vmatprep.subr.bf16.mxu0 0
        %4509 = vmatpush1.bf16.msra.mxu0 0
        %4510 = vmatprep.subr.bf16.mxu0 0
        %4511 = vmatpush1.bf16.msra.mxu0 0
        %4512 = vmatprep.subr.bf16.mxu0 0
        %4513 = vmatpush1.bf16.msra.mxu0 0
        %4514 = vmatprep.subr.bf16.mxu0 0
        %4515 = vmatpush1.bf16.msra.mxu0 0
        %4516 = vmatprep.subr.bf16.mxu0 0
        %4517 = vmatpush1.bf16.msra.mxu0 0
        %4518 = vmatprep.subr.bf16.mxu0 0
        %4519 = vmatpush1.bf16.msra.mxu0 0
        %4520 = vmatprep.subr.bf16.mxu0 0
        %4521 = vmatpush1.bf16.msra.mxu0 0
        %4522 = vmatprep.subr.bf16.mxu0 0
        %4523 = vmatpush1.bf16.msra.mxu0 0
        %4524 = vmatprep.subr.bf16.mxu0 0
        %4525 = vmatpush1.bf16.msra.mxu0 0
        %4526 = vmatprep.subr.bf16.mxu0 0
        %4527 = vmatpush1.bf16.msra.mxu0 0
        %4528 = vmatprep.subr.bf16.mxu0 0
        %4529 = vmatpush1.bf16.msra.mxu0 0
        %4530 = vmatprep.subr.bf16.mxu0 0
        %4531 = vmatpush1.bf16.msra.mxu0 0
        %4532 = vmatprep.mubr.bf16.mxu0 0
        %4533 = vmatmul.mubr.bf16.gmra.mrb[0].mxu0 %v4453
        %v4534 = vpop.f32.mrb[0].mxu0
        %v4535 = vadd.f32 0.0, %v4534
        %v4536 = vpop.f32.mrb[0].mxu0
        %v4537 = vpop.f32.mrb[0].mxu0
        %v4538 = vadd.f32 0.0, %v4537
        %v4539 = vpop.f32.mrb[0].mxu0
        %4540 = vmatprep.mubr.bf16.mxu0 0
        %4541 = vmatmul.mubr.bf16.gmra.mrb[0].mxu0 %v4456
        %v4542 = vpop.f32.mrb[0].mxu0
        %v4543 = vadd.f32 0.0, %v4542
        %v4544 = vpop.f32.mrb[0].mxu0
        %v4545 = vpop.f32.mrb[0].mxu0
        %v4546 = vadd.f32 0.0, %v4545
        %v4547 = vpop.f32.mrb[0].mxu0
        %4548 = vmatprep.mubr.bf16.mxu0 0
        %4549 = vmatmul.mubr.bf16.gmra.mrb[0].mxu0 %v4459
        %v4550 = vpop.f32.mrb[0].mxu0
        %v4551 = vadd.f32 0.0, %v4550
        %v4552 = vpop.f32.mrb[0].mxu0
        %v4553 = vpop.f32.mrb[0].mxu0
        %v4554 = vadd.f32 0.0, %v4553
        %v4555 = vpop.f32.mrb[0].mxu0
        %4556 = vmatprep.mubr.bf16.mxu0 0
        %4557 = vmatmul.mubr.bf16.gmra.mrb[0].mxu0 %v4462
        %v4558 = vpop.f32.mrb[0].mxu0
        %v4559 = vadd.f32 0.0, %v4558
        %v4560 = vpop.f32.mrb[0].mxu0
        %v4561 = vpop.f32.mrb[0].mxu0
        %v4562 = vadd.f32 0.0, %v4561
        %v4563 = vpop.f32.mrb[0].mxu0
        %4564 = vmatprep.mubr.bf16.mxu0 0
        %4565 = vmatmul.mubr.bf16.gmra.mrb[0].mxu0 %v4465
        %v4566 = vpop.f32.mrb[0].mxu0
        %v4567 = vadd.f32 0.0, %v4566
        %v4568 = vpop.f32.mrb[0].mxu0
        %v4569 = vpop.f32.mrb[0].mxu0
        %v4570 = vadd.f32 0.0, %v4569
        %v4571 = vpop.f32.mrb[0].mxu0
        %4572 = vmatprep.mubr.bf16.mxu0 0
        %4573 = vmatmul.mubr.bf16.gmra.mrb[0].mxu0 %v4468
        %v4574 = vpop.f32.mrb[0].mxu0
        %v4575 = vadd.f32 0.0, %v4574
        %v4576 = vpop.f32.mrb[0].mxu0
        %v4577 = vpop.f32.mrb[0].mxu0
        %v4578 = vadd.f32 0.0, %v4577
        %v4579 = vpop.f32.mrb[0].mxu0
        %4580 = vmatprep.mubr.bf16.mxu0 0
        %4581 = vmatmul.mubr.bf16.gmra.mrb[0].mxu0 %v4471
        %v4582 = vpop.f32.mrb[0].mxu0
        %v4583 = vadd.f32 0.0, %v4582
        %v4584 = vpop.f32.mrb[0].mxu0
        %v4585 = vpop.f32.mrb[0].mxu0
        %v4586 = vadd.f32 0.0, %v4585
        %v4587 = vpop.f32.mrb[0].mxu0
        %4588 = vmatprep.mubr.bf16.mxu0 0
        %4589 = vmatmul.mubr.bf16.gmra.mrb[0].mxu0 %v4474
        %v4590 = vpop.f32.mrb[0].mxu0
        %v4591 = vadd.f32 0.0, %v4590
        %v4592 = vpop.f32.mrb[0].mxu0
        %v4593 = vpop.f32.mrb[0].mxu0
        %v4594 = vadd.f32 0.0, %v4593
        %v4595 = vpop.f32.mrb[0].mxu0
        %4596 = vmatprep.mubr.bf16.mxu0 0
        %4597 = vmatmul.mubr.bf16.gmra.mrb[0].mxu0 %v4477
        %v4598 = vpop.f32.mrb[0].mxu0
        %v4599 = vadd.f32 0.0, %v4598
        %v4600 = vpop.f32.mrb[0].mxu0
        %v4601 = vpop.f32.mrb[0].mxu0
        %v4602 = vadd.f32 0.0, %v4601
        %v4603 = vpop.f32.mrb[0].mxu0
        %4604 = vmatprep.mubr.bf16.mxu0 0
        %4605 = vmatmul.mubr.bf16.gmra.mrb[0].mxu0 %v4480
        %v4606 = vpop.f32.mrb[0].mxu0
        %v4607 = vadd.f32 0.0, %v4606
        %v4608 = vpop.f32.mrb[0].mxu0
        %v4609 = vpop.f32.mrb[0].mxu0
        %v4610 = vadd.f32 0.0, %v4609
        %v4611 = vpop.f32.mrb[0].mxu0
        %4612 = vmatprep.mubr.bf16.mxu0 0
        %4613 = vmatmul.mubr.bf16.gmra.mrb[0].mxu0 %v4483
        %v4614 = vpop.f32.mrb[0].mxu0
        %v4615 = vadd.f32 0.0, %v4614
        %v4616 = vpop.f32.mrb[0].mxu0
        %v4617 = vpop.f32.mrb[0].mxu0
        %v4618 = vadd.f32 0.0, %v4617
        %v4619 = vpop.f32.mrb[0].mxu0
        %4620 = vmatprep.mubr.bf16.mxu0 0
        %4621 = vmatmul.mubr.bf16.gmra.mrb[0].mxu0 %v4486
        %v4622 = vpop.f32.mrb[0].mxu0
        %v4623 = vadd.f32 0.0, %v4622
        %v4624 = vpop.f32.mrb[0].mxu0
        %v4625 = vpop.f32.mrb[0].mxu0
        %v4626 = vadd.f32 0.0, %v4625
        %v4627 = vpop.f32.mrb[0].mxu0
        %4628 = vmatprep.mubr.bf16.mxu0 0
        %4629 = vmatmul.mubr.bf16.gmra.mrb[0].mxu0 %v4489
        %v4630 = vpop.f32.mrb[0].mxu0
        %v4631 = vadd.f32 0.0, %v4630
        %v4632 = vpop.f32.mrb[0].mxu0
        %v4633 = vpop.f32.mrb[0].mxu0
        %v4634 = vadd.f32 0.0, %v4633
        %v4635 = vpop.f32.mrb[0].mxu0
        %4636 = vmatprep.mubr.bf16.mxu0 0
        %4637 = vmatmul.mubr.bf16.gmra.mrb[0].mxu0 %v4492
        %v4638 = vpop.f32.mrb[0].mxu0
        %v4639 = vadd.f32 0.0, %v4638
        %v4640 = vpop.f32.mrb[0].mxu0
        %v4641 = vpop.f32.mrb[0].mxu0
        %v4642 = vadd.f32 0.0, %v4641
        %v4643 = vpop.f32.mrb[0].mxu0
        %4644 = vmatprep.mubr.bf16.mxu0 0
        %4645 = vmatmul.mubr.bf16.gmra.mrb[0].mxu0 %v4495
        %v4646 = vpop.f32.mrb[0].mxu0
        %v4647 = vadd.f32 0.0, %v4646
        %v4648 = vpop.f32.mrb[0].mxu0
        %v4649 = vpop.f32.mrb[0].mxu0
        %v4650 = vadd.f32 0.0, %v4649
        %v4651 = vpop.f32.mrb[0].mxu0
        %4652 = vmatprep.mubr.bf16.mxu0 0
        %4653 = vmatmul.mubr.bf16.gmra.mrb[0].mxu0 %v4498
        %v4654 = vpop.f32.mrb[0].mxu0
        %v4655 = vadd.f32 0.0, %v4654
        %v4656 = vpop.f32.mrb[0].mxu0
        %v4657 = vpop.f32.mrb[0].mxu0
        %v4658 = vadd.f32 0.0, %v4657
        %v4659 = vpop.f32.mrb[0].mxu0
        %4660 = vdwg.mxu0
        %v4661 = vadd.f32 %v4323, %v4535
        %v4662 = vadd.f32 %v4324, %v4538
        %v4663 = vadd.f32 %v4325, %v4543
        %v4664 = vadd.f32 %v4326, %v4546
        %v4665 = vadd.f32 %v4327, %v4551
        %v4666 = vadd.f32 %v4328, %v4554
        %v4667 = vadd.f32 %v4329, %v4559
        %v4668 = vadd.f32 %v4330, %v4562
        %v4669 = vadd.f32 %v4331, %v4567
        %v4670 = vadd.f32 %v4332, %v4570
        %v4671 = vadd.f32 %v4333, %v4575
        %v4672 = vadd.f32 %v4334, %v4578
        %v4673 = vadd.f32 %v4335, %v4583
        %v4674 = vadd.f32 %v4336, %v4586
        %v4675 = vadd.f32 %v4337, %v4591
        %v4676 = vadd.f32 %v4338, %v4594
        %v4677 = vadd.f32 %v4339, %v4599
        %v4678 = vadd.f32 %v4340, %v4602
        %v4679 = vadd.f32 %v4341, %v4607
        %v4680 = vadd.f32 %v4342, %v4610
        %v4681 = vadd.f32 %v4343, %v4615
        %v4682 = vadd.f32 %v4344, %v4618
        %v4683 = vadd.f32 %v4345, %v4623
        %v4684 = vadd.f32 %v4346, %v4626
        %v4685 = vadd.f32 %v4347, %v4631
        %v4686 = vadd.f32 %v4348, %v4634
        %v4687 = vadd.f32 %v4349, %v4639
        %v4688 = vadd.f32 %v4350, %v4642
        %v4689 = vadd.f32 %v4351, %v4647
        %v4690 = vadd.f32 %v4352, %v4650
        %v4691 = vadd.f32 %v4353, %v4655
        %v4692 = vadd.f32 %v4354, %v4658
        %v4693 = vld [vmem:[%s499] sm:$0x1]
        %v4695 = vlaneseq
        %v4696 = vshrl.u32 %v4695, 7
        %v4697 = vsub.s32 0, %v4696
        %v4698 = vrot.slane %v4693, %v4697
        %v4700 = vadd.f32 %v4661, %v4698
        %v4701 = vadd.f32 %v4662, %v4698
        %v4702 = vadd.f32 %v4663, %v4698
        %v4703 = vadd.f32 %v4664, %v4698
        %v4704 = vadd.f32 %v4665, %v4698
        %v4705 = vadd.f32 %v4666, %v4698
        %v4706 = vadd.f32 %v4667, %v4698
        %v4707 = vadd.f32 %v4668, %v4698
        %v4708 = vadd.f32 %v4669, %v4698
        %v4709 = vadd.f32 %v4670, %v4698
        %v4710 = vadd.f32 %v4671, %v4698
        %v4711 = vadd.f32 %v4672, %v4698
        %v4712 = vadd.f32 %v4673, %v4698
        %v4713 = vadd.f32 %v4674, %v4698
        %v4714 = vadd.f32 %v4675, %v4698
        %v4715 = vadd.f32 %v4676, %v4698
        %v4716 = vadd.f32 %v4677, %v4698
        %v4717 = vadd.f32 %v4678, %v4698
        %v4718 = vadd.f32 %v4679, %v4698
        %v4719 = vadd.f32 %v4680, %v4698
        %v4720 = vadd.f32 %v4681, %v4698
        %v4721 = vadd.f32 %v4682, %v4698
        %v4722 = vadd.f32 %v4683, %v4698
        %v4723 = vadd.f32 %v4684, %v4698
        %v4724 = vadd.f32 %v4685, %v4698
        %v4725 = vadd.f32 %v4686, %v4698
        %v4726 = vadd.f32 %v4687, %v4698
        %v4727 = vadd.f32 %v4688, %v4698
        %v4728 = vadd.f32 %v4689, %v4698
        %v4729 = vadd.f32 %v4690, %v4698
        %v4730 = vadd.f32 %v4691, %v4698
        %v4731 = vadd.f32 %v4692, %v4698
        %v4732 = vld [vmem:[%s6] sm:$0x1]
        %v4733 = vld [vmem:[#allocation10] sm:$0x1]
        %v4734 = vld [vmem:[%s8] sm:$0xff]
        %v4735 = vld [vmem:[%s8 + $0x8] sm:$0xff]
        %v4736 = vld [vmem:[%s8 + $0x10] sm:$0xff]
        %v4737 = vld [vmem:[%s8 + $0x18] sm:$0xff]
        %v4738 = vld [vmem:[%s8 + $0x20] sm:$0xff]
        %v4739 = vld [vmem:[%s8 + $0x28] sm:$0xff]
        %v4740 = vld [vmem:[%s8 + $0x30] sm:$0xff]
        %v4741 = vld [vmem:[%s8 + $0x38] sm:$0xff]
        %vm4742 = vcmask 523264
        %v4743 = vsel %vm4742, %v4700, 0.0
        %v4744 = vsel %vm4742, %v4701, 0.0
        %v4745 = vadd.f32 %v4743, %v4744
        %v4746 = vsel %vm4742, %v4702, 0.0
        %v4747 = vadd.f32 %v4745, %v4746
        %v4748 = vsel %vm4742, %v4703, 0.0
        %v4749 = vadd.f32 %v4747, %v4748
        %v4750 = vsel %vm4742, %v4704, 0.0
        %v4751 = vadd.f32 %v4749, %v4750
        %v4752 = vsel %vm4742, %v4705, 0.0
        %v4753 = vadd.f32 %v4751, %v4752
        %v4754 = vsel %vm4742, %v4706, 0.0
        %v4755 = vadd.f32 %v4753, %v4754
        %v4756 = vsel %vm4742, %v4707, 0.0
        %v4757 = vadd.f32 %v4755, %v4756
        %v4758 = vsel %vm4742, %v4708, 0.0
        %v4759 = vadd.f32 %v4757, %v4758
        %v4760 = vsel %vm4742, %v4709, 0.0
        %v4761 = vadd.f32 %v4759, %v4760
        %v4762 = vsel %vm4742, %v4710, 0.0
        %v4763 = vadd.f32 %v4761, %v4762
        %v4764 = vsel %vm4742, %v4711, 0.0
        %v4765 = vadd.f32 %v4763, %v4764
        %v4766 = vsel %vm4742, %v4712, 0.0
        %v4767 = vadd.f32 %v4765, %v4766
        %v4768 = vsel %vm4742, %v4713, 0.0
        %v4769 = vadd.f32 %v4767, %v4768
        %v4770 = vsel %vm4742, %v4714, 0.0
        %v4771 = vadd.f32 %v4769, %v4770
        %v4772 = vsel %vm4742, %v4715, 0.0
        %v4773 = vadd.f32 %v4771, %v4772
        %v4774 = vsel %vm4742, %v4716, 0.0
        %v4775 = vadd.f32 %v4773, %v4774
        %v4776 = vsel %vm4742, %v4717, 0.0
        %v4777 = vadd.f32 %v4775, %v4776
        %v4778 = vsel %vm4742, %v4718, 0.0
        %v4779 = vadd.f32 %v4777, %v4778
        %v4780 = vsel %vm4742, %v4719, 0.0
        %v4781 = vadd.f32 %v4779, %v4780
        %v4782 = vsel %vm4742, %v4720, 0.0
        %v4783 = vadd.f32 %v4781, %v4782
        %v4784 = vsel %vm4742, %v4721, 0.0
        %v4785 = vadd.f32 %v4783, %v4784
        %v4786 = vsel %vm4742, %v4722, 0.0
        %v4787 = vadd.f32 %v4785, %v4786
        %v4788 = vsel %vm4742, %v4723, 0.0
        %v4789 = vadd.f32 %v4787, %v4788
        %v4790 = vsel %vm4742, %v4724, 0.0
        %v4791 = vadd.f32 %v4789, %v4790
        %v4792 = vsel %vm4742, %v4725, 0.0
        %v4793 = vadd.f32 %v4791, %v4792
        %v4794 = vsel %vm4742, %v4726, 0.0
        %v4795 = vadd.f32 %v4793, %v4794
        %v4796 = vsel %vm4742, %v4727, 0.0
        %v4797 = vadd.f32 %v4795, %v4796
        %v4798 = vsel %vm4742, %v4728, 0.0
        %v4799 = vadd.f32 %v4797, %v4798
        %v4800 = vsel %vm4742, %v4729, 0.0
        %v4801 = vadd.f32 %v4799, %v4800
        %v4802 = vsel %vm4742, %v4730, 0.0
        %v4803 = vadd.f32 %v4801, %v4802
        %v4804 = vsel %vm4742, %v4731, 0.0
        %v4805 = vadd.f32 %v4803, %v4804
        %v4806 = vrot.slane %v4805, 4
        %v4807 = vadd.f32 %v4805, %v4806
        %v4808 = vrot.slane %v4807, 2
        %v4809 = vadd.f32 %v4807, %v4808
        %v4810 = vrot.slane %v4809, 1
        %v4811 = vadd.f32 %v4809, %v4810
        %v4812 = vmul.f32 %v4811, 0.00390625
        %v4813 = vmul.f32 %v4700, %v4700
        %v4814 = vmul.f32 %v4701, %v4701
        %v4815 = vmul.f32 %v4702, %v4702
        %v4816 = vmul.f32 %v4703, %v4703
        %v4817 = vmul.f32 %v4704, %v4704
        %v4818 = vmul.f32 %v4705, %v4705
        %v4819 = vmul.f32 %v4706, %v4706
        %v4820 = vmul.f32 %v4707, %v4707
        %v4821 = vmul.f32 %v4708, %v4708
        %v4822 = vmul.f32 %v4709, %v4709
        %v4823 = vmul.f32 %v4710, %v4710
        %v4824 = vmul.f32 %v4711, %v4711
        %v4825 = vmul.f32 %v4712, %v4712
        %v4826 = vmul.f32 %v4713, %v4713
        %v4827 = vmul.f32 %v4714, %v4714
        %v4828 = vmul.f32 %v4715, %v4715
        %v4829 = vmul.f32 %v4716, %v4716
        %v4830 = vmul.f32 %v4717, %v4717
        %v4831 = vmul.f32 %v4718, %v4718
        %v4832 = vmul.f32 %v4719, %v4719
        %v4833 = vmul.f32 %v4720, %v4720
        %v4834 = vmul.f32 %v4721, %v4721
        %v4835 = vmul.f32 %v4722, %v4722
        %v4836 = vmul.f32 %v4723, %v4723
        %v4837 = vmul.f32 %v4724, %v4724
        %v4838 = vmul.f32 %v4725, %v4725
        %v4839 = vmul.f32 %v4726, %v4726
        %v4840 = vmul.f32 %v4727, %v4727
        %v4841 = vmul.f32 %v4728, %v4728
        %v4842 = vmul.f32 %v4729, %v4729
        %v4843 = vmul.f32 %v4730, %v4730
        %v4844 = vmul.f32 %v4731, %v4731
        %v4845 = vsel %vm4742, %v4813, 0.0
        %v4846 = vsel %vm4742, %v4814, 0.0
        %v4847 = vadd.f32 %v4845, %v4846
        %v4848 = vsel %vm4742, %v4815, 0.0
        %v4849 = vadd.f32 %v4847, %v4848
        %v4850 = vsel %vm4742, %v4816, 0.0
        %v4851 = vadd.f32 %v4849, %v4850
        %v4852 = vsel %vm4742, %v4817, 0.0
        %v4853 = vadd.f32 %v4851, %v4852
        %v4854 = vsel %vm4742, %v4818, 0.0
        %v4855 = vadd.f32 %v4853, %v4854
        %v4856 = vsel %vm4742, %v4819, 0.0
        %v4857 = vadd.f32 %v4855, %v4856
        %v4858 = vsel %vm4742, %v4820, 0.0
        %v4859 = vadd.f32 %v4857, %v4858
        %v4860 = vsel %vm4742, %v4821, 0.0
        %v4861 = vadd.f32 %v4859, %v4860
        %v4862 = vsel %vm4742, %v4822, 0.0
        %v4863 = vadd.f32 %v4861, %v4862
        %v4864 = vsel %vm4742, %v4823, 0.0
        %v4865 = vadd.f32 %v4863, %v4864
        %v4866 = vsel %vm4742, %v4824, 0.0
        %v4867 = vadd.f32 %v4865, %v4866
        %v4868 = vsel %vm4742, %v4825, 0.0
        %v4869 = vadd.f32 %v4867, %v4868
        %v4870 = vsel %vm4742, %v4826, 0.0
        %v4871 = vadd.f32 %v4869, %v4870
        %v4872 = vsel %vm4742, %v4827, 0.0
        %v4873 = vadd.f32 %v4871, %v4872
        %v4874 = vsel %vm4742, %v4828, 0.0
        %v4875 = vadd.f32 %v4873, %v4874
        %v4876 = vsel %vm4742, %v4829, 0.0
        %v4877 = vadd.f32 %v4875, %v4876
        %v4878 = vsel %vm4742, %v4830, 0.0
        %v4879 = vadd.f32 %v4877, %v4878
        %v4880 = vsel %vm4742, %v4831, 0.0
        %v4881 = vadd.f32 %v4879, %v4880
        %v4882 = vsel %vm4742, %v4832, 0.0
        %v4883 = vadd.f32 %v4881, %v4882
        %v4884 = vsel %vm4742, %v4833, 0.0
        %v4885 = vadd.f32 %v4883, %v4884
        %v4886 = vsel %vm4742, %v4834, 0.0
        %v4887 = vadd.f32 %v4885, %v4886
        %v4888 = vsel %vm4742, %v4835, 0.0
        %v4889 = vadd.f32 %v4887, %v4888
        %v4890 = vsel %vm4742, %v4836, 0.0
        %v4891 = vadd.f32 %v4889, %v4890
        %v4892 = vsel %vm4742, %v4837, 0.0
        %v4893 = vadd.f32 %v4891, %v4892
        %v4894 = vsel %vm4742, %v4838, 0.0
        %v4895 = vadd.f32 %v4893, %v4894
        %v4896 = vsel %vm4742, %v4839, 0.0
        %v4897 = vadd.f32 %v4895, %v4896
        %v4898 = vsel %vm4742, %v4840, 0.0
        %v4899 = vadd.f32 %v4897, %v4898
        %v4900 = vsel %vm4742, %v4841, 0.0
        %v4901 = vadd.f32 %v4899, %v4900
        %v4902 = vsel %vm4742, %v4842, 0.0
        %v4903 = vadd.f32 %v4901, %v4902
        %v4904 = vsel %vm4742, %v4843, 0.0
        %v4905 = vadd.f32 %v4903, %v4904
        %v4906 = vsel %vm4742, %v4844, 0.0
        %v4907 = vadd.f32 %v4905, %v4906
        %v4908 = vrot.slane %v4907, 4
        %v4909 = vadd.f32 %v4907, %v4908
        %v4910 = vrot.slane %v4909, 2
        %v4911 = vadd.f32 %v4909, %v4910
        %v4912 = vrot.slane %v4911, 1
        %v4913 = vadd.f32 %v4911, %v4912
        %v4914 = vmul.f32 %v4913, 0.00390625
        %v4916 = vsel %vm4742, %v4812, 0
        %4918 = vmatprep.subr.mxu0 0.0
        %4919 = vmatpush1.msra.mxu0 %v4734
        %4920 = vmatprep.subr.mxu0 0.0
        %4921 = vmatpush1.msra.mxu0 %v4735
        %4922 = vmatprep.subr.mxu0 0.0
        %4923 = vmatpush1.msra.mxu0 %v4736
        %4924 = vmatprep.subr.mxu0 0.0
        %4925 = vmatpush1.msra.mxu0 %v4737
        %4926 = vmatprep.subr.mxu0 0.0
        %4927 = vmatpush1.msra.mxu0 %v4738
        %4928 = vmatprep.subr.mxu0 0.0
        %4929 = vmatpush1.msra.mxu0 %v4739
        %4930 = vmatprep.subr.mxu0 0.0
        %4931 = vmatpush1.msra.mxu0 %v4740
        %4932 = vmatprep.subr.mxu0 0.0
        %4933 = vmatpush1.msra.mxu0 %v4741
        %4934 = vmatprep.subr.mxu0 0.0
        %4935 = vmatpush1.msra.mxu0 0.0
        %4936 = vmatprep.subr.mxu0 0.0
        %4937 = vmatpush1.msra.mxu0 0.0
        %4938 = vmatprep.subr.mxu0 0.0
        %4939 = vmatpush1.msra.mxu0 0.0
        %4940 = vmatprep.subr.mxu0 0.0
        %4941 = vmatpush1.msra.mxu0 0.0
        %4942 = vmatprep.subr.mxu0 0.0
        %4943 = vmatpush1.msra.mxu0 0.0
        %4944 = vmatprep.subr.mxu0 0.0
        %4945 = vmatpush1.msra.mxu0 0.0
        %4946 = vmatprep.subr.mxu0 0.0
        %4947 = vmatpush1.msra.mxu0 0.0
        %4948 = vmatprep.subr.mxu0 0.0
        %4949 = vmatpush1.msra.mxu0 0.0
        %4950 = vmatprep.subr.mxu0 0.0
        %4951 = vmatpush1.msra.mxu0 0.0
        %4952 = vmatprep.subr.mxu0 0.0
        %4953 = vmatpush1.msra.mxu0 0.0
        %4954 = vmatprep.subr.mxu0 0.0
        %4955 = vmatpush1.msra.mxu0 0.0
        %4956 = vmatprep.subr.mxu0 0.0
        %4957 = vmatpush1.msra.mxu0 0.0
        %4958 = vmatprep.subr.mxu0 0.0
        %4959 = vmatpush1.msra.mxu0 0.0
        %4960 = vmatprep.subr.mxu0 0.0
        %4961 = vmatpush1.msra.mxu0 0.0
        %4962 = vmatprep.subr.mxu0 0.0
        %4963 = vmatpush1.msra.mxu0 0.0
        %4964 = vmatprep.subr.mxu0 0.0
        %4965 = vmatpush1.msra.mxu0 0.0
        %4966 = vmatprep.subr.mxu0 0.0
        %4967 = vmatpush1.msra.mxu0 0.0
        %4968 = vmatprep.subr.mxu0 0.0
        %4969 = vmatpush1.msra.mxu0 0.0
        %4970 = vmatprep.subr.mxu0 0.0
        %4971 = vmatpush1.msra.mxu0 0.0
        %4972 = vmatprep.subr.mxu0 0.0
        %4973 = vmatpush1.msra.mxu0 0.0
        %4974 = vmatprep.subr.mxu0 0.0
        %4975 = vmatpush1.msra.mxu0 0.0
        %4976 = vmatprep.subr.mxu0 0.0
        %4977 = vmatpush1.msra.mxu0 0.0
        %4978 = vmatprep.subr.mxu0 0.0
        %4979 = vmatpush1.msra.mxu0 0.0
        %4980 = vmatprep.subr.mxu0 0.0
        %4981 = vmatpush1.msra.mxu0 0.0
        %4982 = vmatprep.mubr.f32.mxu0 0.0
        %4983 = vmatmul.mubr.f32.gmra.mrb[0].mxu0 %v4916
        %v4984 = vpop.f32.mrb[0].mxu0
        %v4985 = vadd.f32 0.0, %v4984
        %v4986 = vpop.f32.mrb[0].mxu0
        %4987 = vdwg.mxu0
        %v4989 = vsel %vm4742, %v4914, 0
        %4991 = vmatprep.subr.mxu0 0.0
        %4992 = vmatpush1.msra.mxu0 %v4734
        %4993 = vmatprep.subr.mxu0 0.0
        %4994 = vmatpush1.msra.mxu0 %v4735
        %4995 = vmatprep.subr.mxu0 0.0
        %4996 = vmatpush1.msra.mxu0 %v4736
        %4997 = vmatprep.subr.mxu0 0.0
        %4998 = vmatpush1.msra.mxu0 %v4737
        %4999 = vmatprep.subr.mxu0 0.0
        %5000 = vmatpush1.msra.mxu0 %v4738
        %5001 = vmatprep.subr.mxu0 0.0
        %5002 = vmatpush1.msra.mxu0 %v4739
        %5003 = vmatprep.subr.mxu0 0.0
        %5004 = vmatpush1.msra.mxu0 %v4740
        %5005 = vmatprep.subr.mxu0 0.0
        %5006 = vmatpush1.msra.mxu0 %v4741
        %5007 = vmatprep.subr.mxu0 0.0
        %5008 = vmatpush1.msra.mxu0 0.0
        %5009 = vmatprep.subr.mxu0 0.0
        %5010 = vmatpush1.msra.mxu0 0.0
        %5011 = vmatprep.subr.mxu0 0.0
        %5012 = vmatpush1.msra.mxu0 0.0
        %5013 = vmatprep.subr.mxu0 0.0
        %5014 = vmatpush1.msra.mxu0 0.0
        %5015 = vmatprep.subr.mxu0 0.0
        %5016 = vmatpush1.msra.mxu0 0.0
        %5017 = vmatprep.subr.mxu0 0.0
        %5018 = vmatpush1.msra.mxu0 0.0
        %5019 = vmatprep.subr.mxu0 0.0
        %5020 = vmatpush1.msra.mxu0 0.0
        %5021 = vmatprep.subr.mxu0 0.0
        %5022 = vmatpush1.msra.mxu0 0.0
        %5023 = vmatprep.subr.mxu0 0.0
        %5024 = vmatpush1.msra.mxu0 0.0
        %5025 = vmatprep.subr.mxu0 0.0
        %5026 = vmatpush1.msra.mxu0 0.0
        %5027 = vmatprep.subr.mxu0 0.0
        %5028 = vmatpush1.msra.mxu0 0.0
        %5029 = vmatprep.subr.mxu0 0.0
        %5030 = vmatpush1.msra.mxu0 0.0
        %5031 = vmatprep.subr.mxu0 0.0
        %5032 = vmatpush1.msra.mxu0 0.0
        %5033 = vmatprep.subr.mxu0 0.0
        %5034 = vmatpush1.msra.mxu0 0.0
        %5035 = vmatprep.subr.mxu0 0.0
        %5036 = vmatpush1.msra.mxu0 0.0
        %5037 = vmatprep.subr.mxu0 0.0
        %5038 = vmatpush1.msra.mxu0 0.0
        %5039 = vmatprep.subr.mxu0 0.0
        %5040 = vmatpush1.msra.mxu0 0.0
        %5041 = vmatprep.subr.mxu0 0.0
        %5042 = vmatpush1.msra.mxu0 0.0
        %5043 = vmatprep.subr.mxu0 0.0
        %5044 = vmatpush1.msra.mxu0 0.0
        %5045 = vmatprep.subr.mxu0 0.0
        %5046 = vmatpush1.msra.mxu0 0.0
        %5047 = vmatprep.subr.mxu0 0.0
        %5048 = vmatpush1.msra.mxu0 0.0
        %5049 = vmatprep.subr.mxu0 0.0
        %5050 = vmatpush1.msra.mxu0 0.0
        %5051 = vmatprep.subr.mxu0 0.0
        %5052 = vmatpush1.msra.mxu0 0.0
        %5053 = vmatprep.subr.mxu0 0.0
        %5054 = vmatpush1.msra.mxu0 0.0
        %5055 = vmatprep.mubr.f32.mxu0 0.0
        %5056 = vmatmul.mubr.f32.gmra.mrb[0].mxu0 %v4989
        %v5057 = vpop.f32.mrb[0].mxu0
        %v5058 = vadd.f32 0.0, %v5057
        %v5059 = vpop.f32.mrb[0].mxu0
        %5060 = vdwg.mxu0
        %v5061 = vmul.f32 %v4985, %v4985
        %v5062 = vsub.f32 %v5058, %v5061
        %v5063 = vadd.f32 %v5062, 1e-05
        %v5064 = vrsqrt.pop %v5063
        %v5065 = vmul.f32 %v4732, %v5064
        %v5066 = vmul.f32 %v4985, %v5065
        %v5067 = vsub.f32 %v4733, %v5066
        %v5069 = vlaneseq
        %v5070 = vshrl.u32 %v5069, 7
        %v5071 = vsub.s32 0, %v5070
        %v5072 = vrot.slane %v5065, %v5071
        %v5074 = vmul.f32 %v4700, %v5072
        %v5075 = vmul.f32 %v4701, %v5072
        %v5076 = vmul.f32 %v4702, %v5072
        %v5077 = vmul.f32 %v4703, %v5072
        %v5078 = vmul.f32 %v4704, %v5072
        %v5079 = vmul.f32 %v4705, %v5072
        %v5080 = vmul.f32 %v4706, %v5072
        %v5081 = vmul.f32 %v4707, %v5072
        %v5082 = vmul.f32 %v4708, %v5072
        %v5083 = vmul.f32 %v4709, %v5072
        %v5084 = vmul.f32 %v4710, %v5072
        %v5085 = vmul.f32 %v4711, %v5072
        %v5086 = vmul.f32 %v4712, %v5072
        %v5087 = vmul.f32 %v4713, %v5072
        %v5088 = vmul.f32 %v4714, %v5072
        %v5089 = vmul.f32 %v4715, %v5072
        %v5090 = vmul.f32 %v4716, %v5072
        %v5091 = vmul.f32 %v4717, %v5072
        %v5092 = vmul.f32 %v4718, %v5072
        %v5093 = vmul.f32 %v4719, %v5072
        %v5094 = vmul.f32 %v4720, %v5072
        %v5095 = vmul.f32 %v4721, %v5072
        %v5096 = vmul.f32 %v4722, %v5072
        %v5097 = vmul.f32 %v4723, %v5072
        %v5098 = vmul.f32 %v4724, %v5072
        %v5099 = vmul.f32 %v4725, %v5072
        %v5100 = vmul.f32 %v4726, %v5072
        %v5101 = vmul.f32 %v4727, %v5072
        %v5102 = vmul.f32 %v4728, %v5072
        %v5103 = vmul.f32 %v4729, %v5072
        %v5104 = vmul.f32 %v4730, %v5072
        %v5105 = vmul.f32 %v4731, %v5072
        %v5107 = vlaneseq
        %v5108 = vshrl.u32 %v5107, 7
        %v5109 = vsub.s32 0, %v5108
        %v5110 = vrot.slane %v5067, %v5109
        %v5112 = vadd.f32 %v5074, %v5110
        %v5113 = vadd.f32 %v5075, %v5110
        %v5114 = vadd.f32 %v5076, %v5110
        %v5115 = vadd.f32 %v5077, %v5110
        %v5116 = vadd.f32 %v5078, %v5110
        %v5117 = vadd.f32 %v5079, %v5110
        %v5118 = vadd.f32 %v5080, %v5110
        %v5119 = vadd.f32 %v5081, %v5110
        %v5120 = vadd.f32 %v5082, %v5110
        %v5121 = vadd.f32 %v5083, %v5110
        %v5122 = vadd.f32 %v5084, %v5110
        %v5123 = vadd.f32 %v5085, %v5110
        %v5124 = vadd.f32 %v5086, %v5110
        %v5125 = vadd.f32 %v5087, %v5110
        %v5126 = vadd.f32 %v5088, %v5110
        %v5127 = vadd.f32 %v5089, %v5110
        %v5128 = vadd.f32 %v5090, %v5110
        %v5129 = vadd.f32 %v5091, %v5110
        %v5130 = vadd.f32 %v5092, %v5110
        %v5131 = vadd.f32 %v5093, %v5110
        %v5132 = vadd.f32 %v5094, %v5110
        %v5133 = vadd.f32 %v5095, %v5110
        %v5134 = vadd.f32 %v5096, %v5110
        %v5135 = vadd.f32 %v5097, %v5110
        %v5136 = vadd.f32 %v5098, %v5110
        %v5137 = vadd.f32 %v5099, %v5110
        %v5138 = vadd.f32 %v5100, %v5110
        %v5139 = vadd.f32 %v5101, %v5110
        %v5140 = vadd.f32 %v5102, %v5110
        %v5141 = vadd.f32 %v5103, %v5110
        %v5142 = vadd.f32 %v5104, %v5110
        %v5143 = vadd.f32 %v5105, %v5110
        %v5144 = vxor.u32 %v5112, 2147483648
        %v5145 = vxor.u32 %v5113, 2147483648
        %v5146 = vxor.u32 %v5114, 2147483648
        %v5147 = vxor.u32 %v5115, 2147483648
        %v5148 = vxor.u32 %v5116, 2147483648
        %v5149 = vxor.u32 %v5117, 2147483648
        %v5150 = vxor.u32 %v5118, 2147483648
        %v5151 = vxor.u32 %v5119, 2147483648
        %v5152 = vxor.u32 %v5120, 2147483648
        %v5153 = vxor.u32 %v5121, 2147483648
        %v5154 = vxor.u32 %v5122, 2147483648
        %v5155 = vxor.u32 %v5123, 2147483648
        %v5156 = vxor.u32 %v5124, 2147483648
        %v5157 = vxor.u32 %v5125, 2147483648
        %v5158 = vxor.u32 %v5126, 2147483648
        %v5159 = vxor.u32 %v5127, 2147483648
        %v5160 = vxor.u32 %v5128, 2147483648
        %v5161 = vxor.u32 %v5129, 2147483648
        %v5162 = vxor.u32 %v5130, 2147483648
        %v5163 = vxor.u32 %v5131, 2147483648
        %v5164 = vxor.u32 %v5132, 2147483648
        %v5165 = vxor.u32 %v5133, 2147483648
        %v5166 = vxor.u32 %v5134, 2147483648
        %v5167 = vxor.u32 %v5135, 2147483648
        %v5168 = vxor.u32 %v5136, 2147483648
        %v5169 = vxor.u32 %v5137, 2147483648
        %v5170 = vxor.u32 %v5138, 2147483648
        %v5171 = vxor.u32 %v5139, 2147483648
        %v5172 = vxor.u32 %v5140, 2147483648
        %v5173 = vxor.u32 %v5141, 2147483648
        %v5174 = vxor.u32 %v5142, 2147483648
        %v5175 = vxor.u32 %v5143, 2147483648
        %v5176 = vmul.f32 %v5144, 1.442695
        %v5177 = vpow.pop %v5176
        %v5178 = vmul.f32 %v5145, 1.442695
        %v5179 = vpow.pop %v5178
        %v5180 = vmul.f32 %v5146, 1.442695
        %v5181 = vpow.pop %v5180
        %v5182 = vmul.f32 %v5147, 1.442695
        %v5183 = vpow.pop %v5182
        %v5184 = vmul.f32 %v5148, 1.442695
        %v5185 = vpow.pop %v5184
        %v5186 = vmul.f32 %v5149, 1.442695
        %v5187 = vpow.pop %v5186
        %v5188 = vmul.f32 %v5150, 1.442695
        %v5189 = vpow.pop %v5188
        %v5190 = vmul.f32 %v5151, 1.442695
        %v5191 = vpow.pop %v5190
        %v5192 = vmul.f32 %v5152, 1.442695
        %v5193 = vpow.pop %v5192
        %v5194 = vmul.f32 %v5153, 1.442695
        %v5195 = vpow.pop %v5194
        %v5196 = vmul.f32 %v5154, 1.442695
        %v5197 = vpow.pop %v5196
        %v5198 = vmul.f32 %v5155, 1.442695
        %v5199 = vpow.pop %v5198
        %v5200 = vmul.f32 %v5156, 1.442695
        %v5201 = vpow.pop %v5200
        %v5202 = vmul.f32 %v5157, 1.442695
        %v5203 = vpow.pop %v5202
        %v5204 = vmul.f32 %v5158, 1.442695
        %v5205 = vpow.pop %v5204
        %v5206 = vmul.f32 %v5159, 1.442695
        %v5207 = vpow.pop %v5206
        %v5208 = vmul.f32 %v5160, 1.442695
        %v5209 = vpow.pop %v5208
        %v5210 = vmul.f32 %v5161, 1.442695
        %v5211 = vpow.pop %v5210
        %v5212 = vmul.f32 %v5162, 1.442695
        %v5213 = vpow.pop %v5212
        %v5214 = vmul.f32 %v5163, 1.442695
        %v5215 = vpow.pop %v5214
        %v5216 = vmul.f32 %v5164, 1.442695
        %v5217 = vpow.pop %v5216
        %v5218 = vmul.f32 %v5165, 1.442695
        %v5219 = vpow.pop %v5218
        %v5220 = vmul.f32 %v5166, 1.442695
        %v5221 = vpow.pop %v5220
        %v5222 = vmul.f32 %v5167, 1.442695
        %v5223 = vpow.pop %v5222
        %v5224 = vmul.f32 %v5168, 1.442695
        %v5225 = vpow.pop %v5224
        %v5226 = vmul.f32 %v5169, 1.442695
        %v5227 = vpow.pop %v5226
        %v5228 = vmul.f32 %v5170, 1.442695
        %v5229 = vpow.pop %v5228
        %v5230 = vmul.f32 %v5171, 1.442695
        %v5231 = vpow.pop %v5230
        %v5232 = vmul.f32 %v5172, 1.442695
        %v5233 = vpow.pop %v5232
        %v5234 = vmul.f32 %v5173, 1.442695
        %v5235 = vpow.pop %v5234
        %v5236 = vmul.f32 %v5174, 1.442695
        %v5237 = vpow.pop %v5236
        %v5238 = vmul.f32 %v5175, 1.442695
        %v5239 = vpow.pop %v5238
        %v5240 = vadd.f32 %v5177, 1.0
        %v5241 = vadd.f32 %v5179, 1.0
        %v5242 = vadd.f32 %v5181, 1.0
        %v5243 = vadd.f32 %v5183, 1.0
        %v5244 = vadd.f32 %v5185, 1.0
        %v5245 = vadd.f32 %v5187, 1.0
        %v5246 = vadd.f32 %v5189, 1.0
        %v5247 = vadd.f32 %v5191, 1.0
        %v5248 = vadd.f32 %v5193, 1.0
        %v5249 = vadd.f32 %v5195, 1.0
        %v5250 = vadd.f32 %v5197, 1.0
        %v5251 = vadd.f32 %v5199, 1.0
        %v5252 = vadd.f32 %v5201, 1.0
        %v5253 = vadd.f32 %v5203, 1.0
        %v5254 = vadd.f32 %v5205, 1.0
        %v5255 = vadd.f32 %v5207, 1.0
        %v5256 = vadd.f32 %v5209, 1.0
        %v5257 = vadd.f32 %v5211, 1.0
        %v5258 = vadd.f32 %v5213, 1.0
        %v5259 = vadd.f32 %v5215, 1.0
        %v5260 = vadd.f32 %v5217, 1.0
        %v5261 = vadd.f32 %v5219, 1.0
        %v5262 = vadd.f32 %v5221, 1.0
        %v5263 = vadd.f32 %v5223, 1.0
        %v5264 = vadd.f32 %v5225, 1.0
        %v5265 = vadd.f32 %v5227, 1.0
        %v5266 = vadd.f32 %v5229, 1.0
        %v5267 = vadd.f32 %v5231, 1.0
        %v5268 = vadd.f32 %v5233, 1.0
        %v5269 = vadd.f32 %v5235, 1.0
        %v5270 = vadd.f32 %v5237, 1.0
        %v5271 = vadd.f32 %v5239, 1.0
        %v5272 = vrcp.pop %v5240
        %v5273 = vmul.f32 1.0, %v5272
        %v5274 = vrcp.pop %v5241
        %v5275 = vmul.f32 1.0, %v5274
        %v5276 = vrcp.pop %v5242
        %v5277 = vmul.f32 1.0, %v5276
        %v5278 = vrcp.pop %v5243
        %v5279 = vmul.f32 1.0, %v5278
        %v5280 = vrcp.pop %v5244
        %v5281 = vmul.f32 1.0, %v5280
        %v5282 = vrcp.pop %v5245
        %v5283 = vmul.f32 1.0, %v5282
        %v5284 = vrcp.pop %v5246
        %v5285 = vmul.f32 1.0, %v5284
        %v5286 = vrcp.pop %v5247
        %v5287 = vmul.f32 1.0, %v5286
        %v5288 = vrcp.pop %v5248
        %v5289 = vmul.f32 1.0, %v5288
        %v5290 = vrcp.pop %v5249
        %v5291 = vmul.f32 1.0, %v5290
        %v5292 = vrcp.pop %v5250
        %v5293 = vmul.f32 1.0, %v5292
        %v5294 = vrcp.pop %v5251
        %v5295 = vmul.f32 1.0, %v5294
        %v5296 = vrcp.pop %v5252
        %v5297 = vmul.f32 1.0, %v5296
        %v5298 = vrcp.pop %v5253
        %v5299 = vmul.f32 1.0, %v5298
        %v5300 = vrcp.pop %v5254
        %v5301 = vmul.f32 1.0, %v5300
        %v5302 = vrcp.pop %v5255
        %v5303 = vmul.f32 1.0, %v5302
        %v5304 = vrcp.pop %v5256
        %v5305 = vmul.f32 1.0, %v5304
        %v5306 = vrcp.pop %v5257
        %v5307 = vmul.f32 1.0, %v5306
        %v5308 = vrcp.pop %v5258
        %v5309 = vmul.f32 1.0, %v5308
        %v5310 = vrcp.pop %v5259
        %v5311 = vmul.f32 1.0, %v5310
        %v5312 = vrcp.pop %v5260
        %v5313 = vmul.f32 1.0, %v5312
        %v5314 = vrcp.pop %v5261
        %v5315 = vmul.f32 1.0, %v5314
        %v5316 = vrcp.pop %v5262
        %v5317 = vmul.f32 1.0, %v5316
        %v5318 = vrcp.pop %v5263
        %v5319 = vmul.f32 1.0, %v5318
        %v5320 = vrcp.pop %v5264
        %v5321 = vmul.f32 1.0, %v5320
        %v5322 = vrcp.pop %v5265
        %v5323 = vmul.f32 1.0, %v5322
        %v5324 = vrcp.pop %v5266
        %v5325 = vmul.f32 1.0, %v5324
        %v5326 = vrcp.pop %v5267
        %v5327 = vmul.f32 1.0, %v5326
        %v5328 = vrcp.pop %v5268
        %v5329 = vmul.f32 1.0, %v5328
        %v5330 = vrcp.pop %v5269
        %v5331 = vmul.f32 1.0, %v5330
        %v5332 = vrcp.pop %v5270
        %v5333 = vmul.f32 1.0, %v5332
        %v5334 = vrcp.pop %v5271
        %v5335 = vmul.f32 1.0, %v5334
        %v5336 = vmul.f32 %v5112, %v5273
        %v5337 = vmul.f32 %v5113, %v5275
        %v5338 = vmul.f32 %v5114, %v5277
        %v5339 = vmul.f32 %v5115, %v5279
        %v5340 = vmul.f32 %v5116, %v5281
        %v5341 = vmul.f32 %v5117, %v5283
        %v5342 = vmul.f32 %v5118, %v5285
        %v5343 = vmul.f32 %v5119, %v5287
        %v5344 = vmul.f32 %v5120, %v5289
        %v5345 = vmul.f32 %v5121, %v5291
        %v5346 = vmul.f32 %v5122, %v5293
        %v5347 = vmul.f32 %v5123, %v5295
        %v5348 = vmul.f32 %v5124, %v5297
        %v5349 = vmul.f32 %v5125, %v5299
        %v5350 = vmul.f32 %v5126, %v5301
        %v5351 = vmul.f32 %v5127, %v5303
        %v5352 = vmul.f32 %v5128, %v5305
        %v5353 = vmul.f32 %v5129, %v5307
        %v5354 = vmul.f32 %v5130, %v5309
        %v5355 = vmul.f32 %v5131, %v5311
        %v5356 = vmul.f32 %v5132, %v5313
        %v5357 = vmul.f32 %v5133, %v5315
        %v5358 = vmul.f32 %v5134, %v5317
        %v5359 = vmul.f32 %v5135, %v5319
        %v5360 = vmul.f32 %v5136, %v5321
        %v5361 = vmul.f32 %v5137, %v5323
        %v5362 = vmul.f32 %v5138, %v5325
        %v5363 = vmul.f32 %v5139, %v5327
        %v5364 = vmul.f32 %v5140, %v5329
        %v5365 = vmul.f32 %v5141, %v5331
        %v5366 = vmul.f32 %v5142, %v5333
        %v5367 = vmul.f32 %v5143, %v5335
        %v5368 = vpack.c.bf16 %v983, %v982
        %v5369 = vpack.c.bf16 %v985, %v984
        %v5370 = vpack.c.bf16 %v987, %v986
        %v5371 = vpack.c.bf16 %v989, %v988
        %v5372 = vpack.c.bf16 %v991, %v990
        %v5373 = vpack.c.bf16 %v993, %v992
        %v5374 = vpack.c.bf16 %v995, %v994
        %v5375 = vpack.c.bf16 %v997, %v996
        %v5376 = vpack.c.bf16 %v999, %v998
        %v5377 = vpack.c.bf16 %v1001, %v1000
        %v5378 = vpack.c.bf16 %v1003, %v1002
        %v5379 = vpack.c.bf16 %v1005, %v1004
        %v5380 = vpack.c.bf16 %v1007, %v1006
        %v5381 = vpack.c.bf16 %v1009, %v1008
        %v5382 = vpack.c.bf16 %v1011, %v1010
        %v5383 = vpack.c.bf16 %v1013, %v1012
        %v5384 = vld [vmem:[%s11] sm:$0xf]
        %v5385 = vld [vmem:[%s11 + $0x4] sm:$0xf]
        %v5386 = vld [vmem:[%s11 + $0x8] sm:$0xf]
        %v5387 = vld [vmem:[%s11 + $0xc] sm:$0xf]
        %5388 = vst.msk [vmem:[#allocation3] sm:$0xff] %vm4742, 0.0
        %5389 = vst.msk [vmem:[#allocation3 + $0x8] sm:$0xff] %vm4742, 0.0
        %5390 = vst.msk [vmem:[#allocation3 + $0x10] sm:$0xff] %vm4742, 0.0
        %5391 = vst.msk [vmem:[#allocation3 + $0x118] sm:$0xff] %vm4742, 0.0
        %5392 = vst.msk [vmem:[#allocation3 + $0x120] sm:$0xff] %vm4742, 0.0
        %5393 = vst.msk [vmem:[#allocation3 + $0x128] sm:$0xff] %vm4742, 0.0
        %5394 = vst.msk [vmem:[#allocation3 + $0x18] sm:$0xff] %vm4742, %v5336
        %5395 = vst.msk [vmem:[#allocation3 + $0x20] sm:$0xff] %vm4742, %v5337
        %5396 = vst.msk [vmem:[#allocation3 + $0x28] sm:$0xff] %vm4742, %v5338
        %5397 = vst.msk [vmem:[#allocation3 + $0x30] sm:$0xff] %vm4742, %v5339
        %5398 = vst.msk [vmem:[#allocation3 + $0x38] sm:$0xff] %vm4742, %v5340
        %5399 = vst.msk [vmem:[#allocation3 + $0x40] sm:$0xff] %vm4742, %v5341
        %5400 = vst.msk [vmem:[#allocation3 + $0x48] sm:$0xff] %vm4742, %v5342
        %5401 = vst.msk [vmem:[#allocation3 + $0x50] sm:$0xff] %vm4742, %v5343
        %5402 = vst.msk [vmem:[#allocation3 + $0x58] sm:$0xff] %vm4742, %v5344
        %5403 = vst.msk [vmem:[#allocation3 + $0x60] sm:$0xff] %vm4742, %v5345
        %5404 = vst.msk [vmem:[#allocation3 + $0x68] sm:$0xff] %vm4742, %v5346
        %5405 = vst.msk [vmem:[#allocation3 + $0x70] sm:$0xff] %vm4742, %v5347
        %5406 = vst.msk [vmem:[#allocation3 + $0x78] sm:$0xff] %vm4742, %v5348
        %5407 = vst.msk [vmem:[#allocation3 + $0x80] sm:$0xff] %vm4742, %v5349
        %5408 = vst.msk [vmem:[#allocation3 + $0x88] sm:$0xff] %vm4742, %v5350
        %5409 = vst.msk [vmem:[#allocation3 + $0x90] sm:$0xff] %vm4742, %v5351
        %5410 = vst.msk [vmem:[#allocation3 + $0x98] sm:$0xff] %vm4742, %v5352
        %5411 = vst.msk [vmem:[#allocation3 + $0xa0] sm:$0xff] %vm4742, %v5353
        %5412 = vst.msk [vmem:[#allocation3 + $0xa8] sm:$0xff] %vm4742, %v5354
        %5413 = vst.msk [vmem:[#allocation3 + $0xb0] sm:$0xff] %vm4742, %v5355
        %5414 = vst.msk [vmem:[#allocation3 + $0xb8] sm:$0xff] %vm4742, %v5356
        %5415 = vst.msk [vmem:[#allocation3 + $0xc0] sm:$0xff] %vm4742, %v5357
        %5416 = vst.msk [vmem:[#allocation3 + $0xc8] sm:$0xff] %vm4742, %v5358
        %5417 = vst.msk [vmem:[#allocation3 + $0xd0] sm:$0xff] %vm4742, %v5359
        %5418 = vst.msk [vmem:[#allocation3 + $0xd8] sm:$0xff] %vm4742, %v5360
        %5419 = vst.msk [vmem:[#allocation3 + $0xe0] sm:$0xff] %vm4742, %v5361
        %5420 = vst.msk [vmem:[#allocation3 + $0xe8] sm:$0xff] %vm4742, %v5362
        %5421 = vst.msk [vmem:[#allocation3 + $0xf0] sm:$0xff] %vm4742, %v5363
        %5422 = vst.msk [vmem:[#allocation3 + $0xf8] sm:$0xff] %vm4742, %v5364
        %5423 = vst.msk [vmem:[#allocation3 + $0x100] sm:$0xff] %vm4742, %v5365
        %5424 = vst.msk [vmem:[#allocation3 + $0x108] sm:$0xff] %vm4742, %v5366
        %5425 = vst.msk [vmem:[#allocation3 + $0x110] sm:$0xff] %vm4742, %v5367
        %v5426 = vld [vmem:[#allocation3 + $0x7] sm:$0xff]
        %v5427 = vld [vmem:[#allocation3 + $0xf] sm:$0xff]
        %v5428 = vld [vmem:[#allocation3 + $0x17] sm:$0xff]
        %v5429 = vld [vmem:[#allocation3 + $0x1f] sm:$0xff]
        %v5430 = vld [vmem:[#allocation3 + $0x27] sm:$0xff]
        %v5431 = vld [vmem:[#allocation3 + $0x2f] sm:$0xff]
        %v5432 = vld [vmem:[#allocation3 + $0x37] sm:$0xff]
        %v5433 = vld [vmem:[#allocation3 + $0x3f] sm:$0xff]
        %v5434 = vld [vmem:[#allocation3 + $0x47] sm:$0xff]
        %v5435 = vld [vmem:[#allocation3 + $0x4f] sm:$0xff]
        %v5436 = vld [vmem:[#allocation3 + $0x57] sm:$0xff]
        %v5437 = vld [vmem:[#allocation3 + $0x5f] sm:$0xff]
        %v5438 = vld [vmem:[#allocation3 + $0x67] sm:$0xff]
        %v5439 = vld [vmem:[#allocation3 + $0x6f] sm:$0xff]
        %v5440 = vld [vmem:[#allocation3 + $0x77] sm:$0xff]
        %v5441 = vld [vmem:[#allocation3 + $0x7f] sm:$0xff]
        %v5442 = vld [vmem:[#allocation3 + $0x87] sm:$0xff]
        %v5443 = vld [vmem:[#allocation3 + $0x8f] sm:$0xff]
        %v5444 = vld [vmem:[#allocation3 + $0x97] sm:$0xff]
        %v5445 = vld [vmem:[#allocation3 + $0x9f] sm:$0xff]
        %v5446 = vld [vmem:[#allocation3 + $0xa7] sm:$0xff]
        %v5447 = vld [vmem:[#allocation3 + $0xaf] sm:$0xff]
        %v5448 = vld [vmem:[#allocation3 + $0xb7] sm:$0xff]
        %v5449 = vld [vmem:[#allocation3 + $0xbf] sm:$0xff]
        %v5450 = vld [vmem:[#allocation3 + $0xc7] sm:$0xff]
        %v5451 = vld [vmem:[#allocation3 + $0xcf] sm:$0xff]
        %v5452 = vld [vmem:[#allocation3 + $0xd7] sm:$0xff]
        %v5453 = vld [vmem:[#allocation3 + $0xdf] sm:$0xff]
        %v5454 = vld [vmem:[#allocation3 + $0xe7] sm:$0xff]
        %v5455 = vld [vmem:[#allocation3 + $0xef] sm:$0xff]
        %v5456 = vld [vmem:[#allocation3 + $0xf7] sm:$0xff]
        %v5457 = vld [vmem:[#allocation3 + $0xff] sm:$0xff]
        %v5458 = vsel %vm1748, %v5426, 0.0
        %v5459 = vsel %vm1749, %v5427, 0.0
        %v5460 = vsel %vm1750, %v5428, 0.0
        %v5461 = vsel %vm1751, %v5429, 0.0
        %v5462 = vsel %vm1752, %v5430, 0.0
        %v5463 = vsel %vm1753, %v5431, 0.0
        %v5464 = vsel %vm1754, %v5432, 0.0
        %v5465 = vsel %vm1755, %v5433, 0.0
        %v5466 = vsel %vm1756, %v5434, 0.0
        %v5467 = vsel %vm1757, %v5435, 0.0
        %v5468 = vsel %vm1758, %v5436, 0.0
        %v5469 = vsel %vm1759, %v5437, 0.0
        %v5470 = vsel %vm1760, %v5438, 0.0
        %v5471 = vsel %vm1761, %v5439, 0.0
        %v5472 = vsel %vm1762, %v5440, 0.0
        %v5473 = vsel %vm1763, %v5441, 0.0
        %v5474 = vsel %vm1764, %v5442, 0.0
        %v5475 = vsel %vm1765, %v5443, 0.0
        %v5476 = vsel %vm1766, %v5444, 0.0
        %v5477 = vsel %vm1767, %v5445, 0.0
        %v5478 = vsel %vm1768, %v5446, 0.0
        %v5479 = vsel %vm1769, %v5447, 0.0
        %v5480 = vsel %vm1770, %v5448, 0.0
        %v5481 = vsel %vm1771, %v5449, 0.0
        %v5482 = vsel %vm1772, %v5450, 0.0
        %v5483 = vsel %vm1773, %v5451, 0.0
        %v5484 = vsel %vm1774, %v5452, 0.0
        %v5485 = vsel %vm1775, %v5453, 0.0
        %v5486 = vsel %vm1776, %v5454, 0.0
        %v5487 = vsel %vm1777, %v5455, 0.0
        %v5488 = vsel %vm1778, %v5456, 0.0
        %v5489 = vsel %vm1779, %v5457, 0.0
        %v5490 = vpack.c.bf16 %v5459, %v5458
        %v5491 = vpack.c.bf16 %v5461, %v5460
        %v5492 = vpack.c.bf16 %v5463, %v5462
        %v5493 = vpack.c.bf16 %v5465, %v5464
        %v5494 = vpack.c.bf16 %v5467, %v5466
        %v5495 = vpack.c.bf16 %v5469, %v5468
        %v5496 = vpack.c.bf16 %v5471, %v5470
        %v5497 = vpack.c.bf16 %v5473, %v5472
        %v5498 = vpack.c.bf16 %v5475, %v5474
        %v5499 = vpack.c.bf16 %v5477, %v5476
        %v5500 = vpack.c.bf16 %v5479, %v5478
        %v5501 = vpack.c.bf16 %v5481, %v5480
        %v5502 = vpack.c.bf16 %v5483, %v5482
        %v5503 = vpack.c.bf16 %v5485, %v5484
        %v5504 = vpack.c.bf16 %v5487, %v5486
        %v5505 = vpack.c.bf16 %v5489, %v5488
        %v5506 = vld [vmem:[#allocation12] sm:$0xf]
        %v5507 = vld [vmem:[#allocation12 + $0x4] sm:$0xf]
        %v5508 = vld [vmem:[#allocation12 + $0x8] sm:$0xf]
        %v5509 = vld [vmem:[#allocation12 + $0xc] sm:$0xf]
        %v5510 = vld [vmem:[#allocation12 + $0x10] sm:$0xf]
        %v5511 = vld [vmem:[#allocation12 + $0x14] sm:$0xf]
        %v5512 = vld [vmem:[#allocation12 + $0x18] sm:$0xf]
        %v5513 = vld [vmem:[#allocation12 + $0x1c] sm:$0xf]
        %v5522 = vunpack.c.l.b16 %v5506
        %v5523 = vunpack.c.l.b16 %v5507
        %v5524 = vunpack.c.l.b16 %v5508
        %v5525 = vunpack.c.l.b16 %v5509
        %v5526 = vunpack.c.l.b16 %v5510
        %v5527 = vunpack.c.l.b16 %v5511
        %v5528 = vunpack.c.l.b16 %v5512
        %v5529 = vunpack.c.l.b16 %v5513
        %v5530 = vpack.c.b16 %v5523, %v5522
        %v5531 = vpack.c.b16 %v5525, %v5524
        %v5532 = vpack.c.b16 %v5527, %v5526
        %v5533 = vpack.c.b16 %v5529, %v5528
        %v5539 = vsel %vm4742, %v5490, 0
        %v5542 = vsel %vm4742, %v5491, 0
        %v5545 = vsel %vm4742, %v5492, 0
        %v5548 = vsel %vm4742, %v5493, 0
        %v5551 = vsel %vm4742, %v5494, 0
        %v5554 = vsel %vm4742, %v5495, 0
        %v5557 = vsel %vm4742, %v5496, 0
        %v5560 = vsel %vm4742, %v5497, 0
        %v5563 = vsel %vm4742, %v5498, 0
        %v5566 = vsel %vm4742, %v5499, 0
        %v5569 = vsel %vm4742, %v5500, 0
        %v5572 = vsel %vm4742, %v5501, 0
        %v5575 = vsel %vm4742, %v5502, 0
        %v5578 = vsel %vm4742, %v5503, 0
        %v5581 = vsel %vm4742, %v5504, 0
        %v5584 = vsel %vm4742, %v5505, 0
        %5586 = vmatprep.subr.bf16.mxu0 0
        %5587 = vmatpush1.bf16.msra.mxu0 %v5530
        %5588 = vmatprep.subr.bf16.mxu0 0
        %5589 = vmatpush1.bf16.msra.mxu0 %v5531
        %5590 = vmatprep.subr.bf16.mxu0 0
        %5591 = vmatpush1.bf16.msra.mxu0 %v5532
        %5592 = vmatprep.subr.bf16.mxu0 0
        %5593 = vmatpush1.bf16.msra.mxu0 %v5533
        %5594 = vmatprep.subr.bf16.mxu0 0
        %5595 = vmatpush1.bf16.msra.mxu0 0
        %5596 = vmatprep.subr.bf16.mxu0 0
        %5597 = vmatpush1.bf16.msra.mxu0 0
        %5598 = vmatprep.subr.bf16.mxu0 0
        %5599 = vmatpush1.bf16.msra.mxu0 0
        %5600 = vmatprep.subr.bf16.mxu0 0
        %5601 = vmatpush1.bf16.msra.mxu0 0
        %5602 = vmatprep.subr.bf16.mxu0 0
        %5603 = vmatpush1.bf16.msra.mxu0 0
        %5604 = vmatprep.subr.bf16.mxu0 0
        %5605 = vmatpush1.bf16.msra.mxu0 0
        %5606 = vmatprep.subr.bf16.mxu0 0
        %5607 = vmatpush1.bf16.msra.mxu0 0
        %5608 = vmatprep.subr.bf16.mxu0 0
        %5609 = vmatpush1.bf16.msra.mxu0 0
        %5610 = vmatprep.subr.bf16.mxu0 0
        %5611 = vmatpush1.bf16.msra.mxu0 0
        %5612 = vmatprep.subr.bf16.mxu0 0
        %5613 = vmatpush1.bf16.msra.mxu0 0
        %5614 = vmatprep.subr.bf16.mxu0 0
        %5615 = vmatpush1.bf16.msra.mxu0 0
        %5616 = vmatprep.subr.bf16.mxu0 0
        %5617 = vmatpush1.bf16.msra.mxu0 0
        %5618 = vmatprep.mubr.bf16.mxu0 0
        %5619 = vmatmul.mubr.bf16.gmra.mrb[0].mxu0 %v5539
        %v5620 = vpop.f32.mrb[0].mxu0
        %v5621 = vadd.f32 0.0, %v5620
        %v5622 = vpop.f32.mrb[0].mxu0
        %v5623 = vpop.f32.mrb[0].mxu0
        %v5624 = vadd.f32 0.0, %v5623
        %v5625 = vpop.f32.mrb[0].mxu0
        %5626 = vmatprep.mubr.bf16.mxu0 0
        %5627 = vmatmul.mubr.bf16.gmra.mrb[0].mxu0 %v5542
        %v5628 = vpop.f32.mrb[0].mxu0
        %v5629 = vadd.f32 0.0, %v5628
        %v5630 = vpop.f32.mrb[0].mxu0
        %v5631 = vpop.f32.mrb[0].mxu0
        %v5632 = vadd.f32 0.0, %v5631
        %v5633 = vpop.f32.mrb[0].mxu0
        %5634 = vmatprep.mubr.bf16.mxu0 0
        %5635 = vmatmul.mubr.bf16.gmra.mrb[0].mxu0 %v5545
        %v5636 = vpop.f32.mrb[0].mxu0
        %v5637 = vadd.f32 0.0, %v5636
        %v5638 = vpop.f32.mrb[0].mxu0
        %v5639 = vpop.f32.mrb[0].mxu0
        %v5640 = vadd.f32 0.0, %v5639
        %v5641 = vpop.f32.mrb[0].mxu0
        %5642 = vmatprep.mubr.bf16.mxu0 0
        %5643 = vmatmul.mubr.bf16.gmra.mrb[0].mxu0 %v5548
        %v5644 = vpop.f32.mrb[0].mxu0
        %v5645 = vadd.f32 0.0, %v5644
        %v5646 = vpop.f32.mrb[0].mxu0
        %v5647 = vpop.f32.mrb[0].mxu0
        %v5648 = vadd.f32 0.0, %v5647
        %v5649 = vpop.f32.mrb[0].mxu0
        %5650 = vmatprep.mubr.bf16.mxu0 0
        %5651 = vmatmul.mubr.bf16.gmra.mrb[0].mxu0 %v5551
        %v5652 = vpop.f32.mrb[0].mxu0
        %v5653 = vadd.f32 0.0, %v5652
        %v5654 = vpop.f32.mrb[0].mxu0
        %v5655 = vpop.f32.mrb[0].mxu0
        %v5656 = vadd.f32 0.0, %v5655
        %v5657 = vpop.f32.mrb[0].mxu0
        %5658 = vmatprep.mubr.bf16.mxu0 0
        %5659 = vmatmul.mubr.bf16.gmra.mrb[0].mxu0 %v5554
        %v5660 = vpop.f32.mrb[0].mxu0
        %v5661 = vadd.f32 0.0, %v5660
        %v5662 = vpop.f32.mrb[0].mxu0
        %v5663 = vpop.f32.mrb[0].mxu0
        %v5664 = vadd.f32 0.0, %v5663
        %v5665 = vpop.f32.mrb[0].mxu0
        %5666 = vmatprep.mubr.bf16.mxu0 0
        %5667 = vmatmul.mubr.bf16.gmra.mrb[0].mxu0 %v5557
        %v5668 = vpop.f32.mrb[0].mxu0
        %v5669 = vadd.f32 0.0, %v5668
        %v5670 = vpop.f32.mrb[0].mxu0
        %v5671 = vpop.f32.mrb[0].mxu0
        %v5672 = vadd.f32 0.0, %v5671
        %v5673 = vpop.f32.mrb[0].mxu0
        %5674 = vmatprep.mubr.bf16.mxu0 0
        %5675 = vmatmul.mubr.bf16.gmra.mrb[0].mxu0 %v5560
        %v5676 = vpop.f32.mrb[0].mxu0
        %v5677 = vadd.f32 0.0, %v5676
        %v5678 = vpop.f32.mrb[0].mxu0
        %v5679 = vpop.f32.mrb[0].mxu0
        %v5680 = vadd.f32 0.0, %v5679
        %v5681 = vpop.f32.mrb[0].mxu0
        %5682 = vmatprep.mubr.bf16.mxu0 0
        %5683 = vmatmul.mubr.bf16.gmra.mrb[0].mxu0 %v5563
        %v5684 = vpop.f32.mrb[0].mxu0
        %v5685 = vadd.f32 0.0, %v5684
        %v5686 = vpop.f32.mrb[0].mxu0
        %v5687 = vpop.f32.mrb[0].mxu0
        %v5688 = vadd.f32 0.0, %v5687
        %v5689 = vpop.f32.mrb[0].mxu0
        %5690 = vmatprep.mubr.bf16.mxu0 0
        %5691 = vmatmul.mubr.bf16.gmra.mrb[0].mxu0 %v5566
        %v5692 = vpop.f32.mrb[0].mxu0
        %v5693 = vadd.f32 0.0, %v5692
        %v5694 = vpop.f32.mrb[0].mxu0
        %v5695 = vpop.f32.mrb[0].mxu0
        %v5696 = vadd.f32 0.0, %v5695
        %v5697 = vpop.f32.mrb[0].mxu0
        %5698 = vmatprep.mubr.bf16.mxu0 0
        %5699 = vmatmul.mubr.bf16.gmra.mrb[0].mxu0 %v5569
        %v5700 = vpop.f32.mrb[0].mxu0
        %v5701 = vadd.f32 0.0, %v5700
        %v5702 = vpop.f32.mrb[0].mxu0
        %v5703 = vpop.f32.mrb[0].mxu0
        %v5704 = vadd.f32 0.0, %v5703
        %v5705 = vpop.f32.mrb[0].mxu0
        %5706 = vmatprep.mubr.bf16.mxu0 0
        %5707 = vmatmul.mubr.bf16.gmra.mrb[0].mxu0 %v5572
        %v5708 = vpop.f32.mrb[0].mxu0
        %v5709 = vadd.f32 0.0, %v5708
        %v5710 = vpop.f32.mrb[0].mxu0
        %v5711 = vpop.f32.mrb[0].mxu0
        %v5712 = vadd.f32 0.0, %v5711
        %v5713 = vpop.f32.mrb[0].mxu0
        %5714 = vmatprep.mubr.bf16.mxu0 0
        %5715 = vmatmul.mubr.bf16.gmra.mrb[0].mxu0 %v5575
        %v5716 = vpop.f32.mrb[0].mxu0
        %v5717 = vadd.f32 0.0, %v5716
        %v5718 = vpop.f32.mrb[0].mxu0
        %v5719 = vpop.f32.mrb[0].mxu0
        %v5720 = vadd.f32 0.0, %v5719
        %v5721 = vpop.f32.mrb[0].mxu0
        %5722 = vmatprep.mubr.bf16.mxu0 0
        %5723 = vmatmul.mubr.bf16.gmra.mrb[0].mxu0 %v5578
        %v5724 = vpop.f32.mrb[0].mxu0
        %v5725 = vadd.f32 0.0, %v5724
        %v5726 = vpop.f32.mrb[0].mxu0
        %v5727 = vpop.f32.mrb[0].mxu0
        %v5728 = vadd.f32 0.0, %v5727
        %v5729 = vpop.f32.mrb[0].mxu0
        %5730 = vmatprep.mubr.bf16.mxu0 0
        %5731 = vmatmul.mubr.bf16.gmra.mrb[0].mxu0 %v5581
        %v5732 = vpop.f32.mrb[0].mxu0
        %v5733 = vadd.f32 0.0, %v5732
        %v5734 = vpop.f32.mrb[0].mxu0
        %v5735 = vpop.f32.mrb[0].mxu0
        %v5736 = vadd.f32 0.0, %v5735
        %v5737 = vpop.f32.mrb[0].mxu0
        %5738 = vmatprep.mubr.bf16.mxu0 0
        %5739 = vmatmul.mubr.bf16.gmra.mrb[0].mxu0 %v5584
        %v5740 = vpop.f32.mrb[0].mxu0
        %v5741 = vadd.f32 0.0, %v5740
        %v5742 = vpop.f32.mrb[0].mxu0
        %v5743 = vpop.f32.mrb[0].mxu0
        %v5744 = vadd.f32 0.0, %v5743
        %v5745 = vpop.f32.mrb[0].mxu0
        %5746 = vdwg.mxu0
        %v5751 = vunpack.c.l.b16 %v5384
        %v5752 = vunpack.c.l.b16 %v5385
        %v5753 = vunpack.c.l.b16 %v5386
        %v5754 = vunpack.c.l.b16 %v5387
        %v5755 = vpack.c.b16 %v5752, %v5751
        %v5756 = vpack.c.b16 %v5754, %v5753
        %v5760 = vsel %vm1020, %v5368, 0
        %v5763 = vsel %vm1020, %v5369, 0
        %v5766 = vsel %vm1020, %v5370, 0
        %v5769 = vsel %vm1020, %v5371, 0
        %v5772 = vsel %vm1020, %v5372, 0
        %v5775 = vsel %vm1020, %v5373, 0
        %v5778 = vsel %vm1020, %v5374, 0
        %v5781 = vsel %vm1020, %v5375, 0
        %v5784 = vsel %vm1020, %v5376, 0
        %v5787 = vsel %vm1020, %v5377, 0
        %v5790 = vsel %vm1020, %v5378, 0
        %v5793 = vsel %vm1020, %v5379, 0
        %v5796 = vsel %vm1020, %v5380, 0
        %v5799 = vsel %vm1020, %v5381, 0
        %v5802 = vsel %vm1020, %v5382, 0
        %v5805 = vsel %vm1020, %v5383, 0
        %5807 = vmatprep.subr.bf16.mxu0 0
        %5808 = vmatpush1.bf16.msra.mxu0 %v5755
        %5809 = vmatprep.subr.bf16.mxu0 0
        %5810 = vmatpush1.bf16.msra.mxu0 %v5756
        %5811 = vmatprep.subr.bf16.mxu0 0
        %5812 = vmatpush1.bf16.msra.mxu0 0
        %5813 = vmatprep.subr.bf16.mxu0 0
        %5814 = vmatpush1.bf16.msra.mxu0 0
        %5815 = vmatprep.subr.bf16.mxu0 0
        %5816 = vmatpush1.bf16.msra.mxu0 0
        %5817 = vmatprep.subr.bf16.mxu0 0
        %5818 = vmatpush1.bf16.msra.mxu0 0
        %5819 = vmatprep.subr.bf16.mxu0 0
        %5820 = vmatpush1.bf16.msra.mxu0 0
        %5821 = vmatprep.subr.bf16.mxu0 0
        %5822 = vmatpush1.bf16.msra.mxu0 0
        %5823 = vmatprep.subr.bf16.mxu0 0
        %5824 = vmatpush1.bf16.msra.mxu0 0
        %5825 = vmatprep.subr.bf16.mxu0 0
        %5826 = vmatpush1.bf16.msra.mxu0 0
        %5827 = vmatprep.subr.bf16.mxu0 0
        %5828 = vmatpush1.bf16.msra.mxu0 0
        %5829 = vmatprep.subr.bf16.mxu0 0
        %5830 = vmatpush1.bf16.msra.mxu0 0
        %5831 = vmatprep.subr.bf16.mxu0 0
        %5832 = vmatpush1.bf16.msra.mxu0 0
        %5833 = vmatprep.subr.bf16.mxu0 0
        %5834 = vmatpush1.bf16.msra.mxu0 0
        %5835 = vmatprep.subr.bf16.mxu0 0
        %5836 = vmatpush1.bf16.msra.mxu0 0
        %5837 = vmatprep.subr.bf16.mxu0 0
        %5838 = vmatpush1.bf16.msra.mxu0 0
        %5839 = vmatprep.mubr.bf16.mxu0 0
        %5840 = vmatmul.mubr.bf16.gmra.mrb[0].mxu0 %v5760
        %v5841 = vpop.f32.mrb[0].mxu0
        %v5842 = vadd.f32 %v5621, %v5841
        %v5843 = vpop.f32.mrb[0].mxu0
        %v5844 = vpop.f32.mrb[0].mxu0
        %v5845 = vadd.f32 %v5624, %v5844
        %v5846 = vpop.f32.mrb[0].mxu0
        %5847 = vmatprep.mubr.bf16.mxu0 0
        %5848 = vmatmul.mubr.bf16.gmra.mrb[0].mxu0 %v5763
        %v5849 = vpop.f32.mrb[0].mxu0
        %v5850 = vadd.f32 %v5629, %v5849
        %v5851 = vpop.f32.mrb[0].mxu0
        %v5852 = vpop.f32.mrb[0].mxu0
        %v5853 = vadd.f32 %v5632, %v5852
        %v5854 = vpop.f32.mrb[0].mxu0
        %5855 = vmatprep.mubr.bf16.mxu0 0
        %5856 = vmatmul.mubr.bf16.gmra.mrb[0].mxu0 %v5766
        %v5857 = vpop.f32.mrb[0].mxu0
        %v5858 = vadd.f32 %v5637, %v5857
        %v5859 = vpop.f32.mrb[0].mxu0
        %v5860 = vpop.f32.mrb[0].mxu0
        %v5861 = vadd.f32 %v5640, %v5860
        %v5862 = vpop.f32.mrb[0].mxu0
        %5863 = vmatprep.mubr.bf16.mxu0 0
        %5864 = vmatmul.mubr.bf16.gmra.mrb[0].mxu0 %v5769
        %v5865 = vpop.f32.mrb[0].mxu0
        %v5866 = vadd.f32 %v5645, %v5865
        %v5867 = vpop.f32.mrb[0].mxu0
        %v5868 = vpop.f32.mrb[0].mxu0
        %v5869 = vadd.f32 %v5648, %v5868
        %v5870 = vpop.f32.mrb[0].mxu0
        %5871 = vmatprep.mubr.bf16.mxu0 0
        %5872 = vmatmul.mubr.bf16.gmra.mrb[0].mxu0 %v5772
        %v5873 = vpop.f32.mrb[0].mxu0
        %v5874 = vadd.f32 %v5653, %v5873
        %v5875 = vpop.f32.mrb[0].mxu0
        %v5876 = vpop.f32.mrb[0].mxu0
        %v5877 = vadd.f32 %v5656, %v5876
        %v5878 = vpop.f32.mrb[0].mxu0
        %5879 = vmatprep.mubr.bf16.mxu0 0
        %5880 = vmatmul.mubr.bf16.gmra.mrb[0].mxu0 %v5775
        %v5881 = vpop.f32.mrb[0].mxu0
        %v5882 = vadd.f32 %v5661, %v5881
        %v5883 = vpop.f32.mrb[0].mxu0
        %v5884 = vpop.f32.mrb[0].mxu0
        %v5885 = vadd.f32 %v5664, %v5884
        %v5886 = vpop.f32.mrb[0].mxu0
        %5887 = vmatprep.mubr.bf16.mxu0 0
        %5888 = vmatmul.mubr.bf16.gmra.mrb[0].mxu0 %v5778
        %v5889 = vpop.f32.mrb[0].mxu0
        %v5890 = vadd.f32 %v5669, %v5889
        %v5891 = vpop.f32.mrb[0].mxu0
        %v5892 = vpop.f32.mrb[0].mxu0
        %v5893 = vadd.f32 %v5672, %v5892
        %v5894 = vpop.f32.mrb[0].mxu0
        %5895 = vmatprep.mubr.bf16.mxu0 0
        %5896 = vmatmul.mubr.bf16.gmra.mrb[0].mxu0 %v5781
        %v5897 = vpop.f32.mrb[0].mxu0
        %v5898 = vadd.f32 %v5677, %v5897
        %v5899 = vpop.f32.mrb[0].mxu0
        %v5900 = vpop.f32.mrb[0].mxu0
        %v5901 = vadd.f32 %v5680, %v5900
        %v5902 = vpop.f32.mrb[0].mxu0
        %5903 = vmatprep.mubr.bf16.mxu0 0
        %5904 = vmatmul.mubr.bf16.gmra.mrb[0].mxu0 %v5784
        %v5905 = vpop.f32.mrb[0].mxu0
        %v5906 = vadd.f32 %v5685, %v5905
        %v5907 = vpop.f32.mrb[0].mxu0
        %v5908 = vpop.f32.mrb[0].mxu0
        %v5909 = vadd.f32 %v5688, %v5908
        %v5910 = vpop.f32.mrb[0].mxu0
        %5911 = vmatprep.mubr.bf16.mxu0 0
        %5912 = vmatmul.mubr.bf16.gmra.mrb[0].mxu0 %v5787
        %v5913 = vpop.f32.mrb[0].mxu0
        %v5914 = vadd.f32 %v5693, %v5913
        %v5915 = vpop.f32.mrb[0].mxu0
        %v5916 = vpop.f32.mrb[0].mxu0
        %v5917 = vadd.f32 %v5696, %v5916
        %v5918 = vpop.f32.mrb[0].mxu0
        %5919 = vmatprep.mubr.bf16.mxu0 0
        %5920 = vmatmul.mubr.bf16.gmra.mrb[0].mxu0 %v5790
        %v5921 = vpop.f32.mrb[0].mxu0
        %v5922 = vadd.f32 %v5701, %v5921
        %v5923 = vpop.f32.mrb[0].mxu0
        %v5924 = vpop.f32.mrb[0].mxu0
        %v5925 = vadd.f32 %v5704, %v5924
        %v5926 = vpop.f32.mrb[0].mxu0
        %5927 = vmatprep.mubr.bf16.mxu0 0
        %5928 = vmatmul.mubr.bf16.gmra.mrb[0].mxu0 %v5793
        %v5929 = vpop.f32.mrb[0].mxu0
        %v5930 = vadd.f32 %v5709, %v5929
        %v5931 = vpop.f32.mrb[0].mxu0
        %v5932 = vpop.f32.mrb[0].mxu0
        %v5933 = vadd.f32 %v5712, %v5932
        %v5934 = vpop.f32.mrb[0].mxu0
        %5935 = vmatprep.mubr.bf16.mxu0 0
        %5936 = vmatmul.mubr.bf16.gmra.mrb[0].mxu0 %v5796
        %v5937 = vpop.f32.mrb[0].mxu0
        %v5938 = vadd.f32 %v5717, %v5937
        %v5939 = vpop.f32.mrb[0].mxu0
        %v5940 = vpop.f32.mrb[0].mxu0
        %v5941 = vadd.f32 %v5720, %v5940
        %v5942 = vpop.f32.mrb[0].mxu0
        %5943 = vmatprep.mubr.bf16.mxu0 0
        %5944 = vmatmul.mubr.bf16.gmra.mrb[0].mxu0 %v5799
        %v5945 = vpop.f32.mrb[0].mxu0
        %v5946 = vadd.f32 %v5725, %v5945
        %v5947 = vpop.f32.mrb[0].mxu0
        %v5948 = vpop.f32.mrb[0].mxu0
        %v5949 = vadd.f32 %v5728, %v5948
        %v5950 = vpop.f32.mrb[0].mxu0
        %5951 = vmatprep.mubr.bf16.mxu0 0
        %5952 = vmatmul.mubr.bf16.gmra.mrb[0].mxu0 %v5802
        %v5953 = vpop.f32.mrb[0].mxu0
        %v5954 = vadd.f32 %v5733, %v5953
        %v5955 = vpop.f32.mrb[0].mxu0
        %v5956 = vpop.f32.mrb[0].mxu0
        %v5957 = vadd.f32 %v5736, %v5956
        %v5958 = vpop.f32.mrb[0].mxu0
        %5959 = vmatprep.mubr.bf16.mxu0 0
        %5960 = vmatmul.mubr.bf16.gmra.mrb[0].mxu0 %v5805
        %v5961 = vpop.f32.mrb[0].mxu0
        %v5962 = vadd.f32 %v5741, %v5961
        %v5963 = vpop.f32.mrb[0].mxu0
        %v5964 = vpop.f32.mrb[0].mxu0
        %v5965 = vadd.f32 %v5744, %v5964
        %v5966 = vpop.f32.mrb[0].mxu0
        %5967 = vdwg.mxu0
        %v5968 = vld [vmem:[#allocation3 + $0x8] sm:$0xff]
        %v5969 = vld [vmem:[#allocation3 + $0x10] sm:$0xff]
        %v5970 = vld [vmem:[#allocation3 + $0x18] sm:$0xff]
        %v5971 = vld [vmem:[#allocation3 + $0x20] sm:$0xff]
        %v5972 = vld [vmem:[#allocation3 + $0x28] sm:$0xff]
        %v5973 = vld [vmem:[#allocation3 + $0x30] sm:$0xff]
        %v5974 = vld [vmem:[#allocation3 + $0x38] sm:$0xff]
        %v5975 = vld [vmem:[#allocation3 + $0x40] sm:$0xff]
        %v5976 = vld [vmem:[#allocation3 + $0x48] sm:$0xff]
        %v5977 = vld [vmem:[#allocation3 + $0x50] sm:$0xff]
        %v5978 = vld [vmem:[#allocation3 + $0x58] sm:$0xff]
        %v5979 = vld [vmem:[#allocation3 + $0x60] sm:$0xff]
        %v5980 = vld [vmem:[#allocation3 + $0x68] sm:$0xff]
        %v5981 = vld [vmem:[#allocation3 + $0x70] sm:$0xff]
        %v5982 = vld [vmem:[#allocation3 + $0x78] sm:$0xff]
        %v5983 = vld [vmem:[#allocation3 + $0x80] sm:$0xff]
        %v5984 = vld [vmem:[#allocation3 + $0x88] sm:$0xff]
        %v5985 = vld [vmem:[#allocation3 + $0x90] sm:$0xff]
        %v5986 = vld [vmem:[#allocation3 + $0x98] sm:$0xff]
        %v5987 = vld [vmem:[#allocation3 + $0xa0] sm:$0xff]
        %v5988 = vld [vmem:[#allocation3 + $0xa8] sm:$0xff]
        %v5989 = vld [vmem:[#allocation3 + $0xb0] sm:$0xff]
        %v5990 = vld [vmem:[#allocation3 + $0xb8] sm:$0xff]
        %v5991 = vld [vmem:[#allocation3 + $0xc0] sm:$0xff]
        %v5992 = vld [vmem:[#allocation3 + $0xc8] sm:$0xff]
        %v5993 = vld [vmem:[#allocation3 + $0xd0] sm:$0xff]
        %v5994 = vld [vmem:[#allocation3 + $0xd8] sm:$0xff]
        %v5995 = vld [vmem:[#allocation3 + $0xe0] sm:$0xff]
        %v5996 = vld [vmem:[#allocation3 + $0xe8] sm:$0xff]
        %v5997 = vld [vmem:[#allocation3 + $0xf0] sm:$0xff]
        %v5998 = vld [vmem:[#allocation3 + $0xf8] sm:$0xff]
        %v5999 = vld [vmem:[#allocation3 + $0x100] sm:$0xff]
        %v6000 = vpack.c.bf16 %v5969, %v5968
        %v6001 = vpack.c.bf16 %v5971, %v5970
        %v6002 = vpack.c.bf16 %v5973, %v5972
        %v6003 = vpack.c.bf16 %v5975, %v5974
        %v6004 = vpack.c.bf16 %v5977, %v5976
        %v6005 = vpack.c.bf16 %v5979, %v5978
        %v6006 = vpack.c.bf16 %v5981, %v5980
        %v6007 = vpack.c.bf16 %v5983, %v5982
        %v6008 = vpack.c.bf16 %v5985, %v5984
        %v6009 = vpack.c.bf16 %v5987, %v5986
        %v6010 = vpack.c.bf16 %v5989, %v5988
        %v6011 = vpack.c.bf16 %v5991, %v5990
        %v6012 = vpack.c.bf16 %v5993, %v5992
        %v6013 = vpack.c.bf16 %v5995, %v5994
        %v6014 = vpack.c.bf16 %v5997, %v5996
        %v6015 = vpack.c.bf16 %v5999, %v5998
        %s6016 = scalar_lea.vmem [#allocation12], 32
        %v6017 = vld [vmem:[%s6016] sm:$0xf]
        %v6018 = vld [vmem:[%s6016 + $0x4] sm:$0xf]
        %v6019 = vld [vmem:[%s6016 + $0x8] sm:$0xf]
        %v6020 = vld [vmem:[%s6016 + $0xc] sm:$0xf]
        %v6021 = vld [vmem:[%s6016 + $0x10] sm:$0xf]
        %v6022 = vld [vmem:[%s6016 + $0x14] sm:$0xf]
        %v6023 = vld [vmem:[%s6016 + $0x18] sm:$0xf]
        %v6024 = vld [vmem:[%s6016 + $0x1c] sm:$0xf]
        %v6033 = vunpack.c.l.b16 %v6017
        %v6034 = vunpack.c.l.b16 %v6018
        %v6035 = vunpack.c.l.b16 %v6019
        %v6036 = vunpack.c.l.b16 %v6020
        %v6037 = vunpack.c.l.b16 %v6021
        %v6038 = vunpack.c.l.b16 %v6022
        %v6039 = vunpack.c.l.b16 %v6023
        %v6040 = vunpack.c.l.b16 %v6024
        %v6041 = vpack.c.b16 %v6034, %v6033
        %v6042 = vpack.c.b16 %v6036, %v6035
        %v6043 = vpack.c.b16 %v6038, %v6037
        %v6044 = vpack.c.b16 %v6040, %v6039
        %v6050 = vsel %vm4742, %v6000, 0
        %v6053 = vsel %vm4742, %v6001, 0
        %v6056 = vsel %vm4742, %v6002, 0
        %v6059 = vsel %vm4742, %v6003, 0
        %v6062 = vsel %vm4742, %v6004, 0
        %v6065 = vsel %vm4742, %v6005, 0
        %v6068 = vsel %vm4742, %v6006, 0
        %v6071 = vsel %vm4742, %v6007, 0
        %v6074 = vsel %vm4742, %v6008, 0
        %v6077 = vsel %vm4742, %v6009, 0
        %v6080 = vsel %vm4742, %v6010, 0
        %v6083 = vsel %vm4742, %v6011, 0
        %v6086 = vsel %vm4742, %v6012, 0
        %v6089 = vsel %vm4742, %v6013, 0
        %v6092 = vsel %vm4742, %v6014, 0
        %v6095 = vsel %vm4742, %v6015, 0
        %6097 = vmatprep.subr.bf16.mxu0 0
        %6098 = vmatpush1.bf16.msra.mxu0 %v6041
        %6099 = vmatprep.subr.bf16.mxu0 0
        %6100 = vmatpush1.bf16.msra.mxu0 %v6042
        %6101 = vmatprep.subr.bf16.mxu0 0
        %6102 = vmatpush1.bf16.msra.mxu0 %v6043
        %6103 = vmatprep.subr.bf16.mxu0 0
        %6104 = vmatpush1.bf16.msra.mxu0 %v6044
        %6105 = vmatprep.subr.bf16.mxu0 0
        %6106 = vmatpush1.bf16.msra.mxu0 0
        %6107 = vmatprep.subr.bf16.mxu0 0
        %6108 = vmatpush1.bf16.msra.mxu0 0
        %6109 = vmatprep.subr.bf16.mxu0 0
        %6110 = vmatpush1.bf16.msra.mxu0 0
        %6111 = vmatprep.subr.bf16.mxu0 0
        %6112 = vmatpush1.bf16.msra.mxu0 0
        %6113 = vmatprep.subr.bf16.mxu0 0
        %6114 = vmatpush1.bf16.msra.mxu0 0
        %6115 = vmatprep.subr.bf16.mxu0 0
        %6116 = vmatpush1.bf16.msra.mxu0 0
        %6117 = vmatprep.subr.bf16.mxu0 0
        %6118 = vmatpush1.bf16.msra.mxu0 0
        %6119 = vmatprep.subr.bf16.mxu0 0
        %6120 = vmatpush1.bf16.msra.mxu0 0
        %6121 = vmatprep.subr.bf16.mxu0 0
        %6122 = vmatpush1.bf16.msra.mxu0 0
        %6123 = vmatprep.subr.bf16.mxu0 0
        %6124 = vmatpush1.bf16.msra.mxu0 0
        %6125 = vmatprep.subr.bf16.mxu0 0
        %6126 = vmatpush1.bf16.msra.mxu0 0
        %6127 = vmatprep.subr.bf16.mxu0 0
        %6128 = vmatpush1.bf16.msra.mxu0 0
        %6129 = vmatprep.mubr.bf16.mxu0 0
        %6130 = vmatmul.mubr.bf16.gmra.mrb[0].mxu0 %v6050
        %v6131 = vpop.f32.mrb[0].mxu0
        %v6132 = vadd.f32 0.0, %v6131
        %v6133 = vpop.f32.mrb[0].mxu0
        %v6134 = vpop.f32.mrb[0].mxu0
        %v6135 = vadd.f32 0.0, %v6134
        %v6136 = vpop.f32.mrb[0].mxu0
        %6137 = vmatprep.mubr.bf16.mxu0 0
        %6138 = vmatmul.mubr.bf16.gmra.mrb[0].mxu0 %v6053
        %v6139 = vpop.f32.mrb[0].mxu0
        %v6140 = vadd.f32 0.0, %v6139
        %v6141 = vpop.f32.mrb[0].mxu0
        %v6142 = vpop.f32.mrb[0].mxu0
        %v6143 = vadd.f32 0.0, %v6142
        %v6144 = vpop.f32.mrb[0].mxu0
        %6145 = vmatprep.mubr.bf16.mxu0 0
        %6146 = vmatmul.mubr.bf16.gmra.mrb[0].mxu0 %v6056
        %v6147 = vpop.f32.mrb[0].mxu0
        %v6148 = vadd.f32 0.0, %v6147
        %v6149 = vpop.f32.mrb[0].mxu0
        %v6150 = vpop.f32.mrb[0].mxu0
        %v6151 = vadd.f32 0.0, %v6150
        %v6152 = vpop.f32.mrb[0].mxu0
        %6153 = vmatprep.mubr.bf16.mxu0 0
        %6154 = vmatmul.mubr.bf16.gmra.mrb[0].mxu0 %v6059
        %v6155 = vpop.f32.mrb[0].mxu0
        %v6156 = vadd.f32 0.0, %v6155
        %v6157 = vpop.f32.mrb[0].mxu0
        %v6158 = vpop.f32.mrb[0].mxu0
        %v6159 = vadd.f32 0.0, %v6158
        %v6160 = vpop.f32.mrb[0].mxu0
        %6161 = vmatprep.mubr.bf16.mxu0 0
        %6162 = vmatmul.mubr.bf16.gmra.mrb[0].mxu0 %v6062
        %v6163 = vpop.f32.mrb[0].mxu0
        %v6164 = vadd.f32 0.0, %v6163
        %v6165 = vpop.f32.mrb[0].mxu0
        %v6166 = vpop.f32.mrb[0].mxu0
        %v6167 = vadd.f32 0.0, %v6166
        %v6168 = vpop.f32.mrb[0].mxu0
        %6169 = vmatprep.mubr.bf16.mxu0 0
        %6170 = vmatmul.mubr.bf16.gmra.mrb[0].mxu0 %v6065
        %v6171 = vpop.f32.mrb[0].mxu0
        %v6172 = vadd.f32 0.0, %v6171
        %v6173 = vpop.f32.mrb[0].mxu0
        %v6174 = vpop.f32.mrb[0].mxu0
        %v6175 = vadd.f32 0.0, %v6174
        %v6176 = vpop.f32.mrb[0].mxu0
        %6177 = vmatprep.mubr.bf16.mxu0 0
        %6178 = vmatmul.mubr.bf16.gmra.mrb[0].mxu0 %v6068
        %v6179 = vpop.f32.mrb[0].mxu0
        %v6180 = vadd.f32 0.0, %v6179
        %v6181 = vpop.f32.mrb[0].mxu0
        %v6182 = vpop.f32.mrb[0].mxu0
        %v6183 = vadd.f32 0.0, %v6182
        %v6184 = vpop.f32.mrb[0].mxu0
        %6185 = vmatprep.mubr.bf16.mxu0 0
        %6186 = vmatmul.mubr.bf16.gmra.mrb[0].mxu0 %v6071
        %v6187 = vpop.f32.mrb[0].mxu0
        %v6188 = vadd.f32 0.0, %v6187
        %v6189 = vpop.f32.mrb[0].mxu0
        %v6190 = vpop.f32.mrb[0].mxu0
        %v6191 = vadd.f32 0.0, %v6190
        %v6192 = vpop.f32.mrb[0].mxu0
        %6193 = vmatprep.mubr.bf16.mxu0 0
        %6194 = vmatmul.mubr.bf16.gmra.mrb[0].mxu0 %v6074
        %v6195 = vpop.f32.mrb[0].mxu0
        %v6196 = vadd.f32 0.0, %v6195
        %v6197 = vpop.f32.mrb[0].mxu0
        %v6198 = vpop.f32.mrb[0].mxu0
        %v6199 = vadd.f32 0.0, %v6198
        %v6200 = vpop.f32.mrb[0].mxu0
        %6201 = vmatprep.mubr.bf16.mxu0 0
        %6202 = vmatmul.mubr.bf16.gmra.mrb[0].mxu0 %v6077
        %v6203 = vpop.f32.mrb[0].mxu0
        %v6204 = vadd.f32 0.0, %v6203
        %v6205 = vpop.f32.mrb[0].mxu0
        %v6206 = vpop.f32.mrb[0].mxu0
        %v6207 = vadd.f32 0.0, %v6206
        %v6208 = vpop.f32.mrb[0].mxu0
        %6209 = vmatprep.mubr.bf16.mxu0 0
        %6210 = vmatmul.mubr.bf16.gmra.mrb[0].mxu0 %v6080
        %v6211 = vpop.f32.mrb[0].mxu0
        %v6212 = vadd.f32 0.0, %v6211
        %v6213 = vpop.f32.mrb[0].mxu0
        %v6214 = vpop.f32.mrb[0].mxu0
        %v6215 = vadd.f32 0.0, %v6214
        %v6216 = vpop.f32.mrb[0].mxu0
        %6217 = vmatprep.mubr.bf16.mxu0 0
        %6218 = vmatmul.mubr.bf16.gmra.mrb[0].mxu0 %v6083
        %v6219 = vpop.f32.mrb[0].mxu0
        %v6220 = vadd.f32 0.0, %v6219
        %v6221 = vpop.f32.mrb[0].mxu0
        %v6222 = vpop.f32.mrb[0].mxu0
        %v6223 = vadd.f32 0.0, %v6222
        %v6224 = vpop.f32.mrb[0].mxu0
        %6225 = vmatprep.mubr.bf16.mxu0 0
        %6226 = vmatmul.mubr.bf16.gmra.mrb[0].mxu0 %v6086
        %v6227 = vpop.f32.mrb[0].mxu0
        %v6228 = vadd.f32 0.0, %v6227
        %v6229 = vpop.f32.mrb[0].mxu0
        %v6230 = vpop.f32.mrb[0].mxu0
        %v6231 = vadd.f32 0.0, %v6230
        %v6232 = vpop.f32.mrb[0].mxu0
        %6233 = vmatprep.mubr.bf16.mxu0 0
        %6234 = vmatmul.mubr.bf16.gmra.mrb[0].mxu0 %v6089
        %v6235 = vpop.f32.mrb[0].mxu0
        %v6236 = vadd.f32 0.0, %v6235
        %v6237 = vpop.f32.mrb[0].mxu0
        %v6238 = vpop.f32.mrb[0].mxu0
        %v6239 = vadd.f32 0.0, %v6238
        %v6240 = vpop.f32.mrb[0].mxu0
        %6241 = vmatprep.mubr.bf16.mxu0 0
        %6242 = vmatmul.mubr.bf16.gmra.mrb[0].mxu0 %v6092
        %v6243 = vpop.f32.mrb[0].mxu0
        %v6244 = vadd.f32 0.0, %v6243
        %v6245 = vpop.f32.mrb[0].mxu0
        %v6246 = vpop.f32.mrb[0].mxu0
        %v6247 = vadd.f32 0.0, %v6246
        %v6248 = vpop.f32.mrb[0].mxu0
        %6249 = vmatprep.mubr.bf16.mxu0 0
        %6250 = vmatmul.mubr.bf16.gmra.mrb[0].mxu0 %v6095
        %v6251 = vpop.f32.mrb[0].mxu0
        %v6252 = vadd.f32 0.0, %v6251
        %v6253 = vpop.f32.mrb[0].mxu0
        %v6254 = vpop.f32.mrb[0].mxu0
        %v6255 = vadd.f32 0.0, %v6254
        %v6256 = vpop.f32.mrb[0].mxu0
        %6257 = vdwg.mxu0
        %v6258 = vadd.f32 %v5842, %v6132
        %v6259 = vadd.f32 %v5845, %v6135
        %v6260 = vadd.f32 %v5850, %v6140
        %v6261 = vadd.f32 %v5853, %v6143
        %v6262 = vadd.f32 %v5858, %v6148
        %v6263 = vadd.f32 %v5861, %v6151
        %v6264 = vadd.f32 %v5866, %v6156
        %v6265 = vadd.f32 %v5869, %v6159
        %v6266 = vadd.f32 %v5874, %v6164
        %v6267 = vadd.f32 %v5877, %v6167
        %v6268 = vadd.f32 %v5882, %v6172
        %v6269 = vadd.f32 %v5885, %v6175
        %v6270 = vadd.f32 %v5890, %v6180
        %v6271 = vadd.f32 %v5893, %v6183
        %v6272 = vadd.f32 %v5898, %v6188
        %v6273 = vadd.f32 %v5901, %v6191
        %v6274 = vadd.f32 %v5906, %v6196
        %v6275 = vadd.f32 %v5909, %v6199
        %v6276 = vadd.f32 %v5914, %v6204
        %v6277 = vadd.f32 %v5917, %v6207
        %v6278 = vadd.f32 %v5922, %v6212
        %v6279 = vadd.f32 %v5925, %v6215
        %v6280 = vadd.f32 %v5930, %v6220
        %v6281 = vadd.f32 %v5933, %v6223
        %v6282 = vadd.f32 %v5938, %v6228
        %v6283 = vadd.f32 %v5941, %v6231
        %v6284 = vadd.f32 %v5946, %v6236
        %v6285 = vadd.f32 %v5949, %v6239
        %v6286 = vadd.f32 %v5954, %v6244
        %v6287 = vadd.f32 %v5957, %v6247
        %v6288 = vadd.f32 %v5962, %v6252
        %v6289 = vadd.f32 %v5965, %v6255
        %v6290 = vld [vmem:[#allocation3 + $0x9] sm:$0xff]
        %v6291 = vld [vmem:[#allocation3 + $0x11] sm:$0xff]
        %v6292 = vld [vmem:[#allocation3 + $0x19] sm:$0xff]
        %v6293 = vld [vmem:[#allocation3 + $0x21] sm:$0xff]
        %v6294 = vld [vmem:[#allocation3 + $0x29] sm:$0xff]
        %v6295 = vld [vmem:[#allocation3 + $0x31] sm:$0xff]
        %v6296 = vld [vmem:[#allocation3 + $0x39] sm:$0xff]
        %v6297 = vld [vmem:[#allocation3 + $0x41] sm:$0xff]
        %v6298 = vld [vmem:[#allocation3 + $0x49] sm:$0xff]
        %v6299 = vld [vmem:[#allocation3 + $0x51] sm:$0xff]
        %v6300 = vld [vmem:[#allocation3 + $0x59] sm:$0xff]
        %v6301 = vld [vmem:[#allocation3 + $0x61] sm:$0xff]
        %v6302 = vld [vmem:[#allocation3 + $0x69] sm:$0xff]
        %v6303 = vld [vmem:[#allocation3 + $0x71] sm:$0xff]
        %v6304 = vld [vmem:[#allocation3 + $0x79] sm:$0xff]
        %v6305 = vld [vmem:[#allocation3 + $0x81] sm:$0xff]
        %v6306 = vld [vmem:[#allocation3 + $0x89] sm:$0xff]
        %v6307 = vld [vmem:[#allocation3 + $0x91] sm:$0xff]
        %v6308 = vld [vmem:[#allocation3 + $0x99] sm:$0xff]
        %v6309 = vld [vmem:[#allocation3 + $0xa1] sm:$0xff]
        %v6310 = vld [vmem:[#allocation3 + $0xa9] sm:$0xff]
        %v6311 = vld [vmem:[#allocation3 + $0xb1] sm:$0xff]
        %v6312 = vld [vmem:[#allocation3 + $0xb9] sm:$0xff]
        %v6313 = vld [vmem:[#allocation3 + $0xc1] sm:$0xff]
        %v6314 = vld [vmem:[#allocation3 + $0xc9] sm:$0xff]
        %v6315 = vld [vmem:[#allocation3 + $0xd1] sm:$0xff]
        %v6316 = vld [vmem:[#allocation3 + $0xd9] sm:$0xff]
        %v6317 = vld [vmem:[#allocation3 + $0xe1] sm:$0xff]
        %v6318 = vld [vmem:[#allocation3 + $0xe9] sm:$0xff]
        %v6319 = vld [vmem:[#allocation3 + $0xf1] sm:$0xff]
        %v6320 = vld [vmem:[#allocation3 + $0xf9] sm:$0xff]
        %v6321 = vld [vmem:[#allocation3 + $0x101] sm:$0xff]
        %v6322 = vsel %vm2391, %v6290, 0.0
        %v6323 = vsel %vm2392, %v6291, 0.0
        %v6324 = vsel %vm2393, %v6292, 0.0
        %v6325 = vsel %vm2394, %v6293, 0.0
        %v6326 = vsel %vm2395, %v6294, 0.0
        %v6327 = vsel %vm2396, %v6295, 0.0
        %v6328 = vsel %vm2397, %v6296, 0.0
        %v6329 = vsel %vm2398, %v6297, 0.0
        %v6330 = vsel %vm2399, %v6298, 0.0
        %v6331 = vsel %vm2400, %v6299, 0.0
        %v6332 = vsel %vm2401, %v6300, 0.0
        %v6333 = vsel %vm2402, %v6301, 0.0
        %v6334 = vsel %vm2403, %v6302, 0.0
        %v6335 = vsel %vm2404, %v6303, 0.0
        %v6336 = vsel %vm2405, %v6304, 0.0
        %v6337 = vsel %vm2406, %v6305, 0.0
        %v6338 = vsel %vm2407, %v6306, 0.0
        %v6339 = vsel %vm2408, %v6307, 0.0
        %v6340 = vsel %vm2409, %v6308, 0.0
        %v6341 = vsel %vm2410, %v6309, 0.0
        %v6342 = vsel %vm2411, %v6310, 0.0
        %v6343 = vsel %vm2412, %v6311, 0.0
        %v6344 = vsel %vm2413, %v6312, 0.0
        %v6345 = vsel %vm2414, %v6313, 0.0
        %v6346 = vsel %vm2415, %v6314, 0.0
        %v6347 = vsel %vm2416, %v6315, 0.0
        %v6348 = vsel %vm2417, %v6316, 0.0
        %v6349 = vsel %vm2418, %v6317, 0.0
        %v6350 = vsel %vm2419, %v6318, 0.0
        %v6351 = vsel %vm2420, %v6319, 0.0
        %v6352 = vsel %vm2421, %v6320, 0.0
        %v6353 = vsel %vm2422, %v6321, 0.0
        %v6354 = vpack.c.bf16 %v6323, %v6322
        %v6355 = vpack.c.bf16 %v6325, %v6324
        %v6356 = vpack.c.bf16 %v6327, %v6326
        %v6357 = vpack.c.bf16 %v6329, %v6328
        %v6358 = vpack.c.bf16 %v6331, %v6330
        %v6359 = vpack.c.bf16 %v6333, %v6332
        %v6360 = vpack.c.bf16 %v6335, %v6334
        %v6361 = vpack.c.bf16 %v6337, %v6336
        %v6362 = vpack.c.bf16 %v6339, %v6338
        %v6363 = vpack.c.bf16 %v6341, %v6340
        %v6364 = vpack.c.bf16 %v6343, %v6342
        %v6365 = vpack.c.bf16 %v6345, %v6344
        %v6366 = vpack.c.bf16 %v6347, %v6346
        %v6367 = vpack.c.bf16 %v6349, %v6348
        %v6368 = vpack.c.bf16 %v6351, %v6350
        %v6369 = vpack.c.bf16 %v6353, %v6352
        %s6370 = scalar_lea.vmem [#allocation12], 64
        %v6371 = vld [vmem:[%s6370] sm:$0xf]
        %v6372 = vld [vmem:[%s6370 + $0x4] sm:$0xf]
        %v6373 = vld [vmem:[%s6370 + $0x8] sm:$0xf]
        %v6374 = vld [vmem:[%s6370 + $0xc] sm:$0xf]
        %v6375 = vld [vmem:[%s6370 + $0x10] sm:$0xf]
        %v6376 = vld [vmem:[%s6370 + $0x14] sm:$0xf]
        %v6377 = vld [vmem:[%s6370 + $0x18] sm:$0xf]
        %v6378 = vld [vmem:[%s6370 + $0x1c] sm:$0xf]
        %v6387 = vunpack.c.l.b16 %v6371
        %v6388 = vunpack.c.l.b16 %v6372
        %v6389 = vunpack.c.l.b16 %v6373
        %v6390 = vunpack.c.l.b16 %v6374
        %v6391 = vunpack.c.l.b16 %v6375
        %v6392 = vunpack.c.l.b16 %v6376
        %v6393 = vunpack.c.l.b16 %v6377
        %v6394 = vunpack.c.l.b16 %v6378
        %v6395 = vpack.c.b16 %v6388, %v6387
        %v6396 = vpack.c.b16 %v6390, %v6389
        %v6397 = vpack.c.b16 %v6392, %v6391
        %v6398 = vpack.c.b16 %v6394, %v6393
        %v6404 = vsel %vm4742, %v6354, 0
        %v6407 = vsel %vm4742, %v6355, 0
        %v6410 = vsel %vm4742, %v6356, 0
        %v6413 = vsel %vm4742, %v6357, 0
        %v6416 = vsel %vm4742, %v6358, 0
        %v6419 = vsel %vm4742, %v6359, 0
        %v6422 = vsel %vm4742, %v6360, 0
        %v6425 = vsel %vm4742, %v6361, 0
        %v6428 = vsel %vm4742, %v6362, 0
        %v6431 = vsel %vm4742, %v6363, 0
        %v6434 = vsel %vm4742, %v6364, 0
        %v6437 = vsel %vm4742, %v6365, 0
        %v6440 = vsel %vm4742, %v6366, 0
        %v6443 = vsel %vm4742, %v6367, 0
        %v6446 = vsel %vm4742, %v6368, 0
        %v6449 = vsel %vm4742, %v6369, 0
        %6451 = vmatprep.subr.bf16.mxu0 0
        %6452 = vmatpush1.bf16.msra.mxu0 %v6395
        %6453 = vmatprep.subr.bf16.mxu0 0
        %6454 = vmatpush1.bf16.msra.mxu0 %v6396
        %6455 = vmatprep.subr.bf16.mxu0 0
        %6456 = vmatpush1.bf16.msra.mxu0 %v6397
        %6457 = vmatprep.subr.bf16.mxu0 0
        %6458 = vmatpush1.bf16.msra.mxu0 %v6398
        %6459 = vmatprep.subr.bf16.mxu0 0
        %6460 = vmatpush1.bf16.msra.mxu0 0
        %6461 = vmatprep.subr.bf16.mxu0 0
        %6462 = vmatpush1.bf16.msra.mxu0 0
        %6463 = vmatprep.subr.bf16.mxu0 0
        %6464 = vmatpush1.bf16.msra.mxu0 0
        %6465 = vmatprep.subr.bf16.mxu0 0
        %6466 = vmatpush1.bf16.msra.mxu0 0
        %6467 = vmatprep.subr.bf16.mxu0 0
        %6468 = vmatpush1.bf16.msra.mxu0 0
        %6469 = vmatprep.subr.bf16.mxu0 0
        %6470 = vmatpush1.bf16.msra.mxu0 0
        %6471 = vmatprep.subr.bf16.mxu0 0
        %6472 = vmatpush1.bf16.msra.mxu0 0
        %6473 = vmatprep.subr.bf16.mxu0 0
        %6474 = vmatpush1.bf16.msra.mxu0 0
        %6475 = vmatprep.subr.bf16.mxu0 0
        %6476 = vmatpush1.bf16.msra.mxu0 0
        %6477 = vmatprep.subr.bf16.mxu0 0
        %6478 = vmatpush1.bf16.msra.mxu0 0
        %6479 = vmatprep.subr.bf16.mxu0 0
        %6480 = vmatpush1.bf16.msra.mxu0 0
        %6481 = vmatprep.subr.bf16.mxu0 0
        %6482 = vmatpush1.bf16.msra.mxu0 0
        %6483 = vmatprep.mubr.bf16.mxu0 0
        %6484 = vmatmul.mubr.bf16.gmra.mrb[0].mxu0 %v6404
        %v6485 = vpop.f32.mrb[0].mxu0
        %v6486 = vadd.f32 0.0, %v6485
        %v6487 = vpop.f32.mrb[0].mxu0
        %v6488 = vpop.f32.mrb[0].mxu0
        %v6489 = vadd.f32 0.0, %v6488
        %v6490 = vpop.f32.mrb[0].mxu0
        %6491 = vmatprep.mubr.bf16.mxu0 0
        %6492 = vmatmul.mubr.bf16.gmra.mrb[0].mxu0 %v6407
        %v6493 = vpop.f32.mrb[0].mxu0
        %v6494 = vadd.f32 0.0, %v6493
        %v6495 = vpop.f32.mrb[0].mxu0
        %v6496 = vpop.f32.mrb[0].mxu0
        %v6497 = vadd.f32 0.0, %v6496
        %v6498 = vpop.f32.mrb[0].mxu0
        %6499 = vmatprep.mubr.bf16.mxu0 0
        %6500 = vmatmul.mubr.bf16.gmra.mrb[0].mxu0 %v6410
        %v6501 = vpop.f32.mrb[0].mxu0
        %v6502 = vadd.f32 0.0, %v6501
        %v6503 = vpop.f32.mrb[0].mxu0
        %v6504 = vpop.f32.mrb[0].mxu0
        %v6505 = vadd.f32 0.0, %v6504
        %v6506 = vpop.f32.mrb[0].mxu0
        %6507 = vmatprep.mubr.bf16.mxu0 0
        %6508 = vmatmul.mubr.bf16.gmra.mrb[0].mxu0 %v6413
        %v6509 = vpop.f32.mrb[0].mxu0
        %v6510 = vadd.f32 0.0, %v6509
        %v6511 = vpop.f32.mrb[0].mxu0
        %v6512 = vpop.f32.mrb[0].mxu0
        %v6513 = vadd.f32 0.0, %v6512
        %v6514 = vpop.f32.mrb[0].mxu0
        %6515 = vmatprep.mubr.bf16.mxu0 0
        %6516 = vmatmul.mubr.bf16.gmra.mrb[0].mxu0 %v6416
        %v6517 = vpop.f32.mrb[0].mxu0
        %v6518 = vadd.f32 0.0, %v6517
        %v6519 = vpop.f32.mrb[0].mxu0
        %v6520 = vpop.f32.mrb[0].mxu0
        %v6521 = vadd.f32 0.0, %v6520
        %v6522 = vpop.f32.mrb[0].mxu0
        %6523 = vmatprep.mubr.bf16.mxu0 0
        %6524 = vmatmul.mubr.bf16.gmra.mrb[0].mxu0 %v6419
        %v6525 = vpop.f32.mrb[0].mxu0
        %v6526 = vadd.f32 0.0, %v6525
        %v6527 = vpop.f32.mrb[0].mxu0
        %v6528 = vpop.f32.mrb[0].mxu0
        %v6529 = vadd.f32 0.0, %v6528
        %v6530 = vpop.f32.mrb[0].mxu0
        %6531 = vmatprep.mubr.bf16.mxu0 0
        %6532 = vmatmul.mubr.bf16.gmra.mrb[0].mxu0 %v6422
        %v6533 = vpop.f32.mrb[0].mxu0
        %v6534 = vadd.f32 0.0, %v6533
        %v6535 = vpop.f32.mrb[0].mxu0
        %v6536 = vpop.f32.mrb[0].mxu0
        %v6537 = vadd.f32 0.0, %v6536
        %v6538 = vpop.f32.mrb[0].mxu0
        %6539 = vmatprep.mubr.bf16.mxu0 0
        %6540 = vmatmul.mubr.bf16.gmra.mrb[0].mxu0 %v6425
        %v6541 = vpop.f32.mrb[0].mxu0
        %v6542 = vadd.f32 0.0, %v6541
        %v6543 = vpop.f32.mrb[0].mxu0
        %v6544 = vpop.f32.mrb[0].mxu0
        %v6545 = vadd.f32 0.0, %v6544
        %v6546 = vpop.f32.mrb[0].mxu0
        %6547 = vmatprep.mubr.bf16.mxu0 0
        %6548 = vmatmul.mubr.bf16.gmra.mrb[0].mxu0 %v6428
        %v6549 = vpop.f32.mrb[0].mxu0
        %v6550 = vadd.f32 0.0, %v6549
        %v6551 = vpop.f32.mrb[0].mxu0
        %v6552 = vpop.f32.mrb[0].mxu0
        %v6553 = vadd.f32 0.0, %v6552
        %v6554 = vpop.f32.mrb[0].mxu0
        %6555 = vmatprep.mubr.bf16.mxu0 0
        %6556 = vmatmul.mubr.bf16.gmra.mrb[0].mxu0 %v6431
        %v6557 = vpop.f32.mrb[0].mxu0
        %v6558 = vadd.f32 0.0, %v6557
        %v6559 = vpop.f32.mrb[0].mxu0
        %v6560 = vpop.f32.mrb[0].mxu0
        %v6561 = vadd.f32 0.0, %v6560
        %v6562 = vpop.f32.mrb[0].mxu0
        %6563 = vmatprep.mubr.bf16.mxu0 0
        %6564 = vmatmul.mubr.bf16.gmra.mrb[0].mxu0 %v6434
        %v6565 = vpop.f32.mrb[0].mxu0
        %v6566 = vadd.f32 0.0, %v6565
        %v6567 = vpop.f32.mrb[0].mxu0
        %v6568 = vpop.f32.mrb[0].mxu0
        %v6569 = vadd.f32 0.0, %v6568
        %v6570 = vpop.f32.mrb[0].mxu0
        %6571 = vmatprep.mubr.bf16.mxu0 0
        %6572 = vmatmul.mubr.bf16.gmra.mrb[0].mxu0 %v6437
        %v6573 = vpop.f32.mrb[0].mxu0
        %v6574 = vadd.f32 0.0, %v6573
        %v6575 = vpop.f32.mrb[0].mxu0
        %v6576 = vpop.f32.mrb[0].mxu0
        %v6577 = vadd.f32 0.0, %v6576
        %v6578 = vpop.f32.mrb[0].mxu0
        %6579 = vmatprep.mubr.bf16.mxu0 0
        %6580 = vmatmul.mubr.bf16.gmra.mrb[0].mxu0 %v6440
        %v6581 = vpop.f32.mrb[0].mxu0
        %v6582 = vadd.f32 0.0, %v6581
        %v6583 = vpop.f32.mrb[0].mxu0
        %v6584 = vpop.f32.mrb[0].mxu0
        %v6585 = vadd.f32 0.0, %v6584
        %v6586 = vpop.f32.mrb[0].mxu0
        %6587 = vmatprep.mubr.bf16.mxu0 0
        %6588 = vmatmul.mubr.bf16.gmra.mrb[0].mxu0 %v6443
        %v6589 = vpop.f32.mrb[0].mxu0
        %v6590 = vadd.f32 0.0, %v6589
        %v6591 = vpop.f32.mrb[0].mxu0
        %v6592 = vpop.f32.mrb[0].mxu0
        %v6593 = vadd.f32 0.0, %v6592
        %v6594 = vpop.f32.mrb[0].mxu0
        %6595 = vmatprep.mubr.bf16.mxu0 0
        %6596 = vmatmul.mubr.bf16.gmra.mrb[0].mxu0 %v6446
        %v6597 = vpop.f32.mrb[0].mxu0
        %v6598 = vadd.f32 0.0, %v6597
        %v6599 = vpop.f32.mrb[0].mxu0
        %v6600 = vpop.f32.mrb[0].mxu0
        %v6601 = vadd.f32 0.0, %v6600
        %v6602 = vpop.f32.mrb[0].mxu0
        %6603 = vmatprep.mubr.bf16.mxu0 0
        %6604 = vmatmul.mubr.bf16.gmra.mrb[0].mxu0 %v6449
        %v6605 = vpop.f32.mrb[0].mxu0
        %v6606 = vadd.f32 0.0, %v6605
        %v6607 = vpop.f32.mrb[0].mxu0
        %v6608 = vpop.f32.mrb[0].mxu0
        %v6609 = vadd.f32 0.0, %v6608
        %v6610 = vpop.f32.mrb[0].mxu0
        %6611 = vdwg.mxu0
        %v6612 = vadd.f32 %v6258, %v6486
        %v6613 = vadd.f32 %v6259, %v6489
        %v6614 = vadd.f32 %v6260, %v6494
        %v6615 = vadd.f32 %v6261, %v6497
        %v6616 = vadd.f32 %v6262, %v6502
        %v6617 = vadd.f32 %v6263, %v6505
        %v6618 = vadd.f32 %v6264, %v6510
        %v6619 = vadd.f32 %v6265, %v6513
        %v6620 = vadd.f32 %v6266, %v6518
        %v6621 = vadd.f32 %v6267, %v6521
        %v6622 = vadd.f32 %v6268, %v6526
        %v6623 = vadd.f32 %v6269, %v6529
        %v6624 = vadd.f32 %v6270, %v6534
        %v6625 = vadd.f32 %v6271, %v6537
        %v6626 = vadd.f32 %v6272, %v6542
        %v6627 = vadd.f32 %v6273, %v6545
        %v6628 = vadd.f32 %v6274, %v6550
        %v6629 = vadd.f32 %v6275, %v6553
        %v6630 = vadd.f32 %v6276, %v6558
        %v6631 = vadd.f32 %v6277, %v6561
        %v6632 = vadd.f32 %v6278, %v6566
        %v6633 = vadd.f32 %v6279, %v6569
        %v6634 = vadd.f32 %v6280, %v6574
        %v6635 = vadd.f32 %v6281, %v6577
        %v6636 = vadd.f32 %v6282, %v6582
        %v6637 = vadd.f32 %v6283, %v6585
        %v6638 = vadd.f32 %v6284, %v6590
        %v6639 = vadd.f32 %v6285, %v6593
        %v6640 = vadd.f32 %v6286, %v6598
        %v6641 = vadd.f32 %v6287, %v6601
        %v6642 = vadd.f32 %v6288, %v6606
        %v6643 = vadd.f32 %v6289, %v6609
        %v6644 = vld [vmem:[#allocation3 + $0x17] sm:$0xff]
        %v6645 = vld [vmem:[#allocation3 + $0x1f] sm:$0xff]
        %v6646 = vld [vmem:[#allocation3 + $0x27] sm:$0xff]
        %v6647 = vld [vmem:[#allocation3 + $0x2f] sm:$0xff]
        %v6648 = vld [vmem:[#allocation3 + $0x37] sm:$0xff]
        %v6649 = vld [vmem:[#allocation3 + $0x3f] sm:$0xff]
        %v6650 = vld [vmem:[#allocation3 + $0x47] sm:$0xff]
        %v6651 = vld [vmem:[#allocation3 + $0x4f] sm:$0xff]
        %v6652 = vld [vmem:[#allocation3 + $0x57] sm:$0xff]
        %v6653 = vld [vmem:[#allocation3 + $0x5f] sm:$0xff]
        %v6654 = vld [vmem:[#allocation3 + $0x67] sm:$0xff]
        %v6655 = vld [vmem:[#allocation3 + $0x6f] sm:$0xff]
        %v6656 = vld [vmem:[#allocation3 + $0x77] sm:$0xff]
        %v6657 = vld [vmem:[#allocation3 + $0x7f] sm:$0xff]
        %v6658 = vld [vmem:[#allocation3 + $0x87] sm:$0xff]
        %v6659 = vld [vmem:[#allocation3 + $0x8f] sm:$0xff]
        %v6660 = vld [vmem:[#allocation3 + $0x97] sm:$0xff]
        %v6661 = vld [vmem:[#allocation3 + $0x9f] sm:$0xff]
        %v6662 = vld [vmem:[#allocation3 + $0xa7] sm:$0xff]
        %v6663 = vld [vmem:[#allocation3 + $0xaf] sm:$0xff]
        %v6664 = vld [vmem:[#allocation3 + $0xb7] sm:$0xff]
        %v6665 = vld [vmem:[#allocation3 + $0xbf] sm:$0xff]
        %v6666 = vld [vmem:[#allocation3 + $0xc7] sm:$0xff]
        %v6667 = vld [vmem:[#allocation3 + $0xcf] sm:$0xff]
        %v6668 = vld [vmem:[#allocation3 + $0xd7] sm:$0xff]
        %v6669 = vld [vmem:[#allocation3 + $0xdf] sm:$0xff]
        %v6670 = vld [vmem:[#allocation3 + $0xe7] sm:$0xff]
        %v6671 = vld [vmem:[#allocation3 + $0xef] sm:$0xff]
        %v6672 = vld [vmem:[#allocation3 + $0xf7] sm:$0xff]
        %v6673 = vld [vmem:[#allocation3 + $0xff] sm:$0xff]
        %v6674 = vld [vmem:[#allocation3 + $0x107] sm:$0xff]
        %v6675 = vld [vmem:[#allocation3 + $0x10f] sm:$0xff]
        %v6676 = vsel %vm1748, %v6644, 0.0
        %v6677 = vsel %vm1749, %v6645, 0.0
        %v6678 = vsel %vm1750, %v6646, 0.0
        %v6679 = vsel %vm1751, %v6647, 0.0
        %v6680 = vsel %vm1752, %v6648, 0.0
        %v6681 = vsel %vm1753, %v6649, 0.0
        %v6682 = vsel %vm1754, %v6650, 0.0
        %v6683 = vsel %vm1755, %v6651, 0.0
        %v6684 = vsel %vm1756, %v6652, 0.0
        %v6685 = vsel %vm1757, %v6653, 0.0
        %v6686 = vsel %vm1758, %v6654, 0.0
        %v6687 = vsel %vm1759, %v6655, 0.0
        %v6688 = vsel %vm1760, %v6656, 0.0
        %v6689 = vsel %vm1761, %v6657, 0.0
        %v6690 = vsel %vm1762, %v6658, 0.0
        %v6691 = vsel %vm1763, %v6659, 0.0
        %v6692 = vsel %vm1764, %v6660, 0.0
        %v6693 = vsel %vm1765, %v6661, 0.0
        %v6694 = vsel %vm1766, %v6662, 0.0
        %v6695 = vsel %vm1767, %v6663, 0.0
        %v6696 = vsel %vm1768, %v6664, 0.0
        %v6697 = vsel %vm1769, %v6665, 0.0
        %v6698 = vsel %vm1770, %v6666, 0.0
        %v6699 = vsel %vm1771, %v6667, 0.0
        %v6700 = vsel %vm1772, %v6668, 0.0
        %v6701 = vsel %vm1773, %v6669, 0.0
        %v6702 = vsel %vm1774, %v6670, 0.0
        %v6703 = vsel %vm1775, %v6671, 0.0
        %v6704 = vsel %vm1776, %v6672, 0.0
        %v6705 = vsel %vm1777, %v6673, 0.0
        %v6706 = vsel %vm1778, %v6674, 0.0
        %v6707 = vsel %vm1779, %v6675, 0.0
        %v6708 = vpack.c.bf16 %v6677, %v6676
        %v6709 = vpack.c.bf16 %v6679, %v6678
        %v6710 = vpack.c.bf16 %v6681, %v6680
        %v6711 = vpack.c.bf16 %v6683, %v6682
        %v6712 = vpack.c.bf16 %v6685, %v6684
        %v6713 = vpack.c.bf16 %v6687, %v6686
        %v6714 = vpack.c.bf16 %v6689, %v6688
        %v6715 = vpack.c.bf16 %v6691, %v6690
        %v6716 = vpack.c.bf16 %v6693, %v6692
        %v6717 = vpack.c.bf16 %v6695, %v6694
        %v6718 = vpack.c.bf16 %v6697, %v6696
        %v6719 = vpack.c.bf16 %v6699, %v6698
        %v6720 = vpack.c.bf16 %v6701, %v6700
        %v6721 = vpack.c.bf16 %v6703, %v6702
        %v6722 = vpack.c.bf16 %v6705, %v6704
        %v6723 = vpack.c.bf16 %v6707, %v6706
        %s6724 = scalar_lea.vmem [#allocation12], 96
        %v6725 = vld [vmem:[%s6724] sm:$0xf]
        %v6726 = vld [vmem:[%s6724 + $0x4] sm:$0xf]
        %v6727 = vld [vmem:[%s6724 + $0x8] sm:$0xf]
        %v6728 = vld [vmem:[%s6724 + $0xc] sm:$0xf]
        %v6729 = vld [vmem:[%s6724 + $0x10] sm:$0xf]
        %v6730 = vld [vmem:[%s6724 + $0x14] sm:$0xf]
        %v6731 = vld [vmem:[%s6724 + $0x18] sm:$0xf]
        %v6732 = vld [vmem:[%s6724 + $0x1c] sm:$0xf]
        %v6741 = vunpack.c.l.b16 %v6725
        %v6742 = vunpack.c.l.b16 %v6726
        %v6743 = vunpack.c.l.b16 %v6727
        %v6744 = vunpack.c.l.b16 %v6728
        %v6745 = vunpack.c.l.b16 %v6729
        %v6746 = vunpack.c.l.b16 %v6730
        %v6747 = vunpack.c.l.b16 %v6731
        %v6748 = vunpack.c.l.b16 %v6732
        %v6749 = vpack.c.b16 %v6742, %v6741
        %v6750 = vpack.c.b16 %v6744, %v6743
        %v6751 = vpack.c.b16 %v6746, %v6745
        %v6752 = vpack.c.b16 %v6748, %v6747
        %v6758 = vsel %vm4742, %v6708, 0
        %v6761 = vsel %vm4742, %v6709, 0
        %v6764 = vsel %vm4742, %v6710, 0
        %v6767 = vsel %vm4742, %v6711, 0
        %v6770 = vsel %vm4742, %v6712, 0
        %v6773 = vsel %vm4742, %v6713, 0
        %v6776 = vsel %vm4742, %v6714, 0
        %v6779 = vsel %vm4742, %v6715, 0
        %v6782 = vsel %vm4742, %v6716, 0
        %v6785 = vsel %vm4742, %v6717, 0
        %v6788 = vsel %vm4742, %v6718, 0
        %v6791 = vsel %vm4742, %v6719, 0
        %v6794 = vsel %vm4742, %v6720, 0
        %v6797 = vsel %vm4742, %v6721, 0
        %v6800 = vsel %vm4742, %v6722, 0
        %v6803 = vsel %vm4742, %v6723, 0
        %6805 = vmatprep.subr.bf16.mxu0 0
        %6806 = vmatpush1.bf16.msra.mxu0 %v6749
        %6807 = vmatprep.subr.bf16.mxu0 0
        %6808 = vmatpush1.bf16.msra.mxu0 %v6750
        %6809 = vmatprep.subr.bf16.mxu0 0
        %6810 = vmatpush1.bf16.msra.mxu0 %v6751
        %6811 = vmatprep.subr.bf16.mxu0 0
        %6812 = vmatpush1.bf16.msra.mxu0 %v6752
        %6813 = vmatprep.subr.bf16.mxu0 0
        %6814 = vmatpush1.bf16.msra.mxu0 0
        %6815 = vmatprep.subr.bf16.mxu0 0
        %6816 = vmatpush1.bf16.msra.mxu0 0
        %6817 = vmatprep.subr.bf16.mxu0 0
        %6818 = vmatpush1.bf16.msra.mxu0 0
        %6819 = vmatprep.subr.bf16.mxu0 0
        %6820 = vmatpush1.bf16.msra.mxu0 0
        %6821 = vmatprep.subr.bf16.mxu0 0
        %6822 = vmatpush1.bf16.msra.mxu0 0
        %6823 = vmatprep.subr.bf16.mxu0 0
        %6824 = vmatpush1.bf16.msra.mxu0 0
        %6825 = vmatprep.subr.bf16.mxu0 0
        %6826 = vmatpush1.bf16.msra.mxu0 0
        %6827 = vmatprep.subr.bf16.mxu0 0
        %6828 = vmatpush1.bf16.msra.mxu0 0
        %6829 = vmatprep.subr.bf16.mxu0 0
        %6830 = vmatpush1.bf16.msra.mxu0 0
        %6831 = vmatprep.subr.bf16.mxu0 0
        %6832 = vmatpush1.bf16.msra.mxu0 0
        %6833 = vmatprep.subr.bf16.mxu0 0
        %6834 = vmatpush1.bf16.msra.mxu0 0
        %6835 = vmatprep.subr.bf16.mxu0 0
        %6836 = vmatpush1.bf16.msra.mxu0 0
        %6837 = vmatprep.mubr.bf16.mxu0 0
        %6838 = vmatmul.mubr.bf16.gmra.mrb[0].mxu0 %v6758
        %v6839 = vpop.f32.mrb[0].mxu0
        %v6840 = vadd.f32 0.0, %v6839
        %v6841 = vpop.f32.mrb[0].mxu0
        %v6842 = vpop.f32.mrb[0].mxu0
        %v6843 = vadd.f32 0.0, %v6842
        %v6844 = vpop.f32.mrb[0].mxu0
        %6845 = vmatprep.mubr.bf16.mxu0 0
        %6846 = vmatmul.mubr.bf16.gmra.mrb[0].mxu0 %v6761
        %v6847 = vpop.f32.mrb[0].mxu0
        %v6848 = vadd.f32 0.0, %v6847
        %v6849 = vpop.f32.mrb[0].mxu0
        %v6850 = vpop.f32.mrb[0].mxu0
        %v6851 = vadd.f32 0.0, %v6850
        %v6852 = vpop.f32.mrb[0].mxu0
        %6853 = vmatprep.mubr.bf16.mxu0 0
        %6854 = vmatmul.mubr.bf16.gmra.mrb[0].mxu0 %v6764
        %v6855 = vpop.f32.mrb[0].mxu0
        %v6856 = vadd.f32 0.0, %v6855
        %v6857 = vpop.f32.mrb[0].mxu0
        %v6858 = vpop.f32.mrb[0].mxu0
        %v6859 = vadd.f32 0.0, %v6858
        %v6860 = vpop.f32.mrb[0].mxu0
        %6861 = vmatprep.mubr.bf16.mxu0 0
        %6862 = vmatmul.mubr.bf16.gmra.mrb[0].mxu0 %v6767
        %v6863 = vpop.f32.mrb[0].mxu0
        %v6864 = vadd.f32 0.0, %v6863
        %v6865 = vpop.f32.mrb[0].mxu0
        %v6866 = vpop.f32.mrb[0].mxu0
        %v6867 = vadd.f32 0.0, %v6866
        %v6868 = vpop.f32.mrb[0].mxu0
        %6869 = vmatprep.mubr.bf16.mxu0 0
        %6870 = vmatmul.mubr.bf16.gmra.mrb[0].mxu0 %v6770
        %v6871 = vpop.f32.mrb[0].mxu0
        %v6872 = vadd.f32 0.0, %v6871
        %v6873 = vpop.f32.mrb[0].mxu0
        %v6874 = vpop.f32.mrb[0].mxu0
        %v6875 = vadd.f32 0.0, %v6874
        %v6876 = vpop.f32.mrb[0].mxu0
        %6877 = vmatprep.mubr.bf16.mxu0 0
        %6878 = vmatmul.mubr.bf16.gmra.mrb[0].mxu0 %v6773
        %v6879 = vpop.f32.mrb[0].mxu0
        %v6880 = vadd.f32 0.0, %v6879
        %v6881 = vpop.f32.mrb[0].mxu0
        %v6882 = vpop.f32.mrb[0].mxu0
        %v6883 = vadd.f32 0.0, %v6882
        %v6884 = vpop.f32.mrb[0].mxu0
        %6885 = vmatprep.mubr.bf16.mxu0 0
        %6886 = vmatmul.mubr.bf16.gmra.mrb[0].mxu0 %v6776
        %v6887 = vpop.f32.mrb[0].mxu0
        %v6888 = vadd.f32 0.0, %v6887
        %v6889 = vpop.f32.mrb[0].mxu0
        %v6890 = vpop.f32.mrb[0].mxu0
        %v6891 = vadd.f32 0.0, %v6890
        %v6892 = vpop.f32.mrb[0].mxu0
        %6893 = vmatprep.mubr.bf16.mxu0 0
        %6894 = vmatmul.mubr.bf16.gmra.mrb[0].mxu0 %v6779
        %v6895 = vpop.f32.mrb[0].mxu0
        %v6896 = vadd.f32 0.0, %v6895
        %v6897 = vpop.f32.mrb[0].mxu0
        %v6898 = vpop.f32.mrb[0].mxu0
        %v6899 = vadd.f32 0.0, %v6898
        %v6900 = vpop.f32.mrb[0].mxu0
        %6901 = vmatprep.mubr.bf16.mxu0 0
        %6902 = vmatmul.mubr.bf16.gmra.mrb[0].mxu0 %v6782
        %v6903 = vpop.f32.mrb[0].mxu0
        %v6904 = vadd.f32 0.0, %v6903
        %v6905 = vpop.f32.mrb[0].mxu0
        %v6906 = vpop.f32.mrb[0].mxu0
        %v6907 = vadd.f32 0.0, %v6906
        %v6908 = vpop.f32.mrb[0].mxu0
        %6909 = vmatprep.mubr.bf16.mxu0 0
        %6910 = vmatmul.mubr.bf16.gmra.mrb[0].mxu0 %v6785
        %v6911 = vpop.f32.mrb[0].mxu0
        %v6912 = vadd.f32 0.0, %v6911
        %v6913 = vpop.f32.mrb[0].mxu0
        %v6914 = vpop.f32.mrb[0].mxu0
        %v6915 = vadd.f32 0.0, %v6914
        %v6916 = vpop.f32.mrb[0].mxu0
        %6917 = vmatprep.mubr.bf16.mxu0 0
        %6918 = vmatmul.mubr.bf16.gmra.mrb[0].mxu0 %v6788
        %v6919 = vpop.f32.mrb[0].mxu0
        %v6920 = vadd.f32 0.0, %v6919
        %v6921 = vpop.f32.mrb[0].mxu0
        %v6922 = vpop.f32.mrb[0].mxu0
        %v6923 = vadd.f32 0.0, %v6922
        %v6924 = vpop.f32.mrb[0].mxu0
        %6925 = vmatprep.mubr.bf16.mxu0 0
        %6926 = vmatmul.mubr.bf16.gmra.mrb[0].mxu0 %v6791
        %v6927 = vpop.f32.mrb[0].mxu0
        %v6928 = vadd.f32 0.0, %v6927
        %v6929 = vpop.f32.mrb[0].mxu0
        %v6930 = vpop.f32.mrb[0].mxu0
        %v6931 = vadd.f32 0.0, %v6930
        %v6932 = vpop.f32.mrb[0].mxu0
        %6933 = vmatprep.mubr.bf16.mxu0 0
        %6934 = vmatmul.mubr.bf16.gmra.mrb[0].mxu0 %v6794
        %v6935 = vpop.f32.mrb[0].mxu0
        %v6936 = vadd.f32 0.0, %v6935
        %v6937 = vpop.f32.mrb[0].mxu0
        %v6938 = vpop.f32.mrb[0].mxu0
        %v6939 = vadd.f32 0.0, %v6938
        %v6940 = vpop.f32.mrb[0].mxu0
        %6941 = vmatprep.mubr.bf16.mxu0 0
        %6942 = vmatmul.mubr.bf16.gmra.mrb[0].mxu0 %v6797
        %v6943 = vpop.f32.mrb[0].mxu0
        %v6944 = vadd.f32 0.0, %v6943
        %v6945 = vpop.f32.mrb[0].mxu0
        %v6946 = vpop.f32.mrb[0].mxu0
        %v6947 = vadd.f32 0.0, %v6946
        %v6948 = vpop.f32.mrb[0].mxu0
        %6949 = vmatprep.mubr.bf16.mxu0 0
        %6950 = vmatmul.mubr.bf16.gmra.mrb[0].mxu0 %v6800
        %v6951 = vpop.f32.mrb[0].mxu0
        %v6952 = vadd.f32 0.0, %v6951
        %v6953 = vpop.f32.mrb[0].mxu0
        %v6954 = vpop.f32.mrb[0].mxu0
        %v6955 = vadd.f32 0.0, %v6954
        %v6956 = vpop.f32.mrb[0].mxu0
        %6957 = vmatprep.mubr.bf16.mxu0 0
        %6958 = vmatmul.mubr.bf16.gmra.mrb[0].mxu0 %v6803
        %v6959 = vpop.f32.mrb[0].mxu0
        %v6960 = vadd.f32 0.0, %v6959
        %v6961 = vpop.f32.mrb[0].mxu0
        %v6962 = vpop.f32.mrb[0].mxu0
        %v6963 = vadd.f32 0.0, %v6962
        %v6964 = vpop.f32.mrb[0].mxu0
        %6965 = vdwg.mxu0
        %v6966 = vadd.f32 %v6612, %v6840
        %v6967 = vadd.f32 %v6613, %v6843
        %v6968 = vadd.f32 %v6614, %v6848
        %v6969 = vadd.f32 %v6615, %v6851
        %v6970 = vadd.f32 %v6616, %v6856
        %v6971 = vadd.f32 %v6617, %v6859
        %v6972 = vadd.f32 %v6618, %v6864
        %v6973 = vadd.f32 %v6619, %v6867
        %v6974 = vadd.f32 %v6620, %v6872
        %v6975 = vadd.f32 %v6621, %v6875
        %v6976 = vadd.f32 %v6622, %v6880
        %v6977 = vadd.f32 %v6623, %v6883
        %v6978 = vadd.f32 %v6624, %v6888
        %v6979 = vadd.f32 %v6625, %v6891
        %v6980 = vadd.f32 %v6626, %v6896
        %v6981 = vadd.f32 %v6627, %v6899
        %v6982 = vadd.f32 %v6628, %v6904
        %v6983 = vadd.f32 %v6629, %v6907
        %v6984 = vadd.f32 %v6630, %v6912
        %v6985 = vadd.f32 %v6631, %v6915
        %v6986 = vadd.f32 %v6632, %v6920
        %v6987 = vadd.f32 %v6633, %v6923
        %v6988 = vadd.f32 %v6634, %v6928
        %v6989 = vadd.f32 %v6635, %v6931
        %v6990 = vadd.f32 %v6636, %v6936
        %v6991 = vadd.f32 %v6637, %v6939
        %v6992 = vadd.f32 %v6638, %v6944
        %v6993 = vadd.f32 %v6639, %v6947
        %v6994 = vadd.f32 %v6640, %v6952
        %v6995 = vadd.f32 %v6641, %v6955
        %v6996 = vadd.f32 %v6642, %v6960
        %v6997 = vadd.f32 %v6643, %v6963
        %v6998 = vld [vmem:[#allocation3 + $0x18] sm:$0xff]
        %v6999 = vld [vmem:[#allocation3 + $0x20] sm:$0xff]
        %v7000 = vld [vmem:[#allocation3 + $0x28] sm:$0xff]
        %v7001 = vld [vmem:[#allocation3 + $0x30] sm:$0xff]
        %v7002 = vld [vmem:[#allocation3 + $0x38] sm:$0xff]
        %v7003 = vld [vmem:[#allocation3 + $0x40] sm:$0xff]
        %v7004 = vld [vmem:[#allocation3 + $0x48] sm:$0xff]
        %v7005 = vld [vmem:[#allocation3 + $0x50] sm:$0xff]
        %v7006 = vld [vmem:[#allocation3 + $0x58] sm:$0xff]
        %v7007 = vld [vmem:[#allocation3 + $0x60] sm:$0xff]
        %v7008 = vld [vmem:[#allocation3 + $0x68] sm:$0xff]
        %v7009 = vld [vmem:[#allocation3 + $0x70] sm:$0xff]
        %v7010 = vld [vmem:[#allocation3 + $0x78] sm:$0xff]
        %v7011 = vld [vmem:[#allocation3 + $0x80] sm:$0xff]
        %v7012 = vld [vmem:[#allocation3 + $0x88] sm:$0xff]
        %v7013 = vld [vmem:[#allocation3 + $0x90] sm:$0xff]
        %v7014 = vld [vmem:[#allocation3 + $0x98] sm:$0xff]
        %v7015 = vld [vmem:[#allocation3 + $0xa0] sm:$0xff]
        %v7016 = vld [vmem:[#allocation3 + $0xa8] sm:$0xff]
        %v7017 = vld [vmem:[#allocation3 + $0xb0] sm:$0xff]
        %v7018 = vld [vmem:[#allocation3 + $0xb8] sm:$0xff]
        %v7019 = vld [vmem:[#allocation3 + $0xc0] sm:$0xff]
        %v7020 = vld [vmem:[#allocation3 + $0xc8] sm:$0xff]
        %v7021 = vld [vmem:[#allocation3 + $0xd0] sm:$0xff]
        %v7022 = vld [vmem:[#allocation3 + $0xd8] sm:$0xff]
        %v7023 = vld [vmem:[#allocation3 + $0xe0] sm:$0xff]
        %v7024 = vld [vmem:[#allocation3 + $0xe8] sm:$0xff]
        %v7025 = vld [vmem:[#allocation3 + $0xf0] sm:$0xff]
        %v7026 = vld [vmem:[#allocation3 + $0xf8] sm:$0xff]
        %v7027 = vld [vmem:[#allocation3 + $0x100] sm:$0xff]
        %v7028 = vld [vmem:[#allocation3 + $0x108] sm:$0xff]
        %v7029 = vld [vmem:[#allocation3 + $0x110] sm:$0xff]
        %v7030 = vpack.c.bf16 %v6999, %v6998
        %v7031 = vpack.c.bf16 %v7001, %v7000
        %v7032 = vpack.c.bf16 %v7003, %v7002
        %v7033 = vpack.c.bf16 %v7005, %v7004
        %v7034 = vpack.c.bf16 %v7007, %v7006
        %v7035 = vpack.c.bf16 %v7009, %v7008
        %v7036 = vpack.c.bf16 %v7011, %v7010
        %v7037 = vpack.c.bf16 %v7013, %v7012
        %v7038 = vpack.c.bf16 %v7015, %v7014
        %v7039 = vpack.c.bf16 %v7017, %v7016
        %v7040 = vpack.c.bf16 %v7019, %v7018
        %v7041 = vpack.c.bf16 %v7021, %v7020
        %v7042 = vpack.c.bf16 %v7023, %v7022
        %v7043 = vpack.c.bf16 %v7025, %v7024
        %v7044 = vpack.c.bf16 %v7027, %v7026
        %v7045 = vpack.c.bf16 %v7029, %v7028
        %s7046 = scalar_lea.vmem [#allocation12], 128
        %v7047 = vld [vmem:[%s7046] sm:$0xf]
        %v7048 = vld [vmem:[%s7046 + $0x4] sm:$0xf]
        %v7049 = vld [vmem:[%s7046 + $0x8] sm:$0xf]
        %v7050 = vld [vmem:[%s7046 + $0xc] sm:$0xf]
        %v7051 = vld [vmem:[%s7046 + $0x10] sm:$0xf]
        %v7052 = vld [vmem:[%s7046 + $0x14] sm:$0xf]
        %v7053 = vld [vmem:[%s7046 + $0x18] sm:$0xf]
        %v7054 = vld [vmem:[%s7046 + $0x1c] sm:$0xf]
        %v7063 = vunpack.c.l.b16 %v7047
        %v7064 = vunpack.c.l.b16 %v7048
        %v7065 = vunpack.c.l.b16 %v7049
        %v7066 = vunpack.c.l.b16 %v7050
        %v7067 = vunpack.c.l.b16 %v7051
        %v7068 = vunpack.c.l.b16 %v7052
        %v7069 = vunpack.c.l.b16 %v7053
        %v7070 = vunpack.c.l.b16 %v7054
        %v7071 = vpack.c.b16 %v7064, %v7063
        %v7072 = vpack.c.b16 %v7066, %v7065
        %v7073 = vpack.c.b16 %v7068, %v7067
        %v7074 = vpack.c.b16 %v7070, %v7069
        %v7080 = vsel %vm4742, %v7030, 0
        %v7083 = vsel %vm4742, %v7031, 0
        %v7086 = vsel %vm4742, %v7032, 0
        %v7089 = vsel %vm4742, %v7033, 0
        %v7092 = vsel %vm4742, %v7034, 0
        %v7095 = vsel %vm4742, %v7035, 0
        %v7098 = vsel %vm4742, %v7036, 0
        %v7101 = vsel %vm4742, %v7037, 0
        %v7104 = vsel %vm4742, %v7038, 0
        %v7107 = vsel %vm4742, %v7039, 0
        %v7110 = vsel %vm4742, %v7040, 0
        %v7113 = vsel %vm4742, %v7041, 0
        %v7116 = vsel %vm4742, %v7042, 0
        %v7119 = vsel %vm4742, %v7043, 0
        %v7122 = vsel %vm4742, %v7044, 0
        %v7125 = vsel %vm4742, %v7045, 0
        %7127 = vmatprep.subr.bf16.mxu0 0
        %7128 = vmatpush1.bf16.msra.mxu0 %v7071
        %7129 = vmatprep.subr.bf16.mxu0 0
        %7130 = vmatpush1.bf16.msra.mxu0 %v7072
        %7131 = vmatprep.subr.bf16.mxu0 0
        %7132 = vmatpush1.bf16.msra.mxu0 %v7073
        %7133 = vmatprep.subr.bf16.mxu0 0
        %7134 = vmatpush1.bf16.msra.mxu0 %v7074
        %7135 = vmatprep.subr.bf16.mxu0 0
        %7136 = vmatpush1.bf16.msra.mxu0 0
        %7137 = vmatprep.subr.bf16.mxu0 0
        %7138 = vmatpush1.bf16.msra.mxu0 0
        %7139 = vmatprep.subr.bf16.mxu0 0
        %7140 = vmatpush1.bf16.msra.mxu0 0
        %7141 = vmatprep.subr.bf16.mxu0 0
        %7142 = vmatpush1.bf16.msra.mxu0 0
        %7143 = vmatprep.subr.bf16.mxu0 0
        %7144 = vmatpush1.bf16.msra.mxu0 0
        %7145 = vmatprep.subr.bf16.mxu0 0
        %7146 = vmatpush1.bf16.msra.mxu0 0
        %7147 = vmatprep.subr.bf16.mxu0 0
        %7148 = vmatpush1.bf16.msra.mxu0 0
        %7149 = vmatprep.subr.bf16.mxu0 0
        %7150 = vmatpush1.bf16.msra.mxu0 0
        %7151 = vmatprep.subr.bf16.mxu0 0
        %7152 = vmatpush1.bf16.msra.mxu0 0
        %7153 = vmatprep.subr.bf16.mxu0 0
        %7154 = vmatpush1.bf16.msra.mxu0 0
        %7155 = vmatprep.subr.bf16.mxu0 0
        %7156 = vmatpush1.bf16.msra.mxu0 0
        %7157 = vmatprep.subr.bf16.mxu0 0
        %7158 = vmatpush1.bf16.msra.mxu0 0
        %7159 = vmatprep.mubr.bf16.mxu0 0
        %7160 = vmatmul.mubr.bf16.gmra.mrb[0].mxu0 %v7080
        %v7161 = vpop.f32.mrb[0].mxu0
        %v7162 = vadd.f32 0.0, %v7161
        %v7163 = vpop.f32.mrb[0].mxu0
        %v7164 = vpop.f32.mrb[0].mxu0
        %v7165 = vadd.f32 0.0, %v7164
        %v7166 = vpop.f32.mrb[0].mxu0
        %7167 = vmatprep.mubr.bf16.mxu0 0
        %7168 = vmatmul.mubr.bf16.gmra.mrb[0].mxu0 %v7083
        %v7169 = vpop.f32.mrb[0].mxu0
        %v7170 = vadd.f32 0.0, %v7169
        %v7171 = vpop.f32.mrb[0].mxu0
        %v7172 = vpop.f32.mrb[0].mxu0
        %v7173 = vadd.f32 0.0, %v7172
        %v7174 = vpop.f32.mrb[0].mxu0
        %7175 = vmatprep.mubr.bf16.mxu0 0
        %7176 = vmatmul.mubr.bf16.gmra.mrb[0].mxu0 %v7086
        %v7177 = vpop.f32.mrb[0].mxu0
        %v7178 = vadd.f32 0.0, %v7177
        %v7179 = vpop.f32.mrb[0].mxu0
        %v7180 = vpop.f32.mrb[0].mxu0
        %v7181 = vadd.f32 0.0, %v7180
        %v7182 = vpop.f32.mrb[0].mxu0
        %7183 = vmatprep.mubr.bf16.mxu0 0
        %7184 = vmatmul.mubr.bf16.gmra.mrb[0].mxu0 %v7089
        %v7185 = vpop.f32.mrb[0].mxu0
        %v7186 = vadd.f32 0.0, %v7185
        %v7187 = vpop.f32.mrb[0].mxu0
        %v7188 = vpop.f32.mrb[0].mxu0
        %v7189 = vadd.f32 0.0, %v7188
        %v7190 = vpop.f32.mrb[0].mxu0
        %7191 = vmatprep.mubr.bf16.mxu0 0
        %7192 = vmatmul.mubr.bf16.gmra.mrb[0].mxu0 %v7092
        %v7193 = vpop.f32.mrb[0].mxu0
        %v7194 = vadd.f32 0.0, %v7193
        %v7195 = vpop.f32.mrb[0].mxu0
        %v7196 = vpop.f32.mrb[0].mxu0
        %v7197 = vadd.f32 0.0, %v7196
        %v7198 = vpop.f32.mrb[0].mxu0
        %7199 = vmatprep.mubr.bf16.mxu0 0
        %7200 = vmatmul.mubr.bf16.gmra.mrb[0].mxu0 %v7095
        %v7201 = vpop.f32.mrb[0].mxu0
        %v7202 = vadd.f32 0.0, %v7201
        %v7203 = vpop.f32.mrb[0].mxu0
        %v7204 = vpop.f32.mrb[0].mxu0
        %v7205 = vadd.f32 0.0, %v7204
        %v7206 = vpop.f32.mrb[0].mxu0
        %7207 = vmatprep.mubr.bf16.mxu0 0
        %7208 = vmatmul.mubr.bf16.gmra.mrb[0].mxu0 %v7098
        %v7209 = vpop.f32.mrb[0].mxu0
        %v7210 = vadd.f32 0.0, %v7209
        %v7211 = vpop.f32.mrb[0].mxu0
        %v7212 = vpop.f32.mrb[0].mxu0
        %v7213 = vadd.f32 0.0, %v7212
        %v7214 = vpop.f32.mrb[0].mxu0
        %7215 = vmatprep.mubr.bf16.mxu0 0
        %7216 = vmatmul.mubr.bf16.gmra.mrb[0].mxu0 %v7101
        %v7217 = vpop.f32.mrb[0].mxu0
        %v7218 = vadd.f32 0.0, %v7217
        %v7219 = vpop.f32.mrb[0].mxu0
        %v7220 = vpop.f32.mrb[0].mxu0
        %v7221 = vadd.f32 0.0, %v7220
        %v7222 = vpop.f32.mrb[0].mxu0
        %7223 = vmatprep.mubr.bf16.mxu0 0
        %7224 = vmatmul.mubr.bf16.gmra.mrb[0].mxu0 %v7104
        %v7225 = vpop.f32.mrb[0].mxu0
        %v7226 = vadd.f32 0.0, %v7225
        %v7227 = vpop.f32.mrb[0].mxu0
        %v7228 = vpop.f32.mrb[0].mxu0
        %v7229 = vadd.f32 0.0, %v7228
        %v7230 = vpop.f32.mrb[0].mxu0
        %7231 = vmatprep.mubr.bf16.mxu0 0
        %7232 = vmatmul.mubr.bf16.gmra.mrb[0].mxu0 %v7107
        %v7233 = vpop.f32.mrb[0].mxu0
        %v7234 = vadd.f32 0.0, %v7233
        %v7235 = vpop.f32.mrb[0].mxu0
        %v7236 = vpop.f32.mrb[0].mxu0
        %v7237 = vadd.f32 0.0, %v7236
        %v7238 = vpop.f32.mrb[0].mxu0
        %7239 = vmatprep.mubr.bf16.mxu0 0
        %7240 = vmatmul.mubr.bf16.gmra.mrb[0].mxu0 %v7110
        %v7241 = vpop.f32.mrb[0].mxu0
        %v7242 = vadd.f32 0.0, %v7241
        %v7243 = vpop.f32.mrb[0].mxu0
        %v7244 = vpop.f32.mrb[0].mxu0
        %v7245 = vadd.f32 0.0, %v7244
        %v7246 = vpop.f32.mrb[0].mxu0
        %7247 = vmatprep.mubr.bf16.mxu0 0
        %7248 = vmatmul.mubr.bf16.gmra.mrb[0].mxu0 %v7113
        %v7249 = vpop.f32.mrb[0].mxu0
        %v7250 = vadd.f32 0.0, %v7249
        %v7251 = vpop.f32.mrb[0].mxu0
        %v7252 = vpop.f32.mrb[0].mxu0
        %v7253 = vadd.f32 0.0, %v7252
        %v7254 = vpop.f32.mrb[0].mxu0
        %7255 = vmatprep.mubr.bf16.mxu0 0
        %7256 = vmatmul.mubr.bf16.gmra.mrb[0].mxu0 %v7116
        %v7257 = vpop.f32.mrb[0].mxu0
        %v7258 = vadd.f32 0.0, %v7257
        %v7259 = vpop.f32.mrb[0].mxu0
        %v7260 = vpop.f32.mrb[0].mxu0
        %v7261 = vadd.f32 0.0, %v7260
        %v7262 = vpop.f32.mrb[0].mxu0
        %7263 = vmatprep.mubr.bf16.mxu0 0
        %7264 = vmatmul.mubr.bf16.gmra.mrb[0].mxu0 %v7119
        %v7265 = vpop.f32.mrb[0].mxu0
        %v7266 = vadd.f32 0.0, %v7265
        %v7267 = vpop.f32.mrb[0].mxu0
        %v7268 = vpop.f32.mrb[0].mxu0
        %v7269 = vadd.f32 0.0, %v7268
        %v7270 = vpop.f32.mrb[0].mxu0
        %7271 = vmatprep.mubr.bf16.mxu0 0
        %7272 = vmatmul.mubr.bf16.gmra.mrb[0].mxu0 %v7122
        %v7273 = vpop.f32.mrb[0].mxu0
        %v7274 = vadd.f32 0.0, %v7273
        %v7275 = vpop.f32.mrb[0].mxu0
        %v7276 = vpop.f32.mrb[0].mxu0
        %v7277 = vadd.f32 0.0, %v7276
        %v7278 = vpop.f32.mrb[0].mxu0
        %7279 = vmatprep.mubr.bf16.mxu0 0
        %7280 = vmatmul.mubr.bf16.gmra.mrb[0].mxu0 %v7125
        %v7281 = vpop.f32.mrb[0].mxu0
        %v7282 = vadd.f32 0.0, %v7281
        %v7283 = vpop.f32.mrb[0].mxu0
        %v7284 = vpop.f32.mrb[0].mxu0
        %v7285 = vadd.f32 0.0, %v7284
        %v7286 = vpop.f32.mrb[0].mxu0
        %7287 = vdwg.mxu0
        %v7288 = vadd.f32 %v6966, %v7162
        %v7289 = vadd.f32 %v6967, %v7165
        %v7290 = vadd.f32 %v6968, %v7170
        %v7291 = vadd.f32 %v6969, %v7173
        %v7292 = vadd.f32 %v6970, %v7178
        %v7293 = vadd.f32 %v6971, %v7181
        %v7294 = vadd.f32 %v6972, %v7186
        %v7295 = vadd.f32 %v6973, %v7189
        %v7296 = vadd.f32 %v6974, %v7194
        %v7297 = vadd.f32 %v6975, %v7197
        %v7298 = vadd.f32 %v6976, %v7202
        %v7299 = vadd.f32 %v6977, %v7205
        %v7300 = vadd.f32 %v6978, %v7210
        %v7301 = vadd.f32 %v6979, %v7213
        %v7302 = vadd.f32 %v6980, %v7218
        %v7303 = vadd.f32 %v6981, %v7221
        %v7304 = vadd.f32 %v6982, %v7226
        %v7305 = vadd.f32 %v6983, %v7229
        %v7306 = vadd.f32 %v6984, %v7234
        %v7307 = vadd.f32 %v6985, %v7237
        %v7308 = vadd.f32 %v6986, %v7242
        %v7309 = vadd.f32 %v6987, %v7245
        %v7310 = vadd.f32 %v6988, %v7250
        %v7311 = vadd.f32 %v6989, %v7253
        %v7312 = vadd.f32 %v6990, %v7258
        %v7313 = vadd.f32 %v6991, %v7261
        %v7314 = vadd.f32 %v6992, %v7266
        %v7315 = vadd.f32 %v6993, %v7269
        %v7316 = vadd.f32 %v6994, %v7274
        %v7317 = vadd.f32 %v6995, %v7277
        %v7318 = vadd.f32 %v6996, %v7282
        %v7319 = vadd.f32 %v6997, %v7285
        %v7320 = vld [vmem:[#allocation3 + $0x19] sm:$0xff]
        %v7321 = vld [vmem:[#allocation3 + $0x21] sm:$0xff]
        %v7322 = vld [vmem:[#allocation3 + $0x29] sm:$0xff]
        %v7323 = vld [vmem:[#allocation3 + $0x31] sm:$0xff]
        %v7324 = vld [vmem:[#allocation3 + $0x39] sm:$0xff]
        %v7325 = vld [vmem:[#allocation3 + $0x41] sm:$0xff]
        %v7326 = vld [vmem:[#allocation3 + $0x49] sm:$0xff]
        %v7327 = vld [vmem:[#allocation3 + $0x51] sm:$0xff]
        %v7328 = vld [vmem:[#allocation3 + $0x59] sm:$0xff]
        %v7329 = vld [vmem:[#allocation3 + $0x61] sm:$0xff]
        %v7330 = vld [vmem:[#allocation3 + $0x69] sm:$0xff]
        %v7331 = vld [vmem:[#allocation3 + $0x71] sm:$0xff]
        %v7332 = vld [vmem:[#allocation3 + $0x79] sm:$0xff]
        %v7333 = vld [vmem:[#allocation3 + $0x81] sm:$0xff]
        %v7334 = vld [vmem:[#allocation3 + $0x89] sm:$0xff]
        %v7335 = vld [vmem:[#allocation3 + $0x91] sm:$0xff]
        %v7336 = vld [vmem:[#allocation3 + $0x99] sm:$0xff]
        %v7337 = vld [vmem:[#allocation3 + $0xa1] sm:$0xff]
        %v7338 = vld [vmem:[#allocation3 + $0xa9] sm:$0xff]
        %v7339 = vld [vmem:[#allocation3 + $0xb1] sm:$0xff]
        %v7340 = vld [vmem:[#allocation3 + $0xb9] sm:$0xff]
        %v7341 = vld [vmem:[#allocation3 + $0xc1] sm:$0xff]
        %v7342 = vld [vmem:[#allocation3 + $0xc9] sm:$0xff]
        %v7343 = vld [vmem:[#allocation3 + $0xd1] sm:$0xff]
        %v7344 = vld [vmem:[#allocation3 + $0xd9] sm:$0xff]
        %v7345 = vld [vmem:[#allocation3 + $0xe1] sm:$0xff]
        %v7346 = vld [vmem:[#allocation3 + $0xe9] sm:$0xff]
        %v7347 = vld [vmem:[#allocation3 + $0xf1] sm:$0xff]
        %v7348 = vld [vmem:[#allocation3 + $0xf9] sm:$0xff]
        %v7349 = vld [vmem:[#allocation3 + $0x101] sm:$0xff]
        %v7350 = vld [vmem:[#allocation3 + $0x109] sm:$0xff]
        %v7351 = vld [vmem:[#allocation3 + $0x111] sm:$0xff]
        %v7352 = vsel %vm2391, %v7320, 0.0
        %v7353 = vsel %vm2392, %v7321, 0.0
        %v7354 = vsel %vm2393, %v7322, 0.0
        %v7355 = vsel %vm2394, %v7323, 0.0
        %v7356 = vsel %vm2395, %v7324, 0.0
        %v7357 = vsel %vm2396, %v7325, 0.0
        %v7358 = vsel %vm2397, %v7326, 0.0
        %v7359 = vsel %vm2398, %v7327, 0.0
        %v7360 = vsel %vm2399, %v7328, 0.0
        %v7361 = vsel %vm2400, %v7329, 0.0
        %v7362 = vsel %vm2401, %v7330, 0.0
        %v7363 = vsel %vm2402, %v7331, 0.0
        %v7364 = vsel %vm2403, %v7332, 0.0
        %v7365 = vsel %vm2404, %v7333, 0.0
        %v7366 = vsel %vm2405, %v7334, 0.0
        %v7367 = vsel %vm2406, %v7335, 0.0
        %v7368 = vsel %vm2407, %v7336, 0.0
        %v7369 = vsel %vm2408, %v7337, 0.0
        %v7370 = vsel %vm2409, %v7338, 0.0
        %v7371 = vsel %vm2410, %v7339, 0.0
        %v7372 = vsel %vm2411, %v7340, 0.0
        %v7373 = vsel %vm2412, %v7341, 0.0
        %v7374 = vsel %vm2413, %v7342, 0.0
        %v7375 = vsel %vm2414, %v7343, 0.0
        %v7376 = vsel %vm2415, %v7344, 0.0
        %v7377 = vsel %vm2416, %v7345, 0.0
        %v7378 = vsel %vm2417, %v7346, 0.0
        %v7379 = vsel %vm2418, %v7347, 0.0
        %v7380 = vsel %vm2419, %v7348, 0.0
        %v7381 = vsel %vm2420, %v7349, 0.0
        %v7382 = vsel %vm2421, %v7350, 0.0
        %v7383 = vsel %vm2422, %v7351, 0.0
        %v7384 = vpack.c.bf16 %v7353, %v7352
        %v7385 = vpack.c.bf16 %v7355, %v7354
        %v7386 = vpack.c.bf16 %v7357, %v7356
        %v7387 = vpack.c.bf16 %v7359, %v7358
        %v7388 = vpack.c.bf16 %v7361, %v7360
        %v7389 = vpack.c.bf16 %v7363, %v7362
        %v7390 = vpack.c.bf16 %v7365, %v7364
        %v7391 = vpack.c.bf16 %v7367, %v7366
        %v7392 = vpack.c.bf16 %v7369, %v7368
        %v7393 = vpack.c.bf16 %v7371, %v7370
        %v7394 = vpack.c.bf16 %v7373, %v7372
        %v7395 = vpack.c.bf16 %v7375, %v7374
        %v7396 = vpack.c.bf16 %v7377, %v7376
        %v7397 = vpack.c.bf16 %v7379, %v7378
        %v7398 = vpack.c.bf16 %v7381, %v7380
        %v7399 = vpack.c.bf16 %v7383, %v7382
        %s7400 = scalar_lea.vmem [#allocation12], 160
        %v7401 = vld [vmem:[%s7400] sm:$0xf]
        %v7402 = vld [vmem:[%s7400 + $0x4] sm:$0xf]
        %v7403 = vld [vmem:[%s7400 + $0x8] sm:$0xf]
        %v7404 = vld [vmem:[%s7400 + $0xc] sm:$0xf]
        %v7405 = vld [vmem:[%s7400 + $0x10] sm:$0xf]
        %v7406 = vld [vmem:[%s7400 + $0x14] sm:$0xf]
        %v7407 = vld [vmem:[%s7400 + $0x18] sm:$0xf]
        %v7408 = vld [vmem:[%s7400 + $0x1c] sm:$0xf]
        %v7417 = vunpack.c.l.b16 %v7401
        %v7418 = vunpack.c.l.b16 %v7402
        %v7419 = vunpack.c.l.b16 %v7403
        %v7420 = vunpack.c.l.b16 %v7404
        %v7421 = vunpack.c.l.b16 %v7405
        %v7422 = vunpack.c.l.b16 %v7406
        %v7423 = vunpack.c.l.b16 %v7407
        %v7424 = vunpack.c.l.b16 %v7408
        %v7425 = vpack.c.b16 %v7418, %v7417
        %v7426 = vpack.c.b16 %v7420, %v7419
        %v7427 = vpack.c.b16 %v7422, %v7421
        %v7428 = vpack.c.b16 %v7424, %v7423
        %v7434 = vsel %vm4742, %v7384, 0
        %v7437 = vsel %vm4742, %v7385, 0
        %v7440 = vsel %vm4742, %v7386, 0
        %v7443 = vsel %vm4742, %v7387, 0
        %v7446 = vsel %vm4742, %v7388, 0
        %v7449 = vsel %vm4742, %v7389, 0
        %v7452 = vsel %vm4742, %v7390, 0
        %v7455 = vsel %vm4742, %v7391, 0
        %v7458 = vsel %vm4742, %v7392, 0
        %v7461 = vsel %vm4742, %v7393, 0
        %v7464 = vsel %vm4742, %v7394, 0
        %v7467 = vsel %vm4742, %v7395, 0
        %v7470 = vsel %vm4742, %v7396, 0
        %v7473 = vsel %vm4742, %v7397, 0
        %v7476 = vsel %vm4742, %v7398, 0
        %v7479 = vsel %vm4742, %v7399, 0
        %7481 = vmatprep.subr.bf16.mxu0 0
        %7482 = vmatpush1.bf16.msra.mxu0 %v7425
        %7483 = vmatprep.subr.bf16.mxu0 0
        %7484 = vmatpush1.bf16.msra.mxu0 %v7426
        %7485 = vmatprep.subr.bf16.mxu0 0
        %7486 = vmatpush1.bf16.msra.mxu0 %v7427
        %7487 = vmatprep.subr.bf16.mxu0 0
        %7488 = vmatpush1.bf16.msra.mxu0 %v7428
        %7489 = vmatprep.subr.bf16.mxu0 0
        %7490 = vmatpush1.bf16.msra.mxu0 0
        %7491 = vmatprep.subr.bf16.mxu0 0
        %7492 = vmatpush1.bf16.msra.mxu0 0
        %7493 = vmatprep.subr.bf16.mxu0 0
        %7494 = vmatpush1.bf16.msra.mxu0 0
        %7495 = vmatprep.subr.bf16.mxu0 0
        %7496 = vmatpush1.bf16.msra.mxu0 0
        %7497 = vmatprep.subr.bf16.mxu0 0
        %7498 = vmatpush1.bf16.msra.mxu0 0
        %7499 = vmatprep.subr.bf16.mxu0 0
        %7500 = vmatpush1.bf16.msra.mxu0 0
        %7501 = vmatprep.subr.bf16.mxu0 0
        %7502 = vmatpush1.bf16.msra.mxu0 0
        %7503 = vmatprep.subr.bf16.mxu0 0
        %7504 = vmatpush1.bf16.msra.mxu0 0
        %7505 = vmatprep.subr.bf16.mxu0 0
        %7506 = vmatpush1.bf16.msra.mxu0 0
        %7507 = vmatprep.subr.bf16.mxu0 0
        %7508 = vmatpush1.bf16.msra.mxu0 0
        %7509 = vmatprep.subr.bf16.mxu0 0
        %7510 = vmatpush1.bf16.msra.mxu0 0
        %7511 = vmatprep.subr.bf16.mxu0 0
        %7512 = vmatpush1.bf16.msra.mxu0 0
        %7513 = vmatprep.mubr.bf16.mxu0 0
        %7514 = vmatmul.mubr.bf16.gmra.mrb[0].mxu0 %v7434
        %v7515 = vpop.f32.mrb[0].mxu0
        %v7516 = vadd.f32 0.0, %v7515
        %v7517 = vpop.f32.mrb[0].mxu0
        %v7518 = vpop.f32.mrb[0].mxu0
        %v7519 = vadd.f32 0.0, %v7518
        %v7520 = vpop.f32.mrb[0].mxu0
        %7521 = vmatprep.mubr.bf16.mxu0 0
        %7522 = vmatmul.mubr.bf16.gmra.mrb[0].mxu0 %v7437
        %v7523 = vpop.f32.mrb[0].mxu0
        %v7524 = vadd.f32 0.0, %v7523
        %v7525 = vpop.f32.mrb[0].mxu0
        %v7526 = vpop.f32.mrb[0].mxu0
        %v7527 = vadd.f32 0.0, %v7526
        %v7528 = vpop.f32.mrb[0].mxu0
        %7529 = vmatprep.mubr.bf16.mxu0 0
        %7530 = vmatmul.mubr.bf16.gmra.mrb[0].mxu0 %v7440
        %v7531 = vpop.f32.mrb[0].mxu0
        %v7532 = vadd.f32 0.0, %v7531
        %v7533 = vpop.f32.mrb[0].mxu0
        %v7534 = vpop.f32.mrb[0].mxu0
        %v7535 = vadd.f32 0.0, %v7534
        %v7536 = vpop.f32.mrb[0].mxu0
        %7537 = vmatprep.mubr.bf16.mxu0 0
        %7538 = vmatmul.mubr.bf16.gmra.mrb[0].mxu0 %v7443
        %v7539 = vpop.f32.mrb[0].mxu0
        %v7540 = vadd.f32 0.0, %v7539
        %v7541 = vpop.f32.mrb[0].mxu0
        %v7542 = vpop.f32.mrb[0].mxu0
        %v7543 = vadd.f32 0.0, %v7542
        %v7544 = vpop.f32.mrb[0].mxu0
        %7545 = vmatprep.mubr.bf16.mxu0 0
        %7546 = vmatmul.mubr.bf16.gmra.mrb[0].mxu0 %v7446
        %v7547 = vpop.f32.mrb[0].mxu0
        %v7548 = vadd.f32 0.0, %v7547
        %v7549 = vpop.f32.mrb[0].mxu0
        %v7550 = vpop.f32.mrb[0].mxu0
        %v7551 = vadd.f32 0.0, %v7550
        %v7552 = vpop.f32.mrb[0].mxu0
        %7553 = vmatprep.mubr.bf16.mxu0 0
        %7554 = vmatmul.mubr.bf16.gmra.mrb[0].mxu0 %v7449
        %v7555 = vpop.f32.mrb[0].mxu0
        %v7556 = vadd.f32 0.0, %v7555
        %v7557 = vpop.f32.mrb[0].mxu0
        %v7558 = vpop.f32.mrb[0].mxu0
        %v7559 = vadd.f32 0.0, %v7558
        %v7560 = vpop.f32.mrb[0].mxu0
        %7561 = vmatprep.mubr.bf16.mxu0 0
        %7562 = vmatmul.mubr.bf16.gmra.mrb[0].mxu0 %v7452
        %v7563 = vpop.f32.mrb[0].mxu0
        %v7564 = vadd.f32 0.0, %v7563
        %v7565 = vpop.f32.mrb[0].mxu0
        %v7566 = vpop.f32.mrb[0].mxu0
        %v7567 = vadd.f32 0.0, %v7566
        %v7568 = vpop.f32.mrb[0].mxu0
        %7569 = vmatprep.mubr.bf16.mxu0 0
        %7570 = vmatmul.mubr.bf16.gmra.mrb[0].mxu0 %v7455
        %v7571 = vpop.f32.mrb[0].mxu0
        %v7572 = vadd.f32 0.0, %v7571
        %v7573 = vpop.f32.mrb[0].mxu0
        %v7574 = vpop.f32.mrb[0].mxu0
        %v7575 = vadd.f32 0.0, %v7574
        %v7576 = vpop.f32.mrb[0].mxu0
        %7577 = vmatprep.mubr.bf16.mxu0 0
        %7578 = vmatmul.mubr.bf16.gmra.mrb[0].mxu0 %v7458
        %v7579 = vpop.f32.mrb[0].mxu0
        %v7580 = vadd.f32 0.0, %v7579
        %v7581 = vpop.f32.mrb[0].mxu0
        %v7582 = vpop.f32.mrb[0].mxu0
        %v7583 = vadd.f32 0.0, %v7582
        %v7584 = vpop.f32.mrb[0].mxu0
        %7585 = vmatprep.mubr.bf16.mxu0 0
        %7586 = vmatmul.mubr.bf16.gmra.mrb[0].mxu0 %v7461
        %v7587 = vpop.f32.mrb[0].mxu0
        %v7588 = vadd.f32 0.0, %v7587
        %v7589 = vpop.f32.mrb[0].mxu0
        %v7590 = vpop.f32.mrb[0].mxu0
        %v7591 = vadd.f32 0.0, %v7590
        %v7592 = vpop.f32.mrb[0].mxu0
        %7593 = vmatprep.mubr.bf16.mxu0 0
        %7594 = vmatmul.mubr.bf16.gmra.mrb[0].mxu0 %v7464
        %v7595 = vpop.f32.mrb[0].mxu0
        %v7596 = vadd.f32 0.0, %v7595
        %v7597 = vpop.f32.mrb[0].mxu0
        %v7598 = vpop.f32.mrb[0].mxu0
        %v7599 = vadd.f32 0.0, %v7598
        %v7600 = vpop.f32.mrb[0].mxu0
        %7601 = vmatprep.mubr.bf16.mxu0 0
        %7602 = vmatmul.mubr.bf16.gmra.mrb[0].mxu0 %v7467
        %v7603 = vpop.f32.mrb[0].mxu0
        %v7604 = vadd.f32 0.0, %v7603
        %v7605 = vpop.f32.mrb[0].mxu0
        %v7606 = vpop.f32.mrb[0].mxu0
        %v7607 = vadd.f32 0.0, %v7606
        %v7608 = vpop.f32.mrb[0].mxu0
        %7609 = vmatprep.mubr.bf16.mxu0 0
        %7610 = vmatmul.mubr.bf16.gmra.mrb[0].mxu0 %v7470
        %v7611 = vpop.f32.mrb[0].mxu0
        %v7612 = vadd.f32 0.0, %v7611
        %v7613 = vpop.f32.mrb[0].mxu0
        %v7614 = vpop.f32.mrb[0].mxu0
        %v7615 = vadd.f32 0.0, %v7614
        %v7616 = vpop.f32.mrb[0].mxu0
        %7617 = vmatprep.mubr.bf16.mxu0 0
        %7618 = vmatmul.mubr.bf16.gmra.mrb[0].mxu0 %v7473
        %v7619 = vpop.f32.mrb[0].mxu0
        %v7620 = vadd.f32 0.0, %v7619
        %v7621 = vpop.f32.mrb[0].mxu0
        %v7622 = vpop.f32.mrb[0].mxu0
        %v7623 = vadd.f32 0.0, %v7622
        %v7624 = vpop.f32.mrb[0].mxu0
        %7625 = vmatprep.mubr.bf16.mxu0 0
        %7626 = vmatmul.mubr.bf16.gmra.mrb[0].mxu0 %v7476
        %v7627 = vpop.f32.mrb[0].mxu0
        %v7628 = vadd.f32 0.0, %v7627
        %v7629 = vpop.f32.mrb[0].mxu0
        %v7630 = vpop.f32.mrb[0].mxu0
        %v7631 = vadd.f32 0.0, %v7630
        %v7632 = vpop.f32.mrb[0].mxu0
        %7633 = vmatprep.mubr.bf16.mxu0 0
        %7634 = vmatmul.mubr.bf16.gmra.mrb[0].mxu0 %v7479
        %v7635 = vpop.f32.mrb[0].mxu0
        %v7636 = vadd.f32 0.0, %v7635
        %v7637 = vpop.f32.mrb[0].mxu0
        %v7638 = vpop.f32.mrb[0].mxu0
        %v7639 = vadd.f32 0.0, %v7638
        %v7640 = vpop.f32.mrb[0].mxu0
        %7641 = vdwg.mxu0
        %v7642 = vadd.f32 %v7288, %v7516
        %v7643 = vadd.f32 %v7289, %v7519
        %v7644 = vadd.f32 %v7290, %v7524
        %v7645 = vadd.f32 %v7291, %v7527
        %v7646 = vadd.f32 %v7292, %v7532
        %v7647 = vadd.f32 %v7293, %v7535
        %v7648 = vadd.f32 %v7294, %v7540
        %v7649 = vadd.f32 %v7295, %v7543
        %v7650 = vadd.f32 %v7296, %v7548
        %v7651 = vadd.f32 %v7297, %v7551
        %v7652 = vadd.f32 %v7298, %v7556
        %v7653 = vadd.f32 %v7299, %v7559
        %v7654 = vadd.f32 %v7300, %v7564
        %v7655 = vadd.f32 %v7301, %v7567
        %v7656 = vadd.f32 %v7302, %v7572
        %v7657 = vadd.f32 %v7303, %v7575
        %v7658 = vadd.f32 %v7304, %v7580
        %v7659 = vadd.f32 %v7305, %v7583
        %v7660 = vadd.f32 %v7306, %v7588
        %v7661 = vadd.f32 %v7307, %v7591
        %v7662 = vadd.f32 %v7308, %v7596
        %v7663 = vadd.f32 %v7309, %v7599
        %v7664 = vadd.f32 %v7310, %v7604
        %v7665 = vadd.f32 %v7311, %v7607
        %v7666 = vadd.f32 %v7312, %v7612
        %v7667 = vadd.f32 %v7313, %v7615
        %v7668 = vadd.f32 %v7314, %v7620
        %v7669 = vadd.f32 %v7315, %v7623
        %v7670 = vadd.f32 %v7316, %v7628
        %v7671 = vadd.f32 %v7317, %v7631
        %v7672 = vadd.f32 %v7318, %v7636
        %v7673 = vadd.f32 %v7319, %v7639
        %v7674 = vld [vmem:[#allocation3 + $0x27] sm:$0xff]
        %v7675 = vld [vmem:[#allocation3 + $0x2f] sm:$0xff]
        %v7676 = vld [vmem:[#allocation3 + $0x37] sm:$0xff]
        %v7677 = vld [vmem:[#allocation3 + $0x3f] sm:$0xff]
        %v7678 = vld [vmem:[#allocation3 + $0x47] sm:$0xff]
        %v7679 = vld [vmem:[#allocation3 + $0x4f] sm:$0xff]
        %v7680 = vld [vmem:[#allocation3 + $0x57] sm:$0xff]
        %v7681 = vld [vmem:[#allocation3 + $0x5f] sm:$0xff]
        %v7682 = vld [vmem:[#allocation3 + $0x67] sm:$0xff]
        %v7683 = vld [vmem:[#allocation3 + $0x6f] sm:$0xff]
        %v7684 = vld [vmem:[#allocation3 + $0x77] sm:$0xff]
        %v7685 = vld [vmem:[#allocation3 + $0x7f] sm:$0xff]
        %v7686 = vld [vmem:[#allocation3 + $0x87] sm:$0xff]
        %v7687 = vld [vmem:[#allocation3 + $0x8f] sm:$0xff]
        %v7688 = vld [vmem:[#allocation3 + $0x97] sm:$0xff]
        %v7689 = vld [vmem:[#allocation3 + $0x9f] sm:$0xff]
        %v7690 = vld [vmem:[#allocation3 + $0xa7] sm:$0xff]
        %v7691 = vld [vmem:[#allocation3 + $0xaf] sm:$0xff]
        %v7692 = vld [vmem:[#allocation3 + $0xb7] sm:$0xff]
        %v7693 = vld [vmem:[#allocation3 + $0xbf] sm:$0xff]
        %v7694 = vld [vmem:[#allocation3 + $0xc7] sm:$0xff]
        %v7695 = vld [vmem:[#allocation3 + $0xcf] sm:$0xff]
        %v7696 = vld [vmem:[#allocation3 + $0xd7] sm:$0xff]
        %v7697 = vld [vmem:[#allocation3 + $0xdf] sm:$0xff]
        %v7698 = vld [vmem:[#allocation3 + $0xe7] sm:$0xff]
        %v7699 = vld [vmem:[#allocation3 + $0xef] sm:$0xff]
        %v7700 = vld [vmem:[#allocation3 + $0xf7] sm:$0xff]
        %v7701 = vld [vmem:[#allocation3 + $0xff] sm:$0xff]
        %v7702 = vld [vmem:[#allocation3 + $0x107] sm:$0xff]
        %v7703 = vld [vmem:[#allocation3 + $0x10f] sm:$0xff]
        %v7704 = vld [vmem:[#allocation3 + $0x117] sm:$0xff]
        %v7705 = vld [vmem:[#allocation3 + $0x11f] sm:$0xff]
        %v7706 = vsel %vm1748, %v7674, 0.0
        %v7707 = vsel %vm1749, %v7675, 0.0
        %v7708 = vsel %vm1750, %v7676, 0.0
        %v7709 = vsel %vm1751, %v7677, 0.0
        %v7710 = vsel %vm1752, %v7678, 0.0
        %v7711 = vsel %vm1753, %v7679, 0.0
        %v7712 = vsel %vm1754, %v7680, 0.0
        %v7713 = vsel %vm1755, %v7681, 0.0
        %v7714 = vsel %vm1756, %v7682, 0.0
        %v7715 = vsel %vm1757, %v7683, 0.0
        %v7716 = vsel %vm1758, %v7684, 0.0
        %v7717 = vsel %vm1759, %v7685, 0.0
        %v7718 = vsel %vm1760, %v7686, 0.0
        %v7719 = vsel %vm1761, %v7687, 0.0
        %v7720 = vsel %vm1762, %v7688, 0.0
        %v7721 = vsel %vm1763, %v7689, 0.0
        %v7722 = vsel %vm1764, %v7690, 0.0
        %v7723 = vsel %vm1765, %v7691, 0.0
        %v7724 = vsel %vm1766, %v7692, 0.0
        %v7725 = vsel %vm1767, %v7693, 0.0
        %v7726 = vsel %vm1768, %v7694, 0.0
        %v7727 = vsel %vm1769, %v7695, 0.0
        %v7728 = vsel %vm1770, %v7696, 0.0
        %v7729 = vsel %vm1771, %v7697, 0.0
        %v7730 = vsel %vm1772, %v7698, 0.0
        %v7731 = vsel %vm1773, %v7699, 0.0
        %v7732 = vsel %vm1774, %v7700, 0.0
        %v7733 = vsel %vm1775, %v7701, 0.0
        %v7734 = vsel %vm1776, %v7702, 0.0
        %v7735 = vsel %vm1777, %v7703, 0.0
        %v7736 = vsel %vm1778, %v7704, 0.0
        %v7737 = vsel %vm1779, %v7705, 0.0
        %v7738 = vpack.c.bf16 %v7707, %v7706
        %v7739 = vpack.c.bf16 %v7709, %v7708
        %v7740 = vpack.c.bf16 %v7711, %v7710
        %v7741 = vpack.c.bf16 %v7713, %v7712
        %v7742 = vpack.c.bf16 %v7715, %v7714
        %v7743 = vpack.c.bf16 %v7717, %v7716
        %v7744 = vpack.c.bf16 %v7719, %v7718
        %v7745 = vpack.c.bf16 %v7721, %v7720
        %v7746 = vpack.c.bf16 %v7723, %v7722
        %v7747 = vpack.c.bf16 %v7725, %v7724
        %v7748 = vpack.c.bf16 %v7727, %v7726
        %v7749 = vpack.c.bf16 %v7729, %v7728
        %v7750 = vpack.c.bf16 %v7731, %v7730
        %v7751 = vpack.c.bf16 %v7733, %v7732
        %v7752 = vpack.c.bf16 %v7735, %v7734
        %v7753 = vpack.c.bf16 %v7737, %v7736
        %s7754 = scalar_lea.vmem [#allocation12], 192
        %v7755 = vld [vmem:[%s7754] sm:$0xf]
        %v7756 = vld [vmem:[%s7754 + $0x4] sm:$0xf]
        %v7757 = vld [vmem:[%s7754 + $0x8] sm:$0xf]
        %v7758 = vld [vmem:[%s7754 + $0xc] sm:$0xf]
        %v7759 = vld [vmem:[%s7754 + $0x10] sm:$0xf]
        %v7760 = vld [vmem:[%s7754 + $0x14] sm:$0xf]
        %v7761 = vld [vmem:[%s7754 + $0x18] sm:$0xf]
        %v7762 = vld [vmem:[%s7754 + $0x1c] sm:$0xf]
        %v7771 = vunpack.c.l.b16 %v7755
        %v7772 = vunpack.c.l.b16 %v7756
        %v7773 = vunpack.c.l.b16 %v7757
        %v7774 = vunpack.c.l.b16 %v7758
        %v7775 = vunpack.c.l.b16 %v7759
        %v7776 = vunpack.c.l.b16 %v7760
        %v7777 = vunpack.c.l.b16 %v7761
        %v7778 = vunpack.c.l.b16 %v7762
        %v7779 = vpack.c.b16 %v7772, %v7771
        %v7780 = vpack.c.b16 %v7774, %v7773
        %v7781 = vpack.c.b16 %v7776, %v7775
        %v7782 = vpack.c.b16 %v7778, %v7777
        %v7788 = vsel %vm4742, %v7738, 0
        %v7791 = vsel %vm4742, %v7739, 0
        %v7794 = vsel %vm4742, %v7740, 0
        %v7797 = vsel %vm4742, %v7741, 0
        %v7800 = vsel %vm4742, %v7742, 0
        %v7803 = vsel %vm4742, %v7743, 0
        %v7806 = vsel %vm4742, %v7744, 0
        %v7809 = vsel %vm4742, %v7745, 0
        %v7812 = vsel %vm4742, %v7746, 0
        %v7815 = vsel %vm4742, %v7747, 0
        %v7818 = vsel %vm4742, %v7748, 0
        %v7821 = vsel %vm4742, %v7749, 0
        %v7824 = vsel %vm4742, %v7750, 0
        %v7827 = vsel %vm4742, %v7751, 0
        %v7830 = vsel %vm4742, %v7752, 0
        %v7833 = vsel %vm4742, %v7753, 0
        %7835 = vmatprep.subr.bf16.mxu0 0
        %7836 = vmatpush1.bf16.msra.mxu0 %v7779
        %7837 = vmatprep.subr.bf16.mxu0 0
        %7838 = vmatpush1.bf16.msra.mxu0 %v7780
        %7839 = vmatprep.subr.bf16.mxu0 0
        %7840 = vmatpush1.bf16.msra.mxu0 %v7781
        %7841 = vmatprep.subr.bf16.mxu0 0
        %7842 = vmatpush1.bf16.msra.mxu0 %v7782
        %7843 = vmatprep.subr.bf16.mxu0 0
        %7844 = vmatpush1.bf16.msra.mxu0 0
        %7845 = vmatprep.subr.bf16.mxu0 0
        %7846 = vmatpush1.bf16.msra.mxu0 0
        %7847 = vmatprep.subr.bf16.mxu0 0
        %7848 = vmatpush1.bf16.msra.mxu0 0
        %7849 = vmatprep.subr.bf16.mxu0 0
        %7850 = vmatpush1.bf16.msra.mxu0 0
        %7851 = vmatprep.subr.bf16.mxu0 0
        %7852 = vmatpush1.bf16.msra.mxu0 0
        %7853 = vmatprep.subr.bf16.mxu0 0
        %7854 = vmatpush1.bf16.msra.mxu0 0
        %7855 = vmatprep.subr.bf16.mxu0 0
        %7856 = vmatpush1.bf16.msra.mxu0 0
        %7857 = vmatprep.subr.bf16.mxu0 0
        %7858 = vmatpush1.bf16.msra.mxu0 0
        %7859 = vmatprep.subr.bf16.mxu0 0
        %7860 = vmatpush1.bf16.msra.mxu0 0
        %7861 = vmatprep.subr.bf16.mxu0 0
        %7862 = vmatpush1.bf16.msra.mxu0 0
        %7863 = vmatprep.subr.bf16.mxu0 0
        %7864 = vmatpush1.bf16.msra.mxu0 0
        %7865 = vmatprep.subr.bf16.mxu0 0
        %7866 = vmatpush1.bf16.msra.mxu0 0
        %7867 = vmatprep.mubr.bf16.mxu0 0
        %7868 = vmatmul.mubr.bf16.gmra.mrb[0].mxu0 %v7788
        %v7869 = vpop.f32.mrb[0].mxu0
        %v7870 = vadd.f32 0.0, %v7869
        %v7871 = vpop.f32.mrb[0].mxu0
        %v7872 = vpop.f32.mrb[0].mxu0
        %v7873 = vadd.f32 0.0, %v7872
        %v7874 = vpop.f32.mrb[0].mxu0
        %7875 = vmatprep.mubr.bf16.mxu0 0
        %7876 = vmatmul.mubr.bf16.gmra.mrb[0].mxu0 %v7791
        %v7877 = vpop.f32.mrb[0].mxu0
        %v7878 = vadd.f32 0.0, %v7877
        %v7879 = vpop.f32.mrb[0].mxu0
        %v7880 = vpop.f32.mrb[0].mxu0
        %v7881 = vadd.f32 0.0, %v7880
        %v7882 = vpop.f32.mrb[0].mxu0
        %7883 = vmatprep.mubr.bf16.mxu0 0
        %7884 = vmatmul.mubr.bf16.gmra.mrb[0].mxu0 %v7794
        %v7885 = vpop.f32.mrb[0].mxu0
        %v7886 = vadd.f32 0.0, %v7885
        %v7887 = vpop.f32.mrb[0].mxu0
        %v7888 = vpop.f32.mrb[0].mxu0
        %v7889 = vadd.f32 0.0, %v7888
        %v7890 = vpop.f32.mrb[0].mxu0
        %7891 = vmatprep.mubr.bf16.mxu0 0
        %7892 = vmatmul.mubr.bf16.gmra.mrb[0].mxu0 %v7797
        %v7893 = vpop.f32.mrb[0].mxu0
        %v7894 = vadd.f32 0.0, %v7893
        %v7895 = vpop.f32.mrb[0].mxu0
        %v7896 = vpop.f32.mrb[0].mxu0
        %v7897 = vadd.f32 0.0, %v7896
        %v7898 = vpop.f32.mrb[0].mxu0
        %7899 = vmatprep.mubr.bf16.mxu0 0
        %7900 = vmatmul.mubr.bf16.gmra.mrb[0].mxu0 %v7800
        %v7901 = vpop.f32.mrb[0].mxu0
        %v7902 = vadd.f32 0.0, %v7901
        %v7903 = vpop.f32.mrb[0].mxu0
        %v7904 = vpop.f32.mrb[0].mxu0
        %v7905 = vadd.f32 0.0, %v7904
        %v7906 = vpop.f32.mrb[0].mxu0
        %7907 = vmatprep.mubr.bf16.mxu0 0
        %7908 = vmatmul.mubr.bf16.gmra.mrb[0].mxu0 %v7803
        %v7909 = vpop.f32.mrb[0].mxu0
        %v7910 = vadd.f32 0.0, %v7909
        %v7911 = vpop.f32.mrb[0].mxu0
        %v7912 = vpop.f32.mrb[0].mxu0
        %v7913 = vadd.f32 0.0, %v7912
        %v7914 = vpop.f32.mrb[0].mxu0
        %7915 = vmatprep.mubr.bf16.mxu0 0
        %7916 = vmatmul.mubr.bf16.gmra.mrb[0].mxu0 %v7806
        %v7917 = vpop.f32.mrb[0].mxu0
        %v7918 = vadd.f32 0.0, %v7917
        %v7919 = vpop.f32.mrb[0].mxu0
        %v7920 = vpop.f32.mrb[0].mxu0
        %v7921 = vadd.f32 0.0, %v7920
        %v7922 = vpop.f32.mrb[0].mxu0
        %7923 = vmatprep.mubr.bf16.mxu0 0
        %7924 = vmatmul.mubr.bf16.gmra.mrb[0].mxu0 %v7809
        %v7925 = vpop.f32.mrb[0].mxu0
        %v7926 = vadd.f32 0.0, %v7925
        %v7927 = vpop.f32.mrb[0].mxu0
        %v7928 = vpop.f32.mrb[0].mxu0
        %v7929 = vadd.f32 0.0, %v7928
        %v7930 = vpop.f32.mrb[0].mxu0
        %7931 = vmatprep.mubr.bf16.mxu0 0
        %7932 = vmatmul.mubr.bf16.gmra.mrb[0].mxu0 %v7812
        %v7933 = vpop.f32.mrb[0].mxu0
        %v7934 = vadd.f32 0.0, %v7933
        %v7935 = vpop.f32.mrb[0].mxu0
        %v7936 = vpop.f32.mrb[0].mxu0
        %v7937 = vadd.f32 0.0, %v7936
        %v7938 = vpop.f32.mrb[0].mxu0
        %7939 = vmatprep.mubr.bf16.mxu0 0
        %7940 = vmatmul.mubr.bf16.gmra.mrb[0].mxu0 %v7815
        %v7941 = vpop.f32.mrb[0].mxu0
        %v7942 = vadd.f32 0.0, %v7941
        %v7943 = vpop.f32.mrb[0].mxu0
        %v7944 = vpop.f32.mrb[0].mxu0
        %v7945 = vadd.f32 0.0, %v7944
        %v7946 = vpop.f32.mrb[0].mxu0
        %7947 = vmatprep.mubr.bf16.mxu0 0
        %7948 = vmatmul.mubr.bf16.gmra.mrb[0].mxu0 %v7818
        %v7949 = vpop.f32.mrb[0].mxu0
        %v7950 = vadd.f32 0.0, %v7949
        %v7951 = vpop.f32.mrb[0].mxu0
        %v7952 = vpop.f32.mrb[0].mxu0
        %v7953 = vadd.f32 0.0, %v7952
        %v7954 = vpop.f32.mrb[0].mxu0
        %7955 = vmatprep.mubr.bf16.mxu0 0
        %7956 = vmatmul.mubr.bf16.gmra.mrb[0].mxu0 %v7821
        %v7957 = vpop.f32.mrb[0].mxu0
        %v7958 = vadd.f32 0.0, %v7957
        %v7959 = vpop.f32.mrb[0].mxu0
        %v7960 = vpop.f32.mrb[0].mxu0
        %v7961 = vadd.f32 0.0, %v7960
        %v7962 = vpop.f32.mrb[0].mxu0
        %7963 = vmatprep.mubr.bf16.mxu0 0
        %7964 = vmatmul.mubr.bf16.gmra.mrb[0].mxu0 %v7824
        %v7965 = vpop.f32.mrb[0].mxu0
        %v7966 = vadd.f32 0.0, %v7965
        %v7967 = vpop.f32.mrb[0].mxu0
        %v7968 = vpop.f32.mrb[0].mxu0
        %v7969 = vadd.f32 0.0, %v7968
        %v7970 = vpop.f32.mrb[0].mxu0
        %7971 = vmatprep.mubr.bf16.mxu0 0
        %7972 = vmatmul.mubr.bf16.gmra.mrb[0].mxu0 %v7827
        %v7973 = vpop.f32.mrb[0].mxu0
        %v7974 = vadd.f32 0.0, %v7973
        %v7975 = vpop.f32.mrb[0].mxu0
        %v7976 = vpop.f32.mrb[0].mxu0
        %v7977 = vadd.f32 0.0, %v7976
        %v7978 = vpop.f32.mrb[0].mxu0
        %7979 = vmatprep.mubr.bf16.mxu0 0
        %7980 = vmatmul.mubr.bf16.gmra.mrb[0].mxu0 %v7830
        %v7981 = vpop.f32.mrb[0].mxu0
        %v7982 = vadd.f32 0.0, %v7981
        %v7983 = vpop.f32.mrb[0].mxu0
        %v7984 = vpop.f32.mrb[0].mxu0
        %v7985 = vadd.f32 0.0, %v7984
        %v7986 = vpop.f32.mrb[0].mxu0
        %7987 = vmatprep.mubr.bf16.mxu0 0
        %7988 = vmatmul.mubr.bf16.gmra.mrb[0].mxu0 %v7833
        %v7989 = vpop.f32.mrb[0].mxu0
        %v7990 = vadd.f32 0.0, %v7989
        %v7991 = vpop.f32.mrb[0].mxu0
        %v7992 = vpop.f32.mrb[0].mxu0
        %v7993 = vadd.f32 0.0, %v7992
        %v7994 = vpop.f32.mrb[0].mxu0
        %7995 = vdwg.mxu0
        %v7996 = vadd.f32 %v7642, %v7870
        %v7997 = vadd.f32 %v7643, %v7873
        %v7998 = vadd.f32 %v7644, %v7878
        %v7999 = vadd.f32 %v7645, %v7881
        %v8000 = vadd.f32 %v7646, %v7886
        %v8001 = vadd.f32 %v7647, %v7889
        %v8002 = vadd.f32 %v7648, %v7894
        %v8003 = vadd.f32 %v7649, %v7897
        %v8004 = vadd.f32 %v7650, %v7902
        %v8005 = vadd.f32 %v7651, %v7905
        %v8006 = vadd.f32 %v7652, %v7910
        %v8007 = vadd.f32 %v7653, %v7913
        %v8008 = vadd.f32 %v7654, %v7918
        %v8009 = vadd.f32 %v7655, %v7921
        %v8010 = vadd.f32 %v7656, %v7926
        %v8011 = vadd.f32 %v7657, %v7929
        %v8012 = vadd.f32 %v7658, %v7934
        %v8013 = vadd.f32 %v7659, %v7937
        %v8014 = vadd.f32 %v7660, %v7942
        %v8015 = vadd.f32 %v7661, %v7945
        %v8016 = vadd.f32 %v7662, %v7950
        %v8017 = vadd.f32 %v7663, %v7953
        %v8018 = vadd.f32 %v7664, %v7958
        %v8019 = vadd.f32 %v7665, %v7961
        %v8020 = vadd.f32 %v7666, %v7966
        %v8021 = vadd.f32 %v7667, %v7969
        %v8022 = vadd.f32 %v7668, %v7974
        %v8023 = vadd.f32 %v7669, %v7977
        %v8024 = vadd.f32 %v7670, %v7982
        %v8025 = vadd.f32 %v7671, %v7985
        %v8026 = vadd.f32 %v7672, %v7990
        %v8027 = vadd.f32 %v7673, %v7993
        %v8028 = vld [vmem:[#allocation3 + $0x28] sm:$0xff]
        %v8029 = vld [vmem:[#allocation3 + $0x30] sm:$0xff]
        %v8030 = vld [vmem:[#allocation3 + $0x38] sm:$0xff]
        %v8031 = vld [vmem:[#allocation3 + $0x40] sm:$0xff]
        %v8032 = vld [vmem:[#allocation3 + $0x48] sm:$0xff]
        %v8033 = vld [vmem:[#allocation3 + $0x50] sm:$0xff]
        %v8034 = vld [vmem:[#allocation3 + $0x58] sm:$0xff]
        %v8035 = vld [vmem:[#allocation3 + $0x60] sm:$0xff]
        %v8036 = vld [vmem:[#allocation3 + $0x68] sm:$0xff]
        %v8037 = vld [vmem:[#allocation3 + $0x70] sm:$0xff]
        %v8038 = vld [vmem:[#allocation3 + $0x78] sm:$0xff]
        %v8039 = vld [vmem:[#allocation3 + $0x80] sm:$0xff]
        %v8040 = vld [vmem:[#allocation3 + $0x88] sm:$0xff]
        %v8041 = vld [vmem:[#allocation3 + $0x90] sm:$0xff]
        %v8042 = vld [vmem:[#allocation3 + $0x98] sm:$0xff]
        %v8043 = vld [vmem:[#allocation3 + $0xa0] sm:$0xff]
        %v8044 = vld [vmem:[#allocation3 + $0xa8] sm:$0xff]
        %v8045 = vld [vmem:[#allocation3 + $0xb0] sm:$0xff]
        %v8046 = vld [vmem:[#allocation3 + $0xb8] sm:$0xff]
        %v8047 = vld [vmem:[#allocation3 + $0xc0] sm:$0xff]
        %v8048 = vld [vmem:[#allocation3 + $0xc8] sm:$0xff]
        %v8049 = vld [vmem:[#allocation3 + $0xd0] sm:$0xff]
        %v8050 = vld [vmem:[#allocation3 + $0xd8] sm:$0xff]
        %v8051 = vld [vmem:[#allocation3 + $0xe0] sm:$0xff]
        %v8052 = vld [vmem:[#allocation3 + $0xe8] sm:$0xff]
        %v8053 = vld [vmem:[#allocation3 + $0xf0] sm:$0xff]
        %v8054 = vld [vmem:[#allocation3 + $0xf8] sm:$0xff]
        %v8055 = vld [vmem:[#allocation3 + $0x100] sm:$0xff]
        %v8056 = vld [vmem:[#allocation3 + $0x108] sm:$0xff]
        %v8057 = vld [vmem:[#allocation3 + $0x110] sm:$0xff]
        %v8058 = vld [vmem:[#allocation3 + $0x118] sm:$0xff]
        %v8059 = vld [vmem:[#allocation3 + $0x120] sm:$0xff]
        %v8060 = vpack.c.bf16 %v8029, %v8028
        %v8061 = vpack.c.bf16 %v8031, %v8030
        %v8062 = vpack.c.bf16 %v8033, %v8032
        %v8063 = vpack.c.bf16 %v8035, %v8034
        %v8064 = vpack.c.bf16 %v8037, %v8036
        %v8065 = vpack.c.bf16 %v8039, %v8038
        %v8066 = vpack.c.bf16 %v8041, %v8040
        %v8067 = vpack.c.bf16 %v8043, %v8042
        %v8068 = vpack.c.bf16 %v8045, %v8044
        %v8069 = vpack.c.bf16 %v8047, %v8046
        %v8070 = vpack.c.bf16 %v8049, %v8048
        %v8071 = vpack.c.bf16 %v8051, %v8050
        %v8072 = vpack.c.bf16 %v8053, %v8052
        %v8073 = vpack.c.bf16 %v8055, %v8054
        %v8074 = vpack.c.bf16 %v8057, %v8056
        %v8075 = vpack.c.bf16 %v8059, %v8058
        %s8076 = scalar_lea.vmem [#allocation12], 224
        %v8077 = vld [vmem:[%s8076] sm:$0xf]
        %v8078 = vld [vmem:[%s8076 + $0x4] sm:$0xf]
        %v8079 = vld [vmem:[%s8076 + $0x8] sm:$0xf]
        %v8080 = vld [vmem:[%s8076 + $0xc] sm:$0xf]
        %v8081 = vld [vmem:[%s8076 + $0x10] sm:$0xf]
        %v8082 = vld [vmem:[%s8076 + $0x14] sm:$0xf]
        %v8083 = vld [vmem:[%s8076 + $0x18] sm:$0xf]
        %v8084 = vld [vmem:[%s8076 + $0x1c] sm:$0xf]
        %v8093 = vunpack.c.l.b16 %v8077
        %v8094 = vunpack.c.l.b16 %v8078
        %v8095 = vunpack.c.l.b16 %v8079
        %v8096 = vunpack.c.l.b16 %v8080
        %v8097 = vunpack.c.l.b16 %v8081
        %v8098 = vunpack.c.l.b16 %v8082
        %v8099 = vunpack.c.l.b16 %v8083
        %v8100 = vunpack.c.l.b16 %v8084
        %v8101 = vpack.c.b16 %v8094, %v8093
        %v8102 = vpack.c.b16 %v8096, %v8095
        %v8103 = vpack.c.b16 %v8098, %v8097
        %v8104 = vpack.c.b16 %v8100, %v8099
        %v8110 = vsel %vm4742, %v8060, 0
        %v8113 = vsel %vm4742, %v8061, 0
        %v8116 = vsel %vm4742, %v8062, 0
        %v8119 = vsel %vm4742, %v8063, 0
        %v8122 = vsel %vm4742, %v8064, 0
        %v8125 = vsel %vm4742, %v8065, 0
        %v8128 = vsel %vm4742, %v8066, 0
        %v8131 = vsel %vm4742, %v8067, 0
        %v8134 = vsel %vm4742, %v8068, 0
        %v8137 = vsel %vm4742, %v8069, 0
        %v8140 = vsel %vm4742, %v8070, 0
        %v8143 = vsel %vm4742, %v8071, 0
        %v8146 = vsel %vm4742, %v8072, 0
        %v8149 = vsel %vm4742, %v8073, 0
        %v8152 = vsel %vm4742, %v8074, 0
        %v8155 = vsel %vm4742, %v8075, 0
        %8157 = vmatprep.subr.bf16.mxu0 0
        %8158 = vmatpush1.bf16.msra.mxu0 %v8101
        %8159 = vmatprep.subr.bf16.mxu0 0
        %8160 = vmatpush1.bf16.msra.mxu0 %v8102
        %8161 = vmatprep.subr.bf16.mxu0 0
        %8162 = vmatpush1.bf16.msra.mxu0 %v8103
        %8163 = vmatprep.subr.bf16.mxu0 0
        %8164 = vmatpush1.bf16.msra.mxu0 %v8104
        %8165 = vmatprep.subr.bf16.mxu0 0
        %8166 = vmatpush1.bf16.msra.mxu0 0
        %8167 = vmatprep.subr.bf16.mxu0 0
        %8168 = vmatpush1.bf16.msra.mxu0 0
        %8169 = vmatprep.subr.bf16.mxu0 0
        %8170 = vmatpush1.bf16.msra.mxu0 0
        %8171 = vmatprep.subr.bf16.mxu0 0
        %8172 = vmatpush1.bf16.msra.mxu0 0
        %8173 = vmatprep.subr.bf16.mxu0 0
        %8174 = vmatpush1.bf16.msra.mxu0 0
        %8175 = vmatprep.subr.bf16.mxu0 0
        %8176 = vmatpush1.bf16.msra.mxu0 0
        %8177 = vmatprep.subr.bf16.mxu0 0
        %8178 = vmatpush1.bf16.msra.mxu0 0
        %8179 = vmatprep.subr.bf16.mxu0 0
        %8180 = vmatpush1.bf16.msra.mxu0 0
        %8181 = vmatprep.subr.bf16.mxu0 0
        %8182 = vmatpush1.bf16.msra.mxu0 0
        %8183 = vmatprep.subr.bf16.mxu0 0
        %8184 = vmatpush1.bf16.msra.mxu0 0
        %8185 = vmatprep.subr.bf16.mxu0 0
        %8186 = vmatpush1.bf16.msra.mxu0 0
        %8187 = vmatprep.subr.bf16.mxu0 0
        %8188 = vmatpush1.bf16.msra.mxu0 0
        %8189 = vmatprep.mubr.bf16.mxu0 0
        %8190 = vmatmul.mubr.bf16.gmra.mrb[0].mxu0 %v8110
        %v8191 = vpop.f32.mrb[0].mxu0
        %v8192 = vadd.f32 0.0, %v8191
        %v8193 = vpop.f32.mrb[0].mxu0
        %v8194 = vpop.f32.mrb[0].mxu0
        %v8195 = vadd.f32 0.0, %v8194
        %v8196 = vpop.f32.mrb[0].mxu0
        %8197 = vmatprep.mubr.bf16.mxu0 0
        %8198 = vmatmul.mubr.bf16.gmra.mrb[0].mxu0 %v8113
        %v8199 = vpop.f32.mrb[0].mxu0
        %v8200 = vadd.f32 0.0, %v8199
        %v8201 = vpop.f32.mrb[0].mxu0
        %v8202 = vpop.f32.mrb[0].mxu0
        %v8203 = vadd.f32 0.0, %v8202
        %v8204 = vpop.f32.mrb[0].mxu0
        %8205 = vmatprep.mubr.bf16.mxu0 0
        %8206 = vmatmul.mubr.bf16.gmra.mrb[0].mxu0 %v8116
        %v8207 = vpop.f32.mrb[0].mxu0
        %v8208 = vadd.f32 0.0, %v8207
        %v8209 = vpop.f32.mrb[0].mxu0
        %v8210 = vpop.f32.mrb[0].mxu0
        %v8211 = vadd.f32 0.0, %v8210
        %v8212 = vpop.f32.mrb[0].mxu0
        %8213 = vmatprep.mubr.bf16.mxu0 0
        %8214 = vmatmul.mubr.bf16.gmra.mrb[0].mxu0 %v8119
        %v8215 = vpop.f32.mrb[0].mxu0
        %v8216 = vadd.f32 0.0, %v8215
        %v8217 = vpop.f32.mrb[0].mxu0
        %v8218 = vpop.f32.mrb[0].mxu0
        %v8219 = vadd.f32 0.0, %v8218
        %v8220 = vpop.f32.mrb[0].mxu0
        %8221 = vmatprep.mubr.bf16.mxu0 0
        %8222 = vmatmul.mubr.bf16.gmra.mrb[0].mxu0 %v8122
        %v8223 = vpop.f32.mrb[0].mxu0
        %v8224 = vadd.f32 0.0, %v8223
        %v8225 = vpop.f32.mrb[0].mxu0
        %v8226 = vpop.f32.mrb[0].mxu0
        %v8227 = vadd.f32 0.0, %v8226
        %v8228 = vpop.f32.mrb[0].mxu0
        %8229 = vmatprep.mubr.bf16.mxu0 0
        %8230 = vmatmul.mubr.bf16.gmra.mrb[0].mxu0 %v8125
        %v8231 = vpop.f32.mrb[0].mxu0
        %v8232 = vadd.f32 0.0, %v8231
        %v8233 = vpop.f32.mrb[0].mxu0
        %v8234 = vpop.f32.mrb[0].mxu0
        %v8235 = vadd.f32 0.0, %v8234
        %v8236 = vpop.f32.mrb[0].mxu0
        %8237 = vmatprep.mubr.bf16.mxu0 0
        %8238 = vmatmul.mubr.bf16.gmra.mrb[0].mxu0 %v8128
        %v8239 = vpop.f32.mrb[0].mxu0
        %v8240 = vadd.f32 0.0, %v8239
        %v8241 = vpop.f32.mrb[0].mxu0
        %v8242 = vpop.f32.mrb[0].mxu0
        %v8243 = vadd.f32 0.0, %v8242
        %v8244 = vpop.f32.mrb[0].mxu0
        %8245 = vmatprep.mubr.bf16.mxu0 0
        %8246 = vmatmul.mubr.bf16.gmra.mrb[0].mxu0 %v8131
        %v8247 = vpop.f32.mrb[0].mxu0
        %v8248 = vadd.f32 0.0, %v8247
        %v8249 = vpop.f32.mrb[0].mxu0
        %v8250 = vpop.f32.mrb[0].mxu0
        %v8251 = vadd.f32 0.0, %v8250
        %v8252 = vpop.f32.mrb[0].mxu0
        %8253 = vmatprep.mubr.bf16.mxu0 0
        %8254 = vmatmul.mubr.bf16.gmra.mrb[0].mxu0 %v8134
        %v8255 = vpop.f32.mrb[0].mxu0
        %v8256 = vadd.f32 0.0, %v8255
        %v8257 = vpop.f32.mrb[0].mxu0
        %v8258 = vpop.f32.mrb[0].mxu0
        %v8259 = vadd.f32 0.0, %v8258
        %v8260 = vpop.f32.mrb[0].mxu0
        %8261 = vmatprep.mubr.bf16.mxu0 0
        %8262 = vmatmul.mubr.bf16.gmra.mrb[0].mxu0 %v8137
        %v8263 = vpop.f32.mrb[0].mxu0
        %v8264 = vadd.f32 0.0, %v8263
        %v8265 = vpop.f32.mrb[0].mxu0
        %v8266 = vpop.f32.mrb[0].mxu0
        %v8267 = vadd.f32 0.0, %v8266
        %v8268 = vpop.f32.mrb[0].mxu0
        %8269 = vmatprep.mubr.bf16.mxu0 0
        %8270 = vmatmul.mubr.bf16.gmra.mrb[0].mxu0 %v8140
        %v8271 = vpop.f32.mrb[0].mxu0
        %v8272 = vadd.f32 0.0, %v8271
        %v8273 = vpop.f32.mrb[0].mxu0
        %v8274 = vpop.f32.mrb[0].mxu0
        %v8275 = vadd.f32 0.0, %v8274
        %v8276 = vpop.f32.mrb[0].mxu0
        %8277 = vmatprep.mubr.bf16.mxu0 0
        %8278 = vmatmul.mubr.bf16.gmra.mrb[0].mxu0 %v8143
        %v8279 = vpop.f32.mrb[0].mxu0
        %v8280 = vadd.f32 0.0, %v8279
        %v8281 = vpop.f32.mrb[0].mxu0
        %v8282 = vpop.f32.mrb[0].mxu0
        %v8283 = vadd.f32 0.0, %v8282
        %v8284 = vpop.f32.mrb[0].mxu0
        %8285 = vmatprep.mubr.bf16.mxu0 0
        %8286 = vmatmul.mubr.bf16.gmra.mrb[0].mxu0 %v8146
        %v8287 = vpop.f32.mrb[0].mxu0
        %v8288 = vadd.f32 0.0, %v8287
        %v8289 = vpop.f32.mrb[0].mxu0
        %v8290 = vpop.f32.mrb[0].mxu0
        %v8291 = vadd.f32 0.0, %v8290
        %v8292 = vpop.f32.mrb[0].mxu0
        %8293 = vmatprep.mubr.bf16.mxu0 0
        %8294 = vmatmul.mubr.bf16.gmra.mrb[0].mxu0 %v8149
        %v8295 = vpop.f32.mrb[0].mxu0
        %v8296 = vadd.f32 0.0, %v8295
        %v8297 = vpop.f32.mrb[0].mxu0
        %v8298 = vpop.f32.mrb[0].mxu0
        %v8299 = vadd.f32 0.0, %v8298
        %v8300 = vpop.f32.mrb[0].mxu0
        %8301 = vmatprep.mubr.bf16.mxu0 0
        %8302 = vmatmul.mubr.bf16.gmra.mrb[0].mxu0 %v8152
        %v8303 = vpop.f32.mrb[0].mxu0
        %v8304 = vadd.f32 0.0, %v8303
        %v8305 = vpop.f32.mrb[0].mxu0
        %v8306 = vpop.f32.mrb[0].mxu0
        %v8307 = vadd.f32 0.0, %v8306
        %v8308 = vpop.f32.mrb[0].mxu0
        %8309 = vmatprep.mubr.bf16.mxu0 0
        %8310 = vmatmul.mubr.bf16.gmra.mrb[0].mxu0 %v8155
        %v8311 = vpop.f32.mrb[0].mxu0
        %v8312 = vadd.f32 0.0, %v8311
        %v8313 = vpop.f32.mrb[0].mxu0
        %v8314 = vpop.f32.mrb[0].mxu0
        %v8315 = vadd.f32 0.0, %v8314
        %v8316 = vpop.f32.mrb[0].mxu0
        %8317 = vdwg.mxu0
        %v8318 = vadd.f32 %v7996, %v8192
        %v8319 = vadd.f32 %v7997, %v8195
        %v8320 = vadd.f32 %v7998, %v8200
        %v8321 = vadd.f32 %v7999, %v8203
        %v8322 = vadd.f32 %v8000, %v8208
        %v8323 = vadd.f32 %v8001, %v8211
        %v8324 = vadd.f32 %v8002, %v8216
        %v8325 = vadd.f32 %v8003, %v8219
        %v8326 = vadd.f32 %v8004, %v8224
        %v8327 = vadd.f32 %v8005, %v8227
        %v8328 = vadd.f32 %v8006, %v8232
        %v8329 = vadd.f32 %v8007, %v8235
        %v8330 = vadd.f32 %v8008, %v8240
        %v8331 = vadd.f32 %v8009, %v8243
        %v8332 = vadd.f32 %v8010, %v8248
        %v8333 = vadd.f32 %v8011, %v8251
        %v8334 = vadd.f32 %v8012, %v8256
        %v8335 = vadd.f32 %v8013, %v8259
        %v8336 = vadd.f32 %v8014, %v8264
        %v8337 = vadd.f32 %v8015, %v8267
        %v8338 = vadd.f32 %v8016, %v8272
        %v8339 = vadd.f32 %v8017, %v8275
        %v8340 = vadd.f32 %v8018, %v8280
        %v8341 = vadd.f32 %v8019, %v8283
        %v8342 = vadd.f32 %v8020, %v8288
        %v8343 = vadd.f32 %v8021, %v8291
        %v8344 = vadd.f32 %v8022, %v8296
        %v8345 = vadd.f32 %v8023, %v8299
        %v8346 = vadd.f32 %v8024, %v8304
        %v8347 = vadd.f32 %v8025, %v8307
        %v8348 = vadd.f32 %v8026, %v8312
        %v8349 = vadd.f32 %v8027, %v8315
        %v8350 = vld [vmem:[#allocation3 + $0x29] sm:$0xff]
        %v8351 = vld [vmem:[#allocation3 + $0x31] sm:$0xff]
        %v8352 = vld [vmem:[#allocation3 + $0x39] sm:$0xff]
        %v8353 = vld [vmem:[#allocation3 + $0x41] sm:$0xff]
        %v8354 = vld [vmem:[#allocation3 + $0x49] sm:$0xff]
        %v8355 = vld [vmem:[#allocation3 + $0x51] sm:$0xff]
        %v8356 = vld [vmem:[#allocation3 + $0x59] sm:$0xff]
        %v8357 = vld [vmem:[#allocation3 + $0x61] sm:$0xff]
        %v8358 = vld [vmem:[#allocation3 + $0x69] sm:$0xff]
        %v8359 = vld [vmem:[#allocation3 + $0x71] sm:$0xff]
        %v8360 = vld [vmem:[#allocation3 + $0x79] sm:$0xff]
        %v8361 = vld [vmem:[#allocation3 + $0x81] sm:$0xff]
        %v8362 = vld [vmem:[#allocation3 + $0x89] sm:$0xff]
        %v8363 = vld [vmem:[#allocation3 + $0x91] sm:$0xff]
        %v8364 = vld [vmem:[#allocation3 + $0x99] sm:$0xff]
        %v8365 = vld [vmem:[#allocation3 + $0xa1] sm:$0xff]
        %v8366 = vld [vmem:[#allocation3 + $0xa9] sm:$0xff]
        %v8367 = vld [vmem:[#allocation3 + $0xb1] sm:$0xff]
        %v8368 = vld [vmem:[#allocation3 + $0xb9] sm:$0xff]
        %v8369 = vld [vmem:[#allocation3 + $0xc1] sm:$0xff]
        %v8370 = vld [vmem:[#allocation3 + $0xc9] sm:$0xff]
        %v8371 = vld [vmem:[#allocation3 + $0xd1] sm:$0xff]
        %v8372 = vld [vmem:[#allocation3 + $0xd9] sm:$0xff]
        %v8373 = vld [vmem:[#allocation3 + $0xe1] sm:$0xff]
        %v8374 = vld [vmem:[#allocation3 + $0xe9] sm:$0xff]
        %v8375 = vld [vmem:[#allocation3 + $0xf1] sm:$0xff]
        %v8376 = vld [vmem:[#allocation3 + $0xf9] sm:$0xff]
        %v8377 = vld [vmem:[#allocation3 + $0x101] sm:$0xff]
        %v8378 = vld [vmem:[#allocation3 + $0x109] sm:$0xff]
        %v8379 = vld [vmem:[#allocation3 + $0x111] sm:$0xff]
        %v8380 = vld [vmem:[#allocation3 + $0x119] sm:$0xff]
        %v8381 = vld [vmem:[#allocation3 + $0x121] sm:$0xff]
        %v8382 = vsel %vm2391, %v8350, 0.0
        %v8383 = vsel %vm2392, %v8351, 0.0
        %v8384 = vsel %vm2393, %v8352, 0.0
        %v8385 = vsel %vm2394, %v8353, 0.0
        %v8386 = vsel %vm2395, %v8354, 0.0
        %v8387 = vsel %vm2396, %v8355, 0.0
        %v8388 = vsel %vm2397, %v8356, 0.0
        %v8389 = vsel %vm2398, %v8357, 0.0
        %v8390 = vsel %vm2399, %v8358, 0.0
        %v8391 = vsel %vm2400, %v8359, 0.0
        %v8392 = vsel %vm2401, %v8360, 0.0
        %v8393 = vsel %vm2402, %v8361, 0.0
        %v8394 = vsel %vm2403, %v8362, 0.0
        %v8395 = vsel %vm2404, %v8363, 0.0
        %v8396 = vsel %vm2405, %v8364, 0.0
        %v8397 = vsel %vm2406, %v8365, 0.0
        %v8398 = vsel %vm2407, %v8366, 0.0
        %v8399 = vsel %vm2408, %v8367, 0.0
        %v8400 = vsel %vm2409, %v8368, 0.0
        %v8401 = vsel %vm2410, %v8369, 0.0
        %v8402 = vsel %vm2411, %v8370, 0.0
        %v8403 = vsel %vm2412, %v8371, 0.0
        %v8404 = vsel %vm2413, %v8372, 0.0
        %v8405 = vsel %vm2414, %v8373, 0.0
        %v8406 = vsel %vm2415, %v8374, 0.0
        %v8407 = vsel %vm2416, %v8375, 0.0
        %v8408 = vsel %vm2417, %v8376, 0.0
        %v8409 = vsel %vm2418, %v8377, 0.0
        %v8410 = vsel %vm2419, %v8378, 0.0
        %v8411 = vsel %vm2420, %v8379, 0.0
        %v8412 = vsel %vm2421, %v8380, 0.0
        %v8413 = vsel %vm2422, %v8381, 0.0
        %v8414 = vpack.c.bf16 %v8383, %v8382
        %v8415 = vpack.c.bf16 %v8385, %v8384
        %v8416 = vpack.c.bf16 %v8387, %v8386
        %v8417 = vpack.c.bf16 %v8389, %v8388
        %v8418 = vpack.c.bf16 %v8391, %v8390
        %v8419 = vpack.c.bf16 %v8393, %v8392
        %v8420 = vpack.c.bf16 %v8395, %v8394
        %v8421 = vpack.c.bf16 %v8397, %v8396
        %v8422 = vpack.c.bf16 %v8399, %v8398
        %v8423 = vpack.c.bf16 %v8401, %v8400
        %v8424 = vpack.c.bf16 %v8403, %v8402
        %v8425 = vpack.c.bf16 %v8405, %v8404
        %v8426 = vpack.c.bf16 %v8407, %v8406
        %v8427 = vpack.c.bf16 %v8409, %v8408
        %v8428 = vpack.c.bf16 %v8411, %v8410
        %v8429 = vpack.c.bf16 %v8413, %v8412
        %s8430 = scalar_lea.vmem [#allocation12], 256
        %v8431 = vld [vmem:[%s8430] sm:$0xf]
        %v8432 = vld [vmem:[%s8430 + $0x4] sm:$0xf]
        %v8433 = vld [vmem:[%s8430 + $0x8] sm:$0xf]
        %v8434 = vld [vmem:[%s8430 + $0xc] sm:$0xf]
        %v8435 = vld [vmem:[%s8430 + $0x10] sm:$0xf]
        %v8436 = vld [vmem:[%s8430 + $0x14] sm:$0xf]
        %v8437 = vld [vmem:[%s8430 + $0x18] sm:$0xf]
        %v8438 = vld [vmem:[%s8430 + $0x1c] sm:$0xf]
        %v8447 = vunpack.c.l.b16 %v8431
        %v8448 = vunpack.c.l.b16 %v8432
        %v8449 = vunpack.c.l.b16 %v8433
        %v8450 = vunpack.c.l.b16 %v8434
        %v8451 = vunpack.c.l.b16 %v8435
        %v8452 = vunpack.c.l.b16 %v8436
        %v8453 = vunpack.c.l.b16 %v8437
        %v8454 = vunpack.c.l.b16 %v8438
        %v8455 = vpack.c.b16 %v8448, %v8447
        %v8456 = vpack.c.b16 %v8450, %v8449
        %v8457 = vpack.c.b16 %v8452, %v8451
        %v8458 = vpack.c.b16 %v8454, %v8453
        %v8464 = vsel %vm4742, %v8414, 0
        %v8467 = vsel %vm4742, %v8415, 0
        %v8470 = vsel %vm4742, %v8416, 0
        %v8473 = vsel %vm4742, %v8417, 0
        %v8476 = vsel %vm4742, %v8418, 0
        %v8479 = vsel %vm4742, %v8419, 0
        %v8482 = vsel %vm4742, %v8420, 0
        %v8485 = vsel %vm4742, %v8421, 0
        %v8488 = vsel %vm4742, %v8422, 0
        %v8491 = vsel %vm4742, %v8423, 0
        %v8494 = vsel %vm4742, %v8424, 0
        %v8497 = vsel %vm4742, %v8425, 0
        %v8500 = vsel %vm4742, %v8426, 0
        %v8503 = vsel %vm4742, %v8427, 0
        %v8506 = vsel %vm4742, %v8428, 0
        %v8509 = vsel %vm4742, %v8429, 0
        %8511 = vmatprep.subr.bf16.mxu0 0
        %8512 = vmatpush1.bf16.msra.mxu0 %v8455
        %8513 = vmatprep.subr.bf16.mxu0 0
        %8514 = vmatpush1.bf16.msra.mxu0 %v8456
        %8515 = vmatprep.subr.bf16.mxu0 0
        %8516 = vmatpush1.bf16.msra.mxu0 %v8457
        %8517 = vmatprep.subr.bf16.mxu0 0
        %8518 = vmatpush1.bf16.msra.mxu0 %v8458
        %8519 = vmatprep.subr.bf16.mxu0 0
        %8520 = vmatpush1.bf16.msra.mxu0 0
        %8521 = vmatprep.subr.bf16.mxu0 0
        %8522 = vmatpush1.bf16.msra.mxu0 0
        %8523 = vmatprep.subr.bf16.mxu0 0
        %8524 = vmatpush1.bf16.msra.mxu0 0
        %8525 = vmatprep.subr.bf16.mxu0 0
        %8526 = vmatpush1.bf16.msra.mxu0 0
        %8527 = vmatprep.subr.bf16.mxu0 0
        %8528 = vmatpush1.bf16.msra.mxu0 0
        %8529 = vmatprep.subr.bf16.mxu0 0
        %8530 = vmatpush1.bf16.msra.mxu0 0
        %8531 = vmatprep.subr.bf16.mxu0 0
        %8532 = vmatpush1.bf16.msra.mxu0 0
        %8533 = vmatprep.subr.bf16.mxu0 0
        %8534 = vmatpush1.bf16.msra.mxu0 0
        %8535 = vmatprep.subr.bf16.mxu0 0
        %8536 = vmatpush1.bf16.msra.mxu0 0
        %8537 = vmatprep.subr.bf16.mxu0 0
        %8538 = vmatpush1.bf16.msra.mxu0 0
        %8539 = vmatprep.subr.bf16.mxu0 0
        %8540 = vmatpush1.bf16.msra.mxu0 0
        %8541 = vmatprep.subr.bf16.mxu0 0
        %8542 = vmatpush1.bf16.msra.mxu0 0
        %8543 = vmatprep.mubr.bf16.mxu0 0
        %8544 = vmatmul.mubr.bf16.gmra.mrb[0].mxu0 %v8464
        %v8545 = vpop.f32.mrb[0].mxu0
        %v8546 = vadd.f32 0.0, %v8545
        %v8547 = vpop.f32.mrb[0].mxu0
        %v8548 = vpop.f32.mrb[0].mxu0
        %v8549 = vadd.f32 0.0, %v8548
        %v8550 = vpop.f32.mrb[0].mxu0
        %8551 = vmatprep.mubr.bf16.mxu0 0
        %8552 = vmatmul.mubr.bf16.gmra.mrb[0].mxu0 %v8467
        %v8553 = vpop.f32.mrb[0].mxu0
        %v8554 = vadd.f32 0.0, %v8553
        %v8555 = vpop.f32.mrb[0].mxu0
        %v8556 = vpop.f32.mrb[0].mxu0
        %v8557 = vadd.f32 0.0, %v8556
        %v8558 = vpop.f32.mrb[0].mxu0
        %8559 = vmatprep.mubr.bf16.mxu0 0
        %8560 = vmatmul.mubr.bf16.gmra.mrb[0].mxu0 %v8470
        %v8561 = vpop.f32.mrb[0].mxu0
        %v8562 = vadd.f32 0.0, %v8561
        %v8563 = vpop.f32.mrb[0].mxu0
        %v8564 = vpop.f32.mrb[0].mxu0
        %v8565 = vadd.f32 0.0, %v8564
        %v8566 = vpop.f32.mrb[0].mxu0
        %8567 = vmatprep.mubr.bf16.mxu0 0
        %8568 = vmatmul.mubr.bf16.gmra.mrb[0].mxu0 %v8473
        %v8569 = vpop.f32.mrb[0].mxu0
        %v8570 = vadd.f32 0.0, %v8569
        %v8571 = vpop.f32.mrb[0].mxu0
        %v8572 = vpop.f32.mrb[0].mxu0
        %v8573 = vadd.f32 0.0, %v8572
        %v8574 = vpop.f32.mrb[0].mxu0
        %8575 = vmatprep.mubr.bf16.mxu0 0
        %8576 = vmatmul.mubr.bf16.gmra.mrb[0].mxu0 %v8476
        %v8577 = vpop.f32.mrb[0].mxu0
        %v8578 = vadd.f32 0.0, %v8577
        %v8579 = vpop.f32.mrb[0].mxu0
        %v8580 = vpop.f32.mrb[0].mxu0
        %v8581 = vadd.f32 0.0, %v8580
        %v8582 = vpop.f32.mrb[0].mxu0
        %8583 = vmatprep.mubr.bf16.mxu0 0
        %8584 = vmatmul.mubr.bf16.gmra.mrb[0].mxu0 %v8479
        %v8585 = vpop.f32.mrb[0].mxu0
        %v8586 = vadd.f32 0.0, %v8585
        %v8587 = vpop.f32.mrb[0].mxu0
        %v8588 = vpop.f32.mrb[0].mxu0
        %v8589 = vadd.f32 0.0, %v8588
        %v8590 = vpop.f32.mrb[0].mxu0
        %8591 = vmatprep.mubr.bf16.mxu0 0
        %8592 = vmatmul.mubr.bf16.gmra.mrb[0].mxu0 %v8482
        %v8593 = vpop.f32.mrb[0].mxu0
        %v8594 = vadd.f32 0.0, %v8593
        %v8595 = vpop.f32.mrb[0].mxu0
        %v8596 = vpop.f32.mrb[0].mxu0
        %v8597 = vadd.f32 0.0, %v8596
        %v8598 = vpop.f32.mrb[0].mxu0
        %8599 = vmatprep.mubr.bf16.mxu0 0
        %8600 = vmatmul.mubr.bf16.gmra.mrb[0].mxu0 %v8485
        %v8601 = vpop.f32.mrb[0].mxu0
        %v8602 = vadd.f32 0.0, %v8601
        %v8603 = vpop.f32.mrb[0].mxu0
        %v8604 = vpop.f32.mrb[0].mxu0
        %v8605 = vadd.f32 0.0, %v8604
        %v8606 = vpop.f32.mrb[0].mxu0
        %8607 = vmatprep.mubr.bf16.mxu0 0
        %8608 = vmatmul.mubr.bf16.gmra.mrb[0].mxu0 %v8488
        %v8609 = vpop.f32.mrb[0].mxu0
        %v8610 = vadd.f32 0.0, %v8609
        %v8611 = vpop.f32.mrb[0].mxu0
        %v8612 = vpop.f32.mrb[0].mxu0
        %v8613 = vadd.f32 0.0, %v8612
        %v8614 = vpop.f32.mrb[0].mxu0
        %8615 = vmatprep.mubr.bf16.mxu0 0
        %8616 = vmatmul.mubr.bf16.gmra.mrb[0].mxu0 %v8491
        %v8617 = vpop.f32.mrb[0].mxu0
        %v8618 = vadd.f32 0.0, %v8617
        %v8619 = vpop.f32.mrb[0].mxu0
        %v8620 = vpop.f32.mrb[0].mxu0
        %v8621 = vadd.f32 0.0, %v8620
        %v8622 = vpop.f32.mrb[0].mxu0
        %8623 = vmatprep.mubr.bf16.mxu0 0
        %8624 = vmatmul.mubr.bf16.gmra.mrb[0].mxu0 %v8494
        %v8625 = vpop.f32.mrb[0].mxu0
        %v8626 = vadd.f32 0.0, %v8625
        %v8627 = vpop.f32.mrb[0].mxu0
        %v8628 = vpop.f32.mrb[0].mxu0
        %v8629 = vadd.f32 0.0, %v8628
        %v8630 = vpop.f32.mrb[0].mxu0
        %8631 = vmatprep.mubr.bf16.mxu0 0
        %8632 = vmatmul.mubr.bf16.gmra.mrb[0].mxu0 %v8497
        %v8633 = vpop.f32.mrb[0].mxu0
        %v8634 = vadd.f32 0.0, %v8633
        %v8635 = vpop.f32.mrb[0].mxu0
        %v8636 = vpop.f32.mrb[0].mxu0
        %v8637 = vadd.f32 0.0, %v8636
        %v8638 = vpop.f32.mrb[0].mxu0
        %8639 = vmatprep.mubr.bf16.mxu0 0
        %8640 = vmatmul.mubr.bf16.gmra.mrb[0].mxu0 %v8500
        %v8641 = vpop.f32.mrb[0].mxu0
        %v8642 = vadd.f32 0.0, %v8641
        %v8643 = vpop.f32.mrb[0].mxu0
        %v8644 = vpop.f32.mrb[0].mxu0
        %v8645 = vadd.f32 0.0, %v8644
        %v8646 = vpop.f32.mrb[0].mxu0
        %8647 = vmatprep.mubr.bf16.mxu0 0
        %8648 = vmatmul.mubr.bf16.gmra.mrb[0].mxu0 %v8503
        %v8649 = vpop.f32.mrb[0].mxu0
        %v8650 = vadd.f32 0.0, %v8649
        %v8651 = vpop.f32.mrb[0].mxu0
        %v8652 = vpop.f32.mrb[0].mxu0
        %v8653 = vadd.f32 0.0, %v8652
        %v8654 = vpop.f32.mrb[0].mxu0
        %8655 = vmatprep.mubr.bf16.mxu0 0
        %8656 = vmatmul.mubr.bf16.gmra.mrb[0].mxu0 %v8506
        %v8657 = vpop.f32.mrb[0].mxu0
        %v8658 = vadd.f32 0.0, %v8657
        %v8659 = vpop.f32.mrb[0].mxu0
        %v8660 = vpop.f32.mrb[0].mxu0
        %v8661 = vadd.f32 0.0, %v8660
        %v8662 = vpop.f32.mrb[0].mxu0
        %8663 = vmatprep.mubr.bf16.mxu0 0
        %8664 = vmatmul.mubr.bf16.gmra.mrb[0].mxu0 %v8509
        %v8665 = vpop.f32.mrb[0].mxu0
        %v8666 = vadd.f32 0.0, %v8665
        %v8667 = vpop.f32.mrb[0].mxu0
        %v8668 = vpop.f32.mrb[0].mxu0
        %v8669 = vadd.f32 0.0, %v8668
        %v8670 = vpop.f32.mrb[0].mxu0
        %8671 = vdwg.mxu0
        %v8672 = vadd.f32 %v8318, %v8546
        %v8673 = vadd.f32 %v8319, %v8549
        %v8674 = vadd.f32 %v8320, %v8554
        %v8675 = vadd.f32 %v8321, %v8557
        %v8676 = vadd.f32 %v8322, %v8562
        %v8677 = vadd.f32 %v8323, %v8565
        %v8678 = vadd.f32 %v8324, %v8570
        %v8679 = vadd.f32 %v8325, %v8573
        %v8680 = vadd.f32 %v8326, %v8578
        %v8681 = vadd.f32 %v8327, %v8581
        %v8682 = vadd.f32 %v8328, %v8586
        %v8683 = vadd.f32 %v8329, %v8589
        %v8684 = vadd.f32 %v8330, %v8594
        %v8685 = vadd.f32 %v8331, %v8597
        %v8686 = vadd.f32 %v8332, %v8602
        %v8687 = vadd.f32 %v8333, %v8605
        %v8688 = vadd.f32 %v8334, %v8610
        %v8689 = vadd.f32 %v8335, %v8613
        %v8690 = vadd.f32 %v8336, %v8618
        %v8691 = vadd.f32 %v8337, %v8621
        %v8692 = vadd.f32 %v8338, %v8626
        %v8693 = vadd.f32 %v8339, %v8629
        %v8694 = vadd.f32 %v8340, %v8634
        %v8695 = vadd.f32 %v8341, %v8637
        %v8696 = vadd.f32 %v8342, %v8642
        %v8697 = vadd.f32 %v8343, %v8645
        %v8698 = vadd.f32 %v8344, %v8650
        %v8699 = vadd.f32 %v8345, %v8653
        %v8700 = vadd.f32 %v8346, %v8658
        %v8701 = vadd.f32 %v8347, %v8661
        %v8702 = vadd.f32 %v8348, %v8666
        %v8703 = vadd.f32 %v8349, %v8669
        %v8704 = vld [vmem:[%s10] sm:$0x1]
        %v8706 = vlaneseq
        %v8707 = vshrl.u32 %v8706, 7
        %v8708 = vsub.s32 0, %v8707
        %v8709 = vrot.slane %v8704, %v8708
        %v8711 = vadd.f32 %v8672, %v8709
        %v8712 = vadd.f32 %v8673, %v8709
        %v8713 = vadd.f32 %v8674, %v8709
        %v8714 = vadd.f32 %v8675, %v8709
        %v8715 = vadd.f32 %v8676, %v8709
        %v8716 = vadd.f32 %v8677, %v8709
        %v8717 = vadd.f32 %v8678, %v8709
        %v8718 = vadd.f32 %v8679, %v8709
        %v8719 = vadd.f32 %v8680, %v8709
        %v8720 = vadd.f32 %v8681, %v8709
        %v8721 = vadd.f32 %v8682, %v8709
        %v8722 = vadd.f32 %v8683, %v8709
        %v8723 = vadd.f32 %v8684, %v8709
        %v8724 = vadd.f32 %v8685, %v8709
        %v8725 = vadd.f32 %v8686, %v8709
        %v8726 = vadd.f32 %v8687, %v8709
        %v8727 = vadd.f32 %v8688, %v8709
        %v8728 = vadd.f32 %v8689, %v8709
        %v8729 = vadd.f32 %v8690, %v8709
        %v8730 = vadd.f32 %v8691, %v8709
        %v8731 = vadd.f32 %v8692, %v8709
        %v8732 = vadd.f32 %v8693, %v8709
        %v8733 = vadd.f32 %v8694, %v8709
        %v8734 = vadd.f32 %v8695, %v8709
        %v8735 = vadd.f32 %v8696, %v8709
        %v8736 = vadd.f32 %v8697, %v8709
        %v8737 = vadd.f32 %v8698, %v8709
        %v8738 = vadd.f32 %v8699, %v8709
        %v8739 = vadd.f32 %v8700, %v8709
        %v8740 = vadd.f32 %v8701, %v8709
        %v8741 = vadd.f32 %v8702, %v8709
        %v8742 = vadd.f32 %v8703, %v8709
        %8743 = vst.msk [vmem:[%s496] sm:$0xff] %vm4742, %v8711
        %8744 = vst.msk [vmem:[%s496 + $0x8] sm:$0xff] %vm4742, %v8712
        %8745 = vst.msk [vmem:[%s496 + $0x10] sm:$0xff] %vm4742, %v8713
        %8746 = vst.msk [vmem:[%s496 + $0x18] sm:$0xff] %vm4742, %v8714
        %8747 = vst.msk [vmem:[%s496 + $0x20] sm:$0xff] %vm4742, %v8715
        %8748 = vst.msk [vmem:[%s496 + $0x28] sm:$0xff] %vm4742, %v8716
        %8749 = vst.msk [vmem:[%s496 + $0x30] sm:$0xff] %vm4742, %v8717
        %8750 = vst.msk [vmem:[%s496 + $0x38] sm:$0xff] %vm4742, %v8718
        %8751 = vst.msk [vmem:[%s496 + $0x40] sm:$0xff] %vm4742, %v8719
        %8752 = vst.msk [vmem:[%s496 + $0x48] sm:$0xff] %vm4742, %v8720
        %8753 = vst.msk [vmem:[%s496 + $0x50] sm:$0xff] %vm4742, %v8721
        %8754 = vst.msk [vmem:[%s496 + $0x58] sm:$0xff] %vm4742, %v8722
        %8755 = vst.msk [vmem:[%s496 + $0x60] sm:$0xff] %vm4742, %v8723
        %8756 = vst.msk [vmem:[%s496 + $0x68] sm:$0xff] %vm4742, %v8724
        %8757 = vst.msk [vmem:[%s496 + $0x70] sm:$0xff] %vm4742, %v8725
        %8758 = vst.msk [vmem:[%s496 + $0x78] sm:$0xff] %vm4742, %v8726
        %8759 = vst.msk [vmem:[%s496 + $0x80] sm:$0xff] %vm4742, %v8727
        %8760 = vst.msk [vmem:[%s496 + $0x88] sm:$0xff] %vm4742, %v8728
        %8761 = vst.msk [vmem:[%s496 + $0x90] sm:$0xff] %vm4742, %v8729
        %8762 = vst.msk [vmem:[%s496 + $0x98] sm:$0xff] %vm4742, %v8730
        %8763 = vst.msk [vmem:[%s496 + $0xa0] sm:$0xff] %vm4742, %v8731
        %8764 = vst.msk [vmem:[%s496 + $0xa8] sm:$0xff] %vm4742, %v8732
        %8765 = vst.msk [vmem:[%s496 + $0xb0] sm:$0xff] %vm4742, %v8733
        %8766 = vst.msk [vmem:[%s496 + $0xb8] sm:$0xff] %vm4742, %v8734
        %8767 = vst.msk [vmem:[%s496 + $0xc0] sm:$0xff] %vm4742, %v8735
        %8768 = vst.msk [vmem:[%s496 + $0xc8] sm:$0xff] %vm4742, %v8736
        %8769 = vst.msk [vmem:[%s496 + $0xd0] sm:$0xff] %vm4742, %v8737
        %8770 = vst.msk [vmem:[%s496 + $0xd8] sm:$0xff] %vm4742, %v8738
        %8771 = vst.msk [vmem:[%s496 + $0xe0] sm:$0xff] %vm4742, %v8739
        %8772 = vst.msk [vmem:[%s496 + $0xe8] sm:$0xff] %vm4742, %v8740
        %8773 = vst.msk [vmem:[%s496 + $0xf0] sm:$0xff] %vm4742, %v8741
        %8774 = vst.msk [vmem:[%s496 + $0xf8] sm:$0xff] %vm4742, %v8742
        %s8775 = sand.u32 %s301, 1
        %s8776 = scalar_lea.sflag [#allocation6], %s8775
        %s8777 = sand.u32 %s301, 1
        %s8778 = smul.addr %s8777, 256
        %s8779 = scalar_lea.vmem [#allocation13], %s8778
        // Predicated region
        $region89: #{residual_block_forward.1} parent=67 // pred_check
          %p8780 = pneg %p311
        $region90: #{residual_block_forward.1} parent=67 // pred_check_branch
          %8782 = sbr.rel (%p8780) target = $region92
        $region91: #{residual_block_forward.1} parent=67 // pred_region
          %s8784 = ssub.s32 4096, 4096
          %8785 = vsyncadd %s8776, %s8784
          %s8786 = smul.addr %s31, 32
          %s8787 = smul.addr %s8786, 128
          %s8788 = scalar_lea.hbm %s12, %s8787
          %s8789 = sshll.u32 %s8779, 4
          %s8790 = int_to_ptr.vmem [resolvable:$true] %s8789
          %8795 = dma.vmem_to_hbm [thread:$0]  %s8790, 4096, %s8788, %s8776, 128, 128, 8
        $region92: #{residual_block_forward.1} parent=67 // pred_fallthru
          _
      $region68: #{residual_block_forward.1} parent=5 // pred_fallthru
        _
      %p8796 = scmp.le.s32.totalorder 2, %s26
      // Predicated region
      $region93: #{residual_block_forward.1} parent=5 // pred_check
        %p8797 = pneg %p8796
      $region94: #{residual_block_forward.1} parent=5 // pred_check_branch
        %8799 = sbr.rel (%p8797) target = $region96
      $region95: #{residual_block_forward.1} parent=5 // pred_region
        %s8800 = ssub.s32 %s26, 2
        // Predicated region
        $region97: #{residual_block_forward.1} parent=95 // pred_check
          %p8801 = pneg %p317
        $region98: #{residual_block_forward.1} parent=95 // pred_check_branch
          %8803 = sbr.rel (%p8801) target = $region100
        $region99: #{residual_block_forward.1} parent=95 // pred_region
          %s8804 = sand.u32 %s302, 1
          %s8805 = scalar_lea.sflag [#allocation6], %s8804
          %s8806 = sand.u32 %s302, 1
          %s8807 = smul.addr %s8806, 256
          %s8808 = scalar_lea.vmem [#allocation13], %s8807
          %8809 = dma.done %s8805, 4096
        $region100: #{residual_block_forward.1} parent=95 // pred_fallthru
          _
      $region96: #{residual_block_forward.1} parent=5 // pred_fallthru
        _
    $region6: #{residual_block_forward.1} parent=1 // loop_footer
      %s30 = sadd.s32 1, %s26
    $region7: #{residual_block_forward.1} parent=1 // loop_footer_branch
      %25 = sbr.rel target = $region3
    $region8: #{residual_block_forward.1} parent=1 // loop_exit
      _
    %8810 = vsyncpa [#allocation5], 1
    %s8811 = scalar_lea.sflag [#allocation5], 1
    %8812 = vsyncpa %s8811, 1
    %8813 = vsyncpa [#allocation8], 1
    %8814 = vsyncpa [#allocation11], 1
    %8815 = vsyncpa [#allocation6], 1
    %s8816 = scalar_lea.sflag [#allocation6], 1
    %8817 = vsyncpa %s8816, 1

</llo_original>
